<compile_context>
chip_gen: v7x
topology: tpu7x:2x2x1
jax: 0.10.0
libtpu: 0.0.40
codegen_flags: <defaults>
</compile_context>

<pallas_src>
import math

import jax
import jax.numpy as jnp
import numpy as np
from jax.experimental import pallas as pl
from jax.experimental.pallas import tpu as pltpu


# ------------------------------ Pallas kernel ------------------------------- #
def _make_ccff_kernel(num_blocks, shifts, has_conv3):
    """Builds the fused CCFF kernel for a fixed block count / conv3 presence."""

    def kernel(x_ref, mask_ref, w1_ref, b1_ref, w2_ref, b2_ref,
               w3_ref, b3_ref, wp_ref, bp_ref, *rest):
        if has_conv3:
            wc3_ref, bc3_ref, o_ref = rest
        else:
            (o_ref,) = rest

        x = x_ref[...]                         # (Cin, T) f32, lanes = Bt*H*W
        T = x.shape[-1]

        def silu(v):
            return v * jax.nn.sigmoid(v)       # sigmoid -> EUP slot

        def mm(w, v):
            return jnp.dot(w, v, preferred_element_type=jnp.float32)

        # conv1 / conv2 : 1x1 conv (BN folded) + SiLU, both from the input x.
        h = silu(mm(w1_ref[...], x) + b1_ref[...])        # (Ch, T)
        h2 = silu(mm(w2_ref[...], x) + b2_ref[...])       # (Ch, T)

        # RepVgg bottleneck blocks: SiLU( conv3x3_bn(h) + conv1x1_bn(h) )
        for blk in range(num_blocks):
            acc = mm(wp_ref[blk], h) + bp_ref[blk] + b3_ref[blk]     # (Ch, T)
            for t, s in enumerate(shifts):
                r = (-s) % T                   # rolled[:, p] = h[:, (p + s) mod T]
                src = h if r == 0 else pltpu.roll(h, shift=r, axis=1)
                m = mask_ref[pl.ds(t, 1), :]   # (1, T) zero-padding mask
                acc = acc + mm(w3_ref[blk * 9 + t], src * m)
            h = silu(acc)

        y = h + h2                             # bottlenecks(conv1(x)) + conv2(x)
        if has_conv3:
            y = silu(mm(wc3_ref[...], y) + bc3_ref[...])
        o_ref[...] = y.astype(o_ref.dtype)

    return kernel


# ----------------------------- host-side helpers ----------------------------- #
def fold_bn(p, eps=1e-5):
    """Fold eval-mode BatchNorm into a bias-free conv (RepVgg _fuse_bn_tensor)."""
    inv = p['gamma'] / jnp.sqrt(p['var'] + eps)                 # (Cout,)
    wf = p['w'] * inv[:, None, None, None]
    bf = p['beta'] - p['mean'] * inv
    return wf.astype(jnp.float32), bf.astype(jnp.float32)


def _pick_batch_tile(B, HW, max_c):
    """Largest batch fusion Bt (divisor of B) keeping a streamed plane ~<=4 MiB."""
    if HW % 128 != 0:
        return B                       # single full-extent lane block (always legal)
    budget = 4 << 20
    bt = 1
    for cand in range(1, B + 1):
        if B % cand == 0 and cand * HW * max_c * 4 <= budget:
            bt = cand
    return bt


def ccff_forward(x, params):
    """x: (B, Cin, H, W) float32 -> (B, Cout, H, W). Inference-mode CCFF."""
    B, Cin, H, W = x.shape
    HW = H * W
    num_blocks = len(params['blocks'])
    Ch = params['conv1']['w'].shape[0]
    has_conv3 = params.get('conv3') is not None
    Cout = params['conv3']['w'].shape[0] if has_conv3 else Ch

    # ---- fold BatchNorm into conv weights / biases (host side, once) ----
    w1f, b1f = fold_bn(params['conv1'])
    w2f, b2f = fold_bn(params['conv2'])
    w1m, b1m = w1f.reshape(Ch, Cin), b1f.reshape(Ch, 1)
    w2m, b2m = w2f.reshape(Ch, Cin), b2f.reshape(Ch, 1)

    w3_l, b3_l, wp_l, bp_l = [], [], [], []
    for blk in params['blocks']:
        w3f, b3f = fold_bn(blk['conv3x3'])
        wpf, bpf = fold_bn(blk['conv1x1'])
        # (Ch, Ch, 3, 3) -> 9 taps of (Ch, Ch), tap index t = kh*3 + kw
        w3_l.append(jnp.transpose(w3f, (2, 3, 0, 1)).reshape(9, Ch, Ch))
        b3_l.append(b3f.reshape(Ch, 1))
        wp_l.append(wpf.reshape(Ch, Ch))
        bp_l.append(bpf.reshape(Ch, 1))
    w3_all = jnp.concatenate(w3_l, axis=0)      # (nb*9, Ch, Ch)
    b3_all = jnp.stack(b3_l)                    # (nb, Ch, 1)
    wp_all = jnp.stack(wp_l)                    # (nb, Ch, Ch)
    bp_all = jnp.stack(bp_l)                    # (nb, Ch, 1)

    if has_conv3:
        wc3f, bc3f = fold_bn(params['conv3'])
        wc3, bc3 = wc3f.reshape(Cout, Ch), bc3f.reshape(Cout, 1)

    # ---- layout: channels on sublanes, batch*spatial folded onto lanes ----
    x2d = jnp.transpose(x, (1, 0, 2, 3)).reshape(Cin, B * HW).astype(jnp.float32)

    max_c = max(Cin, Ch, Cout)
    Bt = _pick_batch_tile(B, HW, max_c)
    T = Bt * HW
    n_tiles = (B * HW) // T

    # per-tap lane shifts and zero-padding masks for the 3x3 conv (cross-corr.)
    offs = [(dy, dx) for dy in (-1, 0, 1) for dx in (-1, 0, 1)]
    shifts = tuple(dy * W + dx for dy, dx in offs)
    ys, xs = np.meshgrid(np.arange(H), np.arange(W), indexing='ij')
    mask_hw = np.stack([
        (((ys + dy) >= 0) & ((ys + dy) < H) &
         ((xs + dx) >= 0) & ((xs + dx) < W)).astype(np.float32).reshape(HW)
        for dy, dx in offs])                                     # (9, HW)
    masks = jnp.asarray(np.tile(mask_hw, (1, Bt)))               # (9, T)

    kernel = _make_ccff_kernel(num_blocks, shifts, has_conv3)

    const2 = lambda i: (0, 0)
    const3 = lambda i: (0, 0, 0)
    in_specs = [
        pl.BlockSpec((Cin, T), lambda i: (0, i)),                # streamed input
        pl.BlockSpec((9, T), const2),                            # 3x3 pad masks
        pl.BlockSpec((Ch, Cin), const2),                         # conv1 w
        pl.BlockSpec((Ch, 1), const2),                           # conv1 b
        pl.BlockSpec((Ch, Cin), const2),                         # conv2 w
        pl.BlockSpec((Ch, 1), const2),                           # conv2 b
        pl.BlockSpec((num_blocks * 9, Ch, Ch), const3),          # RepVgg 3x3 taps
        pl.BlockSpec((num_blocks, Ch, 1), const3),               # RepVgg 3x3 bias
        pl.BlockSpec((num_blocks, Ch, Ch), const3),              # RepVgg 1x1 w
        pl.BlockSpec((num_blocks, Ch, 1), const3),               # RepVgg 1x1 bias
    ]
    args = [x2d, masks, w1m, b1m, w2m, b2m, w3_all, b3_all, wp_all, bp_all]
    if has_conv3:
        in_specs += [pl.BlockSpec((Cout, Ch), const2),
                     pl.BlockSpec((Cout, 1), const2)]
        args += [wc3, bc3]

    # VMEM budget: only raise the scoped limit when the blocks actually need it.
    weight_bytes = sum(int(np.prod(a.shape)) * 4 for a in args[1:])
    vmem_need = (4 * T * 4 * (Cin + Cout)        # double-buffered in/out blocks
                 + 2 * weight_bytes              # double-buffered (but tiny) weights
                 + 10 * Ch * T * 4               # live in-kernel intermediates
                 + (2 << 20))
    cp = dict(dimension_semantics=("parallel",))
    if vmem_need > (16 << 20):
        cp["vmem_limit_bytes"] = int(min(vmem_need, 64 << 20))

    out2d = pl.pallas_call(
        kernel,
        out_shape=jax.ShapeDtypeStruct((Cout, B * HW), jnp.float32),
        grid_spec=pltpu.PrefetchScalarGridSpec(
            num_scalar_prefetch=0,
            grid=(n_tiles,),
            in_specs=in_specs,
            out_specs=pl.BlockSpec((Cout, T), lambda i: (0, i)),
        ),
        compiler_params=pltpu.CompilerParams(**cp),
    )(*args)

    return jnp.transpose(out2d.reshape(Cout, B, H, W), (1, 0, 2, 3))


# --------------------------- pure-JAX reference ------------------------------ #
def ccff_ref(x, params):
    def conv(v, w, pad):
        return jax.lax.conv_general_dilated(
            v, w, window_strides=(1, 1),
            padding=((pad, pad), (pad, pad)),
            dimension_numbers=('NCHW', 'OIHW', 'NCHW'))

    def bn(v, p, eps=1e-5):
        inv = p['gamma'] / jnp.sqrt(p['var'] + eps)
        return v * inv[None, :, None, None] + (p['beta'] - p['mean'] * inv)[None, :, None, None]

    def cnl(v, p, pad, act):
        y = bn(conv(v, p['w'], pad), p)
        return jax.nn.silu(y) if act else y

    x1 = cnl(x, params['conv1'], 0, True)
    for blk in params['blocks']:
        y = cnl(x1, blk['conv3x3'], 1, False) + cnl(x1, blk['conv1x1'], 0, False)
        x1 = jax.nn.silu(y)
    x2 = cnl(x, params['conv2'], 0, True)
    y = x1 + x2
    if params.get('conv3') is not None:
        y = cnl(y, params['conv3'], 0, True)
    return y


# ----------------------------------- main ------------------------------------ #
def make_cnl_params(key, cin, cout, k):
    kw, kg, kb, km, kv = jax.random.split(key, 5)
    return {
        'w': jax.random.normal(kw, (cout, cin, k, k), jnp.float32) / math.sqrt(cin * k * k),
        'gamma': 1.0 + 0.1 * jax.random.normal(kg, (cout,), jnp.float32),
        'beta': 0.1 * jax.random.normal(kb, (cout,), jnp.float32),
        'mean': 0.1 * jax.random.normal(km, (cout,), jnp.float32),
        'var': jax.nn.softplus(jax.random.normal(kv, (cout,), jnp.float32)) + 0.5,
    }


if __name__ == "__main__":
    B, Cin, H, W = 2, 16, 16, 16
    Cout, expansion, num_blocks = 16, 2.0, 3
    Ch = int(Cout * expansion)          # hidden_channels = 32  -> conv3 is a real 1x1

    key = jax.random.PRNGKey(0)
    keys = jax.random.split(key, 4 + 2 * num_blocks)
    x = jax.random.normal(keys[0], (B, Cin, H, W), jnp.float32)

    params = {
        'conv1': make_cnl_params(keys[1], Cin, Ch, 1),
        'conv2': make_cnl_params(keys[2], Cin, Ch, 1),
        'blocks': [
            {'conv3x3': make_cnl_params(keys[3 + 2 * i], Ch, Ch, 3),
             'conv1x1': make_cnl_params(keys[4 + 2 * i], Ch, Ch, 1)}
            for i in range(num_blocks)],
        'conv3': (make_cnl_params(keys[3 + 2 * num_blocks], Ch, Cout, 1)
                  if Ch != Cout else None),
    }

    out = ccff_forward(x, params)
    out = jax.block_until_ready(out)

    ref = ccff_ref(x, params)
    np.testing.assert_allclose(np.asarray(out), np.asarray(ref),
                               rtol=1e-4, atol=1e-4)
    print("KERNEL_OK")
</pallas_src>

<mosaic_0001>
module attributes {stable_mosaic.version = 11 : i64} {
  func.func @kernel(%arg0: i32, %arg1: memref<16x512xf32, #tpu.memory_space<vmem>>, %arg2: memref<9x512xf32, #tpu.memory_space<vmem>>, %arg3: memref<32x16xf32, #tpu.memory_space<vmem>>, %arg4: memref<32x1xf32, #tpu.memory_space<vmem>>, %arg5: memref<32x16xf32, #tpu.memory_space<vmem>>, %arg6: memref<32x1xf32, #tpu.memory_space<vmem>>, %arg7: memref<27x32x32xf32, #tpu.memory_space<vmem>>, %arg8: memref<3x32x1xf32, #tpu.memory_space<vmem>>, %arg9: memref<3x32x32xf32, #tpu.memory_space<vmem>>, %arg10: memref<3x32x1xf32, #tpu.memory_space<vmem>>, %arg11: memref<16x32xf32, #tpu.memory_space<vmem>>, %arg12: memref<16x1xf32, #tpu.memory_space<vmem>>, %arg13: memref<16x512xf32, #tpu.memory_space<vmem>>) attributes {dimension_semantics = [#tpu.dimension_semantics<parallel>], iteration_bounds = array<i64: 1>, scalar_prefetch = 0 : i64, scratch_operands = 0 : i64, tpu.core_type = #tpu.core_type<tc>, window_params = [{transform_indices = @transform_0, window_bounds = array<i64: 16, 512>}, {pipeline_mode = #tpu.pipeline_mode<synchronous>, transform_indices = @transform_1, window_bounds = array<i64: 9, 512>}, {pipeline_mode = #tpu.pipeline_mode<synchronous>, transform_indices = @transform_2, window_bounds = array<i64: 32, 16>}, {pipeline_mode = #tpu.pipeline_mode<synchronous>, transform_indices = @transform_3, window_bounds = array<i64: 32, 1>}, {pipeline_mode = #tpu.pipeline_mode<synchronous>, transform_indices = @transform_4, window_bounds = array<i64: 32, 16>}, {pipeline_mode = #tpu.pipeline_mode<synchronous>, transform_indices = @transform_5, window_bounds = array<i64: 32, 1>}, {pipeline_mode = #tpu.pipeline_mode<synchronous>, transform_indices = @transform_6, window_bounds = array<i64: 27, 32, 32>}, {pipeline_mode = #tpu.pipeline_mode<synchronous>, transform_indices = @transform_7, window_bounds = array<i64: 3, 32, 1>}, {pipeline_mode = #tpu.pipeline_mode<synchronous>, transform_indices = @transform_8, window_bounds = array<i64: 3, 32, 32>}, {pipeline_mode = #tpu.pipeline_mode<synchronous>, transform_indices = @transform_9, window_bounds = array<i64: 3, 32, 1>}, {pipeline_mode = #tpu.pipeline_mode<synchronous>, transform_indices = @transform_10, window_bounds = array<i64: 16, 32>}, {pipeline_mode = #tpu.pipeline_mode<synchronous>, transform_indices = @transform_11, window_bounds = array<i64: 16, 1>}, {transform_indices = @transform_12, window_bounds = array<i64: 16, 512>}]} {
    %c0 = arith.constant 0 : index
    %c0_0 = arith.constant 0 : index
    %0 = vector.load %arg1[%c0, %c0_0] : memref<16x512xf32, #tpu.memory_space<vmem>>, vector<16x512xf32>
    %c0_1 = arith.constant 0 : index
    %c0_2 = arith.constant 0 : index
    %1 = vector.load %arg3[%c0_1, %c0_2] : memref<32x16xf32, #tpu.memory_space<vmem>>, vector<32x16xf32>
    %cst = arith.constant dense<0.000000e+00> : vector<32x512xf32>
    %2 = tpu.matmul %1, %0, %cst {dimension_numbers = #tpu.dot_dimension_numbers<[1], [0], [0], [1], [0, 0, 1, 1], [], []>} : vector<32x16xf32>, vector<16x512xf32>, vector<32x512xf32> -> vector<32x512xf32>
    %c0_3 = arith.constant 0 : index
    %c0_4 = arith.constant 0 : index
    %3 = vector.load %arg4[%c0_3, %c0_4] : memref<32x1xf32, #tpu.memory_space<vmem>>, vector<32x1xf32>
    %4 = vector.broadcast %3 : vector<32x1xf32> to vector<32x512xf32>
    %5 = arith.addf %2, %4 : vector<32x512xf32>
    %6 = arith.negf %5 : vector<32x512xf32>
    %7 = math.exp %6 : vector<32x512xf32>
    %cst_5 = arith.constant 1.000000e+00 : f32
    %8 = vector.broadcast %cst_5 : f32 to vector<32x512xf32>
    %9 = arith.addf %8, %7 : vector<32x512xf32>
    %10 = arith.divf %8, %9 : vector<32x512xf32>
    %11 = arith.mulf %5, %10 : vector<32x512xf32>
    %c0_6 = arith.constant 0 : index
    %c0_7 = arith.constant 0 : index
    %12 = vector.load %arg5[%c0_6, %c0_7] : memref<32x16xf32, #tpu.memory_space<vmem>>, vector<32x16xf32>
    %cst_8 = arith.constant dense<0.000000e+00> : vector<32x512xf32>
    %13 = tpu.matmul %12, %0, %cst_8 {dimension_numbers = #tpu.dot_dimension_numbers<[1], [0], [0], [1], [0, 0, 1, 1], [], []>} : vector<32x16xf32>, vector<16x512xf32>, vector<32x512xf32> -> vector<32x512xf32>
    %c0_9 = arith.constant 0 : index
    %c0_10 = arith.constant 0 : index
    %14 = vector.load %arg6[%c0_9, %c0_10] : memref<32x1xf32, #tpu.memory_space<vmem>>, vector<32x1xf32>
    %15 = vector.broadcast %14 : vector<32x1xf32> to vector<32x512xf32>
    %16 = arith.addf %13, %15 : vector<32x512xf32>
    %17 = arith.negf %16 : vector<32x512xf32>
    %18 = math.exp %17 : vector<32x512xf32>
    %cst_11 = arith.constant 1.000000e+00 : f32
    %19 = vector.broadcast %cst_11 : f32 to vector<32x512xf32>
    %20 = arith.addf %19, %18 : vector<32x512xf32>
    %21 = arith.divf %19, %20 : vector<32x512xf32>
    %22 = arith.mulf %16, %21 : vector<32x512xf32>
    %c0_12 = arith.constant 0 : index
    %c0_13 = arith.constant 0 : index
    %c0_14 = arith.constant 0 : index
    %23 = vector.load %arg9[%c0_12, %c0_13, %c0_14] : memref<3x32x32xf32, #tpu.memory_space<vmem>>, vector<1x32x32xf32>
    %24 = vector.shape_cast %23 : vector<1x32x32xf32> to vector<32x32xf32>
    %cst_15 = arith.constant dense<0.000000e+00> : vector<32x512xf32>
    %25 = tpu.matmul %24, %11, %cst_15 {dimension_numbers = #tpu.dot_dimension_numbers<[1], [0], [0], [1], [0, 0, 1, 1], [], []>} : vector<32x32xf32>, vector<32x512xf32>, vector<32x512xf32> -> vector<32x512xf32>
    %c0_16 = arith.constant 0 : index
    %c0_17 = arith.constant 0 : index
    %c0_18 = arith.constant 0 : index
    %26 = vector.load %arg10[%c0_16, %c0_17, %c0_18] : memref<3x32x1xf32, #tpu.memory_space<vmem>>, vector<1x32x1xf32>
    %27 = vector.shape_cast %26 : vector<1x32x1xf32> to vector<32x1xf32>
    %28 = vector.broadcast %27 : vector<32x1xf32> to vector<32x512xf32>
    %29 = arith.addf %25, %28 : vector<32x512xf32>
    %c0_19 = arith.constant 0 : index
    %c0_20 = arith.constant 0 : index
    %c0_21 = arith.constant 0 : index
    %30 = vector.load %arg8[%c0_19, %c0_20, %c0_21] : memref<3x32x1xf32, #tpu.memory_space<vmem>>, vector<1x32x1xf32>
    %31 = vector.shape_cast %30 : vector<1x32x1xf32> to vector<32x1xf32>
    %32 = vector.broadcast %31 : vector<32x1xf32> to vector<32x512xf32>
    %33 = arith.addf %29, %32 : vector<32x512xf32>
    %c17_i32 = arith.constant 17 : i32
    %34 = tpu.dynamic_rotate %11 by %c17_i32 dim 1 : vector<32x512xf32>, i32 -> vector<32x512xf32>
    %c0_22 = arith.constant 0 : index
    %c0_23 = arith.constant 0 : index
    %35 = vector.load %arg2[%c0_22, %c0_23] : memref<9x512xf32, #tpu.memory_space<vmem>>, vector<1x512xf32>
    %c0_24 = arith.constant 0 : index
    %c0_25 = arith.constant 0 : index
    %c0_26 = arith.constant 0 : index
    %36 = vector.load %arg7[%c0_24, %c0_25, %c0_26] : memref<27x32x32xf32, #tpu.memory_space<vmem>>, vector<1x32x32xf32>
    %37 = vector.shape_cast %36 : vector<1x32x32xf32> to vector<32x32xf32>
    %38 = vector.broadcast %35 : vector<1x512xf32> to vector<32x512xf32>
    %39 = arith.mulf %34, %38 : vector<32x512xf32>
    %cst_27 = arith.constant dense<0.000000e+00> : vector<32x512xf32>
    %40 = tpu.matmul %37, %39, %cst_27 {dimension_numbers = #tpu.dot_dimension_numbers<[1], [0], [0], [1], [0, 0, 1, 1], [], []>} : vector<32x32xf32>, vector<32x512xf32>, vector<32x512xf32> -> vector<32x512xf32>
    %41 = arith.addf %33, %40 : vector<32x512xf32>
    %c16_i32 = arith.constant 16 : i32
    %42 = tpu.dynamic_rotate %11 by %c16_i32 dim 1 : vector<32x512xf32>, i32 -> vector<32x512xf32>
    %c1 = arith.constant 1 : index
    %c0_28 = arith.constant 0 : index
    %43 = vector.load %arg2[%c1, %c0_28] : memref<9x512xf32, #tpu.memory_space<vmem>>, vector<1x512xf32>
    %c1_29 = arith.constant 1 : index
    %c0_30 = arith.constant 0 : index
    %c0_31 = arith.constant 0 : index
    %44 = vector.load %arg7[%c1_29, %c0_30, %c0_31] : memref<27x32x32xf32, #tpu.memory_space<vmem>>, vector<1x32x32xf32>
    %45 = vector.shape_cast %44 : vector<1x32x32xf32> to vector<32x32xf32>
    %46 = vector.broadcast %43 : vector<1x512xf32> to vector<32x512xf32>
    %47 = arith.mulf %42, %46 : vector<32x512xf32>
    %cst_32 = arith.constant dense<0.000000e+00> : vector<32x512xf32>
    %48 = tpu.matmul %45, %47, %cst_32 {dimension_numbers = #tpu.dot_dimension_numbers<[1], [0], [0], [1], [0, 0, 1, 1], [], []>} : vector<32x32xf32>, vector<32x512xf32>, vector<32x512xf32> -> vector<32x512xf32>
    %49 = arith.addf %41, %48 : vector<32x512xf32>
    %c15_i32 = arith.constant 15 : i32
    %50 = tpu.dynamic_rotate %11 by %c15_i32 dim 1 : vector<32x512xf32>, i32 -> vector<32x512xf32>
    %c2 = arith.constant 2 : index
    %c0_33 = arith.constant 0 : index
    %51 = vector.load %arg2[%c2, %c0_33] : memref<9x512xf32, #tpu.memory_space<vmem>>, vector<1x512xf32>
    %c2_34 = arith.constant 2 : index
    %c0_35 = arith.constant 0 : index
    %c0_36 = arith.constant 0 : index
    %52 = vector.load %arg7[%c2_34, %c0_35, %c0_36] : memref<27x32x32xf32, #tpu.memory_space<vmem>>, vector<1x32x32xf32>
    %53 = vector.shape_cast %52 : vector<1x32x32xf32> to vector<32x32xf32>
    %54 = vector.broadcast %51 : vector<1x512xf32> to vector<32x512xf32>
    %55 = arith.mulf %50, %54 : vector<32x512xf32>
    %cst_37 = arith.constant dense<0.000000e+00> : vector<32x512xf32>
    %56 = tpu.matmul %53, %55, %cst_37 {dimension_numbers = #tpu.dot_dimension_numbers<[1], [0], [0], [1], [0, 0, 1, 1], [], []>} : vector<32x32xf32>, vector<32x512xf32>, vector<32x512xf32> -> vector<32x512xf32>
    %57 = arith.addf %49, %56 : vector<32x512xf32>
    %c1_i32 = arith.constant 1 : i32
    %58 = tpu.dynamic_rotate %11 by %c1_i32 dim 1 : vector<32x512xf32>, i32 -> vector<32x512xf32>
    %c3 = arith.constant 3 : index
    %c0_38 = arith.constant 0 : index
    %59 = vector.load %arg2[%c3, %c0_38] : memref<9x512xf32, #tpu.memory_space<vmem>>, vector<1x512xf32>
    %c3_39 = arith.constant 3 : index
    %c0_40 = arith.constant 0 : index
    %c0_41 = arith.constant 0 : index
    %60 = vector.load %arg7[%c3_39, %c0_40, %c0_41] : memref<27x32x32xf32, #tpu.memory_space<vmem>>, vector<1x32x32xf32>
    %61 = vector.shape_cast %60 : vector<1x32x32xf32> to vector<32x32xf32>
    %62 = vector.broadcast %59 : vector<1x512xf32> to vector<32x512xf32>
    %63 = arith.mulf %58, %62 : vector<32x512xf32>
    %cst_42 = arith.constant dense<0.000000e+00> : vector<32x512xf32>
    %64 = tpu.matmul %61, %63, %cst_42 {dimension_numbers = #tpu.dot_dimension_numbers<[1], [0], [0], [1], [0, 0, 1, 1], [], []>} : vector<32x32xf32>, vector<32x512xf32>, vector<32x512xf32> -> vector<32x512xf32>
    %65 = arith.addf %57, %64 : vector<32x512xf32>
    %c4 = arith.constant 4 : index
    %c0_43 = arith.constant 0 : index
    %66 = vector.load %arg2[%c4, %c0_43] : memref<9x512xf32, #tpu.memory_space<vmem>>, vector<1x512xf32>
    %c4_44 = arith.constant 4 : index
    %c0_45 = arith.constant 0 : index
    %c0_46 = arith.constant 0 : index
    %67 = vector.load %arg7[%c4_44, %c0_45, %c0_46] : memref<27x32x32xf32, #tpu.memory_space<vmem>>, vector<1x32x32xf32>
    %68 = vector.shape_cast %67 : vector<1x32x32xf32> to vector<32x32xf32>
    %69 = vector.broadcast %66 : vector<1x512xf32> to vector<32x512xf32>
    %70 = arith.mulf %11, %69 : vector<32x512xf32>
    %cst_47 = arith.constant dense<0.000000e+00> : vector<32x512xf32>
    %71 = tpu.matmul %68, %70, %cst_47 {dimension_numbers = #tpu.dot_dimension_numbers<[1], [0], [0], [1], [0, 0, 1, 1], [], []>} : vector<32x32xf32>, vector<32x512xf32>, vector<32x512xf32> -> vector<32x512xf32>
    %72 = arith.addf %65, %71 : vector<32x512xf32>
    %c511_i32 = arith.constant 511 : i32
    %73 = tpu.dynamic_rotate %11 by %c511_i32 dim 1 : vector<32x512xf32>, i32 -> vector<32x512xf32>
    %c5 = arith.constant 5 : index
    %c0_48 = arith.constant 0 : index
    %74 = vector.load %arg2[%c5, %c0_48] : memref<9x512xf32, #tpu.memory_space<vmem>>, vector<1x512xf32>
    %c5_49 = arith.constant 5 : index
    %c0_50 = arith.constant 0 : index
    %c0_51 = arith.constant 0 : index
    %75 = vector.load %arg7[%c5_49, %c0_50, %c0_51] : memref<27x32x32xf32, #tpu.memory_space<vmem>>, vector<1x32x32xf32>
    %76 = vector.shape_cast %75 : vector<1x32x32xf32> to vector<32x32xf32>
    %77 = vector.broadcast %74 : vector<1x512xf32> to vector<32x512xf32>
    %78 = arith.mulf %73, %77 : vector<32x512xf32>
    %cst_52 = arith.constant dense<0.000000e+00> : vector<32x512xf32>
    %79 = tpu.matmul %76, %78, %cst_52 {dimension_numbers = #tpu.dot_dimension_numbers<[1], [0], [0], [1], [0, 0, 1, 1], [], []>} : vector<32x32xf32>, vector<32x512xf32>, vector<32x512xf32> -> vector<32x512xf32>
    %80 = arith.addf %72, %79 : vector<32x512xf32>
    %c497_i32 = arith.constant 497 : i32
    %81 = tpu.dynamic_rotate %11 by %c497_i32 dim 1 : vector<32x512xf32>, i32 -> vector<32x512xf32>
    %c6 = arith.constant 6 : index
    %c0_53 = arith.constant 0 : index
    %82 = vector.load %arg2[%c6, %c0_53] : memref<9x512xf32, #tpu.memory_space<vmem>>, vector<1x512xf32>
    %c6_54 = arith.constant 6 : index
    %c0_55 = arith.constant 0 : index
    %c0_56 = arith.constant 0 : index
    %83 = vector.load %arg7[%c6_54, %c0_55, %c0_56] : memref<27x32x32xf32, #tpu.memory_space<vmem>>, vector<1x32x32xf32>
    %84 = vector.shape_cast %83 : vector<1x32x32xf32> to vector<32x32xf32>
    %85 = vector.broadcast %82 : vector<1x512xf32> to vector<32x512xf32>
    %86 = arith.mulf %81, %85 : vector<32x512xf32>
    %cst_57 = arith.constant dense<0.000000e+00> : vector<32x512xf32>
    %87 = tpu.matmul %84, %86, %cst_57 {dimension_numbers = #tpu.dot_dimension_numbers<[1], [0], [0], [1], [0, 0, 1, 1], [], []>} : vector<32x32xf32>, vector<32x512xf32>, vector<32x512xf32> -> vector<32x512xf32>
    %88 = arith.addf %80, %87 : vector<32x512xf32>
    %c496_i32 = arith.constant 496 : i32
    %89 = tpu.dynamic_rotate %11 by %c496_i32 dim 1 : vector<32x512xf32>, i32 -> vector<32x512xf32>
    %c7 = arith.constant 7 : index
    %c0_58 = arith.constant 0 : index
    %90 = vector.load %arg2[%c7, %c0_58] : memref<9x512xf32, #tpu.memory_space<vmem>>, vector<1x512xf32>
    %c7_59 = arith.constant 7 : index
    %c0_60 = arith.constant 0 : index
    %c0_61 = arith.constant 0 : index
    %91 = vector.load %arg7[%c7_59, %c0_60, %c0_61] : memref<27x32x32xf32, #tpu.memory_space<vmem>>, vector<1x32x32xf32>
    %92 = vector.shape_cast %91 : vector<1x32x32xf32> to vector<32x32xf32>
    %93 = vector.broadcast %90 : vector<1x512xf32> to vector<32x512xf32>
    %94 = arith.mulf %89, %93 : vector<32x512xf32>
    %cst_62 = arith.constant dense<0.000000e+00> : vector<32x512xf32>
    %95 = tpu.matmul %92, %94, %cst_62 {dimension_numbers = #tpu.dot_dimension_numbers<[1], [0], [0], [1], [0, 0, 1, 1], [], []>} : vector<32x32xf32>, vector<32x512xf32>, vector<32x512xf32> -> vector<32x512xf32>
    %96 = arith.addf %88, %95 : vector<32x512xf32>
    %c495_i32 = arith.constant 495 : i32
    %97 = tpu.dynamic_rotate %11 by %c495_i32 dim 1 : vector<32x512xf32>, i32 -> vector<32x512xf32>
    %c8 = arith.constant 8 : index
    %c0_63 = arith.constant 0 : index
    %98 = vector.load %arg2[%c8, %c0_63] : memref<9x512xf32, #tpu.memory_space<vmem>>, vector<1x512xf32>
    %c8_64 = arith.constant 8 : index
    %c0_65 = arith.constant 0 : index
    %c0_66 = arith.constant 0 : index
    %99 = vector.load %arg7[%c8_64, %c0_65, %c0_66] : memref<27x32x32xf32, #tpu.memory_space<vmem>>, vector<1x32x32xf32>
    %100 = vector.shape_cast %99 : vector<1x32x32xf32> to vector<32x32xf32>
    %101 = vector.broadcast %98 : vector<1x512xf32> to vector<32x512xf32>
    %102 = arith.mulf %97, %101 : vector<32x512xf32>
    %cst_67 = arith.constant dense<0.000000e+00> : vector<32x512xf32>
    %103 = tpu.matmul %100, %102, %cst_67 {dimension_numbers = #tpu.dot_dimension_numbers<[1], [0], [0], [1], [0, 0, 1, 1], [], []>} : vector<32x32xf32>, vector<32x512xf32>, vector<32x512xf32> -> vector<32x512xf32>
    %104 = arith.addf %96, %103 : vector<32x512xf32>
    %105 = arith.negf %104 : vector<32x512xf32>
    %106 = math.exp %105 : vector<32x512xf32>
    %cst_68 = arith.constant 1.000000e+00 : f32
    %107 = vector.broadcast %cst_68 : f32 to vector<32x512xf32>
    %108 = arith.addf %107, %106 : vector<32x512xf32>
    %109 = arith.divf %107, %108 : vector<32x512xf32>
    %110 = arith.mulf %104, %109 : vector<32x512xf32>
    %c1_69 = arith.constant 1 : index
    %c0_70 = arith.constant 0 : index
    %c0_71 = arith.constant 0 : index
    %111 = vector.load %arg9[%c1_69, %c0_70, %c0_71] : memref<3x32x32xf32, #tpu.memory_space<vmem>>, vector<1x32x32xf32>
    %112 = vector.shape_cast %111 : vector<1x32x32xf32> to vector<32x32xf32>
    %cst_72 = arith.constant dense<0.000000e+00> : vector<32x512xf32>
    %113 = tpu.matmul %112, %110, %cst_72 {dimension_numbers = #tpu.dot_dimension_numbers<[1], [0], [0], [1], [0, 0, 1, 1], [], []>} : vector<32x32xf32>, vector<32x512xf32>, vector<32x512xf32> -> vector<32x512xf32>
    %c1_73 = arith.constant 1 : index
    %c0_74 = arith.constant 0 : index
    %c0_75 = arith.constant 0 : index
    %114 = vector.load %arg10[%c1_73, %c0_74, %c0_75] : memref<3x32x1xf32, #tpu.memory_space<vmem>>, vector<1x32x1xf32>
    %115 = vector.shape_cast %114 : vector<1x32x1xf32> to vector<32x1xf32>
    %116 = vector.broadcast %115 : vector<32x1xf32> to vector<32x512xf32>
    %117 = arith.addf %113, %116 : vector<32x512xf32>
    %c1_76 = arith.constant 1 : index
    %c0_77 = arith.constant 0 : index
    %c0_78 = arith.constant 0 : index
    %118 = vector.load %arg8[%c1_76, %c0_77, %c0_78] : memref<3x32x1xf32, #tpu.memory_space<vmem>>, vector<1x32x1xf32>
    %119 = vector.shape_cast %118 : vector<1x32x1xf32> to vector<32x1xf32>
    %120 = vector.broadcast %119 : vector<32x1xf32> to vector<32x512xf32>
    %121 = arith.addf %117, %120 : vector<32x512xf32>
    %c17_i32_79 = arith.constant 17 : i32
    %122 = tpu.dynamic_rotate %110 by %c17_i32_79 dim 1 : vector<32x512xf32>, i32 -> vector<32x512xf32>
    %c0_80 = arith.constant 0 : index
    %c0_81 = arith.constant 0 : index
    %123 = vector.load %arg2[%c0_80, %c0_81] : memref<9x512xf32, #tpu.memory_space<vmem>>, vector<1x512xf32>
    %c9 = arith.constant 9 : index
    %c0_82 = arith.constant 0 : index
    %c0_83 = arith.constant 0 : index
    %124 = vector.load %arg7[%c9, %c0_82, %c0_83] : memref<27x32x32xf32, #tpu.memory_space<vmem>>, vector<1x32x32xf32>
    %125 = vector.shape_cast %124 : vector<1x32x32xf32> to vector<32x32xf32>
    %126 = vector.broadcast %123 : vector<1x512xf32> to vector<32x512xf32>
    %127 = arith.mulf %122, %126 : vector<32x512xf32>
    %cst_84 = arith.constant dense<0.000000e+00> : vector<32x512xf32>
    %128 = tpu.matmul %125, %127, %cst_84 {dimension_numbers = #tpu.dot_dimension_numbers<[1], [0], [0], [1], [0, 0, 1, 1], [], []>} : vector<32x32xf32>, vector<32x512xf32>, vector<32x512xf32> -> vector<32x512xf32>
    %129 = arith.addf %121, %128 : vector<32x512xf32>
    %c16_i32_85 = arith.constant 16 : i32
    %130 = tpu.dynamic_rotate %110 by %c16_i32_85 dim 1 : vector<32x512xf32>, i32 -> vector<32x512xf32>
    %c1_86 = arith.constant 1 : index
    %c0_87 = arith.constant 0 : index
    %131 = vector.load %arg2[%c1_86, %c0_87] : memref<9x512xf32, #tpu.memory_space<vmem>>, vector<1x512xf32>
    %c10 = arith.constant 10 : index
    %c0_88 = arith.constant 0 : index
    %c0_89 = arith.constant 0 : index
    %132 = vector.load %arg7[%c10, %c0_88, %c0_89] : memref<27x32x32xf32, #tpu.memory_space<vmem>>, vector<1x32x32xf32>
    %133 = vector.shape_cast %132 : vector<1x32x32xf32> to vector<32x32xf32>
    %134 = vector.broadcast %131 : vector<1x512xf32> to vector<32x512xf32>
    %135 = arith.mulf %130, %134 : vector<32x512xf32>
    %cst_90 = arith.constant dense<0.000000e+00> : vector<32x512xf32>
    %136 = tpu.matmul %133, %135, %cst_90 {dimension_numbers = #tpu.dot_dimension_numbers<[1], [0], [0], [1], [0, 0, 1, 1], [], []>} : vector<32x32xf32>, vector<32x512xf32>, vector<32x512xf32> -> vector<32x512xf32>
    %137 = arith.addf %129, %136 : vector<32x512xf32>
    %c15_i32_91 = arith.constant 15 : i32
    %138 = tpu.dynamic_rotate %110 by %c15_i32_91 dim 1 : vector<32x512xf32>, i32 -> vector<32x512xf32>
    %c2_92 = arith.constant 2 : index
    %c0_93 = arith.constant 0 : index
    %139 = vector.load %arg2[%c2_92, %c0_93] : memref<9x512xf32, #tpu.memory_space<vmem>>, vector<1x512xf32>
    %c11 = arith.constant 11 : index
    %c0_94 = arith.constant 0 : index
    %c0_95 = arith.constant 0 : index
    %140 = vector.load %arg7[%c11, %c0_94, %c0_95] : memref<27x32x32xf32, #tpu.memory_space<vmem>>, vector<1x32x32xf32>
    %141 = vector.shape_cast %140 : vector<1x32x32xf32> to vector<32x32xf32>
    %142 = vector.broadcast %139 : vector<1x512xf32> to vector<32x512xf32>
    %143 = arith.mulf %138, %142 : vector<32x512xf32>
    %cst_96 = arith.constant dense<0.000000e+00> : vector<32x512xf32>
    %144 = tpu.matmul %141, %143, %cst_96 {dimension_numbers = #tpu.dot_dimension_numbers<[1], [0], [0], [1], [0, 0, 1, 1], [], []>} : vector<32x32xf32>, vector<32x512xf32>, vector<32x512xf32> -> vector<32x512xf32>
    %145 = arith.addf %137, %144 : vector<32x512xf32>
    %c1_i32_97 = arith.constant 1 : i32
    %146 = tpu.dynamic_rotate %110 by %c1_i32_97 dim 1 : vector<32x512xf32>, i32 -> vector<32x512xf32>
    %c3_98 = arith.constant 3 : index
    %c0_99 = arith.constant 0 : index
    %147 = vector.load %arg2[%c3_98, %c0_99] : memref<9x512xf32, #tpu.memory_space<vmem>>, vector<1x512xf32>
    %c12 = arith.constant 12 : index
    %c0_100 = arith.constant 0 : index
    %c0_101 = arith.constant 0 : index
    %148 = vector.load %arg7[%c12, %c0_100, %c0_101] : memref<27x32x32xf32, #tpu.memory_space<vmem>>, vector<1x32x32xf32>
    %149 = vector.shape_cast %148 : vector<1x32x32xf32> to vector<32x32xf32>
    %150 = vector.broadcast %147 : vector<1x512xf32> to vector<32x512xf32>
    %151 = arith.mulf %146, %150 : vector<32x512xf32>
    %cst_102 = arith.constant dense<0.000000e+00> : vector<32x512xf32>
    %152 = tpu.matmul %149, %151, %cst_102 {dimension_numbers = #tpu.dot_dimension_numbers<[1], [0], [0], [1], [0, 0, 1, 1], [], []>} : vector<32x32xf32>, vector<32x512xf32>, vector<32x512xf32> -> vector<32x512xf32>
    %153 = arith.addf %145, %152 : vector<32x512xf32>
    %c4_103 = arith.constant 4 : index
    %c0_104 = arith.constant 0 : index
    %154 = vector.load %arg2[%c4_103, %c0_104] : memref<9x512xf32, #tpu.memory_space<vmem>>, vector<1x512xf32>
    %c13 = arith.constant 13 : index
    %c0_105 = arith.constant 0 : index
    %c0_106 = arith.constant 0 : index
    %155 = vector.load %arg7[%c13, %c0_105, %c0_106] : memref<27x32x32xf32, #tpu.memory_space<vmem>>, vector<1x32x32xf32>
    %156 = vector.shape_cast %155 : vector<1x32x32xf32> to vector<32x32xf32>
    %157 = vector.broadcast %154 : vector<1x512xf32> to vector<32x512xf32>
    %158 = arith.mulf %110, %157 : vector<32x512xf32>
    %cst_107 = arith.constant dense<0.000000e+00> : vector<32x512xf32>
    %159 = tpu.matmul %156, %158, %cst_107 {dimension_numbers = #tpu.dot_dimension_numbers<[1], [0], [0], [1], [0, 0, 1, 1], [], []>} : vector<32x32xf32>, vector<32x512xf32>, vector<32x512xf32> -> vector<32x512xf32>
    %160 = arith.addf %153, %159 : vector<32x512xf32>
    %c511_i32_108 = arith.constant 511 : i32
    %161 = tpu.dynamic_rotate %110 by %c511_i32_108 dim 1 : vector<32x512xf32>, i32 -> vector<32x512xf32>
    %c5_109 = arith.constant 5 : index
    %c0_110 = arith.constant 0 : index
    %162 = vector.load %arg2[%c5_109, %c0_110] : memref<9x512xf32, #tpu.memory_space<vmem>>, vector<1x512xf32>
    %c14 = arith.constant 14 : index
    %c0_111 = arith.constant 0 : index
    %c0_112 = arith.constant 0 : index
    %163 = vector.load %arg7[%c14, %c0_111, %c0_112] : memref<27x32x32xf32, #tpu.memory_space<vmem>>, vector<1x32x32xf32>
    %164 = vector.shape_cast %163 : vector<1x32x32xf32> to vector<32x32xf32>
    %165 = vector.broadcast %162 : vector<1x512xf32> to vector<32x512xf32>
    %166 = arith.mulf %161, %165 : vector<32x512xf32>
    %cst_113 = arith.constant dense<0.000000e+00> : vector<32x512xf32>
    %167 = tpu.matmul %164, %166, %cst_113 {dimension_numbers = #tpu.dot_dimension_numbers<[1], [0], [0], [1], [0, 0, 1, 1], [], []>} : vector<32x32xf32>, vector<32x512xf32>, vector<32x512xf32> -> vector<32x512xf32>
    %168 = arith.addf %160, %167 : vector<32x512xf32>
    %c497_i32_114 = arith.constant 497 : i32
    %169 = tpu.dynamic_rotate %110 by %c497_i32_114 dim 1 : vector<32x512xf32>, i32 -> vector<32x512xf32>
    %c6_115 = arith.constant 6 : index
    %c0_116 = arith.constant 0 : index
    %170 = vector.load %arg2[%c6_115, %c0_116] : memref<9x512xf32, #tpu.memory_space<vmem>>, vector<1x512xf32>
    %c15 = arith.constant 15 : index
    %c0_117 = arith.constant 0 : index
    %c0_118 = arith.constant 0 : index
    %171 = vector.load %arg7[%c15, %c0_117, %c0_118] : memref<27x32x32xf32, #tpu.memory_space<vmem>>, vector<1x32x32xf32>
    %172 = vector.shape_cast %171 : vector<1x32x32xf32> to vector<32x32xf32>
    %173 = vector.broadcast %170 : vector<1x512xf32> to vector<32x512xf32>
    %174 = arith.mulf %169, %173 : vector<32x512xf32>
    %cst_119 = arith.constant dense<0.000000e+00> : vector<32x512xf32>
    %175 = tpu.matmul %172, %174, %cst_119 {dimension_numbers = #tpu.dot_dimension_numbers<[1], [0], [0], [1], [0, 0, 1, 1], [], []>} : vector<32x32xf32>, vector<32x512xf32>, vector<32x512xf32> -> vector<32x512xf32>
    %176 = arith.addf %168, %175 : vector<32x512xf32>
    %c496_i32_120 = arith.constant 496 : i32
    %177 = tpu.dynamic_rotate %110 by %c496_i32_120 dim 1 : vector<32x512xf32>, i32 -> vector<32x512xf32>
    %c7_121 = arith.constant 7 : index
    %c0_122 = arith.constant 0 : index
    %178 = vector.load %arg2[%c7_121, %c0_122] : memref<9x512xf32, #tpu.memory_space<vmem>>, vector<1x512xf32>
    %c16 = arith.constant 16 : index
    %c0_123 = arith.constant 0 : index
    %c0_124 = arith.constant 0 : index
    %179 = vector.load %arg7[%c16, %c0_123, %c0_124] : memref<27x32x32xf32, #tpu.memory_space<vmem>>, vector<1x32x32xf32>
    %180 = vector.shape_cast %179 : vector<1x32x32xf32> to vector<32x32xf32>
    %181 = vector.broadcast %178 : vector<1x512xf32> to vector<32x512xf32>
    %182 = arith.mulf %177, %181 : vector<32x512xf32>
    %cst_125 = arith.constant dense<0.000000e+00> : vector<32x512xf32>
    %183 = tpu.matmul %180, %182, %cst_125 {dimension_numbers = #tpu.dot_dimension_numbers<[1], [0], [0], [1], [0, 0, 1, 1], [], []>} : vector<32x32xf32>, vector<32x512xf32>, vector<32x512xf32> -> vector<32x512xf32>
    %184 = arith.addf %176, %183 : vector<32x512xf32>
    %c495_i32_126 = arith.constant 495 : i32
    %185 = tpu.dynamic_rotate %110 by %c495_i32_126 dim 1 : vector<32x512xf32>, i32 -> vector<32x512xf32>
    %c8_127 = arith.constant 8 : index
    %c0_128 = arith.constant 0 : index
    %186 = vector.load %arg2[%c8_127, %c0_128] : memref<9x512xf32, #tpu.memory_space<vmem>>, vector<1x512xf32>
    %c17 = arith.constant 17 : index
    %c0_129 = arith.constant 0 : index
    %c0_130 = arith.constant 0 : index
    %187 = vector.load %arg7[%c17, %c0_129, %c0_130] : memref<27x32x32xf32, #tpu.memory_space<vmem>>, vector<1x32x32xf32>
    %188 = vector.shape_cast %187 : vector<1x32x32xf32> to vector<32x32xf32>
    %189 = vector.broadcast %186 : vector<1x512xf32> to vector<32x512xf32>
    %190 = arith.mulf %185, %189 : vector<32x512xf32>
    %cst_131 = arith.constant dense<0.000000e+00> : vector<32x512xf32>
    %191 = tpu.matmul %188, %190, %cst_131 {dimension_numbers = #tpu.dot_dimension_numbers<[1], [0], [0], [1], [0, 0, 1, 1], [], []>} : vector<32x32xf32>, vector<32x512xf32>, vector<32x512xf32> -> vector<32x512xf32>
    %192 = arith.addf %184, %191 : vector<32x512xf32>
    %193 = arith.negf %192 : vector<32x512xf32>
    %194 = math.exp %193 : vector<32x512xf32>
    %cst_132 = arith.constant 1.000000e+00 : f32
    %195 = vector.broadcast %cst_132 : f32 to vector<32x512xf32>
    %196 = arith.addf %195, %194 : vector<32x512xf32>
    %197 = arith.divf %195, %196 : vector<32x512xf32>
    %198 = arith.mulf %192, %197 : vector<32x512xf32>
    %c2_133 = arith.constant 2 : index
    %c0_134 = arith.constant 0 : index
    %c0_135 = arith.constant 0 : index
    %199 = vector.load %arg9[%c2_133, %c0_134, %c0_135] : memref<3x32x32xf32, #tpu.memory_space<vmem>>, vector<1x32x32xf32>
    %200 = vector.shape_cast %199 : vector<1x32x32xf32> to vector<32x32xf32>
    %cst_136 = arith.constant dense<0.000000e+00> : vector<32x512xf32>
    %201 = tpu.matmul %200, %198, %cst_136 {dimension_numbers = #tpu.dot_dimension_numbers<[1], [0], [0], [1], [0, 0, 1, 1], [], []>} : vector<32x32xf32>, vector<32x512xf32>, vector<32x512xf32> -> vector<32x512xf32>
    %c2_137 = arith.constant 2 : index
    %c0_138 = arith.constant 0 : index
    %c0_139 = arith.constant 0 : index
    %202 = vector.load %arg10[%c2_137, %c0_138, %c0_139] : memref<3x32x1xf32, #tpu.memory_space<vmem>>, vector<1x32x1xf32>
    %203 = vector.shape_cast %202 : vector<1x32x1xf32> to vector<32x1xf32>
    %204 = vector.broadcast %203 : vector<32x1xf32> to vector<32x512xf32>
    %205 = arith.addf %201, %204 : vector<32x512xf32>
    %c2_140 = arith.constant 2 : index
    %c0_141 = arith.constant 0 : index
    %c0_142 = arith.constant 0 : index
    %206 = vector.load %arg8[%c2_140, %c0_141, %c0_142] : memref<3x32x1xf32, #tpu.memory_space<vmem>>, vector<1x32x1xf32>
    %207 = vector.shape_cast %206 : vector<1x32x1xf32> to vector<32x1xf32>
    %208 = vector.broadcast %207 : vector<32x1xf32> to vector<32x512xf32>
    %209 = arith.addf %205, %208 : vector<32x512xf32>
    %c17_i32_143 = arith.constant 17 : i32
    %210 = tpu.dynamic_rotate %198 by %c17_i32_143 dim 1 : vector<32x512xf32>, i32 -> vector<32x512xf32>
    %c0_144 = arith.constant 0 : index
    %c0_145 = arith.constant 0 : index
    %211 = vector.load %arg2[%c0_144, %c0_145] : memref<9x512xf32, #tpu.memory_space<vmem>>, vector<1x512xf32>
    %c18 = arith.constant 18 : index
    %c0_146 = arith.constant 0 : index
    %c0_147 = arith.constant 0 : index
    %212 = vector.load %arg7[%c18, %c0_146, %c0_147] : memref<27x32x32xf32, #tpu.memory_space<vmem>>, vector<1x32x32xf32>
    %213 = vector.shape_cast %212 : vector<1x32x32xf32> to vector<32x32xf32>
    %214 = vector.broadcast %211 : vector<1x512xf32> to vector<32x512xf32>
    %215 = arith.mulf %210, %214 : vector<32x512xf32>
    %cst_148 = arith.constant dense<0.000000e+00> : vector<32x512xf32>
    %216 = tpu.matmul %213, %215, %cst_148 {dimension_numbers = #tpu.dot_dimension_numbers<[1], [0], [0], [1], [0, 0, 1, 1], [], []>} : vector<32x32xf32>, vector<32x512xf32>, vector<32x512xf32> -> vector<32x512xf32>
    %217 = arith.addf %209, %216 : vector<32x512xf32>
    %c16_i32_149 = arith.constant 16 : i32
    %218 = tpu.dynamic_rotate %198 by %c16_i32_149 dim 1 : vector<32x512xf32>, i32 -> vector<32x512xf32>
    %c1_150 = arith.constant 1 : index
    %c0_151 = arith.constant 0 : index
    %219 = vector.load %arg2[%c1_150, %c0_151] : memref<9x512xf32, #tpu.memory_space<vmem>>, vector<1x512xf32>
    %c19 = arith.constant 19 : index
    %c0_152 = arith.constant 0 : index
    %c0_153 = arith.constant 0 : index
    %220 = vector.load %arg7[%c19, %c0_152, %c0_153] : memref<27x32x32xf32, #tpu.memory_space<vmem>>, vector<1x32x32xf32>
    %221 = vector.shape_cast %220 : vector<1x32x32xf32> to vector<32x32xf32>
    %222 = vector.broadcast %219 : vector<1x512xf32> to vector<32x512xf32>
    %223 = arith.mulf %218, %222 : vector<32x512xf32>
    %cst_154 = arith.constant dense<0.000000e+00> : vector<32x512xf32>
    %224 = tpu.matmul %221, %223, %cst_154 {dimension_numbers = #tpu.dot_dimension_numbers<[1], [0], [0], [1], [0, 0, 1, 1], [], []>} : vector<32x32xf32>, vector<32x512xf32>, vector<32x512xf32> -> vector<32x512xf32>
    %225 = arith.addf %217, %224 : vector<32x512xf32>
    %c15_i32_155 = arith.constant 15 : i32
    %226 = tpu.dynamic_rotate %198 by %c15_i32_155 dim 1 : vector<32x512xf32>, i32 -> vector<32x512xf32>
    %c2_156 = arith.constant 2 : index
    %c0_157 = arith.constant 0 : index
    %227 = vector.load %arg2[%c2_156, %c0_157] : memref<9x512xf32, #tpu.memory_space<vmem>>, vector<1x512xf32>
    %c20 = arith.constant 20 : index
    %c0_158 = arith.constant 0 : index
    %c0_159 = arith.constant 0 : index
    %228 = vector.load %arg7[%c20, %c0_158, %c0_159] : memref<27x32x32xf32, #tpu.memory_space<vmem>>, vector<1x32x32xf32>
    %229 = vector.shape_cast %228 : vector<1x32x32xf32> to vector<32x32xf32>
    %230 = vector.broadcast %227 : vector<1x512xf32> to vector<32x512xf32>
    %231 = arith.mulf %226, %230 : vector<32x512xf32>
    %cst_160 = arith.constant dense<0.000000e+00> : vector<32x512xf32>
    %232 = tpu.matmul %229, %231, %cst_160 {dimension_numbers = #tpu.dot_dimension_numbers<[1], [0], [0], [1], [0, 0, 1, 1], [], []>} : vector<32x32xf32>, vector<32x512xf32>, vector<32x512xf32> -> vector<32x512xf32>
    %233 = arith.addf %225, %232 : vector<32x512xf32>
    %c1_i32_161 = arith.constant 1 : i32
    %234 = tpu.dynamic_rotate %198 by %c1_i32_161 dim 1 : vector<32x512xf32>, i32 -> vector<32x512xf32>
    %c3_162 = arith.constant 3 : index
    %c0_163 = arith.constant 0 : index
    %235 = vector.load %arg2[%c3_162, %c0_163] : memref<9x512xf32, #tpu.memory_space<vmem>>, vector<1x512xf32>
    %c21 = arith.constant 21 : index
    %c0_164 = arith.constant 0 : index
    %c0_165 = arith.constant 0 : index
    %236 = vector.load %arg7[%c21, %c0_164, %c0_165] : memref<27x32x32xf32, #tpu.memory_space<vmem>>, vector<1x32x32xf32>
    %237 = vector.shape_cast %236 : vector<1x32x32xf32> to vector<32x32xf32>
    %238 = vector.broadcast %235 : vector<1x512xf32> to vector<32x512xf32>
    %239 = arith.mulf %234, %238 : vector<32x512xf32>
    %cst_166 = arith.constant dense<0.000000e+00> : vector<32x512xf32>
    %240 = tpu.matmul %237, %239, %cst_166 {dimension_numbers = #tpu.dot_dimension_numbers<[1], [0], [0], [1], [0, 0, 1, 1], [], []>} : vector<32x32xf32>, vector<32x512xf32>, vector<32x512xf32> -> vector<32x512xf32>
    %241 = arith.addf %233, %240 : vector<32x512xf32>
    %c4_167 = arith.constant 4 : index
    %c0_168 = arith.constant 0 : index
    %242 = vector.load %arg2[%c4_167, %c0_168] : memref<9x512xf32, #tpu.memory_space<vmem>>, vector<1x512xf32>
    %c22 = arith.constant 22 : index
    %c0_169 = arith.constant 0 : index
    %c0_170 = arith.constant 0 : index
    %243 = vector.load %arg7[%c22, %c0_169, %c0_170] : memref<27x32x32xf32, #tpu.memory_space<vmem>>, vector<1x32x32xf32>
    %244 = vector.shape_cast %243 : vector<1x32x32xf32> to vector<32x32xf32>
    %245 = vector.broadcast %242 : vector<1x512xf32> to vector<32x512xf32>
    %246 = arith.mulf %198, %245 : vector<32x512xf32>
    %cst_171 = arith.constant dense<0.000000e+00> : vector<32x512xf32>
    %247 = tpu.matmul %244, %246, %cst_171 {dimension_numbers = #tpu.dot_dimension_numbers<[1], [0], [0], [1], [0, 0, 1, 1], [], []>} : vector<32x32xf32>, vector<32x512xf32>, vector<32x512xf32> -> vector<32x512xf32>
    %248 = arith.addf %241, %247 : vector<32x512xf32>
    %c511_i32_172 = arith.constant 511 : i32
    %249 = tpu.dynamic_rotate %198 by %c511_i32_172 dim 1 : vector<32x512xf32>, i32 -> vector<32x512xf32>
    %c5_173 = arith.constant 5 : index
    %c0_174 = arith.constant 0 : index
    %250 = vector.load %arg2[%c5_173, %c0_174] : memref<9x512xf32, #tpu.memory_space<vmem>>, vector<1x512xf32>
    %c23 = arith.constant 23 : index
    %c0_175 = arith.constant 0 : index
    %c0_176 = arith.constant 0 : index
    %251 = vector.load %arg7[%c23, %c0_175, %c0_176] : memref<27x32x32xf32, #tpu.memory_space<vmem>>, vector<1x32x32xf32>
    %252 = vector.shape_cast %251 : vector<1x32x32xf32> to vector<32x32xf32>
    %253 = vector.broadcast %250 : vector<1x512xf32> to vector<32x512xf32>
    %254 = arith.mulf %249, %253 : vector<32x512xf32>
    %cst_177 = arith.constant dense<0.000000e+00> : vector<32x512xf32>
    %255 = tpu.matmul %252, %254, %cst_177 {dimension_numbers = #tpu.dot_dimension_numbers<[1], [0], [0], [1], [0, 0, 1, 1], [], []>} : vector<32x32xf32>, vector<32x512xf32>, vector<32x512xf32> -> vector<32x512xf32>
    %256 = arith.addf %248, %255 : vector<32x512xf32>
    %c497_i32_178 = arith.constant 497 : i32
    %257 = tpu.dynamic_rotate %198 by %c497_i32_178 dim 1 : vector<32x512xf32>, i32 -> vector<32x512xf32>
    %c6_179 = arith.constant 6 : index
    %c0_180 = arith.constant 0 : index
    %258 = vector.load %arg2[%c6_179, %c0_180] : memref<9x512xf32, #tpu.memory_space<vmem>>, vector<1x512xf32>
    %c24 = arith.constant 24 : index
    %c0_181 = arith.constant 0 : index
    %c0_182 = arith.constant 0 : index
    %259 = vector.load %arg7[%c24, %c0_181, %c0_182] : memref<27x32x32xf32, #tpu.memory_space<vmem>>, vector<1x32x32xf32>
    %260 = vector.shape_cast %259 : vector<1x32x32xf32> to vector<32x32xf32>
    %261 = vector.broadcast %258 : vector<1x512xf32> to vector<32x512xf32>
    %262 = arith.mulf %257, %261 : vector<32x512xf32>
    %cst_183 = arith.constant dense<0.000000e+00> : vector<32x512xf32>
    %263 = tpu.matmul %260, %262, %cst_183 {dimension_numbers = #tpu.dot_dimension_numbers<[1], [0], [0], [1], [0, 0, 1, 1], [], []>} : vector<32x32xf32>, vector<32x512xf32>, vector<32x512xf32> -> vector<32x512xf32>
    %264 = arith.addf %256, %263 : vector<32x512xf32>
    %c496_i32_184 = arith.constant 496 : i32
    %265 = tpu.dynamic_rotate %198 by %c496_i32_184 dim 1 : vector<32x512xf32>, i32 -> vector<32x512xf32>
    %c7_185 = arith.constant 7 : index
    %c0_186 = arith.constant 0 : index
    %266 = vector.load %arg2[%c7_185, %c0_186] : memref<9x512xf32, #tpu.memory_space<vmem>>, vector<1x512xf32>
    %c25 = arith.constant 25 : index
    %c0_187 = arith.constant 0 : index
    %c0_188 = arith.constant 0 : index
    %267 = vector.load %arg7[%c25, %c0_187, %c0_188] : memref<27x32x32xf32, #tpu.memory_space<vmem>>, vector<1x32x32xf32>
    %268 = vector.shape_cast %267 : vector<1x32x32xf32> to vector<32x32xf32>
    %269 = vector.broadcast %266 : vector<1x512xf32> to vector<32x512xf32>
    %270 = arith.mulf %265, %269 : vector<32x512xf32>
    %cst_189 = arith.constant dense<0.000000e+00> : vector<32x512xf32>
    %271 = tpu.matmul %268, %270, %cst_189 {dimension_numbers = #tpu.dot_dimension_numbers<[1], [0], [0], [1], [0, 0, 1, 1], [], []>} : vector<32x32xf32>, vector<32x512xf32>, vector<32x512xf32> -> vector<32x512xf32>
    %272 = arith.addf %264, %271 : vector<32x512xf32>
    %c495_i32_190 = arith.constant 495 : i32
    %273 = tpu.dynamic_rotate %198 by %c495_i32_190 dim 1 : vector<32x512xf32>, i32 -> vector<32x512xf32>
    %c8_191 = arith.constant 8 : index
    %c0_192 = arith.constant 0 : index
    %274 = vector.load %arg2[%c8_191, %c0_192] : memref<9x512xf32, #tpu.memory_space<vmem>>, vector<1x512xf32>
    %c26 = arith.constant 26 : index
    %c0_193 = arith.constant 0 : index
    %c0_194 = arith.constant 0 : index
    %275 = vector.load %arg7[%c26, %c0_193, %c0_194] : memref<27x32x32xf32, #tpu.memory_space<vmem>>, vector<1x32x32xf32>
    %276 = vector.shape_cast %275 : vector<1x32x32xf32> to vector<32x32xf32>
    %277 = vector.broadcast %274 : vector<1x512xf32> to vector<32x512xf32>
    %278 = arith.mulf %273, %277 : vector<32x512xf32>
    %cst_195 = arith.constant dense<0.000000e+00> : vector<32x512xf32>
    %279 = tpu.matmul %276, %278, %cst_195 {dimension_numbers = #tpu.dot_dimension_numbers<[1], [0], [0], [1], [0, 0, 1, 1], [], []>} : vector<32x32xf32>, vector<32x512xf32>, vector<32x512xf32> -> vector<32x512xf32>
    %280 = arith.addf %272, %279 : vector<32x512xf32>
    %281 = arith.negf %280 : vector<32x512xf32>
    %282 = math.exp %281 : vector<32x512xf32>
    %cst_196 = arith.constant 1.000000e+00 : f32
    %283 = vector.broadcast %cst_196 : f32 to vector<32x512xf32>
    %284 = arith.addf %283, %282 : vector<32x512xf32>
    %285 = arith.divf %283, %284 : vector<32x512xf32>
    %286 = arith.mulf %280, %285 : vector<32x512xf32>
    %287 = arith.addf %286, %22 : vector<32x512xf32>
    %c0_197 = arith.constant 0 : index
    %c0_198 = arith.constant 0 : index
    %288 = vector.load %arg11[%c0_197, %c0_198] : memref<16x32xf32, #tpu.memory_space<vmem>>, vector<16x32xf32>
    %cst_199 = arith.constant dense<0.000000e+00> : vector<16x512xf32>
    %289 = tpu.matmul %288, %287, %cst_199 {dimension_numbers = #tpu.dot_dimension_numbers<[1], [0], [0], [1], [0, 0, 1, 1], [], []>} : vector<16x32xf32>, vector<32x512xf32>, vector<16x512xf32> -> vector<16x512xf32>
    %c0_200 = arith.constant 0 : index
    %c0_201 = arith.constant 0 : index
    %290 = vector.load %arg12[%c0_200, %c0_201] : memref<16x1xf32, #tpu.memory_space<vmem>>, vector<16x1xf32>
    %291 = vector.broadcast %290 : vector<16x1xf32> to vector<16x512xf32>
    %292 = arith.addf %289, %291 : vector<16x512xf32>
    %293 = arith.negf %292 : vector<16x512xf32>
    %294 = math.exp %293 : vector<16x512xf32>
    %cst_202 = arith.constant 1.000000e+00 : f32
    %295 = vector.broadcast %cst_202 : f32 to vector<16x512xf32>
    %296 = arith.addf %295, %294 : vector<16x512xf32>
    %297 = arith.divf %295, %296 : vector<16x512xf32>
    %298 = arith.mulf %292, %297 : vector<16x512xf32>
    %c0_203 = arith.constant 0 : index
    %c0_204 = arith.constant 0 : index
    %299 = vector.load %arg13[%c0_203, %c0_204] : memref<16x512xf32, #tpu.memory_space<vmem>>, vector<16x512xf32>
    tpu.vector_store %arg13[%c0_203, %c0_204], %298 {strides = array<i32>} : memref<16x512xf32, #tpu.memory_space<vmem>>, vector<16x512xf32>,
    return
  }
  func.func @transform_0(%arg0: i32) -> (i32, i32) {
    %c0_i32 = arith.constant 0 : i32
    %c0_i32_0 = arith.constant 0 : i32
    return %c0_i32, %arg0 : i32, i32
  }
  func.func @transform_1(%arg0: i32) -> (i32, i32) {
    %c0_i32 = arith.constant 0 : i32
    %c0_i32_0 = arith.constant 0 : i32
    %c0_i32_1 = arith.constant 0 : i32
    return %c0_i32, %c0_i32_0 : i32, i32
  }
  func.func @transform_2(%arg0: i32) -> (i32, i32) {
    %c0_i32 = arith.constant 0 : i32
    %c0_i32_0 = arith.constant 0 : i32
    %c0_i32_1 = arith.constant 0 : i32
    return %c0_i32, %c0_i32_0 : i32, i32
  }
  func.func @transform_3(%arg0: i32) -> (i32, i32) {
    %c0_i32 = arith.constant 0 : i32
    %c0_i32_0 = arith.constant 0 : i32
    %c0_i32_1 = arith.constant 0 : i32
    return %c0_i32, %c0_i32_0 : i32, i32
  }
  func.func @transform_4(%arg0: i32) -> (i32, i32) {
    %c0_i32 = arith.constant 0 : i32
    %c0_i32_0 = arith.constant 0 : i32
    %c0_i32_1 = arith.constant 0 : i32
    return %c0_i32, %c0_i32_0 : i32, i32
  }
  func.func @transform_5(%arg0: i32) -> (i32, i32) {
    %c0_i32 = arith.constant 0 : i32
    %c0_i32_0 = arith.constant 0 : i32
    %c0_i32_1 = arith.constant 0 : i32
    return %c0_i32, %c0_i32_0 : i32, i32
  }
  func.func @transform_6(%arg0: i32) -> (i32, i32, i32) {
    %c0_i32 = arith.constant 0 : i32
    %c0_i32_0 = arith.constant 0 : i32
    %c0_i32_1 = arith.constant 0 : i32
    %c0_i32_2 = arith.constant 0 : i32
    return %c0_i32, %c0_i32_0, %c0_i32_1 : i32, i32, i32
  }
  func.func @transform_7(%arg0: i32) -> (i32, i32, i32) {
    %c0_i32 = arith.constant 0 : i32
    %c0_i32_0 = arith.constant 0 : i32
    %c0_i32_1 = arith.constant 0 : i32
    %c0_i32_2 = arith.constant 0 : i32
    return %c0_i32, %c0_i32_0, %c0_i32_1 : i32, i32, i32
  }
  func.func @transform_8(%arg0: i32) -> (i32, i32, i32) {
    %c0_i32 = arith.constant 0 : i32
    %c0_i32_0 = arith.constant 0 : i32
    %c0_i32_1 = arith.constant 0 : i32
    %c0_i32_2 = arith.constant 0 : i32
    return %c0_i32, %c0_i32_0, %c0_i32_1 : i32, i32, i32
  }
  func.func @transform_9(%arg0: i32) -> (i32, i32, i32) {
    %c0_i32 = arith.constant 0 : i32
    %c0_i32_0 = arith.constant 0 : i32
    %c0_i32_1 = arith.constant 0 : i32
    %c0_i32_2 = arith.constant 0 : i32
    return %c0_i32, %c0_i32_0, %c0_i32_1 : i32, i32, i32
  }
  func.func @transform_10(%arg0: i32) -> (i32, i32) {
    %c0_i32 = arith.constant 0 : i32
    %c0_i32_0 = arith.constant 0 : i32
    %c0_i32_1 = arith.constant 0 : i32
    return %c0_i32, %c0_i32_0 : i32, i32
  }
  func.func @transform_11(%arg0: i32) -> (i32, i32) {
    %c0_i32 = arith.constant 0 : i32
    %c0_i32_0 = arith.constant 0 : i32
    %c0_i32_1 = arith.constant 0 : i32
    return %c0_i32, %c0_i32_0 : i32, i32
  }
  func.func @transform_12(%arg0: i32) -> (i32, i32) {
    %c0_i32 = arith.constant 0 : i32
    %c0_i32_0 = arith.constant 0 : i32
    return %c0_i32, %arg0 : i32, i32
  }
}

</mosaic_0001>

<llo_original>
// kernel: tpu_custom_call.1
$region0: #{tpu_custom_call.1}
  #allocation0 [shape = 'u32[]', space=smem, size = 0x4, offset = 0x4, fixed_abs, tag = 'smem constant byte address 0x4 - core index']
  #allocation1 [shape = 'u32[144,128]{1,0:T(1,128)}', space=vmem, size = 0x12000, scoped, tag = 'internal scratch']
  %s0 = inlined_call_operand.vmem [shape: f32[16,512], index: 0, kind: input, shape index: {}]
  %s1 = inlined_call_operand.vmem [shape: f32[9,512], index: 1, kind: input, shape index: {}]
  %s2 = inlined_call_operand.vmem [shape: f32[32,16], index: 2, kind: input, shape index: {}]
  %s3 = inlined_call_operand.vmem [shape: f32[32,1], index: 3, kind: input, shape index: {}]
  %s4 = inlined_call_operand.vmem [shape: f32[32,16], index: 4, kind: input, shape index: {}]
  %s5 = inlined_call_operand.vmem [shape: f32[32,1], index: 5, kind: input, shape index: {}]
  %s6 = inlined_call_operand.hbm [shape: f32[27,32,32], index: 6, kind: input, shape index: {}]
  %s7 = inlined_call_operand.vmem [shape: f32[3,32,1], index: 7, kind: input, shape index: {}]
  %s8 = inlined_call_operand.vmem [shape: f32[3,32,32], index: 8, kind: input, shape index: {}]
  %s9 = inlined_call_operand.vmem [shape: f32[3,32,1], index: 9, kind: input, shape index: {}]
  %s10 = inlined_call_operand.vmem [shape: f32[16,32], index: 10, kind: input, shape index: {}]
  %s11 = inlined_call_operand.vmem [shape: f32[16,1], index: 11, kind: input, shape index: {}]
  %s12 = inlined_call_operand.hbm [shape: f32[16,512], index: 12, kind: output, shape index: {}]
  %s13 = sld [smem:[#allocation0]]
  $region62: #{tpu_custom_call.1} parent=0
    _
  %s15 = ssub.s32 1, %s13
  %s16 = scalar_select 0, %s15, %s13
  $region1: #{tpu_custom_call.1} parent=0
    #allocation2 [shape = 'u8[442368]{0}', space=vmem, size = 0x6c000, scoped, tag = 'input window, operand 6, single buffered']
    #allocation3 [shape = 's32[1]{0}', space=sflag, size = 0x4, scoped, tag = 'scoped memory for tpu_custom_call.1']
    #allocation4 [shape = 's32[1]{0}', space=sflag, size = 0x4, scoped, tag = 'scoped memory for tpu_custom_call.1']
    #allocation5 [shape = 'u8[32768]{0}', space=vmem, size = 0x8000, scoped, tag = 'output window, operand 0, single buffered']
    %17 = vsyncpa [#allocation3], 0
    %18 = vsyncpa [#allocation4], 0
    // Predicated region
    $region2: #{tpu_custom_call.1} parent=1 // pred_check
      _
    $region3: #{tpu_custom_call.1} parent=1 // pred_check_branch
      %20 = sbr.rel (0) target = $region5
    $region4: #{tpu_custom_call.1} parent=1 // pred_region
      _
    $region5: #{tpu_custom_call.1} parent=1 // pred_fallthru
      _
    // Predicated region
    $region6: #{tpu_custom_call.1} parent=1 // pred_check
      _
    $region7: #{tpu_custom_call.1} parent=1 // pred_check_branch
      %22 = sbr.rel (0) target = $region9
    $region8: #{tpu_custom_call.1} parent=1 // pred_region
      _
    $region9: #{tpu_custom_call.1} parent=1 // pred_fallthru
      _
    // Predicated region
    $region10: #{tpu_custom_call.1} parent=1 // pred_check
      _
    $region11: #{tpu_custom_call.1} parent=1 // pred_check_branch
      %24 = sbr.rel (0) target = $region13
    $region12: #{tpu_custom_call.1} parent=1 // pred_region
      _
    $region13: #{tpu_custom_call.1} parent=1 // pred_fallthru
      _
    // Predicated region
    $region14: #{tpu_custom_call.1} parent=1 // pred_check
      _
    $region15: #{tpu_custom_call.1} parent=1 // pred_check_branch
      %26 = sbr.rel (0) target = $region17
    $region16: #{tpu_custom_call.1} parent=1 // pred_region
      _
    $region17: #{tpu_custom_call.1} parent=1 // pred_fallthru
      _
    // Predicated region
    $region18: #{tpu_custom_call.1} parent=1 // pred_check
      _
    $region19: #{tpu_custom_call.1} parent=1 // pred_check_branch
      %28 = sbr.rel (0) target = $region21
    $region20: #{tpu_custom_call.1} parent=1 // pred_region
      _
    $region21: #{tpu_custom_call.1} parent=1 // pred_fallthru
      _
    // Predicated region
    $region22: #{tpu_custom_call.1} parent=1 // pred_check
      _
    $region23: #{tpu_custom_call.1} parent=1 // pred_check_branch
      %30 = sbr.rel (0) target = $region25
    $region24: #{tpu_custom_call.1} parent=1 // pred_region
      _
    $region25: #{tpu_custom_call.1} parent=1 // pred_fallthru
      _
    // Predicated region
    $region26: #{tpu_custom_call.1} parent=1 // pred_check
      _
    $region27: #{tpu_custom_call.1} parent=1 // pred_check_branch
      %32 = sbr.rel (0) target = $region29
    $region28: #{tpu_custom_call.1} parent=1 // pred_region
      %s34 = ssub.s32 13824, 13824
      %35 = vsyncadd [#allocation3], %s34
      %s36 = sshll.u32 [#allocation2], 4
      %s37 = int_to_ptr.vmem [resolvable:$true] %s36
      %42 = dma.hbm_to_vmem [thread:$0]  %s6, 13824, %s37, [#allocation3], 128, 128, 8
    $region29: #{tpu_custom_call.1} parent=1 // pred_fallthru
      _
    // Predicated region
    $region30: #{tpu_custom_call.1} parent=1 // pred_check
      _
    $region31: #{tpu_custom_call.1} parent=1 // pred_check_branch
      %44 = sbr.rel (0) target = $region33
    $region32: #{tpu_custom_call.1} parent=1 // pred_region
      _
    $region33: #{tpu_custom_call.1} parent=1 // pred_fallthru
      _
    // Predicated region
    $region34: #{tpu_custom_call.1} parent=1 // pred_check
      _
    $region35: #{tpu_custom_call.1} parent=1 // pred_check_branch
      %46 = sbr.rel (0) target = $region37
    $region36: #{tpu_custom_call.1} parent=1 // pred_region
      _
    $region37: #{tpu_custom_call.1} parent=1 // pred_fallthru
      _
    // Predicated region
    $region38: #{tpu_custom_call.1} parent=1 // pred_check
      _
    $region39: #{tpu_custom_call.1} parent=1 // pred_check_branch
      %48 = sbr.rel (0) target = $region41
    $region40: #{tpu_custom_call.1} parent=1 // pred_region
      _
    $region41: #{tpu_custom_call.1} parent=1 // pred_fallthru
      _
    // Predicated region
    $region42: #{tpu_custom_call.1} parent=1 // pred_check
      _
    $region43: #{tpu_custom_call.1} parent=1 // pred_check_branch
      %50 = sbr.rel (0) target = $region45
    $region44: #{tpu_custom_call.1} parent=1 // pred_region
      _
    $region45: #{tpu_custom_call.1} parent=1 // pred_fallthru
      _
    // Predicated region
    $region46: #{tpu_custom_call.1} parent=1 // pred_check
      _
    $region47: #{tpu_custom_call.1} parent=1 // pred_check_branch
      %52 = sbr.rel (0) target = $region49
    $region48: #{tpu_custom_call.1} parent=1 // pred_region
      _
    $region49: #{tpu_custom_call.1} parent=1 // pred_fallthru
      _
    // Predicated region
    $region50: #{tpu_custom_call.1} parent=1 // pred_check
      _
    $region51: #{tpu_custom_call.1} parent=1 // pred_check_branch
      %54 = sbr.rel (0) target = $region53
    $region52: #{tpu_custom_call.1} parent=1 // pred_region
      %55 = dma.done [#allocation3], 13824
    $region53: #{tpu_custom_call.1} parent=1 // pred_fallthru
      _
    %v56 = vld [vmem:[%s0] sm:$0xff]
    %v57 = vld [vmem:[%s0 + $0x8] sm:$0xff]
    %v58 = vld [vmem:[%s0 + $0x10] sm:$0xff]
    %v59 = vld [vmem:[%s0 + $0x18] sm:$0xff]
    %v60 = vld [vmem:[%s0 + $0x20] sm:$0xff]
    %v61 = vld [vmem:[%s0 + $0x28] sm:$0xff]
    %v62 = vld [vmem:[%s0 + $0x30] sm:$0xff]
    %v63 = vld [vmem:[%s0 + $0x38] sm:$0xff]
    %v64 = vld [vmem:[%s2] sm:$0xff]
    %v65 = vld [vmem:[%s2 + $0x8] sm:$0xff]
    %v66 = vld [vmem:[%s2 + $0x10] sm:$0xff]
    %v67 = vld [vmem:[%s2 + $0x18] sm:$0xff]
    %v68 = vld [vmem:[%s3] sm:$0xff]
    %v69 = vld [vmem:[%s3 + $0x8] sm:$0xff]
    %v70 = vld [vmem:[%s3 + $0x10] sm:$0xff]
    %v71 = vld [vmem:[%s3 + $0x18] sm:$0xff]
    %73 = vset.pattern.permute.xlu0 0
    %74 = vperm.xlu0 %73, %v68
    %v75 = vpop.permute.xlu0 %74
    %78 = vset.pattern.permute.xlu0 0
    %79 = vperm.xlu0 %78, %v69
    %v80 = vpop.permute.xlu0 %79
    %83 = vset.pattern.permute.xlu0 0
    %84 = vperm.xlu0 %83, %v70
    %v85 = vpop.permute.xlu0 %84
    %88 = vset.pattern.permute.xlu0 0
    %89 = vperm.xlu0 %88, %v71
    %v90 = vpop.permute.xlu0 %89
    %vm92 = vcmask 130048
    %v94 = vsel %vm92, %v64, 0
    %v97 = vsel %vm92, %v65, 0
    %v100 = vsel %vm92, %v66, 0
    %v103 = vsel %vm92, %v67, 0
    %105 = vmatprep.subr.mxu0 %v57
    %106 = vmatpush1.msra.mxu0 %v56
    %107 = vmatprep.subr.mxu0 %v61
    %108 = vmatpush1.msra.mxu0 %v60
    %109 = vmatprep.subr.mxu0 0.0
    %110 = vmatpush1.msra.mxu0 0.0
    %111 = vmatprep.subr.mxu0 0.0
    %112 = vmatpush1.msra.mxu0 0.0
    %113 = vmatprep.subr.mxu0 0.0
    %114 = vmatpush1.msra.mxu0 0.0
    %115 = vmatprep.subr.mxu0 0.0
    %116 = vmatpush1.msra.mxu0 0.0
    %117 = vmatprep.subr.mxu0 0.0
    %118 = vmatpush1.msra.mxu0 0.0
    %119 = vmatprep.subr.mxu0 0.0
    %120 = vmatpush1.msra.mxu0 0.0
    %121 = vmatprep.subr.mxu0 0.0
    %122 = vmatpush1.msra.mxu0 0.0
    %123 = vmatprep.subr.mxu0 0.0
    %124 = vmatpush1.msra.mxu0 0.0
    %125 = vmatprep.subr.mxu0 0.0
    %126 = vmatpush1.msra.mxu0 0.0
    %127 = vmatprep.subr.mxu0 0.0
    %128 = vmatpush1.msra.mxu0 0.0
    %129 = vmatprep.subr.mxu0 0.0
    %130 = vmatpush1.msra.mxu0 0.0
    %131 = vmatprep.subr.mxu0 0.0
    %132 = vmatpush1.msra.mxu0 0.0
    %133 = vmatprep.subr.mxu0 0.0
    %134 = vmatpush1.msra.mxu0 0.0
    %135 = vmatprep.subr.mxu0 0.0
    %136 = vmatpush1.msra.mxu0 0.0
    %137 = vmatprep.subr.mxu0 0.0
    %138 = vmatpush1.msra.mxu0 0.0
    %139 = vmatprep.subr.mxu0 0.0
    %140 = vmatpush1.msra.mxu0 0.0
    %141 = vmatprep.subr.mxu0 0.0
    %142 = vmatpush1.msra.mxu0 0.0
    %143 = vmatprep.subr.mxu0 0.0
    %144 = vmatpush1.msra.mxu0 0.0
    %145 = vmatprep.subr.mxu0 0.0
    %146 = vmatpush1.msra.mxu0 0.0
    %147 = vmatprep.subr.mxu0 0.0
    %148 = vmatpush1.msra.mxu0 0.0
    %149 = vmatprep.subr.mxu0 0.0
    %150 = vmatpush1.msra.mxu0 0.0
    %151 = vmatprep.subr.mxu0 0.0
    %152 = vmatpush1.msra.mxu0 0.0
    %153 = vmatprep.subr.mxu0 0.0
    %154 = vmatpush1.msra.mxu0 0.0
    %155 = vmatprep.subr.mxu0 0.0
    %156 = vmatpush1.msra.mxu0 0.0
    %157 = vmatprep.subr.mxu0 0.0
    %158 = vmatpush1.msra.mxu0 0.0
    %159 = vmatprep.subr.mxu0 0.0
    %160 = vmatpush1.msra.mxu0 0.0
    %161 = vmatprep.subr.mxu0 0.0
    %162 = vmatpush1.msra.mxu0 0.0
    %163 = vmatprep.subr.mxu0 0.0
    %164 = vmatpush1.msra.mxu0 0.0
    %165 = vmatprep.subr.mxu0 0.0
    %166 = vmatpush1.msra.mxu0 0.0
    %167 = vmatprep.subr.mxu0 0.0
    %168 = vmatpush1.msra.mxu0 0.0
    %169 = vmatprep.mubr.f32.mxu0 0.0
    %170 = vmatmul.mubr.f32.gmra.mrb[0].mxu0 %v94
    %v171 = vpop.f32.mrb[0].mxu0
    %v172 = vadd.f32 %v75, %v171
    %v173 = vpop.f32.mrb[0].mxu0
    %v174 = vadd.f32 %v75, %v173
    %175 = vmatprep.mubr.f32.mxu0 0.0
    %176 = vmatmul.mubr.f32.gmra.mrb[0].mxu0 %v97
    %v177 = vpop.f32.mrb[0].mxu0
    %v178 = vadd.f32 %v80, %v177
    %v179 = vpop.f32.mrb[0].mxu0
    %v180 = vadd.f32 %v80, %v179
    %181 = vmatprep.mubr.f32.mxu0 0.0
    %182 = vmatmul.mubr.f32.gmra.mrb[0].mxu0 %v100
    %v183 = vpop.f32.mrb[0].mxu0
    %v184 = vadd.f32 %v85, %v183
    %v185 = vpop.f32.mrb[0].mxu0
    %v186 = vadd.f32 %v85, %v185
    %187 = vmatprep.mubr.f32.mxu0 0.0
    %188 = vmatmul.mubr.f32.gmra.mrb[0].mxu0 %v103
    %v189 = vpop.f32.mrb[0].mxu0
    %v190 = vadd.f32 %v90, %v189
    %v191 = vpop.f32.mrb[0].mxu0
    %v192 = vadd.f32 %v90, %v191
    %193 = vdwg.mxu0
    %194 = vmatprep.subr.mxu0 %v59
    %195 = vmatpush1.msra.mxu0 %v58
    %196 = vmatprep.subr.mxu0 %v63
    %197 = vmatpush1.msra.mxu0 %v62
    %198 = vmatprep.subr.mxu0 0.0
    %199 = vmatpush1.msra.mxu0 0.0
    %200 = vmatprep.subr.mxu0 0.0
    %201 = vmatpush1.msra.mxu0 0.0
    %202 = vmatprep.subr.mxu0 0.0
    %203 = vmatpush1.msra.mxu0 0.0
    %204 = vmatprep.subr.mxu0 0.0
    %205 = vmatpush1.msra.mxu0 0.0
    %206 = vmatprep.subr.mxu0 0.0
    %207 = vmatpush1.msra.mxu0 0.0
    %208 = vmatprep.subr.mxu0 0.0
    %209 = vmatpush1.msra.mxu0 0.0
    %210 = vmatprep.subr.mxu0 0.0
    %211 = vmatpush1.msra.mxu0 0.0
    %212 = vmatprep.subr.mxu0 0.0
    %213 = vmatpush1.msra.mxu0 0.0
    %214 = vmatprep.subr.mxu0 0.0
    %215 = vmatpush1.msra.mxu0 0.0
    %216 = vmatprep.subr.mxu0 0.0
    %217 = vmatpush1.msra.mxu0 0.0
    %218 = vmatprep.subr.mxu0 0.0
    %219 = vmatpush1.msra.mxu0 0.0
    %220 = vmatprep.subr.mxu0 0.0
    %221 = vmatpush1.msra.mxu0 0.0
    %222 = vmatprep.subr.mxu0 0.0
    %223 = vmatpush1.msra.mxu0 0.0
    %224 = vmatprep.subr.mxu0 0.0
    %225 = vmatpush1.msra.mxu0 0.0
    %226 = vmatprep.subr.mxu0 0.0
    %227 = vmatpush1.msra.mxu0 0.0
    %228 = vmatprep.subr.mxu0 0.0
    %229 = vmatpush1.msra.mxu0 0.0
    %230 = vmatprep.subr.mxu0 0.0
    %231 = vmatpush1.msra.mxu0 0.0
    %232 = vmatprep.subr.mxu0 0.0
    %233 = vmatpush1.msra.mxu0 0.0
    %234 = vmatprep.subr.mxu0 0.0
    %235 = vmatpush1.msra.mxu0 0.0
    %236 = vmatprep.subr.mxu0 0.0
    %237 = vmatpush1.msra.mxu0 0.0
    %238 = vmatprep.subr.mxu0 0.0
    %239 = vmatpush1.msra.mxu0 0.0
    %240 = vmatprep.subr.mxu0 0.0
    %241 = vmatpush1.msra.mxu0 0.0
    %242 = vmatprep.subr.mxu0 0.0
    %243 = vmatpush1.msra.mxu0 0.0
    %244 = vmatprep.subr.mxu0 0.0
    %245 = vmatpush1.msra.mxu0 0.0
    %246 = vmatprep.subr.mxu0 0.0
    %247 = vmatpush1.msra.mxu0 0.0
    %248 = vmatprep.subr.mxu0 0.0
    %249 = vmatpush1.msra.mxu0 0.0
    %250 = vmatprep.subr.mxu0 0.0
    %251 = vmatpush1.msra.mxu0 0.0
    %252 = vmatprep.subr.mxu0 0.0
    %253 = vmatpush1.msra.mxu0 0.0
    %254 = vmatprep.subr.mxu0 0.0
    %255 = vmatpush1.msra.mxu0 0.0
    %256 = vmatprep.subr.mxu0 0.0
    %257 = vmatpush1.msra.mxu0 0.0
    %258 = vmatprep.mubr.f32.mxu0 0.0
    %259 = vmatmul.mubr.f32.gmra.mrb[0].mxu0 %v94
    %v260 = vpop.f32.mrb[0].mxu0
    %v261 = vadd.f32 %v75, %v260
    %v262 = vpop.f32.mrb[0].mxu0
    %v263 = vadd.f32 %v75, %v262
    %264 = vmatprep.mubr.f32.mxu0 0.0
    %265 = vmatmul.mubr.f32.gmra.mrb[0].mxu0 %v97
    %v266 = vpop.f32.mrb[0].mxu0
    %v267 = vadd.f32 %v80, %v266
    %v268 = vpop.f32.mrb[0].mxu0
    %v269 = vadd.f32 %v80, %v268
    %270 = vmatprep.mubr.f32.mxu0 0.0
    %271 = vmatmul.mubr.f32.gmra.mrb[0].mxu0 %v100
    %v272 = vpop.f32.mrb[0].mxu0
    %v273 = vadd.f32 %v85, %v272
    %v274 = vpop.f32.mrb[0].mxu0
    %v275 = vadd.f32 %v85, %v274
    %276 = vmatprep.mubr.f32.mxu0 0.0
    %277 = vmatmul.mubr.f32.gmra.mrb[0].mxu0 %v103
    %v278 = vpop.f32.mrb[0].mxu0
    %v279 = vadd.f32 %v90, %v278
    %v280 = vpop.f32.mrb[0].mxu0
    %v281 = vadd.f32 %v90, %v280
    %282 = vdwg.mxu0
    %v283 = vxor.u32 %v172, 2147483648
    %v284 = vxor.u32 %v174, 2147483648
    %v285 = vxor.u32 %v261, 2147483648
    %v286 = vxor.u32 %v263, 2147483648
    %v287 = vxor.u32 %v178, 2147483648
    %v288 = vxor.u32 %v180, 2147483648
    %v289 = vxor.u32 %v267, 2147483648
    %v290 = vxor.u32 %v269, 2147483648
    %v291 = vxor.u32 %v184, 2147483648
    %v292 = vxor.u32 %v186, 2147483648
    %v293 = vxor.u32 %v273, 2147483648
    %v294 = vxor.u32 %v275, 2147483648
    %v295 = vxor.u32 %v190, 2147483648
    %v296 = vxor.u32 %v192, 2147483648
    %v297 = vxor.u32 %v279, 2147483648
    %v298 = vxor.u32 %v281, 2147483648
    %v299 = vmul.f32 %v283, 1.442695
    %v300 = vpow.pop %v299
    %v301 = vmul.f32 %v284, 1.442695
    %v302 = vpow.pop %v301
    %v303 = vmul.f32 %v285, 1.442695
    %v304 = vpow.pop %v303
    %v305 = vmul.f32 %v286, 1.442695
    %v306 = vpow.pop %v305
    %v307 = vmul.f32 %v287, 1.442695
    %v308 = vpow.pop %v307
    %v309 = vmul.f32 %v288, 1.442695
    %v310 = vpow.pop %v309
    %v311 = vmul.f32 %v289, 1.442695
    %v312 = vpow.pop %v311
    %v313 = vmul.f32 %v290, 1.442695
    %v314 = vpow.pop %v313
    %v315 = vmul.f32 %v291, 1.442695
    %v316 = vpow.pop %v315
    %v317 = vmul.f32 %v292, 1.442695
    %v318 = vpow.pop %v317
    %v319 = vmul.f32 %v293, 1.442695
    %v320 = vpow.pop %v319
    %v321 = vmul.f32 %v294, 1.442695
    %v322 = vpow.pop %v321
    %v323 = vmul.f32 %v295, 1.442695
    %v324 = vpow.pop %v323
    %v325 = vmul.f32 %v296, 1.442695
    %v326 = vpow.pop %v325
    %v327 = vmul.f32 %v297, 1.442695
    %v328 = vpow.pop %v327
    %v329 = vmul.f32 %v298, 1.442695
    %v330 = vpow.pop %v329
    %v331 = vadd.f32 %v300, 1.0
    %v332 = vadd.f32 %v302, 1.0
    %v333 = vadd.f32 %v304, 1.0
    %v334 = vadd.f32 %v306, 1.0
    %v335 = vadd.f32 %v308, 1.0
    %v336 = vadd.f32 %v310, 1.0
    %v337 = vadd.f32 %v312, 1.0
    %v338 = vadd.f32 %v314, 1.0
    %v339 = vadd.f32 %v316, 1.0
    %v340 = vadd.f32 %v318, 1.0
    %v341 = vadd.f32 %v320, 1.0
    %v342 = vadd.f32 %v322, 1.0
    %v343 = vadd.f32 %v324, 1.0
    %v344 = vadd.f32 %v326, 1.0
    %v345 = vadd.f32 %v328, 1.0
    %v346 = vadd.f32 %v330, 1.0
    %v347 = vrcp.pop %v331
    %v348 = vmul.f32 1.0, %v347
    %v349 = vrcp.pop %v332
    %v350 = vmul.f32 1.0, %v349
    %v351 = vrcp.pop %v333
    %v352 = vmul.f32 1.0, %v351
    %v353 = vrcp.pop %v334
    %v354 = vmul.f32 1.0, %v353
    %v355 = vrcp.pop %v335
    %v356 = vmul.f32 1.0, %v355
    %v357 = vrcp.pop %v336
    %v358 = vmul.f32 1.0, %v357
    %v359 = vrcp.pop %v337
    %v360 = vmul.f32 1.0, %v359
    %v361 = vrcp.pop %v338
    %v362 = vmul.f32 1.0, %v361
    %v363 = vrcp.pop %v339
    %v364 = vmul.f32 1.0, %v363
    %v365 = vrcp.pop %v340
    %v366 = vmul.f32 1.0, %v365
    %v367 = vrcp.pop %v341
    %v368 = vmul.f32 1.0, %v367
    %v369 = vrcp.pop %v342
    %v370 = vmul.f32 1.0, %v369
    %v371 = vrcp.pop %v343
    %v372 = vmul.f32 1.0, %v371
    %v373 = vrcp.pop %v344
    %v374 = vmul.f32 1.0, %v373
    %v375 = vrcp.pop %v345
    %v376 = vmul.f32 1.0, %v375
    %v377 = vrcp.pop %v346
    %v378 = vmul.f32 1.0, %v377
    %v379 = vmul.f32 %v172, %v348
    %v380 = vmul.f32 %v174, %v350
    %v381 = vmul.f32 %v261, %v352
    %v382 = vmul.f32 %v263, %v354
    %v383 = vmul.f32 %v178, %v356
    %v384 = vmul.f32 %v180, %v358
    %v385 = vmul.f32 %v267, %v360
    %v386 = vmul.f32 %v269, %v362
    %v387 = vmul.f32 %v184, %v364
    %v388 = vmul.f32 %v186, %v366
    %v389 = vmul.f32 %v273, %v368
    %v390 = vmul.f32 %v275, %v370
    %v391 = vmul.f32 %v190, %v372
    %v392 = vmul.f32 %v192, %v374
    %v393 = vmul.f32 %v279, %v376
    %v394 = vmul.f32 %v281, %v378
    %v395 = vld [vmem:[%s4] sm:$0xff]
    %v396 = vld [vmem:[%s4 + $0x8] sm:$0xff]
    %v397 = vld [vmem:[%s4 + $0x10] sm:$0xff]
    %v398 = vld [vmem:[%s4 + $0x18] sm:$0xff]
    %v399 = vld [vmem:[%s5] sm:$0xff]
    %v400 = vld [vmem:[%s5 + $0x8] sm:$0xff]
    %v401 = vld [vmem:[%s5 + $0x10] sm:$0xff]
    %v402 = vld [vmem:[%s5 + $0x18] sm:$0xff]
    %404 = vset.pattern.permute.xlu0 0
    %405 = vperm.xlu0 %404, %v399
    %v406 = vpop.permute.xlu0 %405
    %409 = vset.pattern.permute.xlu0 0
    %410 = vperm.xlu0 %409, %v400
    %v411 = vpop.permute.xlu0 %410
    %414 = vset.pattern.permute.xlu0 0
    %415 = vperm.xlu0 %414, %v401
    %v416 = vpop.permute.xlu0 %415
    %419 = vset.pattern.permute.xlu0 0
    %420 = vperm.xlu0 %419, %v402
    %v421 = vpop.permute.xlu0 %420
    %v424 = vsel %vm92, %v395, 0
    %v427 = vsel %vm92, %v396, 0
    %v430 = vsel %vm92, %v397, 0
    %v433 = vsel %vm92, %v398, 0
    %435 = vmatprep.subr.mxu0 %v57
    %436 = vmatpush1.msra.mxu0 %v56
    %437 = vmatprep.subr.mxu0 %v61
    %438 = vmatpush1.msra.mxu0 %v60
    %439 = vmatprep.subr.mxu0 0.0
    %440 = vmatpush1.msra.mxu0 0.0
    %441 = vmatprep.subr.mxu0 0.0
    %442 = vmatpush1.msra.mxu0 0.0
    %443 = vmatprep.subr.mxu0 0.0
    %444 = vmatpush1.msra.mxu0 0.0
    %445 = vmatprep.subr.mxu0 0.0
    %446 = vmatpush1.msra.mxu0 0.0
    %447 = vmatprep.subr.mxu0 0.0
    %448 = vmatpush1.msra.mxu0 0.0
    %449 = vmatprep.subr.mxu0 0.0
    %450 = vmatpush1.msra.mxu0 0.0
    %451 = vmatprep.subr.mxu0 0.0
    %452 = vmatpush1.msra.mxu0 0.0
    %453 = vmatprep.subr.mxu0 0.0
    %454 = vmatpush1.msra.mxu0 0.0
    %455 = vmatprep.subr.mxu0 0.0
    %456 = vmatpush1.msra.mxu0 0.0
    %457 = vmatprep.subr.mxu0 0.0
    %458 = vmatpush1.msra.mxu0 0.0
    %459 = vmatprep.subr.mxu0 0.0
    %460 = vmatpush1.msra.mxu0 0.0
    %461 = vmatprep.subr.mxu0 0.0
    %462 = vmatpush1.msra.mxu0 0.0
    %463 = vmatprep.subr.mxu0 0.0
    %464 = vmatpush1.msra.mxu0 0.0
    %465 = vmatprep.subr.mxu0 0.0
    %466 = vmatpush1.msra.mxu0 0.0
    %467 = vmatprep.subr.mxu0 0.0
    %468 = vmatpush1.msra.mxu0 0.0
    %469 = vmatprep.subr.mxu0 0.0
    %470 = vmatpush1.msra.mxu0 0.0
    %471 = vmatprep.subr.mxu0 0.0
    %472 = vmatpush1.msra.mxu0 0.0
    %473 = vmatprep.subr.mxu0 0.0
    %474 = vmatpush1.msra.mxu0 0.0
    %475 = vmatprep.subr.mxu0 0.0
    %476 = vmatpush1.msra.mxu0 0.0
    %477 = vmatprep.subr.mxu0 0.0
    %478 = vmatpush1.msra.mxu0 0.0
    %479 = vmatprep.subr.mxu0 0.0
    %480 = vmatpush1.msra.mxu0 0.0
    %481 = vmatprep.subr.mxu0 0.0
    %482 = vmatpush1.msra.mxu0 0.0
    %483 = vmatprep.subr.mxu0 0.0
    %484 = vmatpush1.msra.mxu0 0.0
    %485 = vmatprep.subr.mxu0 0.0
    %486 = vmatpush1.msra.mxu0 0.0
    %487 = vmatprep.subr.mxu0 0.0
    %488 = vmatpush1.msra.mxu0 0.0
    %489 = vmatprep.subr.mxu0 0.0
    %490 = vmatpush1.msra.mxu0 0.0
    %491 = vmatprep.subr.mxu0 0.0
    %492 = vmatpush1.msra.mxu0 0.0
    %493 = vmatprep.subr.mxu0 0.0
    %494 = vmatpush1.msra.mxu0 0.0
    %495 = vmatprep.subr.mxu0 0.0
    %496 = vmatpush1.msra.mxu0 0.0
    %497 = vmatprep.subr.mxu0 0.0
    %498 = vmatpush1.msra.mxu0 0.0
    %499 = vmatprep.mubr.f32.mxu0 0.0
    %500 = vmatmul.mubr.f32.gmra.mrb[0].mxu0 %v424
    %v501 = vpop.f32.mrb[0].mxu0
    %v502 = vadd.f32 %v406, %v501
    %v503 = vpop.f32.mrb[0].mxu0
    %v504 = vadd.f32 %v406, %v503
    %505 = vmatprep.mubr.f32.mxu0 0.0
    %506 = vmatmul.mubr.f32.gmra.mrb[0].mxu0 %v427
    %v507 = vpop.f32.mrb[0].mxu0
    %v508 = vadd.f32 %v411, %v507
    %v509 = vpop.f32.mrb[0].mxu0
    %v510 = vadd.f32 %v411, %v509
    %511 = vmatprep.mubr.f32.mxu0 0.0
    %512 = vmatmul.mubr.f32.gmra.mrb[0].mxu0 %v430
    %v513 = vpop.f32.mrb[0].mxu0
    %v514 = vadd.f32 %v416, %v513
    %v515 = vpop.f32.mrb[0].mxu0
    %v516 = vadd.f32 %v416, %v515
    %517 = vmatprep.mubr.f32.mxu0 0.0
    %518 = vmatmul.mubr.f32.gmra.mrb[0].mxu0 %v433
    %v519 = vpop.f32.mrb[0].mxu0
    %v520 = vadd.f32 %v421, %v519
    %v521 = vpop.f32.mrb[0].mxu0
    %v522 = vadd.f32 %v421, %v521
    %523 = vdwg.mxu0
    %524 = vmatprep.subr.mxu0 %v59
    %525 = vmatpush1.msra.mxu0 %v58
    %526 = vmatprep.subr.mxu0 %v63
    %527 = vmatpush1.msra.mxu0 %v62
    %528 = vmatprep.subr.mxu0 0.0
    %529 = vmatpush1.msra.mxu0 0.0
    %530 = vmatprep.subr.mxu0 0.0
    %531 = vmatpush1.msra.mxu0 0.0
    %532 = vmatprep.subr.mxu0 0.0
    %533 = vmatpush1.msra.mxu0 0.0
    %534 = vmatprep.subr.mxu0 0.0
    %535 = vmatpush1.msra.mxu0 0.0
    %536 = vmatprep.subr.mxu0 0.0
    %537 = vmatpush1.msra.mxu0 0.0
    %538 = vmatprep.subr.mxu0 0.0
    %539 = vmatpush1.msra.mxu0 0.0
    %540 = vmatprep.subr.mxu0 0.0
    %541 = vmatpush1.msra.mxu0 0.0
    %542 = vmatprep.subr.mxu0 0.0
    %543 = vmatpush1.msra.mxu0 0.0
    %544 = vmatprep.subr.mxu0 0.0
    %545 = vmatpush1.msra.mxu0 0.0
    %546 = vmatprep.subr.mxu0 0.0
    %547 = vmatpush1.msra.mxu0 0.0
    %548 = vmatprep.subr.mxu0 0.0
    %549 = vmatpush1.msra.mxu0 0.0
    %550 = vmatprep.subr.mxu0 0.0
    %551 = vmatpush1.msra.mxu0 0.0
    %552 = vmatprep.subr.mxu0 0.0
    %553 = vmatpush1.msra.mxu0 0.0
    %554 = vmatprep.subr.mxu0 0.0
    %555 = vmatpush1.msra.mxu0 0.0
    %556 = vmatprep.subr.mxu0 0.0
    %557 = vmatpush1.msra.mxu0 0.0
    %558 = vmatprep.subr.mxu0 0.0
    %559 = vmatpush1.msra.mxu0 0.0
    %560 = vmatprep.subr.mxu0 0.0
    %561 = vmatpush1.msra.mxu0 0.0
    %562 = vmatprep.subr.mxu0 0.0
    %563 = vmatpush1.msra.mxu0 0.0
    %564 = vmatprep.subr.mxu0 0.0
    %565 = vmatpush1.msra.mxu0 0.0
    %566 = vmatprep.subr.mxu0 0.0
    %567 = vmatpush1.msra.mxu0 0.0
    %568 = vmatprep.subr.mxu0 0.0
    %569 = vmatpush1.msra.mxu0 0.0
    %570 = vmatprep.subr.mxu0 0.0
    %571 = vmatpush1.msra.mxu0 0.0
    %572 = vmatprep.subr.mxu0 0.0
    %573 = vmatpush1.msra.mxu0 0.0
    %574 = vmatprep.subr.mxu0 0.0
    %575 = vmatpush1.msra.mxu0 0.0
    %576 = vmatprep.subr.mxu0 0.0
    %577 = vmatpush1.msra.mxu0 0.0
    %578 = vmatprep.subr.mxu0 0.0
    %579 = vmatpush1.msra.mxu0 0.0
    %580 = vmatprep.subr.mxu0 0.0
    %581 = vmatpush1.msra.mxu0 0.0
    %582 = vmatprep.subr.mxu0 0.0
    %583 = vmatpush1.msra.mxu0 0.0
    %584 = vmatprep.subr.mxu0 0.0
    %585 = vmatpush1.msra.mxu0 0.0
    %586 = vmatprep.subr.mxu0 0.0
    %587 = vmatpush1.msra.mxu0 0.0
    %588 = vmatprep.mubr.f32.mxu0 0.0
    %589 = vmatmul.mubr.f32.gmra.mrb[0].mxu0 %v424
    %v590 = vpop.f32.mrb[0].mxu0
    %v591 = vadd.f32 %v406, %v590
    %v592 = vpop.f32.mrb[0].mxu0
    %v593 = vadd.f32 %v406, %v592
    %594 = vmatprep.mubr.f32.mxu0 0.0
    %595 = vmatmul.mubr.f32.gmra.mrb[0].mxu0 %v427
    %v596 = vpop.f32.mrb[0].mxu0
    %v597 = vadd.f32 %v411, %v596
    %v598 = vpop.f32.mrb[0].mxu0
    %v599 = vadd.f32 %v411, %v598
    %600 = vmatprep.mubr.f32.mxu0 0.0
    %601 = vmatmul.mubr.f32.gmra.mrb[0].mxu0 %v430
    %v602 = vpop.f32.mrb[0].mxu0
    %v603 = vadd.f32 %v416, %v602
    %v604 = vpop.f32.mrb[0].mxu0
    %v605 = vadd.f32 %v416, %v604
    %606 = vmatprep.mubr.f32.mxu0 0.0
    %607 = vmatmul.mubr.f32.gmra.mrb[0].mxu0 %v433
    %v608 = vpop.f32.mrb[0].mxu0
    %v609 = vadd.f32 %v421, %v608
    %v610 = vpop.f32.mrb[0].mxu0
    %v611 = vadd.f32 %v421, %v610
    %612 = vdwg.mxu0
    %v613 = vxor.u32 %v502, 2147483648
    %v614 = vxor.u32 %v504, 2147483648
    %v615 = vxor.u32 %v591, 2147483648
    %v616 = vxor.u32 %v593, 2147483648
    %v617 = vxor.u32 %v508, 2147483648
    %v618 = vxor.u32 %v510, 2147483648
    %v619 = vxor.u32 %v597, 2147483648
    %v620 = vxor.u32 %v599, 2147483648
    %v621 = vxor.u32 %v514, 2147483648
    %v622 = vxor.u32 %v516, 2147483648
    %v623 = vxor.u32 %v603, 2147483648
    %v624 = vxor.u32 %v605, 2147483648
    %v625 = vxor.u32 %v520, 2147483648
    %v626 = vxor.u32 %v522, 2147483648
    %v627 = vxor.u32 %v609, 2147483648
    %v628 = vxor.u32 %v611, 2147483648
    %v629 = vmul.f32 %v613, 1.442695
    %v630 = vpow.pop %v629
    %v631 = vmul.f32 %v614, 1.442695
    %v632 = vpow.pop %v631
    %v633 = vmul.f32 %v615, 1.442695
    %v634 = vpow.pop %v633
    %v635 = vmul.f32 %v616, 1.442695
    %v636 = vpow.pop %v635
    %v637 = vmul.f32 %v617, 1.442695
    %v638 = vpow.pop %v637
    %v639 = vmul.f32 %v618, 1.442695
    %v640 = vpow.pop %v639
    %v641 = vmul.f32 %v619, 1.442695
    %v642 = vpow.pop %v641
    %v643 = vmul.f32 %v620, 1.442695
    %v644 = vpow.pop %v643
    %v645 = vmul.f32 %v621, 1.442695
    %v646 = vpow.pop %v645
    %v647 = vmul.f32 %v622, 1.442695
    %v648 = vpow.pop %v647
    %v649 = vmul.f32 %v623, 1.442695
    %v650 = vpow.pop %v649
    %v651 = vmul.f32 %v624, 1.442695
    %v652 = vpow.pop %v651
    %v653 = vmul.f32 %v625, 1.442695
    %v654 = vpow.pop %v653
    %v655 = vmul.f32 %v626, 1.442695
    %v656 = vpow.pop %v655
    %v657 = vmul.f32 %v627, 1.442695
    %v658 = vpow.pop %v657
    %v659 = vmul.f32 %v628, 1.442695
    %v660 = vpow.pop %v659
    %v661 = vadd.f32 %v630, 1.0
    %v662 = vadd.f32 %v632, 1.0
    %v663 = vadd.f32 %v634, 1.0
    %v664 = vadd.f32 %v636, 1.0
    %v665 = vadd.f32 %v638, 1.0
    %v666 = vadd.f32 %v640, 1.0
    %v667 = vadd.f32 %v642, 1.0
    %v668 = vadd.f32 %v644, 1.0
    %v669 = vadd.f32 %v646, 1.0
    %v670 = vadd.f32 %v648, 1.0
    %v671 = vadd.f32 %v650, 1.0
    %v672 = vadd.f32 %v652, 1.0
    %v673 = vadd.f32 %v654, 1.0
    %v674 = vadd.f32 %v656, 1.0
    %v675 = vadd.f32 %v658, 1.0
    %v676 = vadd.f32 %v660, 1.0
    %v677 = vrcp.pop %v661
    %v678 = vmul.f32 1.0, %v677
    %v679 = vrcp.pop %v662
    %v680 = vmul.f32 1.0, %v679
    %v681 = vrcp.pop %v663
    %v682 = vmul.f32 1.0, %v681
    %v683 = vrcp.pop %v664
    %v684 = vmul.f32 1.0, %v683
    %v685 = vrcp.pop %v665
    %v686 = vmul.f32 1.0, %v685
    %v687 = vrcp.pop %v666
    %v688 = vmul.f32 1.0, %v687
    %v689 = vrcp.pop %v667
    %v690 = vmul.f32 1.0, %v689
    %v691 = vrcp.pop %v668
    %v692 = vmul.f32 1.0, %v691
    %v693 = vrcp.pop %v669
    %v694 = vmul.f32 1.0, %v693
    %v695 = vrcp.pop %v670
    %v696 = vmul.f32 1.0, %v695
    %v697 = vrcp.pop %v671
    %v698 = vmul.f32 1.0, %v697
    %v699 = vrcp.pop %v672
    %v700 = vmul.f32 1.0, %v699
    %v701 = vrcp.pop %v673
    %v702 = vmul.f32 1.0, %v701
    %v703 = vrcp.pop %v674
    %v704 = vmul.f32 1.0, %v703
    %v705 = vrcp.pop %v675
    %v706 = vmul.f32 1.0, %v705
    %v707 = vrcp.pop %v676
    %v708 = vmul.f32 1.0, %v707
    %v709 = vmul.f32 %v502, %v678
    %v710 = vmul.f32 %v504, %v680
    %v711 = vmul.f32 %v591, %v682
    %v712 = vmul.f32 %v593, %v684
    %v713 = vmul.f32 %v508, %v686
    %v714 = vmul.f32 %v510, %v688
    %v715 = vmul.f32 %v597, %v690
    %v716 = vmul.f32 %v599, %v692
    %v717 = vmul.f32 %v514, %v694
    %v718 = vmul.f32 %v516, %v696
    %v719 = vmul.f32 %v603, %v698
    %v720 = vmul.f32 %v605, %v700
    %v721 = vmul.f32 %v520, %v702
    %v722 = vmul.f32 %v522, %v704
    %v723 = vmul.f32 %v609, %v706
    %v724 = vmul.f32 %v611, %v708
    %v725 = vld [vmem:[%s8] sm:$0xff]
    %v726 = vld [vmem:[%s8 + $0x8] sm:$0xff]
    %v727 = vld [vmem:[%s8 + $0x10] sm:$0xff]
    %v728 = vld [vmem:[%s8 + $0x18] sm:$0xff]
    %v729 = vld [vmem:[%s9] sm:$0xff]
    %v730 = vld [vmem:[%s9 + $0x8] sm:$0xff]
    %v731 = vld [vmem:[%s9 + $0x10] sm:$0xff]
    %v732 = vld [vmem:[%s9 + $0x18] sm:$0xff]
    %734 = vset.pattern.permute.xlu0 0
    %735 = vperm.xlu0 %734, %v729
    %v736 = vpop.permute.xlu0 %735
    %739 = vset.pattern.permute.xlu0 0
    %740 = vperm.xlu0 %739, %v730
    %v741 = vpop.permute.xlu0 %740
    %744 = vset.pattern.permute.xlu0 0
    %745 = vperm.xlu0 %744, %v731
    %v746 = vpop.permute.xlu0 %745
    %749 = vset.pattern.permute.xlu0 0
    %750 = vperm.xlu0 %749, %v732
    %v751 = vpop.permute.xlu0 %750
    %vm753 = vcmask 261120
    %v755 = vsel %vm753, %v725, 0
    %v758 = vsel %vm753, %v726, 0
    %v761 = vsel %vm753, %v727, 0
    %v764 = vsel %vm753, %v728, 0
    %766 = vmatprep.subr.mxu0 %v380
    %767 = vmatpush1.msra.mxu0 %v379
    %768 = vmatprep.subr.mxu0 %v384
    %769 = vmatpush1.msra.mxu0 %v383
    %770 = vmatprep.subr.mxu0 %v388
    %771 = vmatpush1.msra.mxu0 %v387
    %772 = vmatprep.subr.mxu0 %v392
    %773 = vmatpush1.msra.mxu0 %v391
    %774 = vmatprep.subr.mxu0 0.0
    %775 = vmatpush1.msra.mxu0 0.0
    %776 = vmatprep.subr.mxu0 0.0
    %777 = vmatpush1.msra.mxu0 0.0
    %778 = vmatprep.subr.mxu0 0.0
    %779 = vmatpush1.msra.mxu0 0.0
    %780 = vmatprep.subr.mxu0 0.0
    %781 = vmatpush1.msra.mxu0 0.0
    %782 = vmatprep.subr.mxu0 0.0
    %783 = vmatpush1.msra.mxu0 0.0
    %784 = vmatprep.subr.mxu0 0.0
    %785 = vmatpush1.msra.mxu0 0.0
    %786 = vmatprep.subr.mxu0 0.0
    %787 = vmatpush1.msra.mxu0 0.0
    %788 = vmatprep.subr.mxu0 0.0
    %789 = vmatpush1.msra.mxu0 0.0
    %790 = vmatprep.subr.mxu0 0.0
    %791 = vmatpush1.msra.mxu0 0.0
    %792 = vmatprep.subr.mxu0 0.0
    %793 = vmatpush1.msra.mxu0 0.0
    %794 = vmatprep.subr.mxu0 0.0
    %795 = vmatpush1.msra.mxu0 0.0
    %796 = vmatprep.subr.mxu0 0.0
    %797 = vmatpush1.msra.mxu0 0.0
    %798 = vmatprep.subr.mxu0 0.0
    %799 = vmatpush1.msra.mxu0 0.0
    %800 = vmatprep.subr.mxu0 0.0
    %801 = vmatpush1.msra.mxu0 0.0
    %802 = vmatprep.subr.mxu0 0.0
    %803 = vmatpush1.msra.mxu0 0.0
    %804 = vmatprep.subr.mxu0 0.0
    %805 = vmatpush1.msra.mxu0 0.0
    %806 = vmatprep.subr.mxu0 0.0
    %807 = vmatpush1.msra.mxu0 0.0
    %808 = vmatprep.subr.mxu0 0.0
    %809 = vmatpush1.msra.mxu0 0.0
    %810 = vmatprep.subr.mxu0 0.0
    %811 = vmatpush1.msra.mxu0 0.0
    %812 = vmatprep.subr.mxu0 0.0
    %813 = vmatpush1.msra.mxu0 0.0
    %814 = vmatprep.subr.mxu0 0.0
    %815 = vmatpush1.msra.mxu0 0.0
    %816 = vmatprep.subr.mxu0 0.0
    %817 = vmatpush1.msra.mxu0 0.0
    %818 = vmatprep.subr.mxu0 0.0
    %819 = vmatpush1.msra.mxu0 0.0
    %820 = vmatprep.subr.mxu0 0.0
    %821 = vmatpush1.msra.mxu0 0.0
    %822 = vmatprep.subr.mxu0 0.0
    %823 = vmatpush1.msra.mxu0 0.0
    %824 = vmatprep.subr.mxu0 0.0
    %825 = vmatpush1.msra.mxu0 0.0
    %826 = vmatprep.subr.mxu0 0.0
    %827 = vmatpush1.msra.mxu0 0.0
    %828 = vmatprep.subr.mxu0 0.0
    %829 = vmatpush1.msra.mxu0 0.0
    %830 = vmatprep.mubr.f32.mxu0 0.0
    %831 = vmatmul.mubr.f32.gmra.mrb[0].mxu0 %v755
    %v832 = vpop.f32.mrb[0].mxu0
    %v833 = vadd.f32 %v736, %v832
    %v834 = vpop.f32.mrb[0].mxu0
    %v835 = vadd.f32 %v736, %v834
    %836 = vmatprep.mubr.f32.mxu0 0.0
    %837 = vmatmul.mubr.f32.gmra.mrb[0].mxu0 %v758
    %v838 = vpop.f32.mrb[0].mxu0
    %v839 = vadd.f32 %v741, %v838
    %v840 = vpop.f32.mrb[0].mxu0
    %v841 = vadd.f32 %v741, %v840
    %842 = vmatprep.mubr.f32.mxu0 0.0
    %843 = vmatmul.mubr.f32.gmra.mrb[0].mxu0 %v761
    %v844 = vpop.f32.mrb[0].mxu0
    %v845 = vadd.f32 %v746, %v844
    %v846 = vpop.f32.mrb[0].mxu0
    %v847 = vadd.f32 %v746, %v846
    %848 = vmatprep.mubr.f32.mxu0 0.0
    %849 = vmatmul.mubr.f32.gmra.mrb[0].mxu0 %v764
    %v850 = vpop.f32.mrb[0].mxu0
    %v851 = vadd.f32 %v751, %v850
    %v852 = vpop.f32.mrb[0].mxu0
    %v853 = vadd.f32 %v751, %v852
    %854 = vdwg.mxu0
    %855 = vmatprep.subr.mxu0 %v382
    %856 = vmatpush1.msra.mxu0 %v381
    %857 = vmatprep.subr.mxu0 %v386
    %858 = vmatpush1.msra.mxu0 %v385
    %859 = vmatprep.subr.mxu0 %v390
    %860 = vmatpush1.msra.mxu0 %v389
    %861 = vmatprep.subr.mxu0 %v394
    %862 = vmatpush1.msra.mxu0 %v393
    %863 = vmatprep.subr.mxu0 0.0
    %864 = vmatpush1.msra.mxu0 0.0
    %865 = vmatprep.subr.mxu0 0.0
    %866 = vmatpush1.msra.mxu0 0.0
    %867 = vmatprep.subr.mxu0 0.0
    %868 = vmatpush1.msra.mxu0 0.0
    %869 = vmatprep.subr.mxu0 0.0
    %870 = vmatpush1.msra.mxu0 0.0
    %871 = vmatprep.subr.mxu0 0.0
    %872 = vmatpush1.msra.mxu0 0.0
    %873 = vmatprep.subr.mxu0 0.0
    %874 = vmatpush1.msra.mxu0 0.0
    %875 = vmatprep.subr.mxu0 0.0
    %876 = vmatpush1.msra.mxu0 0.0
    %877 = vmatprep.subr.mxu0 0.0
    %878 = vmatpush1.msra.mxu0 0.0
    %879 = vmatprep.subr.mxu0 0.0
    %880 = vmatpush1.msra.mxu0 0.0
    %881 = vmatprep.subr.mxu0 0.0
    %882 = vmatpush1.msra.mxu0 0.0
    %883 = vmatprep.subr.mxu0 0.0
    %884 = vmatpush1.msra.mxu0 0.0
    %885 = vmatprep.subr.mxu0 0.0
    %886 = vmatpush1.msra.mxu0 0.0
    %887 = vmatprep.subr.mxu0 0.0
    %888 = vmatpush1.msra.mxu0 0.0
    %889 = vmatprep.subr.mxu0 0.0
    %890 = vmatpush1.msra.mxu0 0.0
    %891 = vmatprep.subr.mxu0 0.0
    %892 = vmatpush1.msra.mxu0 0.0
    %893 = vmatprep.subr.mxu0 0.0
    %894 = vmatpush1.msra.mxu0 0.0
    %895 = vmatprep.subr.mxu0 0.0
    %896 = vmatpush1.msra.mxu0 0.0
    %897 = vmatprep.subr.mxu0 0.0
    %898 = vmatpush1.msra.mxu0 0.0
    %899 = vmatprep.subr.mxu0 0.0
    %900 = vmatpush1.msra.mxu0 0.0
    %901 = vmatprep.subr.mxu0 0.0
    %902 = vmatpush1.msra.mxu0 0.0
    %903 = vmatprep.subr.mxu0 0.0
    %904 = vmatpush1.msra.mxu0 0.0
    %905 = vmatprep.subr.mxu0 0.0
    %906 = vmatpush1.msra.mxu0 0.0
    %907 = vmatprep.subr.mxu0 0.0
    %908 = vmatpush1.msra.mxu0 0.0
    %909 = vmatprep.subr.mxu0 0.0
    %910 = vmatpush1.msra.mxu0 0.0
    %911 = vmatprep.subr.mxu0 0.0
    %912 = vmatpush1.msra.mxu0 0.0
    %913 = vmatprep.subr.mxu0 0.0
    %914 = vmatpush1.msra.mxu0 0.0
    %915 = vmatprep.subr.mxu0 0.0
    %916 = vmatpush1.msra.mxu0 0.0
    %917 = vmatprep.subr.mxu0 0.0
    %918 = vmatpush1.msra.mxu0 0.0
    %919 = vmatprep.mubr.f32.mxu0 0.0
    %920 = vmatmul.mubr.f32.gmra.mrb[0].mxu0 %v755
    %v921 = vpop.f32.mrb[0].mxu0
    %v922 = vadd.f32 %v736, %v921
    %v923 = vpop.f32.mrb[0].mxu0
    %v924 = vadd.f32 %v736, %v923
    %925 = vmatprep.mubr.f32.mxu0 0.0
    %926 = vmatmul.mubr.f32.gmra.mrb[0].mxu0 %v758
    %v927 = vpop.f32.mrb[0].mxu0
    %v928 = vadd.f32 %v741, %v927
    %v929 = vpop.f32.mrb[0].mxu0
    %v930 = vadd.f32 %v741, %v929
    %931 = vmatprep.mubr.f32.mxu0 0.0
    %932 = vmatmul.mubr.f32.gmra.mrb[0].mxu0 %v761
    %v933 = vpop.f32.mrb[0].mxu0
    %v934 = vadd.f32 %v746, %v933
    %v935 = vpop.f32.mrb[0].mxu0
    %v936 = vadd.f32 %v746, %v935
    %937 = vmatprep.mubr.f32.mxu0 0.0
    %938 = vmatmul.mubr.f32.gmra.mrb[0].mxu0 %v764
    %v939 = vpop.f32.mrb[0].mxu0
    %v940 = vadd.f32 %v751, %v939
    %v941 = vpop.f32.mrb[0].mxu0
    %v942 = vadd.f32 %v751, %v941
    %943 = vdwg.mxu0
    %v944 = vld [vmem:[%s7] sm:$0xff]
    %v945 = vld [vmem:[%s7 + $0x8] sm:$0xff]
    %v946 = vld [vmem:[%s7 + $0x10] sm:$0xff]
    %v947 = vld [vmem:[%s7 + $0x18] sm:$0xff]
    %949 = vset.pattern.permute.xlu0 0
    %950 = vperm.xlu0 %949, %v944
    %v951 = vpop.permute.xlu0 %950
    %954 = vset.pattern.permute.xlu0 0
    %955 = vperm.xlu0 %954, %v945
    %v956 = vpop.permute.xlu0 %955
    %959 = vset.pattern.permute.xlu0 0
    %960 = vperm.xlu0 %959, %v946
    %v961 = vpop.permute.xlu0 %960
    %964 = vset.pattern.permute.xlu0 0
    %965 = vperm.xlu0 %964, %v947
    %v966 = vpop.permute.xlu0 %965
    %v968 = vadd.f32 %v833, %v951
    %v969 = vadd.f32 %v835, %v951
    %v970 = vadd.f32 %v922, %v951
    %v971 = vadd.f32 %v924, %v951
    %v972 = vadd.f32 %v839, %v956
    %v973 = vadd.f32 %v841, %v956
    %v974 = vadd.f32 %v928, %v956
    %v975 = vadd.f32 %v930, %v956
    %v976 = vadd.f32 %v845, %v961
    %v977 = vadd.f32 %v847, %v961
    %v978 = vadd.f32 %v934, %v961
    %v979 = vadd.f32 %v936, %v961
    %v980 = vadd.f32 %v851, %v966
    %v981 = vadd.f32 %v853, %v966
    %v982 = vadd.f32 %v940, %v966
    %v983 = vadd.f32 %v942, %v966
    %984 = vrot.lane.b32.xlu0 %v379, 17
    %v985 = vpop.permute.xlu0 %984
    %986 = vrot.lane.b32.xlu0 %v383, 17
    %v987 = vpop.permute.xlu0 %986
    %988 = vrot.lane.b32.xlu0 %v387, 17
    %v989 = vpop.permute.xlu0 %988
    %990 = vrot.lane.b32.xlu0 %v391, 17
    %v991 = vpop.permute.xlu0 %990
    %992 = vrot.lane.b32.xlu0 %v380, 17
    %v993 = vpop.permute.xlu0 %992
    %994 = vrot.lane.b32.xlu0 %v384, 17
    %v995 = vpop.permute.xlu0 %994
    %996 = vrot.lane.b32.xlu0 %v388, 17
    %v997 = vpop.permute.xlu0 %996
    %998 = vrot.lane.b32.xlu0 %v392, 17
    %v999 = vpop.permute.xlu0 %998
    %1000 = vrot.lane.b32.xlu0 %v381, 17
    %v1001 = vpop.permute.xlu0 %1000
    %1002 = vrot.lane.b32.xlu0 %v385, 17
    %v1003 = vpop.permute.xlu0 %1002
    %1004 = vrot.lane.b32.xlu0 %v389, 17
    %v1005 = vpop.permute.xlu0 %1004
    %1006 = vrot.lane.b32.xlu0 %v393, 17
    %v1007 = vpop.permute.xlu0 %1006
    %1008 = vrot.lane.b32.xlu0 %v382, 17
    %v1009 = vpop.permute.xlu0 %1008
    %1010 = vrot.lane.b32.xlu0 %v386, 17
    %v1011 = vpop.permute.xlu0 %1010
    %1012 = vrot.lane.b32.xlu0 %v390, 17
    %v1013 = vpop.permute.xlu0 %1012
    %1014 = vrot.lane.b32.xlu0 %v394, 17
    %v1015 = vpop.permute.xlu0 %1014
    %v1016 = vlaneseq
    %v1017 = vand.u32 %v1016, 127
    %vm1018 = vcmp.lt.s32.totalorder %v1017, 17
    %v1019 = vsel %vm1018, %v1001, %v1009
    %v1020 = vsel %vm1018, %v1003, %v1011
    %v1021 = vsel %vm1018, %v1005, %v1013
    %v1022 = vsel %vm1018, %v1007, %v1015
    %v1023 = vsel %vm1018, %v993, %v1001
    %v1024 = vsel %vm1018, %v995, %v1003
    %v1025 = vsel %vm1018, %v997, %v1005
    %v1026 = vsel %vm1018, %v999, %v1007
    %v1027 = vsel %vm1018, %v985, %v993
    %v1028 = vsel %vm1018, %v987, %v995
    %v1029 = vsel %vm1018, %v989, %v997
    %v1030 = vsel %vm1018, %v991, %v999
    %v1031 = vsel %vm1018, %v1009, %v985
    %v1032 = vsel %vm1018, %v1011, %v987
    %v1033 = vsel %vm1018, %v1013, %v989
    %v1034 = vsel %vm1018, %v1015, %v991
    %v1035 = vld [vmem:[%s1] ss:$8 sm:$0xf]
    %v1036 = vld [vmem:[#allocation2] sm:$0xff]
    %v1037 = vld [vmem:[#allocation2 + $0x8] sm:$0xff]
    %v1038 = vld [vmem:[#allocation2 + $0x10] sm:$0xff]
    %v1039 = vld [vmem:[#allocation2 + $0x18] sm:$0xff]
    %v1041 = vlaneseq
    %v1042 = vshrl.u32 %v1041, 7
    %v1043 = vsub.s32 0, %v1042
    %v1044 = vrot.slane %v1035, %v1043
    %v1045 = vlaneseq
    %v1046 = vshrl.u32 %v1045, 7
    %v1047 = vsub.s32 1, %v1046
    %v1048 = vrot.slane %v1035, %v1047
    %v1049 = vlaneseq
    %v1050 = vshrl.u32 %v1049, 7
    %v1051 = vsub.s32 2, %v1050
    %v1052 = vrot.slane %v1035, %v1051
    %v1053 = vlaneseq
    %v1054 = vshrl.u32 %v1053, 7
    %v1055 = vsub.s32 3, %v1054
    %v1056 = vrot.slane %v1035, %v1055
    %v1061 = vmul.f32 %v1031, %v1044
    %v1062 = vmul.f32 %v1027, %v1048
    %v1063 = vmul.f32 %v1023, %v1052
    %v1064 = vmul.f32 %v1019, %v1056
    %v1065 = vmul.f32 %v1032, %v1044
    %v1066 = vmul.f32 %v1028, %v1048
    %v1067 = vmul.f32 %v1024, %v1052
    %v1068 = vmul.f32 %v1020, %v1056
    %v1069 = vmul.f32 %v1033, %v1044
    %v1070 = vmul.f32 %v1029, %v1048
    %v1071 = vmul.f32 %v1025, %v1052
    %v1072 = vmul.f32 %v1021, %v1056
    %v1073 = vmul.f32 %v1034, %v1044
    %v1074 = vmul.f32 %v1030, %v1048
    %v1075 = vmul.f32 %v1026, %v1052
    %v1076 = vmul.f32 %v1022, %v1056
    %v1078 = vsel %vm753, %v1036, 0
    %v1081 = vsel %vm753, %v1037, 0
    %v1084 = vsel %vm753, %v1038, 0
    %v1087 = vsel %vm753, %v1039, 0
    %1089 = vmatprep.subr.mxu0 %v1062
    %1090 = vmatpush1.msra.mxu0 %v1061
    %1091 = vmatprep.subr.mxu0 %v1066
    %1092 = vmatpush1.msra.mxu0 %v1065
    %1093 = vmatprep.subr.mxu0 %v1070
    %1094 = vmatpush1.msra.mxu0 %v1069
    %1095 = vmatprep.subr.mxu0 %v1074
    %1096 = vmatpush1.msra.mxu0 %v1073
    %1097 = vmatprep.subr.mxu0 0.0
    %1098 = vmatpush1.msra.mxu0 0.0
    %1099 = vmatprep.subr.mxu0 0.0
    %1100 = vmatpush1.msra.mxu0 0.0
    %1101 = vmatprep.subr.mxu0 0.0
    %1102 = vmatpush1.msra.mxu0 0.0
    %1103 = vmatprep.subr.mxu0 0.0
    %1104 = vmatpush1.msra.mxu0 0.0
    %1105 = vmatprep.subr.mxu0 0.0
    %1106 = vmatpush1.msra.mxu0 0.0
    %1107 = vmatprep.subr.mxu0 0.0
    %1108 = vmatpush1.msra.mxu0 0.0
    %1109 = vmatprep.subr.mxu0 0.0
    %1110 = vmatpush1.msra.mxu0 0.0
    %1111 = vmatprep.subr.mxu0 0.0
    %1112 = vmatpush1.msra.mxu0 0.0
    %1113 = vmatprep.subr.mxu0 0.0
    %1114 = vmatpush1.msra.mxu0 0.0
    %1115 = vmatprep.subr.mxu0 0.0
    %1116 = vmatpush1.msra.mxu0 0.0
    %1117 = vmatprep.subr.mxu0 0.0
    %1118 = vmatpush1.msra.mxu0 0.0
    %1119 = vmatprep.subr.mxu0 0.0
    %1120 = vmatpush1.msra.mxu0 0.0
    %1121 = vmatprep.subr.mxu0 0.0
    %1122 = vmatpush1.msra.mxu0 0.0
    %1123 = vmatprep.subr.mxu0 0.0
    %1124 = vmatpush1.msra.mxu0 0.0
    %1125 = vmatprep.subr.mxu0 0.0
    %1126 = vmatpush1.msra.mxu0 0.0
    %1127 = vmatprep.subr.mxu0 0.0
    %1128 = vmatpush1.msra.mxu0 0.0
    %1129 = vmatprep.subr.mxu0 0.0
    %1130 = vmatpush1.msra.mxu0 0.0
    %1131 = vmatprep.subr.mxu0 0.0
    %1132 = vmatpush1.msra.mxu0 0.0
    %1133 = vmatprep.subr.mxu0 0.0
    %1134 = vmatpush1.msra.mxu0 0.0
    %1135 = vmatprep.subr.mxu0 0.0
    %1136 = vmatpush1.msra.mxu0 0.0
    %1137 = vmatprep.subr.mxu0 0.0
    %1138 = vmatpush1.msra.mxu0 0.0
    %1139 = vmatprep.subr.mxu0 0.0
    %1140 = vmatpush1.msra.mxu0 0.0
    %1141 = vmatprep.subr.mxu0 0.0
    %1142 = vmatpush1.msra.mxu0 0.0
    %1143 = vmatprep.subr.mxu0 0.0
    %1144 = vmatpush1.msra.mxu0 0.0
    %1145 = vmatprep.subr.mxu0 0.0
    %1146 = vmatpush1.msra.mxu0 0.0
    %1147 = vmatprep.subr.mxu0 0.0
    %1148 = vmatpush1.msra.mxu0 0.0
    %1149 = vmatprep.subr.mxu0 0.0
    %1150 = vmatpush1.msra.mxu0 0.0
    %1151 = vmatprep.subr.mxu0 0.0
    %1152 = vmatpush1.msra.mxu0 0.0
    %1153 = vmatprep.mubr.f32.mxu0 0.0
    %1154 = vmatmul.mubr.f32.gmra.mrb[0].mxu0 %v1078
    %v1155 = vpop.f32.mrb[0].mxu0
    %v1156 = vadd.f32 0.0, %v1155
    %v1157 = vpop.f32.mrb[0].mxu0
    %v1158 = vadd.f32 0.0, %v1157
    %1159 = vmatprep.mubr.f32.mxu0 0.0
    %1160 = vmatmul.mubr.f32.gmra.mrb[0].mxu0 %v1081
    %v1161 = vpop.f32.mrb[0].mxu0
    %v1162 = vadd.f32 0.0, %v1161
    %v1163 = vpop.f32.mrb[0].mxu0
    %v1164 = vadd.f32 0.0, %v1163
    %1165 = vmatprep.mubr.f32.mxu0 0.0
    %1166 = vmatmul.mubr.f32.gmra.mrb[0].mxu0 %v1084
    %v1167 = vpop.f32.mrb[0].mxu0
    %v1168 = vadd.f32 0.0, %v1167
    %v1169 = vpop.f32.mrb[0].mxu0
    %v1170 = vadd.f32 0.0, %v1169
    %1171 = vmatprep.mubr.f32.mxu0 0.0
    %1172 = vmatmul.mubr.f32.gmra.mrb[0].mxu0 %v1087
    %v1173 = vpop.f32.mrb[0].mxu0
    %v1174 = vadd.f32 0.0, %v1173
    %v1175 = vpop.f32.mrb[0].mxu0
    %v1176 = vadd.f32 0.0, %v1175
    %1177 = vdwg.mxu0
    %1178 = vmatprep.subr.mxu0 %v1064
    %1179 = vmatpush1.msra.mxu0 %v1063
    %1180 = vmatprep.subr.mxu0 %v1068
    %1181 = vmatpush1.msra.mxu0 %v1067
    %1182 = vmatprep.subr.mxu0 %v1072
    %1183 = vmatpush1.msra.mxu0 %v1071
    %1184 = vmatprep.subr.mxu0 %v1076
    %1185 = vmatpush1.msra.mxu0 %v1075
    %1186 = vmatprep.subr.mxu0 0.0
    %1187 = vmatpush1.msra.mxu0 0.0
    %1188 = vmatprep.subr.mxu0 0.0
    %1189 = vmatpush1.msra.mxu0 0.0
    %1190 = vmatprep.subr.mxu0 0.0
    %1191 = vmatpush1.msra.mxu0 0.0
    %1192 = vmatprep.subr.mxu0 0.0
    %1193 = vmatpush1.msra.mxu0 0.0
    %1194 = vmatprep.subr.mxu0 0.0
    %1195 = vmatpush1.msra.mxu0 0.0
    %1196 = vmatprep.subr.mxu0 0.0
    %1197 = vmatpush1.msra.mxu0 0.0
    %1198 = vmatprep.subr.mxu0 0.0
    %1199 = vmatpush1.msra.mxu0 0.0
    %1200 = vmatprep.subr.mxu0 0.0
    %1201 = vmatpush1.msra.mxu0 0.0
    %1202 = vmatprep.subr.mxu0 0.0
    %1203 = vmatpush1.msra.mxu0 0.0
    %1204 = vmatprep.subr.mxu0 0.0
    %1205 = vmatpush1.msra.mxu0 0.0
    %1206 = vmatprep.subr.mxu0 0.0
    %1207 = vmatpush1.msra.mxu0 0.0
    %1208 = vmatprep.subr.mxu0 0.0
    %1209 = vmatpush1.msra.mxu0 0.0
    %1210 = vmatprep.subr.mxu0 0.0
    %1211 = vmatpush1.msra.mxu0 0.0
    %1212 = vmatprep.subr.mxu0 0.0
    %1213 = vmatpush1.msra.mxu0 0.0
    %1214 = vmatprep.subr.mxu0 0.0
    %1215 = vmatpush1.msra.mxu0 0.0
    %1216 = vmatprep.subr.mxu0 0.0
    %1217 = vmatpush1.msra.mxu0 0.0
    %1218 = vmatprep.subr.mxu0 0.0
    %1219 = vmatpush1.msra.mxu0 0.0
    %1220 = vmatprep.subr.mxu0 0.0
    %1221 = vmatpush1.msra.mxu0 0.0
    %1222 = vmatprep.subr.mxu0 0.0
    %1223 = vmatpush1.msra.mxu0 0.0
    %1224 = vmatprep.subr.mxu0 0.0
    %1225 = vmatpush1.msra.mxu0 0.0
    %1226 = vmatprep.subr.mxu0 0.0
    %1227 = vmatpush1.msra.mxu0 0.0
    %1228 = vmatprep.subr.mxu0 0.0
    %1229 = vmatpush1.msra.mxu0 0.0
    %1230 = vmatprep.subr.mxu0 0.0
    %1231 = vmatpush1.msra.mxu0 0.0
    %1232 = vmatprep.subr.mxu0 0.0
    %1233 = vmatpush1.msra.mxu0 0.0
    %1234 = vmatprep.subr.mxu0 0.0
    %1235 = vmatpush1.msra.mxu0 0.0
    %1236 = vmatprep.subr.mxu0 0.0
    %1237 = vmatpush1.msra.mxu0 0.0
    %1238 = vmatprep.subr.mxu0 0.0
    %1239 = vmatpush1.msra.mxu0 0.0
    %1240 = vmatprep.subr.mxu0 0.0
    %1241 = vmatpush1.msra.mxu0 0.0
    %1242 = vmatprep.mubr.f32.mxu0 0.0
    %1243 = vmatmul.mubr.f32.gmra.mrb[0].mxu0 %v1078
    %v1244 = vpop.f32.mrb[0].mxu0
    %v1245 = vadd.f32 0.0, %v1244
    %v1246 = vpop.f32.mrb[0].mxu0
    %v1247 = vadd.f32 0.0, %v1246
    %1248 = vmatprep.mubr.f32.mxu0 0.0
    %1249 = vmatmul.mubr.f32.gmra.mrb[0].mxu0 %v1081
    %v1250 = vpop.f32.mrb[0].mxu0
    %v1251 = vadd.f32 0.0, %v1250
    %v1252 = vpop.f32.mrb[0].mxu0
    %v1253 = vadd.f32 0.0, %v1252
    %1254 = vmatprep.mubr.f32.mxu0 0.0
    %1255 = vmatmul.mubr.f32.gmra.mrb[0].mxu0 %v1084
    %v1256 = vpop.f32.mrb[0].mxu0
    %v1257 = vadd.f32 0.0, %v1256
    %v1258 = vpop.f32.mrb[0].mxu0
    %v1259 = vadd.f32 0.0, %v1258
    %1260 = vmatprep.mubr.f32.mxu0 0.0
    %1261 = vmatmul.mubr.f32.gmra.mrb[0].mxu0 %v1087
    %v1262 = vpop.f32.mrb[0].mxu0
    %v1263 = vadd.f32 0.0, %v1262
    %v1264 = vpop.f32.mrb[0].mxu0
    %v1265 = vadd.f32 0.0, %v1264
    %1266 = vdwg.mxu0
    %v1267 = vadd.f32 %v968, %v1156
    %v1268 = vadd.f32 %v969, %v1158
    %v1269 = vadd.f32 %v970, %v1245
    %v1270 = vadd.f32 %v971, %v1247
    %v1271 = vadd.f32 %v972, %v1162
    %v1272 = vadd.f32 %v973, %v1164
    %v1273 = vadd.f32 %v974, %v1251
    %v1274 = vadd.f32 %v975, %v1253
    %v1275 = vadd.f32 %v976, %v1168
    %v1276 = vadd.f32 %v977, %v1170
    %v1277 = vadd.f32 %v978, %v1257
    %v1278 = vadd.f32 %v979, %v1259
    %v1279 = vadd.f32 %v980, %v1174
    %v1280 = vadd.f32 %v981, %v1176
    %v1281 = vadd.f32 %v982, %v1263
    %v1282 = vadd.f32 %v983, %v1265
    %1283 = vrot.lane.b32.xlu0 %v379, 16
    %v1284 = vpop.permute.xlu0 %1283
    %1285 = vrot.lane.b32.xlu0 %v383, 16
    %v1286 = vpop.permute.xlu0 %1285
    %1287 = vrot.lane.b32.xlu0 %v387, 16
    %v1288 = vpop.permute.xlu0 %1287
    %1289 = vrot.lane.b32.xlu0 %v391, 16
    %v1290 = vpop.permute.xlu0 %1289
    %1291 = vrot.lane.b32.xlu0 %v380, 16
    %v1292 = vpop.permute.xlu0 %1291
    %1293 = vrot.lane.b32.xlu0 %v384, 16
    %v1294 = vpop.permute.xlu0 %1293
    %1295 = vrot.lane.b32.xlu0 %v388, 16
    %v1296 = vpop.permute.xlu0 %1295
    %1297 = vrot.lane.b32.xlu0 %v392, 16
    %v1298 = vpop.permute.xlu0 %1297
    %1299 = vrot.lane.b32.xlu0 %v381, 16
    %v1300 = vpop.permute.xlu0 %1299
    %1301 = vrot.lane.b32.xlu0 %v385, 16
    %v1302 = vpop.permute.xlu0 %1301
    %1303 = vrot.lane.b32.xlu0 %v389, 16
    %v1304 = vpop.permute.xlu0 %1303
    %1305 = vrot.lane.b32.xlu0 %v393, 16
    %v1306 = vpop.permute.xlu0 %1305
    %1307 = vrot.lane.b32.xlu0 %v382, 16
    %v1308 = vpop.permute.xlu0 %1307
    %1309 = vrot.lane.b32.xlu0 %v386, 16
    %v1310 = vpop.permute.xlu0 %1309
    %1311 = vrot.lane.b32.xlu0 %v390, 16
    %v1312 = vpop.permute.xlu0 %1311
    %1313 = vrot.lane.b32.xlu0 %v394, 16
    %v1314 = vpop.permute.xlu0 %1313
    %vm1315 = vcmp.lt.s32.totalorder %v1017, 16
    %v1316 = vsel %vm1315, %v1300, %v1308
    %v1317 = vsel %vm1315, %v1302, %v1310
    %v1318 = vsel %vm1315, %v1304, %v1312
    %v1319 = vsel %vm1315, %v1306, %v1314
    %v1320 = vsel %vm1315, %v1292, %v1300
    %v1321 = vsel %vm1315, %v1294, %v1302
    %v1322 = vsel %vm1315, %v1296, %v1304
    %v1323 = vsel %vm1315, %v1298, %v1306
    %v1324 = vsel %vm1315, %v1284, %v1292
    %v1325 = vsel %vm1315, %v1286, %v1294
    %v1326 = vsel %vm1315, %v1288, %v1296
    %v1327 = vsel %vm1315, %v1290, %v1298
    %v1328 = vsel %vm1315, %v1308, %v1284
    %v1329 = vsel %vm1315, %v1310, %v1286
    %v1330 = vsel %vm1315, %v1312, %v1288
    %v1331 = vsel %vm1315, %v1314, %v1290
    %s1332 = scalar_lea.vmem %s1, 1
    %v1333 = vld [vmem:[%s1332] ss:$8 sm:$0xf]
    %s1334 = scalar_lea.vmem [#allocation2], 32
    %v1335 = vld [vmem:[%s1334] sm:$0xff]
    %v1336 = vld [vmem:[%s1334 + $0x8] sm:$0xff]
    %v1337 = vld [vmem:[%s1334 + $0x10] sm:$0xff]
    %v1338 = vld [vmem:[%s1334 + $0x18] sm:$0xff]
    %v1340 = vlaneseq
    %v1341 = vshrl.u32 %v1340, 7
    %v1342 = vsub.s32 0, %v1341
    %v1343 = vrot.slane %v1333, %v1342
    %v1344 = vlaneseq
    %v1345 = vshrl.u32 %v1344, 7
    %v1346 = vsub.s32 1, %v1345
    %v1347 = vrot.slane %v1333, %v1346
    %v1348 = vlaneseq
    %v1349 = vshrl.u32 %v1348, 7
    %v1350 = vsub.s32 2, %v1349
    %v1351 = vrot.slane %v1333, %v1350
    %v1352 = vlaneseq
    %v1353 = vshrl.u32 %v1352, 7
    %v1354 = vsub.s32 3, %v1353
    %v1355 = vrot.slane %v1333, %v1354
    %v1360 = vmul.f32 %v1328, %v1343
    %v1361 = vmul.f32 %v1324, %v1347
    %v1362 = vmul.f32 %v1320, %v1351
    %v1363 = vmul.f32 %v1316, %v1355
    %v1364 = vmul.f32 %v1329, %v1343
    %v1365 = vmul.f32 %v1325, %v1347
    %v1366 = vmul.f32 %v1321, %v1351
    %v1367 = vmul.f32 %v1317, %v1355
    %v1368 = vmul.f32 %v1330, %v1343
    %v1369 = vmul.f32 %v1326, %v1347
    %v1370 = vmul.f32 %v1322, %v1351
    %v1371 = vmul.f32 %v1318, %v1355
    %v1372 = vmul.f32 %v1331, %v1343
    %v1373 = vmul.f32 %v1327, %v1347
    %v1374 = vmul.f32 %v1323, %v1351
    %v1375 = vmul.f32 %v1319, %v1355
    %v1377 = vsel %vm753, %v1335, 0
    %v1380 = vsel %vm753, %v1336, 0
    %v1383 = vsel %vm753, %v1337, 0
    %v1386 = vsel %vm753, %v1338, 0
    %1388 = vmatprep.subr.mxu0 %v1361
    %1389 = vmatpush1.msra.mxu0 %v1360
    %1390 = vmatprep.subr.mxu0 %v1365
    %1391 = vmatpush1.msra.mxu0 %v1364
    %1392 = vmatprep.subr.mxu0 %v1369
    %1393 = vmatpush1.msra.mxu0 %v1368
    %1394 = vmatprep.subr.mxu0 %v1373
    %1395 = vmatpush1.msra.mxu0 %v1372
    %1396 = vmatprep.subr.mxu0 0.0
    %1397 = vmatpush1.msra.mxu0 0.0
    %1398 = vmatprep.subr.mxu0 0.0
    %1399 = vmatpush1.msra.mxu0 0.0
    %1400 = vmatprep.subr.mxu0 0.0
    %1401 = vmatpush1.msra.mxu0 0.0
    %1402 = vmatprep.subr.mxu0 0.0
    %1403 = vmatpush1.msra.mxu0 0.0
    %1404 = vmatprep.subr.mxu0 0.0
    %1405 = vmatpush1.msra.mxu0 0.0
    %1406 = vmatprep.subr.mxu0 0.0
    %1407 = vmatpush1.msra.mxu0 0.0
    %1408 = vmatprep.subr.mxu0 0.0
    %1409 = vmatpush1.msra.mxu0 0.0
    %1410 = vmatprep.subr.mxu0 0.0
    %1411 = vmatpush1.msra.mxu0 0.0
    %1412 = vmatprep.subr.mxu0 0.0
    %1413 = vmatpush1.msra.mxu0 0.0
    %1414 = vmatprep.subr.mxu0 0.0
    %1415 = vmatpush1.msra.mxu0 0.0
    %1416 = vmatprep.subr.mxu0 0.0
    %1417 = vmatpush1.msra.mxu0 0.0
    %1418 = vmatprep.subr.mxu0 0.0
    %1419 = vmatpush1.msra.mxu0 0.0
    %1420 = vmatprep.subr.mxu0 0.0
    %1421 = vmatpush1.msra.mxu0 0.0
    %1422 = vmatprep.subr.mxu0 0.0
    %1423 = vmatpush1.msra.mxu0 0.0
    %1424 = vmatprep.subr.mxu0 0.0
    %1425 = vmatpush1.msra.mxu0 0.0
    %1426 = vmatprep.subr.mxu0 0.0
    %1427 = vmatpush1.msra.mxu0 0.0
    %1428 = vmatprep.subr.mxu0 0.0
    %1429 = vmatpush1.msra.mxu0 0.0
    %1430 = vmatprep.subr.mxu0 0.0
    %1431 = vmatpush1.msra.mxu0 0.0
    %1432 = vmatprep.subr.mxu0 0.0
    %1433 = vmatpush1.msra.mxu0 0.0
    %1434 = vmatprep.subr.mxu0 0.0
    %1435 = vmatpush1.msra.mxu0 0.0
    %1436 = vmatprep.subr.mxu0 0.0
    %1437 = vmatpush1.msra.mxu0 0.0
    %1438 = vmatprep.subr.mxu0 0.0
    %1439 = vmatpush1.msra.mxu0 0.0
    %1440 = vmatprep.subr.mxu0 0.0
    %1441 = vmatpush1.msra.mxu0 0.0
    %1442 = vmatprep.subr.mxu0 0.0
    %1443 = vmatpush1.msra.mxu0 0.0
    %1444 = vmatprep.subr.mxu0 0.0
    %1445 = vmatpush1.msra.mxu0 0.0
    %1446 = vmatprep.subr.mxu0 0.0
    %1447 = vmatpush1.msra.mxu0 0.0
    %1448 = vmatprep.subr.mxu0 0.0
    %1449 = vmatpush1.msra.mxu0 0.0
    %1450 = vmatprep.subr.mxu0 0.0
    %1451 = vmatpush1.msra.mxu0 0.0
    %1452 = vmatprep.mubr.f32.mxu0 0.0
    %1453 = vmatmul.mubr.f32.gmra.mrb[0].mxu0 %v1377
    %v1454 = vpop.f32.mrb[0].mxu0
    %v1455 = vadd.f32 0.0, %v1454
    %v1456 = vpop.f32.mrb[0].mxu0
    %v1457 = vadd.f32 0.0, %v1456
    %1458 = vmatprep.mubr.f32.mxu0 0.0
    %1459 = vmatmul.mubr.f32.gmra.mrb[0].mxu0 %v1380
    %v1460 = vpop.f32.mrb[0].mxu0
    %v1461 = vadd.f32 0.0, %v1460
    %v1462 = vpop.f32.mrb[0].mxu0
    %v1463 = vadd.f32 0.0, %v1462
    %1464 = vmatprep.mubr.f32.mxu0 0.0
    %1465 = vmatmul.mubr.f32.gmra.mrb[0].mxu0 %v1383
    %v1466 = vpop.f32.mrb[0].mxu0
    %v1467 = vadd.f32 0.0, %v1466
    %v1468 = vpop.f32.mrb[0].mxu0
    %v1469 = vadd.f32 0.0, %v1468
    %1470 = vmatprep.mubr.f32.mxu0 0.0
    %1471 = vmatmul.mubr.f32.gmra.mrb[0].mxu0 %v1386
    %v1472 = vpop.f32.mrb[0].mxu0
    %v1473 = vadd.f32 0.0, %v1472
    %v1474 = vpop.f32.mrb[0].mxu0
    %v1475 = vadd.f32 0.0, %v1474
    %1476 = vdwg.mxu0
    %1477 = vmatprep.subr.mxu0 %v1363
    %1478 = vmatpush1.msra.mxu0 %v1362
    %1479 = vmatprep.subr.mxu0 %v1367
    %1480 = vmatpush1.msra.mxu0 %v1366
    %1481 = vmatprep.subr.mxu0 %v1371
    %1482 = vmatpush1.msra.mxu0 %v1370
    %1483 = vmatprep.subr.mxu0 %v1375
    %1484 = vmatpush1.msra.mxu0 %v1374
    %1485 = vmatprep.subr.mxu0 0.0
    %1486 = vmatpush1.msra.mxu0 0.0
    %1487 = vmatprep.subr.mxu0 0.0
    %1488 = vmatpush1.msra.mxu0 0.0
    %1489 = vmatprep.subr.mxu0 0.0
    %1490 = vmatpush1.msra.mxu0 0.0
    %1491 = vmatprep.subr.mxu0 0.0
    %1492 = vmatpush1.msra.mxu0 0.0
    %1493 = vmatprep.subr.mxu0 0.0
    %1494 = vmatpush1.msra.mxu0 0.0
    %1495 = vmatprep.subr.mxu0 0.0
    %1496 = vmatpush1.msra.mxu0 0.0
    %1497 = vmatprep.subr.mxu0 0.0
    %1498 = vmatpush1.msra.mxu0 0.0
    %1499 = vmatprep.subr.mxu0 0.0
    %1500 = vmatpush1.msra.mxu0 0.0
    %1501 = vmatprep.subr.mxu0 0.0
    %1502 = vmatpush1.msra.mxu0 0.0
    %1503 = vmatprep.subr.mxu0 0.0
    %1504 = vmatpush1.msra.mxu0 0.0
    %1505 = vmatprep.subr.mxu0 0.0
    %1506 = vmatpush1.msra.mxu0 0.0
    %1507 = vmatprep.subr.mxu0 0.0
    %1508 = vmatpush1.msra.mxu0 0.0
    %1509 = vmatprep.subr.mxu0 0.0
    %1510 = vmatpush1.msra.mxu0 0.0
    %1511 = vmatprep.subr.mxu0 0.0
    %1512 = vmatpush1.msra.mxu0 0.0
    %1513 = vmatprep.subr.mxu0 0.0
    %1514 = vmatpush1.msra.mxu0 0.0
    %1515 = vmatprep.subr.mxu0 0.0
    %1516 = vmatpush1.msra.mxu0 0.0
    %1517 = vmatprep.subr.mxu0 0.0
    %1518 = vmatpush1.msra.mxu0 0.0
    %1519 = vmatprep.subr.mxu0 0.0
    %1520 = vmatpush1.msra.mxu0 0.0
    %1521 = vmatprep.subr.mxu0 0.0
    %1522 = vmatpush1.msra.mxu0 0.0
    %1523 = vmatprep.subr.mxu0 0.0
    %1524 = vmatpush1.msra.mxu0 0.0
    %1525 = vmatprep.subr.mxu0 0.0
    %1526 = vmatpush1.msra.mxu0 0.0
    %1527 = vmatprep.subr.mxu0 0.0
    %1528 = vmatpush1.msra.mxu0 0.0
    %1529 = vmatprep.subr.mxu0 0.0
    %1530 = vmatpush1.msra.mxu0 0.0
    %1531 = vmatprep.subr.mxu0 0.0
    %1532 = vmatpush1.msra.mxu0 0.0
    %1533 = vmatprep.subr.mxu0 0.0
    %1534 = vmatpush1.msra.mxu0 0.0
    %1535 = vmatprep.subr.mxu0 0.0
    %1536 = vmatpush1.msra.mxu0 0.0
    %1537 = vmatprep.subr.mxu0 0.0
    %1538 = vmatpush1.msra.mxu0 0.0
    %1539 = vmatprep.subr.mxu0 0.0
    %1540 = vmatpush1.msra.mxu0 0.0
    %1541 = vmatprep.mubr.f32.mxu0 0.0
    %1542 = vmatmul.mubr.f32.gmra.mrb[0].mxu0 %v1377
    %v1543 = vpop.f32.mrb[0].mxu0
    %v1544 = vadd.f32 0.0, %v1543
    %v1545 = vpop.f32.mrb[0].mxu0
    %v1546 = vadd.f32 0.0, %v1545
    %1547 = vmatprep.mubr.f32.mxu0 0.0
    %1548 = vmatmul.mubr.f32.gmra.mrb[0].mxu0 %v1380
    %v1549 = vpop.f32.mrb[0].mxu0
    %v1550 = vadd.f32 0.0, %v1549
    %v1551 = vpop.f32.mrb[0].mxu0
    %v1552 = vadd.f32 0.0, %v1551
    %1553 = vmatprep.mubr.f32.mxu0 0.0
    %1554 = vmatmul.mubr.f32.gmra.mrb[0].mxu0 %v1383
    %v1555 = vpop.f32.mrb[0].mxu0
    %v1556 = vadd.f32 0.0, %v1555
    %v1557 = vpop.f32.mrb[0].mxu0
    %v1558 = vadd.f32 0.0, %v1557
    %1559 = vmatprep.mubr.f32.mxu0 0.0
    %1560 = vmatmul.mubr.f32.gmra.mrb[0].mxu0 %v1386
    %v1561 = vpop.f32.mrb[0].mxu0
    %v1562 = vadd.f32 0.0, %v1561
    %v1563 = vpop.f32.mrb[0].mxu0
    %v1564 = vadd.f32 0.0, %v1563
    %1565 = vdwg.mxu0
    %v1566 = vadd.f32 %v1267, %v1455
    %v1567 = vadd.f32 %v1268, %v1457
    %v1568 = vadd.f32 %v1269, %v1544
    %v1569 = vadd.f32 %v1270, %v1546
    %v1570 = vadd.f32 %v1271, %v1461
    %v1571 = vadd.f32 %v1272, %v1463
    %v1572 = vadd.f32 %v1273, %v1550
    %v1573 = vadd.f32 %v1274, %v1552
    %v1574 = vadd.f32 %v1275, %v1467
    %v1575 = vadd.f32 %v1276, %v1469
    %v1576 = vadd.f32 %v1277, %v1556
    %v1577 = vadd.f32 %v1278, %v1558
    %v1578 = vadd.f32 %v1279, %v1473
    %v1579 = vadd.f32 %v1280, %v1475
    %v1580 = vadd.f32 %v1281, %v1562
    %v1581 = vadd.f32 %v1282, %v1564
    %1582 = vrot.lane.b32.xlu0 %v379, 15
    %v1583 = vpop.permute.xlu0 %1582
    %1584 = vrot.lane.b32.xlu0 %v383, 15
    %v1585 = vpop.permute.xlu0 %1584
    %1586 = vrot.lane.b32.xlu0 %v387, 15
    %v1587 = vpop.permute.xlu0 %1586
    %1588 = vrot.lane.b32.xlu0 %v391, 15
    %v1589 = vpop.permute.xlu0 %1588
    %1590 = vrot.lane.b32.xlu0 %v380, 15
    %v1591 = vpop.permute.xlu0 %1590
    %1592 = vrot.lane.b32.xlu0 %v384, 15
    %v1593 = vpop.permute.xlu0 %1592
    %1594 = vrot.lane.b32.xlu0 %v388, 15
    %v1595 = vpop.permute.xlu0 %1594
    %1596 = vrot.lane.b32.xlu0 %v392, 15
    %v1597 = vpop.permute.xlu0 %1596
    %1598 = vrot.lane.b32.xlu0 %v381, 15
    %v1599 = vpop.permute.xlu0 %1598
    %1600 = vrot.lane.b32.xlu0 %v385, 15
    %v1601 = vpop.permute.xlu0 %1600
    %1602 = vrot.lane.b32.xlu0 %v389, 15
    %v1603 = vpop.permute.xlu0 %1602
    %1604 = vrot.lane.b32.xlu0 %v393, 15
    %v1605 = vpop.permute.xlu0 %1604
    %1606 = vrot.lane.b32.xlu0 %v382, 15
    %v1607 = vpop.permute.xlu0 %1606
    %1608 = vrot.lane.b32.xlu0 %v386, 15
    %v1609 = vpop.permute.xlu0 %1608
    %1610 = vrot.lane.b32.xlu0 %v390, 15
    %v1611 = vpop.permute.xlu0 %1610
    %1612 = vrot.lane.b32.xlu0 %v394, 15
    %v1613 = vpop.permute.xlu0 %1612
    %vm1614 = vcmp.lt.s32.totalorder %v1017, 15
    %v1615 = vsel %vm1614, %v1599, %v1607
    %v1616 = vsel %vm1614, %v1601, %v1609
    %v1617 = vsel %vm1614, %v1603, %v1611
    %v1618 = vsel %vm1614, %v1605, %v1613
    %v1619 = vsel %vm1614, %v1591, %v1599
    %v1620 = vsel %vm1614, %v1593, %v1601
    %v1621 = vsel %vm1614, %v1595, %v1603
    %v1622 = vsel %vm1614, %v1597, %v1605
    %v1623 = vsel %vm1614, %v1583, %v1591
    %v1624 = vsel %vm1614, %v1585, %v1593
    %v1625 = vsel %vm1614, %v1587, %v1595
    %v1626 = vsel %vm1614, %v1589, %v1597
    %v1627 = vsel %vm1614, %v1607, %v1583
    %v1628 = vsel %vm1614, %v1609, %v1585
    %v1629 = vsel %vm1614, %v1611, %v1587
    %v1630 = vsel %vm1614, %v1613, %v1589
    %s1631 = scalar_lea.vmem %s1, 2
    %v1632 = vld [vmem:[%s1631] ss:$8 sm:$0xf]
    %s1633 = scalar_lea.vmem [#allocation2], 64
    %v1634 = vld [vmem:[%s1633] sm:$0xff]
    %v1635 = vld [vmem:[%s1633 + $0x8] sm:$0xff]
    %v1636 = vld [vmem:[%s1633 + $0x10] sm:$0xff]
    %v1637 = vld [vmem:[%s1633 + $0x18] sm:$0xff]
    %v1639 = vlaneseq
    %v1640 = vshrl.u32 %v1639, 7
    %v1641 = vsub.s32 0, %v1640
    %v1642 = vrot.slane %v1632, %v1641
    %v1643 = vlaneseq
    %v1644 = vshrl.u32 %v1643, 7
    %v1645 = vsub.s32 1, %v1644
    %v1646 = vrot.slane %v1632, %v1645
    %v1647 = vlaneseq
    %v1648 = vshrl.u32 %v1647, 7
    %v1649 = vsub.s32 2, %v1648
    %v1650 = vrot.slane %v1632, %v1649
    %v1651 = vlaneseq
    %v1652 = vshrl.u32 %v1651, 7
    %v1653 = vsub.s32 3, %v1652
    %v1654 = vrot.slane %v1632, %v1653
    %v1659 = vmul.f32 %v1627, %v1642
    %v1660 = vmul.f32 %v1623, %v1646
    %v1661 = vmul.f32 %v1619, %v1650
    %v1662 = vmul.f32 %v1615, %v1654
    %v1663 = vmul.f32 %v1628, %v1642
    %v1664 = vmul.f32 %v1624, %v1646
    %v1665 = vmul.f32 %v1620, %v1650
    %v1666 = vmul.f32 %v1616, %v1654
    %v1667 = vmul.f32 %v1629, %v1642
    %v1668 = vmul.f32 %v1625, %v1646
    %v1669 = vmul.f32 %v1621, %v1650
    %v1670 = vmul.f32 %v1617, %v1654
    %v1671 = vmul.f32 %v1630, %v1642
    %v1672 = vmul.f32 %v1626, %v1646
    %v1673 = vmul.f32 %v1622, %v1650
    %v1674 = vmul.f32 %v1618, %v1654
    %v1676 = vsel %vm753, %v1634, 0
    %v1679 = vsel %vm753, %v1635, 0
    %v1682 = vsel %vm753, %v1636, 0
    %v1685 = vsel %vm753, %v1637, 0
    %1687 = vmatprep.subr.mxu0 %v1660
    %1688 = vmatpush1.msra.mxu0 %v1659
    %1689 = vmatprep.subr.mxu0 %v1664
    %1690 = vmatpush1.msra.mxu0 %v1663
    %1691 = vmatprep.subr.mxu0 %v1668
    %1692 = vmatpush1.msra.mxu0 %v1667
    %1693 = vmatprep.subr.mxu0 %v1672
    %1694 = vmatpush1.msra.mxu0 %v1671
    %1695 = vmatprep.subr.mxu0 0.0
    %1696 = vmatpush1.msra.mxu0 0.0
    %1697 = vmatprep.subr.mxu0 0.0
    %1698 = vmatpush1.msra.mxu0 0.0
    %1699 = vmatprep.subr.mxu0 0.0
    %1700 = vmatpush1.msra.mxu0 0.0
    %1701 = vmatprep.subr.mxu0 0.0
    %1702 = vmatpush1.msra.mxu0 0.0
    %1703 = vmatprep.subr.mxu0 0.0
    %1704 = vmatpush1.msra.mxu0 0.0
    %1705 = vmatprep.subr.mxu0 0.0
    %1706 = vmatpush1.msra.mxu0 0.0
    %1707 = vmatprep.subr.mxu0 0.0
    %1708 = vmatpush1.msra.mxu0 0.0
    %1709 = vmatprep.subr.mxu0 0.0
    %1710 = vmatpush1.msra.mxu0 0.0
    %1711 = vmatprep.subr.mxu0 0.0
    %1712 = vmatpush1.msra.mxu0 0.0
    %1713 = vmatprep.subr.mxu0 0.0
    %1714 = vmatpush1.msra.mxu0 0.0
    %1715 = vmatprep.subr.mxu0 0.0
    %1716 = vmatpush1.msra.mxu0 0.0
    %1717 = vmatprep.subr.mxu0 0.0
    %1718 = vmatpush1.msra.mxu0 0.0
    %1719 = vmatprep.subr.mxu0 0.0
    %1720 = vmatpush1.msra.mxu0 0.0
    %1721 = vmatprep.subr.mxu0 0.0
    %1722 = vmatpush1.msra.mxu0 0.0
    %1723 = vmatprep.subr.mxu0 0.0
    %1724 = vmatpush1.msra.mxu0 0.0
    %1725 = vmatprep.subr.mxu0 0.0
    %1726 = vmatpush1.msra.mxu0 0.0
    %1727 = vmatprep.subr.mxu0 0.0
    %1728 = vmatpush1.msra.mxu0 0.0
    %1729 = vmatprep.subr.mxu0 0.0
    %1730 = vmatpush1.msra.mxu0 0.0
    %1731 = vmatprep.subr.mxu0 0.0
    %1732 = vmatpush1.msra.mxu0 0.0
    %1733 = vmatprep.subr.mxu0 0.0
    %1734 = vmatpush1.msra.mxu0 0.0
    %1735 = vmatprep.subr.mxu0 0.0
    %1736 = vmatpush1.msra.mxu0 0.0
    %1737 = vmatprep.subr.mxu0 0.0
    %1738 = vmatpush1.msra.mxu0 0.0
    %1739 = vmatprep.subr.mxu0 0.0
    %1740 = vmatpush1.msra.mxu0 0.0
    %1741 = vmatprep.subr.mxu0 0.0
    %1742 = vmatpush1.msra.mxu0 0.0
    %1743 = vmatprep.subr.mxu0 0.0
    %1744 = vmatpush1.msra.mxu0 0.0
    %1745 = vmatprep.subr.mxu0 0.0
    %1746 = vmatpush1.msra.mxu0 0.0
    %1747 = vmatprep.subr.mxu0 0.0
    %1748 = vmatpush1.msra.mxu0 0.0
    %1749 = vmatprep.subr.mxu0 0.0
    %1750 = vmatpush1.msra.mxu0 0.0
    %1751 = vmatprep.mubr.f32.mxu0 0.0
    %1752 = vmatmul.mubr.f32.gmra.mrb[0].mxu0 %v1676
    %v1753 = vpop.f32.mrb[0].mxu0
    %v1754 = vadd.f32 0.0, %v1753
    %v1755 = vpop.f32.mrb[0].mxu0
    %v1756 = vadd.f32 0.0, %v1755
    %1757 = vmatprep.mubr.f32.mxu0 0.0
    %1758 = vmatmul.mubr.f32.gmra.mrb[0].mxu0 %v1679
    %v1759 = vpop.f32.mrb[0].mxu0
    %v1760 = vadd.f32 0.0, %v1759
    %v1761 = vpop.f32.mrb[0].mxu0
    %v1762 = vadd.f32 0.0, %v1761
    %1763 = vmatprep.mubr.f32.mxu0 0.0
    %1764 = vmatmul.mubr.f32.gmra.mrb[0].mxu0 %v1682
    %v1765 = vpop.f32.mrb[0].mxu0
    %v1766 = vadd.f32 0.0, %v1765
    %v1767 = vpop.f32.mrb[0].mxu0
    %v1768 = vadd.f32 0.0, %v1767
    %1769 = vmatprep.mubr.f32.mxu0 0.0
    %1770 = vmatmul.mubr.f32.gmra.mrb[0].mxu0 %v1685
    %v1771 = vpop.f32.mrb[0].mxu0
    %v1772 = vadd.f32 0.0, %v1771
    %v1773 = vpop.f32.mrb[0].mxu0
    %v1774 = vadd.f32 0.0, %v1773
    %1775 = vdwg.mxu0
    %1776 = vmatprep.subr.mxu0 %v1662
    %1777 = vmatpush1.msra.mxu0 %v1661
    %1778 = vmatprep.subr.mxu0 %v1666
    %1779 = vmatpush1.msra.mxu0 %v1665
    %1780 = vmatprep.subr.mxu0 %v1670
    %1781 = vmatpush1.msra.mxu0 %v1669
    %1782 = vmatprep.subr.mxu0 %v1674
    %1783 = vmatpush1.msra.mxu0 %v1673
    %1784 = vmatprep.subr.mxu0 0.0
    %1785 = vmatpush1.msra.mxu0 0.0
    %1786 = vmatprep.subr.mxu0 0.0
    %1787 = vmatpush1.msra.mxu0 0.0
    %1788 = vmatprep.subr.mxu0 0.0
    %1789 = vmatpush1.msra.mxu0 0.0
    %1790 = vmatprep.subr.mxu0 0.0
    %1791 = vmatpush1.msra.mxu0 0.0
    %1792 = vmatprep.subr.mxu0 0.0
    %1793 = vmatpush1.msra.mxu0 0.0
    %1794 = vmatprep.subr.mxu0 0.0
    %1795 = vmatpush1.msra.mxu0 0.0
    %1796 = vmatprep.subr.mxu0 0.0
    %1797 = vmatpush1.msra.mxu0 0.0
    %1798 = vmatprep.subr.mxu0 0.0
    %1799 = vmatpush1.msra.mxu0 0.0
    %1800 = vmatprep.subr.mxu0 0.0
    %1801 = vmatpush1.msra.mxu0 0.0
    %1802 = vmatprep.subr.mxu0 0.0
    %1803 = vmatpush1.msra.mxu0 0.0
    %1804 = vmatprep.subr.mxu0 0.0
    %1805 = vmatpush1.msra.mxu0 0.0
    %1806 = vmatprep.subr.mxu0 0.0
    %1807 = vmatpush1.msra.mxu0 0.0
    %1808 = vmatprep.subr.mxu0 0.0
    %1809 = vmatpush1.msra.mxu0 0.0
    %1810 = vmatprep.subr.mxu0 0.0
    %1811 = vmatpush1.msra.mxu0 0.0
    %1812 = vmatprep.subr.mxu0 0.0
    %1813 = vmatpush1.msra.mxu0 0.0
    %1814 = vmatprep.subr.mxu0 0.0
    %1815 = vmatpush1.msra.mxu0 0.0
    %1816 = vmatprep.subr.mxu0 0.0
    %1817 = vmatpush1.msra.mxu0 0.0
    %1818 = vmatprep.subr.mxu0 0.0
    %1819 = vmatpush1.msra.mxu0 0.0
    %1820 = vmatprep.subr.mxu0 0.0
    %1821 = vmatpush1.msra.mxu0 0.0
    %1822 = vmatprep.subr.mxu0 0.0
    %1823 = vmatpush1.msra.mxu0 0.0
    %1824 = vmatprep.subr.mxu0 0.0
    %1825 = vmatpush1.msra.mxu0 0.0
    %1826 = vmatprep.subr.mxu0 0.0
    %1827 = vmatpush1.msra.mxu0 0.0
    %1828 = vmatprep.subr.mxu0 0.0
    %1829 = vmatpush1.msra.mxu0 0.0
    %1830 = vmatprep.subr.mxu0 0.0
    %1831 = vmatpush1.msra.mxu0 0.0
    %1832 = vmatprep.subr.mxu0 0.0
    %1833 = vmatpush1.msra.mxu0 0.0
    %1834 = vmatprep.subr.mxu0 0.0
    %1835 = vmatpush1.msra.mxu0 0.0
    %1836 = vmatprep.subr.mxu0 0.0
    %1837 = vmatpush1.msra.mxu0 0.0
    %1838 = vmatprep.subr.mxu0 0.0
    %1839 = vmatpush1.msra.mxu0 0.0
    %1840 = vmatprep.mubr.f32.mxu0 0.0
    %1841 = vmatmul.mubr.f32.gmra.mrb[0].mxu0 %v1676
    %v1842 = vpop.f32.mrb[0].mxu0
    %v1843 = vadd.f32 0.0, %v1842
    %v1844 = vpop.f32.mrb[0].mxu0
    %v1845 = vadd.f32 0.0, %v1844
    %1846 = vmatprep.mubr.f32.mxu0 0.0
    %1847 = vmatmul.mubr.f32.gmra.mrb[0].mxu0 %v1679
    %v1848 = vpop.f32.mrb[0].mxu0
    %v1849 = vadd.f32 0.0, %v1848
    %v1850 = vpop.f32.mrb[0].mxu0
    %v1851 = vadd.f32 0.0, %v1850
    %1852 = vmatprep.mubr.f32.mxu0 0.0
    %1853 = vmatmul.mubr.f32.gmra.mrb[0].mxu0 %v1682
    %v1854 = vpop.f32.mrb[0].mxu0
    %v1855 = vadd.f32 0.0, %v1854
    %v1856 = vpop.f32.mrb[0].mxu0
    %v1857 = vadd.f32 0.0, %v1856
    %1858 = vmatprep.mubr.f32.mxu0 0.0
    %1859 = vmatmul.mubr.f32.gmra.mrb[0].mxu0 %v1685
    %v1860 = vpop.f32.mrb[0].mxu0
    %v1861 = vadd.f32 0.0, %v1860
    %v1862 = vpop.f32.mrb[0].mxu0
    %v1863 = vadd.f32 0.0, %v1862
    %1864 = vdwg.mxu0
    %v1865 = vadd.f32 %v1566, %v1754
    %v1866 = vadd.f32 %v1567, %v1756
    %v1867 = vadd.f32 %v1568, %v1843
    %v1868 = vadd.f32 %v1569, %v1845
    %v1869 = vadd.f32 %v1570, %v1760
    %v1870 = vadd.f32 %v1571, %v1762
    %v1871 = vadd.f32 %v1572, %v1849
    %v1872 = vadd.f32 %v1573, %v1851
    %v1873 = vadd.f32 %v1574, %v1766
    %v1874 = vadd.f32 %v1575, %v1768
    %v1875 = vadd.f32 %v1576, %v1855
    %v1876 = vadd.f32 %v1577, %v1857
    %v1877 = vadd.f32 %v1578, %v1772
    %v1878 = vadd.f32 %v1579, %v1774
    %v1879 = vadd.f32 %v1580, %v1861
    %v1880 = vadd.f32 %v1581, %v1863
    %1881 = vrot.lane.b32.xlu0 %v379, 1
    %v1882 = vpop.permute.xlu0 %1881
    %1883 = vrot.lane.b32.xlu0 %v383, 1
    %v1884 = vpop.permute.xlu0 %1883
    %1885 = vrot.lane.b32.xlu0 %v387, 1
    %v1886 = vpop.permute.xlu0 %1885
    %1887 = vrot.lane.b32.xlu0 %v391, 1
    %v1888 = vpop.permute.xlu0 %1887
    %1889 = vrot.lane.b32.xlu0 %v380, 1
    %v1890 = vpop.permute.xlu0 %1889
    %1891 = vrot.lane.b32.xlu0 %v384, 1
    %v1892 = vpop.permute.xlu0 %1891
    %1893 = vrot.lane.b32.xlu0 %v388, 1
    %v1894 = vpop.permute.xlu0 %1893
    %1895 = vrot.lane.b32.xlu0 %v392, 1
    %v1896 = vpop.permute.xlu0 %1895
    %1897 = vrot.lane.b32.xlu0 %v381, 1
    %v1898 = vpop.permute.xlu0 %1897
    %1899 = vrot.lane.b32.xlu0 %v385, 1
    %v1900 = vpop.permute.xlu0 %1899
    %1901 = vrot.lane.b32.xlu0 %v389, 1
    %v1902 = vpop.permute.xlu0 %1901
    %1903 = vrot.lane.b32.xlu0 %v393, 1
    %v1904 = vpop.permute.xlu0 %1903
    %1905 = vrot.lane.b32.xlu0 %v382, 1
    %v1906 = vpop.permute.xlu0 %1905
    %1907 = vrot.lane.b32.xlu0 %v386, 1
    %v1908 = vpop.permute.xlu0 %1907
    %1909 = vrot.lane.b32.xlu0 %v390, 1
    %v1910 = vpop.permute.xlu0 %1909
    %1911 = vrot.lane.b32.xlu0 %v394, 1
    %v1912 = vpop.permute.xlu0 %1911
    %vm1913 = vcmp.lt.s32.totalorder %v1017, 1
    %v1914 = vsel %vm1913, %v1898, %v1906
    %v1915 = vsel %vm1913, %v1900, %v1908
    %v1916 = vsel %vm1913, %v1902, %v1910
    %v1917 = vsel %vm1913, %v1904, %v1912
    %v1918 = vsel %vm1913, %v1890, %v1898
    %v1919 = vsel %vm1913, %v1892, %v1900
    %v1920 = vsel %vm1913, %v1894, %v1902
    %v1921 = vsel %vm1913, %v1896, %v1904
    %v1922 = vsel %vm1913, %v1882, %v1890
    %v1923 = vsel %vm1913, %v1884, %v1892
    %v1924 = vsel %vm1913, %v1886, %v1894
    %v1925 = vsel %vm1913, %v1888, %v1896
    %v1926 = vsel %vm1913, %v1906, %v1882
    %v1927 = vsel %vm1913, %v1908, %v1884
    %v1928 = vsel %vm1913, %v1910, %v1886
    %v1929 = vsel %vm1913, %v1912, %v1888
    %s1930 = scalar_lea.vmem %s1, 3
    %v1931 = vld [vmem:[%s1930] ss:$8 sm:$0xf]
    %s1932 = scalar_lea.vmem [#allocation2], 96
    %v1933 = vld [vmem:[%s1932] sm:$0xff]
    %v1934 = vld [vmem:[%s1932 + $0x8] sm:$0xff]
    %v1935 = vld [vmem:[%s1932 + $0x10] sm:$0xff]
    %v1936 = vld [vmem:[%s1932 + $0x18] sm:$0xff]
    %v1938 = vlaneseq
    %v1939 = vshrl.u32 %v1938, 7
    %v1940 = vsub.s32 0, %v1939
    %v1941 = vrot.slane %v1931, %v1940
    %v1942 = vlaneseq
    %v1943 = vshrl.u32 %v1942, 7
    %v1944 = vsub.s32 1, %v1943
    %v1945 = vrot.slane %v1931, %v1944
    %v1946 = vlaneseq
    %v1947 = vshrl.u32 %v1946, 7
    %v1948 = vsub.s32 2, %v1947
    %v1949 = vrot.slane %v1931, %v1948
    %v1950 = vlaneseq
    %v1951 = vshrl.u32 %v1950, 7
    %v1952 = vsub.s32 3, %v1951
    %v1953 = vrot.slane %v1931, %v1952
    %v1958 = vmul.f32 %v1926, %v1941
    %v1959 = vmul.f32 %v1922, %v1945
    %v1960 = vmul.f32 %v1918, %v1949
    %v1961 = vmul.f32 %v1914, %v1953
    %v1962 = vmul.f32 %v1927, %v1941
    %v1963 = vmul.f32 %v1923, %v1945
    %v1964 = vmul.f32 %v1919, %v1949
    %v1965 = vmul.f32 %v1915, %v1953
    %v1966 = vmul.f32 %v1928, %v1941
    %v1967 = vmul.f32 %v1924, %v1945
    %v1968 = vmul.f32 %v1920, %v1949
    %v1969 = vmul.f32 %v1916, %v1953
    %v1970 = vmul.f32 %v1929, %v1941
    %v1971 = vmul.f32 %v1925, %v1945
    %v1972 = vmul.f32 %v1921, %v1949
    %v1973 = vmul.f32 %v1917, %v1953
    %v1975 = vsel %vm753, %v1933, 0
    %v1978 = vsel %vm753, %v1934, 0
    %v1981 = vsel %vm753, %v1935, 0
    %v1984 = vsel %vm753, %v1936, 0
    %1986 = vmatprep.subr.mxu0 %v1959
    %1987 = vmatpush1.msra.mxu0 %v1958
    %1988 = vmatprep.subr.mxu0 %v1963
    %1989 = vmatpush1.msra.mxu0 %v1962
    %1990 = vmatprep.subr.mxu0 %v1967
    %1991 = vmatpush1.msra.mxu0 %v1966
    %1992 = vmatprep.subr.mxu0 %v1971
    %1993 = vmatpush1.msra.mxu0 %v1970
    %1994 = vmatprep.subr.mxu0 0.0
    %1995 = vmatpush1.msra.mxu0 0.0
    %1996 = vmatprep.subr.mxu0 0.0
    %1997 = vmatpush1.msra.mxu0 0.0
    %1998 = vmatprep.subr.mxu0 0.0
    %1999 = vmatpush1.msra.mxu0 0.0
    %2000 = vmatprep.subr.mxu0 0.0
    %2001 = vmatpush1.msra.mxu0 0.0
    %2002 = vmatprep.subr.mxu0 0.0
    %2003 = vmatpush1.msra.mxu0 0.0
    %2004 = vmatprep.subr.mxu0 0.0
    %2005 = vmatpush1.msra.mxu0 0.0
    %2006 = vmatprep.subr.mxu0 0.0
    %2007 = vmatpush1.msra.mxu0 0.0
    %2008 = vmatprep.subr.mxu0 0.0
    %2009 = vmatpush1.msra.mxu0 0.0
    %2010 = vmatprep.subr.mxu0 0.0
    %2011 = vmatpush1.msra.mxu0 0.0
    %2012 = vmatprep.subr.mxu0 0.0
    %2013 = vmatpush1.msra.mxu0 0.0
    %2014 = vmatprep.subr.mxu0 0.0
    %2015 = vmatpush1.msra.mxu0 0.0
    %2016 = vmatprep.subr.mxu0 0.0
    %2017 = vmatpush1.msra.mxu0 0.0
    %2018 = vmatprep.subr.mxu0 0.0
    %2019 = vmatpush1.msra.mxu0 0.0
    %2020 = vmatprep.subr.mxu0 0.0
    %2021 = vmatpush1.msra.mxu0 0.0
    %2022 = vmatprep.subr.mxu0 0.0
    %2023 = vmatpush1.msra.mxu0 0.0
    %2024 = vmatprep.subr.mxu0 0.0
    %2025 = vmatpush1.msra.mxu0 0.0
    %2026 = vmatprep.subr.mxu0 0.0
    %2027 = vmatpush1.msra.mxu0 0.0
    %2028 = vmatprep.subr.mxu0 0.0
    %2029 = vmatpush1.msra.mxu0 0.0
    %2030 = vmatprep.subr.mxu0 0.0
    %2031 = vmatpush1.msra.mxu0 0.0
    %2032 = vmatprep.subr.mxu0 0.0
    %2033 = vmatpush1.msra.mxu0 0.0
    %2034 = vmatprep.subr.mxu0 0.0
    %2035 = vmatpush1.msra.mxu0 0.0
    %2036 = vmatprep.subr.mxu0 0.0
    %2037 = vmatpush1.msra.mxu0 0.0
    %2038 = vmatprep.subr.mxu0 0.0
    %2039 = vmatpush1.msra.mxu0 0.0
    %2040 = vmatprep.subr.mxu0 0.0
    %2041 = vmatpush1.msra.mxu0 0.0
    %2042 = vmatprep.subr.mxu0 0.0
    %2043 = vmatpush1.msra.mxu0 0.0
    %2044 = vmatprep.subr.mxu0 0.0
    %2045 = vmatpush1.msra.mxu0 0.0
    %2046 = vmatprep.subr.mxu0 0.0
    %2047 = vmatpush1.msra.mxu0 0.0
    %2048 = vmatprep.subr.mxu0 0.0
    %2049 = vmatpush1.msra.mxu0 0.0
    %2050 = vmatprep.mubr.f32.mxu0 0.0
    %2051 = vmatmul.mubr.f32.gmra.mrb[0].mxu0 %v1975
    %v2052 = vpop.f32.mrb[0].mxu0
    %v2053 = vadd.f32 0.0, %v2052
    %v2054 = vpop.f32.mrb[0].mxu0
    %v2055 = vadd.f32 0.0, %v2054
    %2056 = vmatprep.mubr.f32.mxu0 0.0
    %2057 = vmatmul.mubr.f32.gmra.mrb[0].mxu0 %v1978
    %v2058 = vpop.f32.mrb[0].mxu0
    %v2059 = vadd.f32 0.0, %v2058
    %v2060 = vpop.f32.mrb[0].mxu0
    %v2061 = vadd.f32 0.0, %v2060
    %2062 = vmatprep.mubr.f32.mxu0 0.0
    %2063 = vmatmul.mubr.f32.gmra.mrb[0].mxu0 %v1981
    %v2064 = vpop.f32.mrb[0].mxu0
    %v2065 = vadd.f32 0.0, %v2064
    %v2066 = vpop.f32.mrb[0].mxu0
    %v2067 = vadd.f32 0.0, %v2066
    %2068 = vmatprep.mubr.f32.mxu0 0.0
    %2069 = vmatmul.mubr.f32.gmra.mrb[0].mxu0 %v1984
    %v2070 = vpop.f32.mrb[0].mxu0
    %v2071 = vadd.f32 0.0, %v2070
    %v2072 = vpop.f32.mrb[0].mxu0
    %v2073 = vadd.f32 0.0, %v2072
    %2074 = vdwg.mxu0
    %2075 = vmatprep.subr.mxu0 %v1961
    %2076 = vmatpush1.msra.mxu0 %v1960
    %2077 = vmatprep.subr.mxu0 %v1965
    %2078 = vmatpush1.msra.mxu0 %v1964
    %2079 = vmatprep.subr.mxu0 %v1969
    %2080 = vmatpush1.msra.mxu0 %v1968
    %2081 = vmatprep.subr.mxu0 %v1973
    %2082 = vmatpush1.msra.mxu0 %v1972
    %2083 = vmatprep.subr.mxu0 0.0
    %2084 = vmatpush1.msra.mxu0 0.0
    %2085 = vmatprep.subr.mxu0 0.0
    %2086 = vmatpush1.msra.mxu0 0.0
    %2087 = vmatprep.subr.mxu0 0.0
    %2088 = vmatpush1.msra.mxu0 0.0
    %2089 = vmatprep.subr.mxu0 0.0
    %2090 = vmatpush1.msra.mxu0 0.0
    %2091 = vmatprep.subr.mxu0 0.0
    %2092 = vmatpush1.msra.mxu0 0.0
    %2093 = vmatprep.subr.mxu0 0.0
    %2094 = vmatpush1.msra.mxu0 0.0
    %2095 = vmatprep.subr.mxu0 0.0
    %2096 = vmatpush1.msra.mxu0 0.0
    %2097 = vmatprep.subr.mxu0 0.0
    %2098 = vmatpush1.msra.mxu0 0.0
    %2099 = vmatprep.subr.mxu0 0.0
    %2100 = vmatpush1.msra.mxu0 0.0
    %2101 = vmatprep.subr.mxu0 0.0
    %2102 = vmatpush1.msra.mxu0 0.0
    %2103 = vmatprep.subr.mxu0 0.0
    %2104 = vmatpush1.msra.mxu0 0.0
    %2105 = vmatprep.subr.mxu0 0.0
    %2106 = vmatpush1.msra.mxu0 0.0
    %2107 = vmatprep.subr.mxu0 0.0
    %2108 = vmatpush1.msra.mxu0 0.0
    %2109 = vmatprep.subr.mxu0 0.0
    %2110 = vmatpush1.msra.mxu0 0.0
    %2111 = vmatprep.subr.mxu0 0.0
    %2112 = vmatpush1.msra.mxu0 0.0
    %2113 = vmatprep.subr.mxu0 0.0
    %2114 = vmatpush1.msra.mxu0 0.0
    %2115 = vmatprep.subr.mxu0 0.0
    %2116 = vmatpush1.msra.mxu0 0.0
    %2117 = vmatprep.subr.mxu0 0.0
    %2118 = vmatpush1.msra.mxu0 0.0
    %2119 = vmatprep.subr.mxu0 0.0
    %2120 = vmatpush1.msra.mxu0 0.0
    %2121 = vmatprep.subr.mxu0 0.0
    %2122 = vmatpush1.msra.mxu0 0.0
    %2123 = vmatprep.subr.mxu0 0.0
    %2124 = vmatpush1.msra.mxu0 0.0
    %2125 = vmatprep.subr.mxu0 0.0
    %2126 = vmatpush1.msra.mxu0 0.0
    %2127 = vmatprep.subr.mxu0 0.0
    %2128 = vmatpush1.msra.mxu0 0.0
    %2129 = vmatprep.subr.mxu0 0.0
    %2130 = vmatpush1.msra.mxu0 0.0
    %2131 = vmatprep.subr.mxu0 0.0
    %2132 = vmatpush1.msra.mxu0 0.0
    %2133 = vmatprep.subr.mxu0 0.0
    %2134 = vmatpush1.msra.mxu0 0.0
    %2135 = vmatprep.subr.mxu0 0.0
    %2136 = vmatpush1.msra.mxu0 0.0
    %2137 = vmatprep.subr.mxu0 0.0
    %2138 = vmatpush1.msra.mxu0 0.0
    %2139 = vmatprep.mubr.f32.mxu0 0.0
    %2140 = vmatmul.mubr.f32.gmra.mrb[0].mxu0 %v1975
    %v2141 = vpop.f32.mrb[0].mxu0
    %v2142 = vadd.f32 0.0, %v2141
    %v2143 = vpop.f32.mrb[0].mxu0
    %v2144 = vadd.f32 0.0, %v2143
    %2145 = vmatprep.mubr.f32.mxu0 0.0
    %2146 = vmatmul.mubr.f32.gmra.mrb[0].mxu0 %v1978
    %v2147 = vpop.f32.mrb[0].mxu0
    %v2148 = vadd.f32 0.0, %v2147
    %v2149 = vpop.f32.mrb[0].mxu0
    %v2150 = vadd.f32 0.0, %v2149
    %2151 = vmatprep.mubr.f32.mxu0 0.0
    %2152 = vmatmul.mubr.f32.gmra.mrb[0].mxu0 %v1981
    %v2153 = vpop.f32.mrb[0].mxu0
    %v2154 = vadd.f32 0.0, %v2153
    %v2155 = vpop.f32.mrb[0].mxu0
    %v2156 = vadd.f32 0.0, %v2155
    %2157 = vmatprep.mubr.f32.mxu0 0.0
    %2158 = vmatmul.mubr.f32.gmra.mrb[0].mxu0 %v1984
    %v2159 = vpop.f32.mrb[0].mxu0
    %v2160 = vadd.f32 0.0, %v2159
    %v2161 = vpop.f32.mrb[0].mxu0
    %v2162 = vadd.f32 0.0, %v2161
    %2163 = vdwg.mxu0
    %v2164 = vadd.f32 %v1865, %v2053
    %v2165 = vadd.f32 %v1866, %v2055
    %v2166 = vadd.f32 %v1867, %v2142
    %v2167 = vadd.f32 %v1868, %v2144
    %v2168 = vadd.f32 %v1869, %v2059
    %v2169 = vadd.f32 %v1870, %v2061
    %v2170 = vadd.f32 %v1871, %v2148
    %v2171 = vadd.f32 %v1872, %v2150
    %v2172 = vadd.f32 %v1873, %v2065
    %v2173 = vadd.f32 %v1874, %v2067
    %v2174 = vadd.f32 %v1875, %v2154
    %v2175 = vadd.f32 %v1876, %v2156
    %v2176 = vadd.f32 %v1877, %v2071
    %v2177 = vadd.f32 %v1878, %v2073
    %v2178 = vadd.f32 %v1879, %v2160
    %v2179 = vadd.f32 %v1880, %v2162
    %s2180 = scalar_lea.vmem %s1, 4
    %v2181 = vld [vmem:[%s2180] ss:$8 sm:$0xf]
    %s2182 = scalar_lea.vmem [#allocation2], 128
    %v2183 = vld [vmem:[%s2182] sm:$0xff]
    %v2184 = vld [vmem:[%s2182 + $0x8] sm:$0xff]
    %v2185 = vld [vmem:[%s2182 + $0x10] sm:$0xff]
    %v2186 = vld [vmem:[%s2182 + $0x18] sm:$0xff]
    %v2188 = vlaneseq
    %v2189 = vshrl.u32 %v2188, 7
    %v2190 = vsub.s32 0, %v2189
    %v2191 = vrot.slane %v2181, %v2190
    %v2192 = vlaneseq
    %v2193 = vshrl.u32 %v2192, 7
    %v2194 = vsub.s32 1, %v2193
    %v2195 = vrot.slane %v2181, %v2194
    %v2196 = vlaneseq
    %v2197 = vshrl.u32 %v2196, 7
    %v2198 = vsub.s32 2, %v2197
    %v2199 = vrot.slane %v2181, %v2198
    %v2200 = vlaneseq
    %v2201 = vshrl.u32 %v2200, 7
    %v2202 = vsub.s32 3, %v2201
    %v2203 = vrot.slane %v2181, %v2202
    %v2208 = vmul.f32 %v379, %v2191
    %v2209 = vmul.f32 %v380, %v2195
    %v2210 = vmul.f32 %v381, %v2199
    %v2211 = vmul.f32 %v382, %v2203
    %v2212 = vmul.f32 %v383, %v2191
    %v2213 = vmul.f32 %v384, %v2195
    %v2214 = vmul.f32 %v385, %v2199
    %v2215 = vmul.f32 %v386, %v2203
    %v2216 = vmul.f32 %v387, %v2191
    %v2217 = vmul.f32 %v388, %v2195
    %v2218 = vmul.f32 %v389, %v2199
    %v2219 = vmul.f32 %v390, %v2203
    %v2220 = vmul.f32 %v391, %v2191
    %v2221 = vmul.f32 %v392, %v2195
    %v2222 = vmul.f32 %v393, %v2199
    %v2223 = vmul.f32 %v394, %v2203
    %v2225 = vsel %vm753, %v2183, 0
    %v2228 = vsel %vm753, %v2184, 0
    %v2231 = vsel %vm753, %v2185, 0
    %v2234 = vsel %vm753, %v2186, 0
    %2236 = vmatprep.subr.mxu0 %v2209
    %2237 = vmatpush1.msra.mxu0 %v2208
    %2238 = vmatprep.subr.mxu0 %v2213
    %2239 = vmatpush1.msra.mxu0 %v2212
    %2240 = vmatprep.subr.mxu0 %v2217
    %2241 = vmatpush1.msra.mxu0 %v2216
    %2242 = vmatprep.subr.mxu0 %v2221
    %2243 = vmatpush1.msra.mxu0 %v2220
    %2244 = vmatprep.subr.mxu0 0.0
    %2245 = vmatpush1.msra.mxu0 0.0
    %2246 = vmatprep.subr.mxu0 0.0
    %2247 = vmatpush1.msra.mxu0 0.0
    %2248 = vmatprep.subr.mxu0 0.0
    %2249 = vmatpush1.msra.mxu0 0.0
    %2250 = vmatprep.subr.mxu0 0.0
    %2251 = vmatpush1.msra.mxu0 0.0
    %2252 = vmatprep.subr.mxu0 0.0
    %2253 = vmatpush1.msra.mxu0 0.0
    %2254 = vmatprep.subr.mxu0 0.0
    %2255 = vmatpush1.msra.mxu0 0.0
    %2256 = vmatprep.subr.mxu0 0.0
    %2257 = vmatpush1.msra.mxu0 0.0
    %2258 = vmatprep.subr.mxu0 0.0
    %2259 = vmatpush1.msra.mxu0 0.0
    %2260 = vmatprep.subr.mxu0 0.0
    %2261 = vmatpush1.msra.mxu0 0.0
    %2262 = vmatprep.subr.mxu0 0.0
    %2263 = vmatpush1.msra.mxu0 0.0
    %2264 = vmatprep.subr.mxu0 0.0
    %2265 = vmatpush1.msra.mxu0 0.0
    %2266 = vmatprep.subr.mxu0 0.0
    %2267 = vmatpush1.msra.mxu0 0.0
    %2268 = vmatprep.subr.mxu0 0.0
    %2269 = vmatpush1.msra.mxu0 0.0
    %2270 = vmatprep.subr.mxu0 0.0
    %2271 = vmatpush1.msra.mxu0 0.0
    %2272 = vmatprep.subr.mxu0 0.0
    %2273 = vmatpush1.msra.mxu0 0.0
    %2274 = vmatprep.subr.mxu0 0.0
    %2275 = vmatpush1.msra.mxu0 0.0
    %2276 = vmatprep.subr.mxu0 0.0
    %2277 = vmatpush1.msra.mxu0 0.0
    %2278 = vmatprep.subr.mxu0 0.0
    %2279 = vmatpush1.msra.mxu0 0.0
    %2280 = vmatprep.subr.mxu0 0.0
    %2281 = vmatpush1.msra.mxu0 0.0
    %2282 = vmatprep.subr.mxu0 0.0
    %2283 = vmatpush1.msra.mxu0 0.0
    %2284 = vmatprep.subr.mxu0 0.0
    %2285 = vmatpush1.msra.mxu0 0.0
    %2286 = vmatprep.subr.mxu0 0.0
    %2287 = vmatpush1.msra.mxu0 0.0
    %2288 = vmatprep.subr.mxu0 0.0
    %2289 = vmatpush1.msra.mxu0 0.0
    %2290 = vmatprep.subr.mxu0 0.0
    %2291 = vmatpush1.msra.mxu0 0.0
    %2292 = vmatprep.subr.mxu0 0.0
    %2293 = vmatpush1.msra.mxu0 0.0
    %2294 = vmatprep.subr.mxu0 0.0
    %2295 = vmatpush1.msra.mxu0 0.0
    %2296 = vmatprep.subr.mxu0 0.0
    %2297 = vmatpush1.msra.mxu0 0.0
    %2298 = vmatprep.subr.mxu0 0.0
    %2299 = vmatpush1.msra.mxu0 0.0
    %2300 = vmatprep.mubr.f32.mxu0 0.0
    %2301 = vmatmul.mubr.f32.gmra.mrb[0].mxu0 %v2225
    %v2302 = vpop.f32.mrb[0].mxu0
    %v2303 = vadd.f32 0.0, %v2302
    %v2304 = vpop.f32.mrb[0].mxu0
    %v2305 = vadd.f32 0.0, %v2304
    %2306 = vmatprep.mubr.f32.mxu0 0.0
    %2307 = vmatmul.mubr.f32.gmra.mrb[0].mxu0 %v2228
    %v2308 = vpop.f32.mrb[0].mxu0
    %v2309 = vadd.f32 0.0, %v2308
    %v2310 = vpop.f32.mrb[0].mxu0
    %v2311 = vadd.f32 0.0, %v2310
    %2312 = vmatprep.mubr.f32.mxu0 0.0
    %2313 = vmatmul.mubr.f32.gmra.mrb[0].mxu0 %v2231
    %v2314 = vpop.f32.mrb[0].mxu0
    %v2315 = vadd.f32 0.0, %v2314
    %v2316 = vpop.f32.mrb[0].mxu0
    %v2317 = vadd.f32 0.0, %v2316
    %2318 = vmatprep.mubr.f32.mxu0 0.0
    %2319 = vmatmul.mubr.f32.gmra.mrb[0].mxu0 %v2234
    %v2320 = vpop.f32.mrb[0].mxu0
    %v2321 = vadd.f32 0.0, %v2320
    %v2322 = vpop.f32.mrb[0].mxu0
    %v2323 = vadd.f32 0.0, %v2322
    %2324 = vdwg.mxu0
    %2325 = vmatprep.subr.mxu0 %v2211
    %2326 = vmatpush1.msra.mxu0 %v2210
    %2327 = vmatprep.subr.mxu0 %v2215
    %2328 = vmatpush1.msra.mxu0 %v2214
    %2329 = vmatprep.subr.mxu0 %v2219
    %2330 = vmatpush1.msra.mxu0 %v2218
    %2331 = vmatprep.subr.mxu0 %v2223
    %2332 = vmatpush1.msra.mxu0 %v2222
    %2333 = vmatprep.subr.mxu0 0.0
    %2334 = vmatpush1.msra.mxu0 0.0
    %2335 = vmatprep.subr.mxu0 0.0
    %2336 = vmatpush1.msra.mxu0 0.0
    %2337 = vmatprep.subr.mxu0 0.0
    %2338 = vmatpush1.msra.mxu0 0.0
    %2339 = vmatprep.subr.mxu0 0.0
    %2340 = vmatpush1.msra.mxu0 0.0
    %2341 = vmatprep.subr.mxu0 0.0
    %2342 = vmatpush1.msra.mxu0 0.0
    %2343 = vmatprep.subr.mxu0 0.0
    %2344 = vmatpush1.msra.mxu0 0.0
    %2345 = vmatprep.subr.mxu0 0.0
    %2346 = vmatpush1.msra.mxu0 0.0
    %2347 = vmatprep.subr.mxu0 0.0
    %2348 = vmatpush1.msra.mxu0 0.0
    %2349 = vmatprep.subr.mxu0 0.0
    %2350 = vmatpush1.msra.mxu0 0.0
    %2351 = vmatprep.subr.mxu0 0.0
    %2352 = vmatpush1.msra.mxu0 0.0
    %2353 = vmatprep.subr.mxu0 0.0
    %2354 = vmatpush1.msra.mxu0 0.0
    %2355 = vmatprep.subr.mxu0 0.0
    %2356 = vmatpush1.msra.mxu0 0.0
    %2357 = vmatprep.subr.mxu0 0.0
    %2358 = vmatpush1.msra.mxu0 0.0
    %2359 = vmatprep.subr.mxu0 0.0
    %2360 = vmatpush1.msra.mxu0 0.0
    %2361 = vmatprep.subr.mxu0 0.0
    %2362 = vmatpush1.msra.mxu0 0.0
    %2363 = vmatprep.subr.mxu0 0.0
    %2364 = vmatpush1.msra.mxu0 0.0
    %2365 = vmatprep.subr.mxu0 0.0
    %2366 = vmatpush1.msra.mxu0 0.0
    %2367 = vmatprep.subr.mxu0 0.0
    %2368 = vmatpush1.msra.mxu0 0.0
    %2369 = vmatprep.subr.mxu0 0.0
    %2370 = vmatpush1.msra.mxu0 0.0
    %2371 = vmatprep.subr.mxu0 0.0
    %2372 = vmatpush1.msra.mxu0 0.0
    %2373 = vmatprep.subr.mxu0 0.0
    %2374 = vmatpush1.msra.mxu0 0.0
    %2375 = vmatprep.subr.mxu0 0.0
    %2376 = vmatpush1.msra.mxu0 0.0
    %2377 = vmatprep.subr.mxu0 0.0
    %2378 = vmatpush1.msra.mxu0 0.0
    %2379 = vmatprep.subr.mxu0 0.0
    %2380 = vmatpush1.msra.mxu0 0.0
    %2381 = vmatprep.subr.mxu0 0.0
    %2382 = vmatpush1.msra.mxu0 0.0
    %2383 = vmatprep.subr.mxu0 0.0
    %2384 = vmatpush1.msra.mxu0 0.0
    %2385 = vmatprep.subr.mxu0 0.0
    %2386 = vmatpush1.msra.mxu0 0.0
    %2387 = vmatprep.subr.mxu0 0.0
    %2388 = vmatpush1.msra.mxu0 0.0
    %2389 = vmatprep.mubr.f32.mxu0 0.0
    %2390 = vmatmul.mubr.f32.gmra.mrb[0].mxu0 %v2225
    %v2391 = vpop.f32.mrb[0].mxu0
    %v2392 = vadd.f32 0.0, %v2391
    %v2393 = vpop.f32.mrb[0].mxu0
    %v2394 = vadd.f32 0.0, %v2393
    %2395 = vmatprep.mubr.f32.mxu0 0.0
    %2396 = vmatmul.mubr.f32.gmra.mrb[0].mxu0 %v2228
    %v2397 = vpop.f32.mrb[0].mxu0
    %v2398 = vadd.f32 0.0, %v2397
    %v2399 = vpop.f32.mrb[0].mxu0
    %v2400 = vadd.f32 0.0, %v2399
    %2401 = vmatprep.mubr.f32.mxu0 0.0
    %2402 = vmatmul.mubr.f32.gmra.mrb[0].mxu0 %v2231
    %v2403 = vpop.f32.mrb[0].mxu0
    %v2404 = vadd.f32 0.0, %v2403
    %v2405 = vpop.f32.mrb[0].mxu0
    %v2406 = vadd.f32 0.0, %v2405
    %2407 = vmatprep.mubr.f32.mxu0 0.0
    %2408 = vmatmul.mubr.f32.gmra.mrb[0].mxu0 %v2234
    %v2409 = vpop.f32.mrb[0].mxu0
    %v2410 = vadd.f32 0.0, %v2409
    %v2411 = vpop.f32.mrb[0].mxu0
    %v2412 = vadd.f32 0.0, %v2411
    %2413 = vdwg.mxu0
    %v2414 = vadd.f32 %v2164, %v2303
    %v2415 = vadd.f32 %v2165, %v2305
    %v2416 = vadd.f32 %v2166, %v2392
    %v2417 = vadd.f32 %v2167, %v2394
    %v2418 = vadd.f32 %v2168, %v2309
    %v2419 = vadd.f32 %v2169, %v2311
    %v2420 = vadd.f32 %v2170, %v2398
    %v2421 = vadd.f32 %v2171, %v2400
    %v2422 = vadd.f32 %v2172, %v2315
    %v2423 = vadd.f32 %v2173, %v2317
    %v2424 = vadd.f32 %v2174, %v2404
    %v2425 = vadd.f32 %v2175, %v2406
    %v2426 = vadd.f32 %v2176, %v2321
    %v2427 = vadd.f32 %v2177, %v2323
    %v2428 = vadd.f32 %v2178, %v2410
    %v2429 = vadd.f32 %v2179, %v2412
    %2430 = vrot.lane.b32.xlu0 %v379, 127
    %v2431 = vpop.permute.xlu0 %2430
    %2432 = vrot.lane.b32.xlu0 %v383, 127
    %v2433 = vpop.permute.xlu0 %2432
    %2434 = vrot.lane.b32.xlu0 %v387, 127
    %v2435 = vpop.permute.xlu0 %2434
    %2436 = vrot.lane.b32.xlu0 %v391, 127
    %v2437 = vpop.permute.xlu0 %2436
    %2438 = vrot.lane.b32.xlu0 %v380, 127
    %v2439 = vpop.permute.xlu0 %2438
    %2440 = vrot.lane.b32.xlu0 %v384, 127
    %v2441 = vpop.permute.xlu0 %2440
    %2442 = vrot.lane.b32.xlu0 %v388, 127
    %v2443 = vpop.permute.xlu0 %2442
    %2444 = vrot.lane.b32.xlu0 %v392, 127
    %v2445 = vpop.permute.xlu0 %2444
    %2446 = vrot.lane.b32.xlu0 %v381, 127
    %v2447 = vpop.permute.xlu0 %2446
    %2448 = vrot.lane.b32.xlu0 %v385, 127
    %v2449 = vpop.permute.xlu0 %2448
    %2450 = vrot.lane.b32.xlu0 %v389, 127
    %v2451 = vpop.permute.xlu0 %2450
    %2452 = vrot.lane.b32.xlu0 %v393, 127
    %v2453 = vpop.permute.xlu0 %2452
    %2454 = vrot.lane.b32.xlu0 %v382, 127
    %v2455 = vpop.permute.xlu0 %2454
    %2456 = vrot.lane.b32.xlu0 %v386, 127
    %v2457 = vpop.permute.xlu0 %2456
    %2458 = vrot.lane.b32.xlu0 %v390, 127
    %v2459 = vpop.permute.xlu0 %2458
    %2460 = vrot.lane.b32.xlu0 %v394, 127
    %v2461 = vpop.permute.xlu0 %2460
    %vm2462 = vcmp.lt.s32.totalorder %v1017, 127
    %v2463 = vsel %vm2462, %v2447, %v2455
    %v2464 = vsel %vm2462, %v2449, %v2457
    %v2465 = vsel %vm2462, %v2451, %v2459
    %v2466 = vsel %vm2462, %v2453, %v2461
    %v2467 = vsel %vm2462, %v2439, %v2447
    %v2468 = vsel %vm2462, %v2441, %v2449
    %v2469 = vsel %vm2462, %v2443, %v2451
    %v2470 = vsel %vm2462, %v2445, %v2453
    %v2471 = vsel %vm2462, %v2431, %v2439
    %v2472 = vsel %vm2462, %v2433, %v2441
    %v2473 = vsel %vm2462, %v2435, %v2443
    %v2474 = vsel %vm2462, %v2437, %v2445
    %v2475 = vsel %vm2462, %v2455, %v2431
    %v2476 = vsel %vm2462, %v2457, %v2433
    %v2477 = vsel %vm2462, %v2459, %v2435
    %v2478 = vsel %vm2462, %v2461, %v2437
    %s2479 = scalar_lea.vmem %s1, 5
    %v2480 = vld [vmem:[%s2479] ss:$8 sm:$0xf]
    %s2481 = scalar_lea.vmem [#allocation2], 160
    %v2482 = vld [vmem:[%s2481] sm:$0xff]
    %v2483 = vld [vmem:[%s2481 + $0x8] sm:$0xff]
    %v2484 = vld [vmem:[%s2481 + $0x10] sm:$0xff]
    %v2485 = vld [vmem:[%s2481 + $0x18] sm:$0xff]
    %v2487 = vlaneseq
    %v2488 = vshrl.u32 %v2487, 7
    %v2489 = vsub.s32 0, %v2488
    %v2490 = vrot.slane %v2480, %v2489
    %v2491 = vlaneseq
    %v2492 = vshrl.u32 %v2491, 7
    %v2493 = vsub.s32 1, %v2492
    %v2494 = vrot.slane %v2480, %v2493
    %v2495 = vlaneseq
    %v2496 = vshrl.u32 %v2495, 7
    %v2497 = vsub.s32 2, %v2496
    %v2498 = vrot.slane %v2480, %v2497
    %v2499 = vlaneseq
    %v2500 = vshrl.u32 %v2499, 7
    %v2501 = vsub.s32 3, %v2500
    %v2502 = vrot.slane %v2480, %v2501
    %v2507 = vmul.f32 %v2471, %v2490
    %v2508 = vmul.f32 %v2467, %v2494
    %v2509 = vmul.f32 %v2463, %v2498
    %v2510 = vmul.f32 %v2475, %v2502
    %v2511 = vmul.f32 %v2472, %v2490
    %v2512 = vmul.f32 %v2468, %v2494
    %v2513 = vmul.f32 %v2464, %v2498
    %v2514 = vmul.f32 %v2476, %v2502
    %v2515 = vmul.f32 %v2473, %v2490
    %v2516 = vmul.f32 %v2469, %v2494
    %v2517 = vmul.f32 %v2465, %v2498
    %v2518 = vmul.f32 %v2477, %v2502
    %v2519 = vmul.f32 %v2474, %v2490
    %v2520 = vmul.f32 %v2470, %v2494
    %v2521 = vmul.f32 %v2466, %v2498
    %v2522 = vmul.f32 %v2478, %v2502
    %v2524 = vsel %vm753, %v2482, 0
    %v2527 = vsel %vm753, %v2483, 0
    %v2530 = vsel %vm753, %v2484, 0
    %v2533 = vsel %vm753, %v2485, 0
    %2535 = vmatprep.subr.mxu0 %v2508
    %2536 = vmatpush1.msra.mxu0 %v2507
    %2537 = vmatprep.subr.mxu0 %v2512
    %2538 = vmatpush1.msra.mxu0 %v2511
    %2539 = vmatprep.subr.mxu0 %v2516
    %2540 = vmatpush1.msra.mxu0 %v2515
    %2541 = vmatprep.subr.mxu0 %v2520
    %2542 = vmatpush1.msra.mxu0 %v2519
    %2543 = vmatprep.subr.mxu0 0.0
    %2544 = vmatpush1.msra.mxu0 0.0
    %2545 = vmatprep.subr.mxu0 0.0
    %2546 = vmatpush1.msra.mxu0 0.0
    %2547 = vmatprep.subr.mxu0 0.0
    %2548 = vmatpush1.msra.mxu0 0.0
    %2549 = vmatprep.subr.mxu0 0.0
    %2550 = vmatpush1.msra.mxu0 0.0
    %2551 = vmatprep.subr.mxu0 0.0
    %2552 = vmatpush1.msra.mxu0 0.0
    %2553 = vmatprep.subr.mxu0 0.0
    %2554 = vmatpush1.msra.mxu0 0.0
    %2555 = vmatprep.subr.mxu0 0.0
    %2556 = vmatpush1.msra.mxu0 0.0
    %2557 = vmatprep.subr.mxu0 0.0
    %2558 = vmatpush1.msra.mxu0 0.0
    %2559 = vmatprep.subr.mxu0 0.0
    %2560 = vmatpush1.msra.mxu0 0.0
    %2561 = vmatprep.subr.mxu0 0.0
    %2562 = vmatpush1.msra.mxu0 0.0
    %2563 = vmatprep.subr.mxu0 0.0
    %2564 = vmatpush1.msra.mxu0 0.0
    %2565 = vmatprep.subr.mxu0 0.0
    %2566 = vmatpush1.msra.mxu0 0.0
    %2567 = vmatprep.subr.mxu0 0.0
    %2568 = vmatpush1.msra.mxu0 0.0
    %2569 = vmatprep.subr.mxu0 0.0
    %2570 = vmatpush1.msra.mxu0 0.0
    %2571 = vmatprep.subr.mxu0 0.0
    %2572 = vmatpush1.msra.mxu0 0.0
    %2573 = vmatprep.subr.mxu0 0.0
    %2574 = vmatpush1.msra.mxu0 0.0
    %2575 = vmatprep.subr.mxu0 0.0
    %2576 = vmatpush1.msra.mxu0 0.0
    %2577 = vmatprep.subr.mxu0 0.0
    %2578 = vmatpush1.msra.mxu0 0.0
    %2579 = vmatprep.subr.mxu0 0.0
    %2580 = vmatpush1.msra.mxu0 0.0
    %2581 = vmatprep.subr.mxu0 0.0
    %2582 = vmatpush1.msra.mxu0 0.0
    %2583 = vmatprep.subr.mxu0 0.0
    %2584 = vmatpush1.msra.mxu0 0.0
    %2585 = vmatprep.subr.mxu0 0.0
    %2586 = vmatpush1.msra.mxu0 0.0
    %2587 = vmatprep.subr.mxu0 0.0
    %2588 = vmatpush1.msra.mxu0 0.0
    %2589 = vmatprep.subr.mxu0 0.0
    %2590 = vmatpush1.msra.mxu0 0.0
    %2591 = vmatprep.subr.mxu0 0.0
    %2592 = vmatpush1.msra.mxu0 0.0
    %2593 = vmatprep.subr.mxu0 0.0
    %2594 = vmatpush1.msra.mxu0 0.0
    %2595 = vmatprep.subr.mxu0 0.0
    %2596 = vmatpush1.msra.mxu0 0.0
    %2597 = vmatprep.subr.mxu0 0.0
    %2598 = vmatpush1.msra.mxu0 0.0
    %2599 = vmatprep.mubr.f32.mxu0 0.0
    %2600 = vmatmul.mubr.f32.gmra.mrb[0].mxu0 %v2524
    %v2601 = vpop.f32.mrb[0].mxu0
    %v2602 = vadd.f32 0.0, %v2601
    %v2603 = vpop.f32.mrb[0].mxu0
    %v2604 = vadd.f32 0.0, %v2603
    %2605 = vmatprep.mubr.f32.mxu0 0.0
    %2606 = vmatmul.mubr.f32.gmra.mrb[0].mxu0 %v2527
    %v2607 = vpop.f32.mrb[0].mxu0
    %v2608 = vadd.f32 0.0, %v2607
    %v2609 = vpop.f32.mrb[0].mxu0
    %v2610 = vadd.f32 0.0, %v2609
    %2611 = vmatprep.mubr.f32.mxu0 0.0
    %2612 = vmatmul.mubr.f32.gmra.mrb[0].mxu0 %v2530
    %v2613 = vpop.f32.mrb[0].mxu0
    %v2614 = vadd.f32 0.0, %v2613
    %v2615 = vpop.f32.mrb[0].mxu0
    %v2616 = vadd.f32 0.0, %v2615
    %2617 = vmatprep.mubr.f32.mxu0 0.0
    %2618 = vmatmul.mubr.f32.gmra.mrb[0].mxu0 %v2533
    %v2619 = vpop.f32.mrb[0].mxu0
    %v2620 = vadd.f32 0.0, %v2619
    %v2621 = vpop.f32.mrb[0].mxu0
    %v2622 = vadd.f32 0.0, %v2621
    %2623 = vdwg.mxu0
    %2624 = vmatprep.subr.mxu0 %v2510
    %2625 = vmatpush1.msra.mxu0 %v2509
    %2626 = vmatprep.subr.mxu0 %v2514
    %2627 = vmatpush1.msra.mxu0 %v2513
    %2628 = vmatprep.subr.mxu0 %v2518
    %2629 = vmatpush1.msra.mxu0 %v2517
    %2630 = vmatprep.subr.mxu0 %v2522
    %2631 = vmatpush1.msra.mxu0 %v2521
    %2632 = vmatprep.subr.mxu0 0.0
    %2633 = vmatpush1.msra.mxu0 0.0
    %2634 = vmatprep.subr.mxu0 0.0
    %2635 = vmatpush1.msra.mxu0 0.0
    %2636 = vmatprep.subr.mxu0 0.0
    %2637 = vmatpush1.msra.mxu0 0.0
    %2638 = vmatprep.subr.mxu0 0.0
    %2639 = vmatpush1.msra.mxu0 0.0
    %2640 = vmatprep.subr.mxu0 0.0
    %2641 = vmatpush1.msra.mxu0 0.0
    %2642 = vmatprep.subr.mxu0 0.0
    %2643 = vmatpush1.msra.mxu0 0.0
    %2644 = vmatprep.subr.mxu0 0.0
    %2645 = vmatpush1.msra.mxu0 0.0
    %2646 = vmatprep.subr.mxu0 0.0
    %2647 = vmatpush1.msra.mxu0 0.0
    %2648 = vmatprep.subr.mxu0 0.0
    %2649 = vmatpush1.msra.mxu0 0.0
    %2650 = vmatprep.subr.mxu0 0.0
    %2651 = vmatpush1.msra.mxu0 0.0
    %2652 = vmatprep.subr.mxu0 0.0
    %2653 = vmatpush1.msra.mxu0 0.0
    %2654 = vmatprep.subr.mxu0 0.0
    %2655 = vmatpush1.msra.mxu0 0.0
    %2656 = vmatprep.subr.mxu0 0.0
    %2657 = vmatpush1.msra.mxu0 0.0
    %2658 = vmatprep.subr.mxu0 0.0
    %2659 = vmatpush1.msra.mxu0 0.0
    %2660 = vmatprep.subr.mxu0 0.0
    %2661 = vmatpush1.msra.mxu0 0.0
    %2662 = vmatprep.subr.mxu0 0.0
    %2663 = vmatpush1.msra.mxu0 0.0
    %2664 = vmatprep.subr.mxu0 0.0
    %2665 = vmatpush1.msra.mxu0 0.0
    %2666 = vmatprep.subr.mxu0 0.0
    %2667 = vmatpush1.msra.mxu0 0.0
    %2668 = vmatprep.subr.mxu0 0.0
    %2669 = vmatpush1.msra.mxu0 0.0
    %2670 = vmatprep.subr.mxu0 0.0
    %2671 = vmatpush1.msra.mxu0 0.0
    %2672 = vmatprep.subr.mxu0 0.0
    %2673 = vmatpush1.msra.mxu0 0.0
    %2674 = vmatprep.subr.mxu0 0.0
    %2675 = vmatpush1.msra.mxu0 0.0
    %2676 = vmatprep.subr.mxu0 0.0
    %2677 = vmatpush1.msra.mxu0 0.0
    %2678 = vmatprep.subr.mxu0 0.0
    %2679 = vmatpush1.msra.mxu0 0.0
    %2680 = vmatprep.subr.mxu0 0.0
    %2681 = vmatpush1.msra.mxu0 0.0
    %2682 = vmatprep.subr.mxu0 0.0
    %2683 = vmatpush1.msra.mxu0 0.0
    %2684 = vmatprep.subr.mxu0 0.0
    %2685 = vmatpush1.msra.mxu0 0.0
    %2686 = vmatprep.subr.mxu0 0.0
    %2687 = vmatpush1.msra.mxu0 0.0
    %2688 = vmatprep.mubr.f32.mxu0 0.0
    %2689 = vmatmul.mubr.f32.gmra.mrb[0].mxu0 %v2524
    %v2690 = vpop.f32.mrb[0].mxu0
    %v2691 = vadd.f32 0.0, %v2690
    %v2692 = vpop.f32.mrb[0].mxu0
    %v2693 = vadd.f32 0.0, %v2692
    %2694 = vmatprep.mubr.f32.mxu0 0.0
    %2695 = vmatmul.mubr.f32.gmra.mrb[0].mxu0 %v2527
    %v2696 = vpop.f32.mrb[0].mxu0
    %v2697 = vadd.f32 0.0, %v2696
    %v2698 = vpop.f32.mrb[0].mxu0
    %v2699 = vadd.f32 0.0, %v2698
    %2700 = vmatprep.mubr.f32.mxu0 0.0
    %2701 = vmatmul.mubr.f32.gmra.mrb[0].mxu0 %v2530
    %v2702 = vpop.f32.mrb[0].mxu0
    %v2703 = vadd.f32 0.0, %v2702
    %v2704 = vpop.f32.mrb[0].mxu0
    %v2705 = vadd.f32 0.0, %v2704
    %2706 = vmatprep.mubr.f32.mxu0 0.0
    %2707 = vmatmul.mubr.f32.gmra.mrb[0].mxu0 %v2533
    %v2708 = vpop.f32.mrb[0].mxu0
    %v2709 = vadd.f32 0.0, %v2708
    %v2710 = vpop.f32.mrb[0].mxu0
    %v2711 = vadd.f32 0.0, %v2710
    %2712 = vdwg.mxu0
    %v2713 = vadd.f32 %v2414, %v2602
    %v2714 = vadd.f32 %v2415, %v2604
    %v2715 = vadd.f32 %v2416, %v2691
    %v2716 = vadd.f32 %v2417, %v2693
    %v2717 = vadd.f32 %v2418, %v2608
    %v2718 = vadd.f32 %v2419, %v2610
    %v2719 = vadd.f32 %v2420, %v2697
    %v2720 = vadd.f32 %v2421, %v2699
    %v2721 = vadd.f32 %v2422, %v2614
    %v2722 = vadd.f32 %v2423, %v2616
    %v2723 = vadd.f32 %v2424, %v2703
    %v2724 = vadd.f32 %v2425, %v2705
    %v2725 = vadd.f32 %v2426, %v2620
    %v2726 = vadd.f32 %v2427, %v2622
    %v2727 = vadd.f32 %v2428, %v2709
    %v2728 = vadd.f32 %v2429, %v2711
    %2729 = vrot.lane.b32.xlu0 %v379, 113
    %v2730 = vpop.permute.xlu0 %2729
    %2731 = vrot.lane.b32.xlu0 %v383, 113
    %v2732 = vpop.permute.xlu0 %2731
    %2733 = vrot.lane.b32.xlu0 %v387, 113
    %v2734 = vpop.permute.xlu0 %2733
    %2735 = vrot.lane.b32.xlu0 %v391, 113
    %v2736 = vpop.permute.xlu0 %2735
    %2737 = vrot.lane.b32.xlu0 %v380, 113
    %v2738 = vpop.permute.xlu0 %2737
    %2739 = vrot.lane.b32.xlu0 %v384, 113
    %v2740 = vpop.permute.xlu0 %2739
    %2741 = vrot.lane.b32.xlu0 %v388, 113
    %v2742 = vpop.permute.xlu0 %2741
    %2743 = vrot.lane.b32.xlu0 %v392, 113
    %v2744 = vpop.permute.xlu0 %2743
    %2745 = vrot.lane.b32.xlu0 %v381, 113
    %v2746 = vpop.permute.xlu0 %2745
    %2747 = vrot.lane.b32.xlu0 %v385, 113
    %v2748 = vpop.permute.xlu0 %2747
    %2749 = vrot.lane.b32.xlu0 %v389, 113
    %v2750 = vpop.permute.xlu0 %2749
    %2751 = vrot.lane.b32.xlu0 %v393, 113
    %v2752 = vpop.permute.xlu0 %2751
    %2753 = vrot.lane.b32.xlu0 %v382, 113
    %v2754 = vpop.permute.xlu0 %2753
    %2755 = vrot.lane.b32.xlu0 %v386, 113
    %v2756 = vpop.permute.xlu0 %2755
    %2757 = vrot.lane.b32.xlu0 %v390, 113
    %v2758 = vpop.permute.xlu0 %2757
    %2759 = vrot.lane.b32.xlu0 %v394, 113
    %v2760 = vpop.permute.xlu0 %2759
    %vm2761 = vcmp.lt.s32.totalorder %v1017, 113
    %v2762 = vsel %vm2761, %v2746, %v2754
    %v2763 = vsel %vm2761, %v2748, %v2756
    %v2764 = vsel %vm2761, %v2750, %v2758
    %v2765 = vsel %vm2761, %v2752, %v2760
    %v2766 = vsel %vm2761, %v2738, %v2746
    %v2767 = vsel %vm2761, %v2740, %v2748
    %v2768 = vsel %vm2761, %v2742, %v2750
    %v2769 = vsel %vm2761, %v2744, %v2752
    %v2770 = vsel %vm2761, %v2730, %v2738
    %v2771 = vsel %vm2761, %v2732, %v2740
    %v2772 = vsel %vm2761, %v2734, %v2742
    %v2773 = vsel %vm2761, %v2736, %v2744
    %v2774 = vsel %vm2761, %v2754, %v2730
    %v2775 = vsel %vm2761, %v2756, %v2732
    %v2776 = vsel %vm2761, %v2758, %v2734
    %v2777 = vsel %vm2761, %v2760, %v2736
    %s2778 = scalar_lea.vmem %s1, 6
    %v2779 = vld [vmem:[%s2778] ss:$8 sm:$0xf]
    %s2780 = scalar_lea.vmem [#allocation2], 192
    %v2781 = vld [vmem:[%s2780] sm:$0xff]
    %v2782 = vld [vmem:[%s2780 + $0x8] sm:$0xff]
    %v2783 = vld [vmem:[%s2780 + $0x10] sm:$0xff]
    %v2784 = vld [vmem:[%s2780 + $0x18] sm:$0xff]
    %v2786 = vlaneseq
    %v2787 = vshrl.u32 %v2786, 7
    %v2788 = vsub.s32 0, %v2787
    %v2789 = vrot.slane %v2779, %v2788
    %v2790 = vlaneseq
    %v2791 = vshrl.u32 %v2790, 7
    %v2792 = vsub.s32 1, %v2791
    %v2793 = vrot.slane %v2779, %v2792
    %v2794 = vlaneseq
    %v2795 = vshrl.u32 %v2794, 7
    %v2796 = vsub.s32 2, %v2795
    %v2797 = vrot.slane %v2779, %v2796
    %v2798 = vlaneseq
    %v2799 = vshrl.u32 %v2798, 7
    %v2800 = vsub.s32 3, %v2799
    %v2801 = vrot.slane %v2779, %v2800
    %v2806 = vmul.f32 %v2770, %v2789
    %v2807 = vmul.f32 %v2766, %v2793
    %v2808 = vmul.f32 %v2762, %v2797
    %v2809 = vmul.f32 %v2774, %v2801
    %v2810 = vmul.f32 %v2771, %v2789
    %v2811 = vmul.f32 %v2767, %v2793
    %v2812 = vmul.f32 %v2763, %v2797
    %v2813 = vmul.f32 %v2775, %v2801
    %v2814 = vmul.f32 %v2772, %v2789
    %v2815 = vmul.f32 %v2768, %v2793
    %v2816 = vmul.f32 %v2764, %v2797
    %v2817 = vmul.f32 %v2776, %v2801
    %v2818 = vmul.f32 %v2773, %v2789
    %v2819 = vmul.f32 %v2769, %v2793
    %v2820 = vmul.f32 %v2765, %v2797
    %v2821 = vmul.f32 %v2777, %v2801
    %v2823 = vsel %vm753, %v2781, 0
    %v2826 = vsel %vm753, %v2782, 0
    %v2829 = vsel %vm753, %v2783, 0
    %v2832 = vsel %vm753, %v2784, 0
    %2834 = vmatprep.subr.mxu0 %v2807
    %2835 = vmatpush1.msra.mxu0 %v2806
    %2836 = vmatprep.subr.mxu0 %v2811
    %2837 = vmatpush1.msra.mxu0 %v2810
    %2838 = vmatprep.subr.mxu0 %v2815
    %2839 = vmatpush1.msra.mxu0 %v2814
    %2840 = vmatprep.subr.mxu0 %v2819
    %2841 = vmatpush1.msra.mxu0 %v2818
    %2842 = vmatprep.subr.mxu0 0.0
    %2843 = vmatpush1.msra.mxu0 0.0
    %2844 = vmatprep.subr.mxu0 0.0
    %2845 = vmatpush1.msra.mxu0 0.0
    %2846 = vmatprep.subr.mxu0 0.0
    %2847 = vmatpush1.msra.mxu0 0.0
    %2848 = vmatprep.subr.mxu0 0.0
    %2849 = vmatpush1.msra.mxu0 0.0
    %2850 = vmatprep.subr.mxu0 0.0
    %2851 = vmatpush1.msra.mxu0 0.0
    %2852 = vmatprep.subr.mxu0 0.0
    %2853 = vmatpush1.msra.mxu0 0.0
    %2854 = vmatprep.subr.mxu0 0.0
    %2855 = vmatpush1.msra.mxu0 0.0
    %2856 = vmatprep.subr.mxu0 0.0
    %2857 = vmatpush1.msra.mxu0 0.0
    %2858 = vmatprep.subr.mxu0 0.0
    %2859 = vmatpush1.msra.mxu0 0.0
    %2860 = vmatprep.subr.mxu0 0.0
    %2861 = vmatpush1.msra.mxu0 0.0
    %2862 = vmatprep.subr.mxu0 0.0
    %2863 = vmatpush1.msra.mxu0 0.0
    %2864 = vmatprep.subr.mxu0 0.0
    %2865 = vmatpush1.msra.mxu0 0.0
    %2866 = vmatprep.subr.mxu0 0.0
    %2867 = vmatpush1.msra.mxu0 0.0
    %2868 = vmatprep.subr.mxu0 0.0
    %2869 = vmatpush1.msra.mxu0 0.0
    %2870 = vmatprep.subr.mxu0 0.0
    %2871 = vmatpush1.msra.mxu0 0.0
    %2872 = vmatprep.subr.mxu0 0.0
    %2873 = vmatpush1.msra.mxu0 0.0
    %2874 = vmatprep.subr.mxu0 0.0
    %2875 = vmatpush1.msra.mxu0 0.0
    %2876 = vmatprep.subr.mxu0 0.0
    %2877 = vmatpush1.msra.mxu0 0.0
    %2878 = vmatprep.subr.mxu0 0.0
    %2879 = vmatpush1.msra.mxu0 0.0
    %2880 = vmatprep.subr.mxu0 0.0
    %2881 = vmatpush1.msra.mxu0 0.0
    %2882 = vmatprep.subr.mxu0 0.0
    %2883 = vmatpush1.msra.mxu0 0.0
    %2884 = vmatprep.subr.mxu0 0.0
    %2885 = vmatpush1.msra.mxu0 0.0
    %2886 = vmatprep.subr.mxu0 0.0
    %2887 = vmatpush1.msra.mxu0 0.0
    %2888 = vmatprep.subr.mxu0 0.0
    %2889 = vmatpush1.msra.mxu0 0.0
    %2890 = vmatprep.subr.mxu0 0.0
    %2891 = vmatpush1.msra.mxu0 0.0
    %2892 = vmatprep.subr.mxu0 0.0
    %2893 = vmatpush1.msra.mxu0 0.0
    %2894 = vmatprep.subr.mxu0 0.0
    %2895 = vmatpush1.msra.mxu0 0.0
    %2896 = vmatprep.subr.mxu0 0.0
    %2897 = vmatpush1.msra.mxu0 0.0
    %2898 = vmatprep.mubr.f32.mxu0 0.0
    %2899 = vmatmul.mubr.f32.gmra.mrb[0].mxu0 %v2823
    %v2900 = vpop.f32.mrb[0].mxu0
    %v2901 = vadd.f32 0.0, %v2900
    %v2902 = vpop.f32.mrb[0].mxu0
    %v2903 = vadd.f32 0.0, %v2902
    %2904 = vmatprep.mubr.f32.mxu0 0.0
    %2905 = vmatmul.mubr.f32.gmra.mrb[0].mxu0 %v2826
    %v2906 = vpop.f32.mrb[0].mxu0
    %v2907 = vadd.f32 0.0, %v2906
    %v2908 = vpop.f32.mrb[0].mxu0
    %v2909 = vadd.f32 0.0, %v2908
    %2910 = vmatprep.mubr.f32.mxu0 0.0
    %2911 = vmatmul.mubr.f32.gmra.mrb[0].mxu0 %v2829
    %v2912 = vpop.f32.mrb[0].mxu0
    %v2913 = vadd.f32 0.0, %v2912
    %v2914 = vpop.f32.mrb[0].mxu0
    %v2915 = vadd.f32 0.0, %v2914
    %2916 = vmatprep.mubr.f32.mxu0 0.0
    %2917 = vmatmul.mubr.f32.gmra.mrb[0].mxu0 %v2832
    %v2918 = vpop.f32.mrb[0].mxu0
    %v2919 = vadd.f32 0.0, %v2918
    %v2920 = vpop.f32.mrb[0].mxu0
    %v2921 = vadd.f32 0.0, %v2920
    %2922 = vdwg.mxu0
    %2923 = vmatprep.subr.mxu0 %v2809
    %2924 = vmatpush1.msra.mxu0 %v2808
    %2925 = vmatprep.subr.mxu0 %v2813
    %2926 = vmatpush1.msra.mxu0 %v2812
    %2927 = vmatprep.subr.mxu0 %v2817
    %2928 = vmatpush1.msra.mxu0 %v2816
    %2929 = vmatprep.subr.mxu0 %v2821
    %2930 = vmatpush1.msra.mxu0 %v2820
    %2931 = vmatprep.subr.mxu0 0.0
    %2932 = vmatpush1.msra.mxu0 0.0
    %2933 = vmatprep.subr.mxu0 0.0
    %2934 = vmatpush1.msra.mxu0 0.0
    %2935 = vmatprep.subr.mxu0 0.0
    %2936 = vmatpush1.msra.mxu0 0.0
    %2937 = vmatprep.subr.mxu0 0.0
    %2938 = vmatpush1.msra.mxu0 0.0
    %2939 = vmatprep.subr.mxu0 0.0
    %2940 = vmatpush1.msra.mxu0 0.0
    %2941 = vmatprep.subr.mxu0 0.0
    %2942 = vmatpush1.msra.mxu0 0.0
    %2943 = vmatprep.subr.mxu0 0.0
    %2944 = vmatpush1.msra.mxu0 0.0
    %2945 = vmatprep.subr.mxu0 0.0
    %2946 = vmatpush1.msra.mxu0 0.0
    %2947 = vmatprep.subr.mxu0 0.0
    %2948 = vmatpush1.msra.mxu0 0.0
    %2949 = vmatprep.subr.mxu0 0.0
    %2950 = vmatpush1.msra.mxu0 0.0
    %2951 = vmatprep.subr.mxu0 0.0
    %2952 = vmatpush1.msra.mxu0 0.0
    %2953 = vmatprep.subr.mxu0 0.0
    %2954 = vmatpush1.msra.mxu0 0.0
    %2955 = vmatprep.subr.mxu0 0.0
    %2956 = vmatpush1.msra.mxu0 0.0
    %2957 = vmatprep.subr.mxu0 0.0
    %2958 = vmatpush1.msra.mxu0 0.0
    %2959 = vmatprep.subr.mxu0 0.0
    %2960 = vmatpush1.msra.mxu0 0.0
    %2961 = vmatprep.subr.mxu0 0.0
    %2962 = vmatpush1.msra.mxu0 0.0
    %2963 = vmatprep.subr.mxu0 0.0
    %2964 = vmatpush1.msra.mxu0 0.0
    %2965 = vmatprep.subr.mxu0 0.0
    %2966 = vmatpush1.msra.mxu0 0.0
    %2967 = vmatprep.subr.mxu0 0.0
    %2968 = vmatpush1.msra.mxu0 0.0
    %2969 = vmatprep.subr.mxu0 0.0
    %2970 = vmatpush1.msra.mxu0 0.0
    %2971 = vmatprep.subr.mxu0 0.0
    %2972 = vmatpush1.msra.mxu0 0.0
    %2973 = vmatprep.subr.mxu0 0.0
    %2974 = vmatpush1.msra.mxu0 0.0
    %2975 = vmatprep.subr.mxu0 0.0
    %2976 = vmatpush1.msra.mxu0 0.0
    %2977 = vmatprep.subr.mxu0 0.0
    %2978 = vmatpush1.msra.mxu0 0.0
    %2979 = vmatprep.subr.mxu0 0.0
    %2980 = vmatpush1.msra.mxu0 0.0
    %2981 = vmatprep.subr.mxu0 0.0
    %2982 = vmatpush1.msra.mxu0 0.0
    %2983 = vmatprep.subr.mxu0 0.0
    %2984 = vmatpush1.msra.mxu0 0.0
    %2985 = vmatprep.subr.mxu0 0.0
    %2986 = vmatpush1.msra.mxu0 0.0
    %2987 = vmatprep.mubr.f32.mxu0 0.0
    %2988 = vmatmul.mubr.f32.gmra.mrb[0].mxu0 %v2823
    %v2989 = vpop.f32.mrb[0].mxu0
    %v2990 = vadd.f32 0.0, %v2989
    %v2991 = vpop.f32.mrb[0].mxu0
    %v2992 = vadd.f32 0.0, %v2991
    %2993 = vmatprep.mubr.f32.mxu0 0.0
    %2994 = vmatmul.mubr.f32.gmra.mrb[0].mxu0 %v2826
    %v2995 = vpop.f32.mrb[0].mxu0
    %v2996 = vadd.f32 0.0, %v2995
    %v2997 = vpop.f32.mrb[0].mxu0
    %v2998 = vadd.f32 0.0, %v2997
    %2999 = vmatprep.mubr.f32.mxu0 0.0
    %3000 = vmatmul.mubr.f32.gmra.mrb[0].mxu0 %v2829
    %v3001 = vpop.f32.mrb[0].mxu0
    %v3002 = vadd.f32 0.0, %v3001
    %v3003 = vpop.f32.mrb[0].mxu0
    %v3004 = vadd.f32 0.0, %v3003
    %3005 = vmatprep.mubr.f32.mxu0 0.0
    %3006 = vmatmul.mubr.f32.gmra.mrb[0].mxu0 %v2832
    %v3007 = vpop.f32.mrb[0].mxu0
    %v3008 = vadd.f32 0.0, %v3007
    %v3009 = vpop.f32.mrb[0].mxu0
    %v3010 = vadd.f32 0.0, %v3009
    %3011 = vdwg.mxu0
    %v3012 = vadd.f32 %v2713, %v2901
    %v3013 = vadd.f32 %v2714, %v2903
    %v3014 = vadd.f32 %v2715, %v2990
    %v3015 = vadd.f32 %v2716, %v2992
    %v3016 = vadd.f32 %v2717, %v2907
    %v3017 = vadd.f32 %v2718, %v2909
    %v3018 = vadd.f32 %v2719, %v2996
    %v3019 = vadd.f32 %v2720, %v2998
    %v3020 = vadd.f32 %v2721, %v2913
    %v3021 = vadd.f32 %v2722, %v2915
    %v3022 = vadd.f32 %v2723, %v3002
    %v3023 = vadd.f32 %v2724, %v3004
    %v3024 = vadd.f32 %v2725, %v2919
    %v3025 = vadd.f32 %v2726, %v2921
    %v3026 = vadd.f32 %v2727, %v3008
    %v3027 = vadd.f32 %v2728, %v3010
    %3028 = vrot.lane.b32.xlu0 %v379, 112
    %v3029 = vpop.permute.xlu0 %3028
    %3030 = vrot.lane.b32.xlu0 %v383, 112
    %v3031 = vpop.permute.xlu0 %3030
    %3032 = vrot.lane.b32.xlu0 %v387, 112
    %v3033 = vpop.permute.xlu0 %3032
    %3034 = vrot.lane.b32.xlu0 %v391, 112
    %v3035 = vpop.permute.xlu0 %3034
    %3036 = vrot.lane.b32.xlu0 %v380, 112
    %v3037 = vpop.permute.xlu0 %3036
    %3038 = vrot.lane.b32.xlu0 %v384, 112
    %v3039 = vpop.permute.xlu0 %3038
    %3040 = vrot.lane.b32.xlu0 %v388, 112
    %v3041 = vpop.permute.xlu0 %3040
    %3042 = vrot.lane.b32.xlu0 %v392, 112
    %v3043 = vpop.permute.xlu0 %3042
    %3044 = vrot.lane.b32.xlu0 %v381, 112
    %v3045 = vpop.permute.xlu0 %3044
    %3046 = vrot.lane.b32.xlu0 %v385, 112
    %v3047 = vpop.permute.xlu0 %3046
    %3048 = vrot.lane.b32.xlu0 %v389, 112
    %v3049 = vpop.permute.xlu0 %3048
    %3050 = vrot.lane.b32.xlu0 %v393, 112
    %v3051 = vpop.permute.xlu0 %3050
    %3052 = vrot.lane.b32.xlu0 %v382, 112
    %v3053 = vpop.permute.xlu0 %3052
    %3054 = vrot.lane.b32.xlu0 %v386, 112
    %v3055 = vpop.permute.xlu0 %3054
    %3056 = vrot.lane.b32.xlu0 %v390, 112
    %v3057 = vpop.permute.xlu0 %3056
    %3058 = vrot.lane.b32.xlu0 %v394, 112
    %v3059 = vpop.permute.xlu0 %3058
    %vm3060 = vcmp.lt.s32.totalorder %v1017, 112
    %v3061 = vsel %vm3060, %v3045, %v3053
    %v3062 = vsel %vm3060, %v3047, %v3055
    %v3063 = vsel %vm3060, %v3049, %v3057
    %v3064 = vsel %vm3060, %v3051, %v3059
    %v3065 = vsel %vm3060, %v3037, %v3045
    %v3066 = vsel %vm3060, %v3039, %v3047
    %v3067 = vsel %vm3060, %v3041, %v3049
    %v3068 = vsel %vm3060, %v3043, %v3051
    %v3069 = vsel %vm3060, %v3029, %v3037
    %v3070 = vsel %vm3060, %v3031, %v3039
    %v3071 = vsel %vm3060, %v3033, %v3041
    %v3072 = vsel %vm3060, %v3035, %v3043
    %v3073 = vsel %vm3060, %v3053, %v3029
    %v3074 = vsel %vm3060, %v3055, %v3031
    %v3075 = vsel %vm3060, %v3057, %v3033
    %v3076 = vsel %vm3060, %v3059, %v3035
    %s3077 = scalar_lea.vmem %s1, 7
    %v3078 = vld [vmem:[%s3077] ss:$8 sm:$0xf]
    %s3079 = scalar_lea.vmem [#allocation2], 224
    %v3080 = vld [vmem:[%s3079] sm:$0xff]
    %v3081 = vld [vmem:[%s3079 + $0x8] sm:$0xff]
    %v3082 = vld [vmem:[%s3079 + $0x10] sm:$0xff]
    %v3083 = vld [vmem:[%s3079 + $0x18] sm:$0xff]
    %v3085 = vlaneseq
    %v3086 = vshrl.u32 %v3085, 7
    %v3087 = vsub.s32 0, %v3086
    %v3088 = vrot.slane %v3078, %v3087
    %v3089 = vlaneseq
    %v3090 = vshrl.u32 %v3089, 7
    %v3091 = vsub.s32 1, %v3090
    %v3092 = vrot.slane %v3078, %v3091
    %v3093 = vlaneseq
    %v3094 = vshrl.u32 %v3093, 7
    %v3095 = vsub.s32 2, %v3094
    %v3096 = vrot.slane %v3078, %v3095
    %v3097 = vlaneseq
    %v3098 = vshrl.u32 %v3097, 7
    %v3099 = vsub.s32 3, %v3098
    %v3100 = vrot.slane %v3078, %v3099
    %v3105 = vmul.f32 %v3069, %v3088
    %v3106 = vmul.f32 %v3065, %v3092
    %v3107 = vmul.f32 %v3061, %v3096
    %v3108 = vmul.f32 %v3073, %v3100
    %v3109 = vmul.f32 %v3070, %v3088
    %v3110 = vmul.f32 %v3066, %v3092
    %v3111 = vmul.f32 %v3062, %v3096
    %v3112 = vmul.f32 %v3074, %v3100
    %v3113 = vmul.f32 %v3071, %v3088
    %v3114 = vmul.f32 %v3067, %v3092
    %v3115 = vmul.f32 %v3063, %v3096
    %v3116 = vmul.f32 %v3075, %v3100
    %v3117 = vmul.f32 %v3072, %v3088
    %v3118 = vmul.f32 %v3068, %v3092
    %v3119 = vmul.f32 %v3064, %v3096
    %v3120 = vmul.f32 %v3076, %v3100
    %v3122 = vsel %vm753, %v3080, 0
    %v3125 = vsel %vm753, %v3081, 0
    %v3128 = vsel %vm753, %v3082, 0
    %v3131 = vsel %vm753, %v3083, 0
    %3133 = vmatprep.subr.mxu0 %v3106
    %3134 = vmatpush1.msra.mxu0 %v3105
    %3135 = vmatprep.subr.mxu0 %v3110
    %3136 = vmatpush1.msra.mxu0 %v3109
    %3137 = vmatprep.subr.mxu0 %v3114
    %3138 = vmatpush1.msra.mxu0 %v3113
    %3139 = vmatprep.subr.mxu0 %v3118
    %3140 = vmatpush1.msra.mxu0 %v3117
    %3141 = vmatprep.subr.mxu0 0.0
    %3142 = vmatpush1.msra.mxu0 0.0
    %3143 = vmatprep.subr.mxu0 0.0
    %3144 = vmatpush1.msra.mxu0 0.0
    %3145 = vmatprep.subr.mxu0 0.0
    %3146 = vmatpush1.msra.mxu0 0.0
    %3147 = vmatprep.subr.mxu0 0.0
    %3148 = vmatpush1.msra.mxu0 0.0
    %3149 = vmatprep.subr.mxu0 0.0
    %3150 = vmatpush1.msra.mxu0 0.0
    %3151 = vmatprep.subr.mxu0 0.0
    %3152 = vmatpush1.msra.mxu0 0.0
    %3153 = vmatprep.subr.mxu0 0.0
    %3154 = vmatpush1.msra.mxu0 0.0
    %3155 = vmatprep.subr.mxu0 0.0
    %3156 = vmatpush1.msra.mxu0 0.0
    %3157 = vmatprep.subr.mxu0 0.0
    %3158 = vmatpush1.msra.mxu0 0.0
    %3159 = vmatprep.subr.mxu0 0.0
    %3160 = vmatpush1.msra.mxu0 0.0
    %3161 = vmatprep.subr.mxu0 0.0
    %3162 = vmatpush1.msra.mxu0 0.0
    %3163 = vmatprep.subr.mxu0 0.0
    %3164 = vmatpush1.msra.mxu0 0.0
    %3165 = vmatprep.subr.mxu0 0.0
    %3166 = vmatpush1.msra.mxu0 0.0
    %3167 = vmatprep.subr.mxu0 0.0
    %3168 = vmatpush1.msra.mxu0 0.0
    %3169 = vmatprep.subr.mxu0 0.0
    %3170 = vmatpush1.msra.mxu0 0.0
    %3171 = vmatprep.subr.mxu0 0.0
    %3172 = vmatpush1.msra.mxu0 0.0
    %3173 = vmatprep.subr.mxu0 0.0
    %3174 = vmatpush1.msra.mxu0 0.0
    %3175 = vmatprep.subr.mxu0 0.0
    %3176 = vmatpush1.msra.mxu0 0.0
    %3177 = vmatprep.subr.mxu0 0.0
    %3178 = vmatpush1.msra.mxu0 0.0
    %3179 = vmatprep.subr.mxu0 0.0
    %3180 = vmatpush1.msra.mxu0 0.0
    %3181 = vmatprep.subr.mxu0 0.0
    %3182 = vmatpush1.msra.mxu0 0.0
    %3183 = vmatprep.subr.mxu0 0.0
    %3184 = vmatpush1.msra.mxu0 0.0
    %3185 = vmatprep.subr.mxu0 0.0
    %3186 = vmatpush1.msra.mxu0 0.0
    %3187 = vmatprep.subr.mxu0 0.0
    %3188 = vmatpush1.msra.mxu0 0.0
    %3189 = vmatprep.subr.mxu0 0.0
    %3190 = vmatpush1.msra.mxu0 0.0
    %3191 = vmatprep.subr.mxu0 0.0
    %3192 = vmatpush1.msra.mxu0 0.0
    %3193 = vmatprep.subr.mxu0 0.0
    %3194 = vmatpush1.msra.mxu0 0.0
    %3195 = vmatprep.subr.mxu0 0.0
    %3196 = vmatpush1.msra.mxu0 0.0
    %3197 = vmatprep.mubr.f32.mxu0 0.0
    %3198 = vmatmul.mubr.f32.gmra.mrb[0].mxu0 %v3122
    %v3199 = vpop.f32.mrb[0].mxu0
    %v3200 = vadd.f32 0.0, %v3199
    %v3201 = vpop.f32.mrb[0].mxu0
    %v3202 = vadd.f32 0.0, %v3201
    %3203 = vmatprep.mubr.f32.mxu0 0.0
    %3204 = vmatmul.mubr.f32.gmra.mrb[0].mxu0 %v3125
    %v3205 = vpop.f32.mrb[0].mxu0
    %v3206 = vadd.f32 0.0, %v3205
    %v3207 = vpop.f32.mrb[0].mxu0
    %v3208 = vadd.f32 0.0, %v3207
    %3209 = vmatprep.mubr.f32.mxu0 0.0
    %3210 = vmatmul.mubr.f32.gmra.mrb[0].mxu0 %v3128
    %v3211 = vpop.f32.mrb[0].mxu0
    %v3212 = vadd.f32 0.0, %v3211
    %v3213 = vpop.f32.mrb[0].mxu0
    %v3214 = vadd.f32 0.0, %v3213
    %3215 = vmatprep.mubr.f32.mxu0 0.0
    %3216 = vmatmul.mubr.f32.gmra.mrb[0].mxu0 %v3131
    %v3217 = vpop.f32.mrb[0].mxu0
    %v3218 = vadd.f32 0.0, %v3217
    %v3219 = vpop.f32.mrb[0].mxu0
    %v3220 = vadd.f32 0.0, %v3219
    %3221 = vdwg.mxu0
    %3222 = vmatprep.subr.mxu0 %v3108
    %3223 = vmatpush1.msra.mxu0 %v3107
    %3224 = vmatprep.subr.mxu0 %v3112
    %3225 = vmatpush1.msra.mxu0 %v3111
    %3226 = vmatprep.subr.mxu0 %v3116
    %3227 = vmatpush1.msra.mxu0 %v3115
    %3228 = vmatprep.subr.mxu0 %v3120
    %3229 = vmatpush1.msra.mxu0 %v3119
    %3230 = vmatprep.subr.mxu0 0.0
    %3231 = vmatpush1.msra.mxu0 0.0
    %3232 = vmatprep.subr.mxu0 0.0
    %3233 = vmatpush1.msra.mxu0 0.0
    %3234 = vmatprep.subr.mxu0 0.0
    %3235 = vmatpush1.msra.mxu0 0.0
    %3236 = vmatprep.subr.mxu0 0.0
    %3237 = vmatpush1.msra.mxu0 0.0
    %3238 = vmatprep.subr.mxu0 0.0
    %3239 = vmatpush1.msra.mxu0 0.0
    %3240 = vmatprep.subr.mxu0 0.0
    %3241 = vmatpush1.msra.mxu0 0.0
    %3242 = vmatprep.subr.mxu0 0.0
    %3243 = vmatpush1.msra.mxu0 0.0
    %3244 = vmatprep.subr.mxu0 0.0
    %3245 = vmatpush1.msra.mxu0 0.0
    %3246 = vmatprep.subr.mxu0 0.0
    %3247 = vmatpush1.msra.mxu0 0.0
    %3248 = vmatprep.subr.mxu0 0.0
    %3249 = vmatpush1.msra.mxu0 0.0
    %3250 = vmatprep.subr.mxu0 0.0
    %3251 = vmatpush1.msra.mxu0 0.0
    %3252 = vmatprep.subr.mxu0 0.0
    %3253 = vmatpush1.msra.mxu0 0.0
    %3254 = vmatprep.subr.mxu0 0.0
    %3255 = vmatpush1.msra.mxu0 0.0
    %3256 = vmatprep.subr.mxu0 0.0
    %3257 = vmatpush1.msra.mxu0 0.0
    %3258 = vmatprep.subr.mxu0 0.0
    %3259 = vmatpush1.msra.mxu0 0.0
    %3260 = vmatprep.subr.mxu0 0.0
    %3261 = vmatpush1.msra.mxu0 0.0
    %3262 = vmatprep.subr.mxu0 0.0
    %3263 = vmatpush1.msra.mxu0 0.0
    %3264 = vmatprep.subr.mxu0 0.0
    %3265 = vmatpush1.msra.mxu0 0.0
    %3266 = vmatprep.subr.mxu0 0.0
    %3267 = vmatpush1.msra.mxu0 0.0
    %3268 = vmatprep.subr.mxu0 0.0
    %3269 = vmatpush1.msra.mxu0 0.0
    %3270 = vmatprep.subr.mxu0 0.0
    %3271 = vmatpush1.msra.mxu0 0.0
    %3272 = vmatprep.subr.mxu0 0.0
    %3273 = vmatpush1.msra.mxu0 0.0
    %3274 = vmatprep.subr.mxu0 0.0
    %3275 = vmatpush1.msra.mxu0 0.0
    %3276 = vmatprep.subr.mxu0 0.0
    %3277 = vmatpush1.msra.mxu0 0.0
    %3278 = vmatprep.subr.mxu0 0.0
    %3279 = vmatpush1.msra.mxu0 0.0
    %3280 = vmatprep.subr.mxu0 0.0
    %3281 = vmatpush1.msra.mxu0 0.0
    %3282 = vmatprep.subr.mxu0 0.0
    %3283 = vmatpush1.msra.mxu0 0.0
    %3284 = vmatprep.subr.mxu0 0.0
    %3285 = vmatpush1.msra.mxu0 0.0
    %3286 = vmatprep.mubr.f32.mxu0 0.0
    %3287 = vmatmul.mubr.f32.gmra.mrb[0].mxu0 %v3122
    %v3288 = vpop.f32.mrb[0].mxu0
    %v3289 = vadd.f32 0.0, %v3288
    %v3290 = vpop.f32.mrb[0].mxu0
    %v3291 = vadd.f32 0.0, %v3290
    %3292 = vmatprep.mubr.f32.mxu0 0.0
    %3293 = vmatmul.mubr.f32.gmra.mrb[0].mxu0 %v3125
    %v3294 = vpop.f32.mrb[0].mxu0
    %v3295 = vadd.f32 0.0, %v3294
    %v3296 = vpop.f32.mrb[0].mxu0
    %v3297 = vadd.f32 0.0, %v3296
    %3298 = vmatprep.mubr.f32.mxu0 0.0
    %3299 = vmatmul.mubr.f32.gmra.mrb[0].mxu0 %v3128
    %v3300 = vpop.f32.mrb[0].mxu0
    %v3301 = vadd.f32 0.0, %v3300
    %v3302 = vpop.f32.mrb[0].mxu0
    %v3303 = vadd.f32 0.0, %v3302
    %3304 = vmatprep.mubr.f32.mxu0 0.0
    %3305 = vmatmul.mubr.f32.gmra.mrb[0].mxu0 %v3131
    %v3306 = vpop.f32.mrb[0].mxu0
    %v3307 = vadd.f32 0.0, %v3306
    %v3308 = vpop.f32.mrb[0].mxu0
    %v3309 = vadd.f32 0.0, %v3308
    %3310 = vdwg.mxu0
    %v3311 = vadd.f32 %v3012, %v3200
    %v3312 = vadd.f32 %v3013, %v3202
    %v3313 = vadd.f32 %v3014, %v3289
    %v3314 = vadd.f32 %v3015, %v3291
    %v3315 = vadd.f32 %v3016, %v3206
    %v3316 = vadd.f32 %v3017, %v3208
    %v3317 = vadd.f32 %v3018, %v3295
    %v3318 = vadd.f32 %v3019, %v3297
    %v3319 = vadd.f32 %v3020, %v3212
    %v3320 = vadd.f32 %v3021, %v3214
    %v3321 = vadd.f32 %v3022, %v3301
    %v3322 = vadd.f32 %v3023, %v3303
    %v3323 = vadd.f32 %v3024, %v3218
    %v3324 = vadd.f32 %v3025, %v3220
    %v3325 = vadd.f32 %v3026, %v3307
    %v3326 = vadd.f32 %v3027, %v3309
    %3327 = vrot.lane.b32.xlu0 %v379, 111
    %v3328 = vpop.permute.xlu0 %3327
    %3329 = vrot.lane.b32.xlu0 %v383, 111
    %v3330 = vpop.permute.xlu0 %3329
    %3331 = vrot.lane.b32.xlu0 %v387, 111
    %v3332 = vpop.permute.xlu0 %3331
    %3333 = vrot.lane.b32.xlu0 %v391, 111
    %v3334 = vpop.permute.xlu0 %3333
    %3335 = vrot.lane.b32.xlu0 %v380, 111
    %v3336 = vpop.permute.xlu0 %3335
    %3337 = vrot.lane.b32.xlu0 %v384, 111
    %v3338 = vpop.permute.xlu0 %3337
    %3339 = vrot.lane.b32.xlu0 %v388, 111
    %v3340 = vpop.permute.xlu0 %3339
    %3341 = vrot.lane.b32.xlu0 %v392, 111
    %v3342 = vpop.permute.xlu0 %3341
    %3343 = vrot.lane.b32.xlu0 %v381, 111
    %v3344 = vpop.permute.xlu0 %3343
    %3345 = vrot.lane.b32.xlu0 %v385, 111
    %v3346 = vpop.permute.xlu0 %3345
    %3347 = vrot.lane.b32.xlu0 %v389, 111
    %v3348 = vpop.permute.xlu0 %3347
    %3349 = vrot.lane.b32.xlu0 %v393, 111
    %v3350 = vpop.permute.xlu0 %3349
    %3351 = vrot.lane.b32.xlu0 %v382, 111
    %v3352 = vpop.permute.xlu0 %3351
    %3353 = vrot.lane.b32.xlu0 %v386, 111
    %v3354 = vpop.permute.xlu0 %3353
    %3355 = vrot.lane.b32.xlu0 %v390, 111
    %v3356 = vpop.permute.xlu0 %3355
    %3357 = vrot.lane.b32.xlu0 %v394, 111
    %v3358 = vpop.permute.xlu0 %3357
    %vm3359 = vcmp.lt.s32.totalorder %v1017, 111
    %v3360 = vsel %vm3359, %v3344, %v3352
    %v3361 = vsel %vm3359, %v3346, %v3354
    %v3362 = vsel %vm3359, %v3348, %v3356
    %v3363 = vsel %vm3359, %v3350, %v3358
    %v3364 = vsel %vm3359, %v3336, %v3344
    %v3365 = vsel %vm3359, %v3338, %v3346
    %v3366 = vsel %vm3359, %v3340, %v3348
    %v3367 = vsel %vm3359, %v3342, %v3350
    %v3368 = vsel %vm3359, %v3328, %v3336
    %v3369 = vsel %vm3359, %v3330, %v3338
    %v3370 = vsel %vm3359, %v3332, %v3340
    %v3371 = vsel %vm3359, %v3334, %v3342
    %v3372 = vsel %vm3359, %v3352, %v3328
    %v3373 = vsel %vm3359, %v3354, %v3330
    %v3374 = vsel %vm3359, %v3356, %v3332
    %v3375 = vsel %vm3359, %v3358, %v3334
    %s3376 = scalar_lea.vmem %s1, 32
    %v3377 = vld [vmem:[%s3376] ss:$8 sm:$0xf]
    %s3378 = scalar_lea.vmem [#allocation2], 256
    %v3379 = vld [vmem:[%s3378] sm:$0xff]
    %v3380 = vld [vmem:[%s3378 + $0x8] sm:$0xff]
    %v3381 = vld [vmem:[%s3378 + $0x10] sm:$0xff]
    %v3382 = vld [vmem:[%s3378 + $0x18] sm:$0xff]
    %v3384 = vlaneseq
    %v3385 = vshrl.u32 %v3384, 7
    %v3386 = vsub.s32 0, %v3385
    %v3387 = vrot.slane %v3377, %v3386
    %v3388 = vlaneseq
    %v3389 = vshrl.u32 %v3388, 7
    %v3390 = vsub.s32 1, %v3389
    %v3391 = vrot.slane %v3377, %v3390
    %v3392 = vlaneseq
    %v3393 = vshrl.u32 %v3392, 7
    %v3394 = vsub.s32 2, %v3393
    %v3395 = vrot.slane %v3377, %v3394
    %v3396 = vlaneseq
    %v3397 = vshrl.u32 %v3396, 7
    %v3398 = vsub.s32 3, %v3397
    %v3399 = vrot.slane %v3377, %v3398
    %v3404 = vmul.f32 %v3368, %v3387
    %v3405 = vmul.f32 %v3364, %v3391
    %v3406 = vmul.f32 %v3360, %v3395
    %v3407 = vmul.f32 %v3372, %v3399
    %v3408 = vmul.f32 %v3369, %v3387
    %v3409 = vmul.f32 %v3365, %v3391
    %v3410 = vmul.f32 %v3361, %v3395
    %v3411 = vmul.f32 %v3373, %v3399
    %v3412 = vmul.f32 %v3370, %v3387
    %v3413 = vmul.f32 %v3366, %v3391
    %v3414 = vmul.f32 %v3362, %v3395
    %v3415 = vmul.f32 %v3374, %v3399
    %v3416 = vmul.f32 %v3371, %v3387
    %v3417 = vmul.f32 %v3367, %v3391
    %v3418 = vmul.f32 %v3363, %v3395
    %v3419 = vmul.f32 %v3375, %v3399
    %v3421 = vsel %vm753, %v3379, 0
    %v3424 = vsel %vm753, %v3380, 0
    %v3427 = vsel %vm753, %v3381, 0
    %v3430 = vsel %vm753, %v3382, 0
    %3432 = vmatprep.subr.mxu0 %v3405
    %3433 = vmatpush1.msra.mxu0 %v3404
    %3434 = vmatprep.subr.mxu0 %v3409
    %3435 = vmatpush1.msra.mxu0 %v3408
    %3436 = vmatprep.subr.mxu0 %v3413
    %3437 = vmatpush1.msra.mxu0 %v3412
    %3438 = vmatprep.subr.mxu0 %v3417
    %3439 = vmatpush1.msra.mxu0 %v3416
    %3440 = vmatprep.subr.mxu0 0.0
    %3441 = vmatpush1.msra.mxu0 0.0
    %3442 = vmatprep.subr.mxu0 0.0
    %3443 = vmatpush1.msra.mxu0 0.0
    %3444 = vmatprep.subr.mxu0 0.0
    %3445 = vmatpush1.msra.mxu0 0.0
    %3446 = vmatprep.subr.mxu0 0.0
    %3447 = vmatpush1.msra.mxu0 0.0
    %3448 = vmatprep.subr.mxu0 0.0
    %3449 = vmatpush1.msra.mxu0 0.0
    %3450 = vmatprep.subr.mxu0 0.0
    %3451 = vmatpush1.msra.mxu0 0.0
    %3452 = vmatprep.subr.mxu0 0.0
    %3453 = vmatpush1.msra.mxu0 0.0
    %3454 = vmatprep.subr.mxu0 0.0
    %3455 = vmatpush1.msra.mxu0 0.0
    %3456 = vmatprep.subr.mxu0 0.0
    %3457 = vmatpush1.msra.mxu0 0.0
    %3458 = vmatprep.subr.mxu0 0.0
    %3459 = vmatpush1.msra.mxu0 0.0
    %3460 = vmatprep.subr.mxu0 0.0
    %3461 = vmatpush1.msra.mxu0 0.0
    %3462 = vmatprep.subr.mxu0 0.0
    %3463 = vmatpush1.msra.mxu0 0.0
    %3464 = vmatprep.subr.mxu0 0.0
    %3465 = vmatpush1.msra.mxu0 0.0
    %3466 = vmatprep.subr.mxu0 0.0
    %3467 = vmatpush1.msra.mxu0 0.0
    %3468 = vmatprep.subr.mxu0 0.0
    %3469 = vmatpush1.msra.mxu0 0.0
    %3470 = vmatprep.subr.mxu0 0.0
    %3471 = vmatpush1.msra.mxu0 0.0
    %3472 = vmatprep.subr.mxu0 0.0
    %3473 = vmatpush1.msra.mxu0 0.0
    %3474 = vmatprep.subr.mxu0 0.0
    %3475 = vmatpush1.msra.mxu0 0.0
    %3476 = vmatprep.subr.mxu0 0.0
    %3477 = vmatpush1.msra.mxu0 0.0
    %3478 = vmatprep.subr.mxu0 0.0
    %3479 = vmatpush1.msra.mxu0 0.0
    %3480 = vmatprep.subr.mxu0 0.0
    %3481 = vmatpush1.msra.mxu0 0.0
    %3482 = vmatprep.subr.mxu0 0.0
    %3483 = vmatpush1.msra.mxu0 0.0
    %3484 = vmatprep.subr.mxu0 0.0
    %3485 = vmatpush1.msra.mxu0 0.0
    %3486 = vmatprep.subr.mxu0 0.0
    %3487 = vmatpush1.msra.mxu0 0.0
    %3488 = vmatprep.subr.mxu0 0.0
    %3489 = vmatpush1.msra.mxu0 0.0
    %3490 = vmatprep.subr.mxu0 0.0
    %3491 = vmatpush1.msra.mxu0 0.0
    %3492 = vmatprep.subr.mxu0 0.0
    %3493 = vmatpush1.msra.mxu0 0.0
    %3494 = vmatprep.subr.mxu0 0.0
    %3495 = vmatpush1.msra.mxu0 0.0
    %3496 = vmatprep.mubr.f32.mxu0 0.0
    %3497 = vmatmul.mubr.f32.gmra.mrb[0].mxu0 %v3421
    %v3498 = vpop.f32.mrb[0].mxu0
    %v3499 = vadd.f32 0.0, %v3498
    %v3500 = vpop.f32.mrb[0].mxu0
    %v3501 = vadd.f32 0.0, %v3500
    %3502 = vmatprep.mubr.f32.mxu0 0.0
    %3503 = vmatmul.mubr.f32.gmra.mrb[0].mxu0 %v3424
    %v3504 = vpop.f32.mrb[0].mxu0
    %v3505 = vadd.f32 0.0, %v3504
    %v3506 = vpop.f32.mrb[0].mxu0
    %v3507 = vadd.f32 0.0, %v3506
    %3508 = vmatprep.mubr.f32.mxu0 0.0
    %3509 = vmatmul.mubr.f32.gmra.mrb[0].mxu0 %v3427
    %v3510 = vpop.f32.mrb[0].mxu0
    %v3511 = vadd.f32 0.0, %v3510
    %v3512 = vpop.f32.mrb[0].mxu0
    %v3513 = vadd.f32 0.0, %v3512
    %3514 = vmatprep.mubr.f32.mxu0 0.0
    %3515 = vmatmul.mubr.f32.gmra.mrb[0].mxu0 %v3430
    %v3516 = vpop.f32.mrb[0].mxu0
    %v3517 = vadd.f32 0.0, %v3516
    %v3518 = vpop.f32.mrb[0].mxu0
    %v3519 = vadd.f32 0.0, %v3518
    %3520 = vdwg.mxu0
    %3521 = vmatprep.subr.mxu0 %v3407
    %3522 = vmatpush1.msra.mxu0 %v3406
    %3523 = vmatprep.subr.mxu0 %v3411
    %3524 = vmatpush1.msra.mxu0 %v3410
    %3525 = vmatprep.subr.mxu0 %v3415
    %3526 = vmatpush1.msra.mxu0 %v3414
    %3527 = vmatprep.subr.mxu0 %v3419
    %3528 = vmatpush1.msra.mxu0 %v3418
    %3529 = vmatprep.subr.mxu0 0.0
    %3530 = vmatpush1.msra.mxu0 0.0
    %3531 = vmatprep.subr.mxu0 0.0
    %3532 = vmatpush1.msra.mxu0 0.0
    %3533 = vmatprep.subr.mxu0 0.0
    %3534 = vmatpush1.msra.mxu0 0.0
    %3535 = vmatprep.subr.mxu0 0.0
    %3536 = vmatpush1.msra.mxu0 0.0
    %3537 = vmatprep.subr.mxu0 0.0
    %3538 = vmatpush1.msra.mxu0 0.0
    %3539 = vmatprep.subr.mxu0 0.0
    %3540 = vmatpush1.msra.mxu0 0.0
    %3541 = vmatprep.subr.mxu0 0.0
    %3542 = vmatpush1.msra.mxu0 0.0
    %3543 = vmatprep.subr.mxu0 0.0
    %3544 = vmatpush1.msra.mxu0 0.0
    %3545 = vmatprep.subr.mxu0 0.0
    %3546 = vmatpush1.msra.mxu0 0.0
    %3547 = vmatprep.subr.mxu0 0.0
    %3548 = vmatpush1.msra.mxu0 0.0
    %3549 = vmatprep.subr.mxu0 0.0
    %3550 = vmatpush1.msra.mxu0 0.0
    %3551 = vmatprep.subr.mxu0 0.0
    %3552 = vmatpush1.msra.mxu0 0.0
    %3553 = vmatprep.subr.mxu0 0.0
    %3554 = vmatpush1.msra.mxu0 0.0
    %3555 = vmatprep.subr.mxu0 0.0
    %3556 = vmatpush1.msra.mxu0 0.0
    %3557 = vmatprep.subr.mxu0 0.0
    %3558 = vmatpush1.msra.mxu0 0.0
    %3559 = vmatprep.subr.mxu0 0.0
    %3560 = vmatpush1.msra.mxu0 0.0
    %3561 = vmatprep.subr.mxu0 0.0
    %3562 = vmatpush1.msra.mxu0 0.0
    %3563 = vmatprep.subr.mxu0 0.0
    %3564 = vmatpush1.msra.mxu0 0.0
    %3565 = vmatprep.subr.mxu0 0.0
    %3566 = vmatpush1.msra.mxu0 0.0
    %3567 = vmatprep.subr.mxu0 0.0
    %3568 = vmatpush1.msra.mxu0 0.0
    %3569 = vmatprep.subr.mxu0 0.0
    %3570 = vmatpush1.msra.mxu0 0.0
    %3571 = vmatprep.subr.mxu0 0.0
    %3572 = vmatpush1.msra.mxu0 0.0
    %3573 = vmatprep.subr.mxu0 0.0
    %3574 = vmatpush1.msra.mxu0 0.0
    %3575 = vmatprep.subr.mxu0 0.0
    %3576 = vmatpush1.msra.mxu0 0.0
    %3577 = vmatprep.subr.mxu0 0.0
    %3578 = vmatpush1.msra.mxu0 0.0
    %3579 = vmatprep.subr.mxu0 0.0
    %3580 = vmatpush1.msra.mxu0 0.0
    %3581 = vmatprep.subr.mxu0 0.0
    %3582 = vmatpush1.msra.mxu0 0.0
    %3583 = vmatprep.subr.mxu0 0.0
    %3584 = vmatpush1.msra.mxu0 0.0
    %3585 = vmatprep.mubr.f32.mxu0 0.0
    %3586 = vmatmul.mubr.f32.gmra.mrb[0].mxu0 %v3421
    %v3587 = vpop.f32.mrb[0].mxu0
    %v3588 = vadd.f32 0.0, %v3587
    %v3589 = vpop.f32.mrb[0].mxu0
    %v3590 = vadd.f32 0.0, %v3589
    %3591 = vmatprep.mubr.f32.mxu0 0.0
    %3592 = vmatmul.mubr.f32.gmra.mrb[0].mxu0 %v3424
    %v3593 = vpop.f32.mrb[0].mxu0
    %v3594 = vadd.f32 0.0, %v3593
    %v3595 = vpop.f32.mrb[0].mxu0
    %v3596 = vadd.f32 0.0, %v3595
    %3597 = vmatprep.mubr.f32.mxu0 0.0
    %3598 = vmatmul.mubr.f32.gmra.mrb[0].mxu0 %v3427
    %v3599 = vpop.f32.mrb[0].mxu0
    %v3600 = vadd.f32 0.0, %v3599
    %v3601 = vpop.f32.mrb[0].mxu0
    %v3602 = vadd.f32 0.0, %v3601
    %3603 = vmatprep.mubr.f32.mxu0 0.0
    %3604 = vmatmul.mubr.f32.gmra.mrb[0].mxu0 %v3430
    %v3605 = vpop.f32.mrb[0].mxu0
    %v3606 = vadd.f32 0.0, %v3605
    %v3607 = vpop.f32.mrb[0].mxu0
    %v3608 = vadd.f32 0.0, %v3607
    %3609 = vdwg.mxu0
    %v3610 = vadd.f32 %v3311, %v3499
    %v3611 = vadd.f32 %v3312, %v3501
    %v3612 = vadd.f32 %v3313, %v3588
    %v3613 = vadd.f32 %v3314, %v3590
    %v3614 = vadd.f32 %v3315, %v3505
    %v3615 = vadd.f32 %v3316, %v3507
    %v3616 = vadd.f32 %v3317, %v3594
    %v3617 = vadd.f32 %v3318, %v3596
    %v3618 = vadd.f32 %v3319, %v3511
    %v3619 = vadd.f32 %v3320, %v3513
    %v3620 = vadd.f32 %v3321, %v3600
    %v3621 = vadd.f32 %v3322, %v3602
    %v3622 = vadd.f32 %v3323, %v3517
    %v3623 = vadd.f32 %v3324, %v3519
    %v3624 = vadd.f32 %v3325, %v3606
    %v3625 = vadd.f32 %v3326, %v3608
    %v3626 = vxor.u32 %v3610, 2147483648
    %v3627 = vxor.u32 %v3611, 2147483648
    %v3628 = vxor.u32 %v3612, 2147483648
    %v3629 = vxor.u32 %v3613, 2147483648
    %v3630 = vxor.u32 %v3614, 2147483648
    %v3631 = vxor.u32 %v3615, 2147483648
    %v3632 = vxor.u32 %v3616, 2147483648
    %v3633 = vxor.u32 %v3617, 2147483648
    %v3634 = vxor.u32 %v3618, 2147483648
    %v3635 = vxor.u32 %v3619, 2147483648
    %v3636 = vxor.u32 %v3620, 2147483648
    %v3637 = vxor.u32 %v3621, 2147483648
    %v3638 = vxor.u32 %v3622, 2147483648
    %v3639 = vxor.u32 %v3623, 2147483648
    %v3640 = vxor.u32 %v3624, 2147483648
    %v3641 = vxor.u32 %v3625, 2147483648
    %v3642 = vmul.f32 %v3626, 1.442695
    %v3643 = vpow.pop %v3642
    %v3644 = vmul.f32 %v3627, 1.442695
    %v3645 = vpow.pop %v3644
    %v3646 = vmul.f32 %v3628, 1.442695
    %v3647 = vpow.pop %v3646
    %v3648 = vmul.f32 %v3629, 1.442695
    %v3649 = vpow.pop %v3648
    %v3650 = vmul.f32 %v3630, 1.442695
    %v3651 = vpow.pop %v3650
    %v3652 = vmul.f32 %v3631, 1.442695
    %v3653 = vpow.pop %v3652
    %v3654 = vmul.f32 %v3632, 1.442695
    %v3655 = vpow.pop %v3654
    %v3656 = vmul.f32 %v3633, 1.442695
    %v3657 = vpow.pop %v3656
    %v3658 = vmul.f32 %v3634, 1.442695
    %v3659 = vpow.pop %v3658
    %v3660 = vmul.f32 %v3635, 1.442695
    %v3661 = vpow.pop %v3660
    %v3662 = vmul.f32 %v3636, 1.442695
    %v3663 = vpow.pop %v3662
    %v3664 = vmul.f32 %v3637, 1.442695
    %v3665 = vpow.pop %v3664
    %v3666 = vmul.f32 %v3638, 1.442695
    %v3667 = vpow.pop %v3666
    %v3668 = vmul.f32 %v3639, 1.442695
    %v3669 = vpow.pop %v3668
    %v3670 = vmul.f32 %v3640, 1.442695
    %v3671 = vpow.pop %v3670
    %v3672 = vmul.f32 %v3641, 1.442695
    %v3673 = vpow.pop %v3672
    %v3674 = vadd.f32 %v3643, 1.0
    %v3675 = vadd.f32 %v3645, 1.0
    %v3676 = vadd.f32 %v3647, 1.0
    %v3677 = vadd.f32 %v3649, 1.0
    %v3678 = vadd.f32 %v3651, 1.0
    %v3679 = vadd.f32 %v3653, 1.0
    %v3680 = vadd.f32 %v3655, 1.0
    %v3681 = vadd.f32 %v3657, 1.0
    %v3682 = vadd.f32 %v3659, 1.0
    %v3683 = vadd.f32 %v3661, 1.0
    %v3684 = vadd.f32 %v3663, 1.0
    %v3685 = vadd.f32 %v3665, 1.0
    %v3686 = vadd.f32 %v3667, 1.0
    %v3687 = vadd.f32 %v3669, 1.0
    %v3688 = vadd.f32 %v3671, 1.0
    %v3689 = vadd.f32 %v3673, 1.0
    %v3690 = vrcp.pop %v3674
    %v3691 = vmul.f32 1.0, %v3690
    %v3692 = vrcp.pop %v3675
    %v3693 = vmul.f32 1.0, %v3692
    %v3694 = vrcp.pop %v3676
    %v3695 = vmul.f32 1.0, %v3694
    %v3696 = vrcp.pop %v3677
    %v3697 = vmul.f32 1.0, %v3696
    %v3698 = vrcp.pop %v3678
    %v3699 = vmul.f32 1.0, %v3698
    %v3700 = vrcp.pop %v3679
    %v3701 = vmul.f32 1.0, %v3700
    %v3702 = vrcp.pop %v3680
    %v3703 = vmul.f32 1.0, %v3702
    %v3704 = vrcp.pop %v3681
    %v3705 = vmul.f32 1.0, %v3704
    %v3706 = vrcp.pop %v3682
    %v3707 = vmul.f32 1.0, %v3706
    %v3708 = vrcp.pop %v3683
    %v3709 = vmul.f32 1.0, %v3708
    %v3710 = vrcp.pop %v3684
    %v3711 = vmul.f32 1.0, %v3710
    %v3712 = vrcp.pop %v3685
    %v3713 = vmul.f32 1.0, %v3712
    %v3714 = vrcp.pop %v3686
    %v3715 = vmul.f32 1.0, %v3714
    %v3716 = vrcp.pop %v3687
    %v3717 = vmul.f32 1.0, %v3716
    %v3718 = vrcp.pop %v3688
    %v3719 = vmul.f32 1.0, %v3718
    %v3720 = vrcp.pop %v3689
    %v3721 = vmul.f32 1.0, %v3720
    %v3722 = vmul.f32 %v3610, %v3691
    %v3723 = vmul.f32 %v3611, %v3693
    %v3724 = vmul.f32 %v3612, %v3695
    %v3725 = vmul.f32 %v3613, %v3697
    %v3726 = vmul.f32 %v3614, %v3699
    %v3727 = vmul.f32 %v3615, %v3701
    %v3728 = vmul.f32 %v3616, %v3703
    %v3729 = vmul.f32 %v3617, %v3705
    %v3730 = vmul.f32 %v3618, %v3707
    %v3731 = vmul.f32 %v3619, %v3709
    %v3732 = vmul.f32 %v3620, %v3711
    %v3733 = vmul.f32 %v3621, %v3713
    %v3734 = vmul.f32 %v3622, %v3715
    %v3735 = vmul.f32 %v3623, %v3717
    %v3736 = vmul.f32 %v3624, %v3719
    %v3737 = vmul.f32 %v3625, %v3721
    %s3738 = scalar_lea.vmem %s8, 32
    %v3739 = vld [vmem:[%s3738] sm:$0xff]
    %v3740 = vld [vmem:[%s3738 + $0x8] sm:$0xff]
    %v3741 = vld [vmem:[%s3738 + $0x10] sm:$0xff]
    %v3742 = vld [vmem:[%s3738 + $0x18] sm:$0xff]
    %s3743 = scalar_lea.vmem %s9, 32
    %v3744 = vld [vmem:[%s3743] sm:$0xff]
    %v3745 = vld [vmem:[%s3743 + $0x8] sm:$0xff]
    %v3746 = vld [vmem:[%s3743 + $0x10] sm:$0xff]
    %v3747 = vld [vmem:[%s3743 + $0x18] sm:$0xff]
    %3749 = vset.pattern.permute.xlu0 0
    %3750 = vperm.xlu0 %3749, %v3744
    %v3751 = vpop.permute.xlu0 %3750
    %3754 = vset.pattern.permute.xlu0 0
    %3755 = vperm.xlu0 %3754, %v3745
    %v3756 = vpop.permute.xlu0 %3755
    %3759 = vset.pattern.permute.xlu0 0
    %3760 = vperm.xlu0 %3759, %v3746
    %v3761 = vpop.permute.xlu0 %3760
    %3764 = vset.pattern.permute.xlu0 0
    %3765 = vperm.xlu0 %3764, %v3747
    %v3766 = vpop.permute.xlu0 %3765
    %v3769 = vsel %vm753, %v3739, 0
    %v3772 = vsel %vm753, %v3740, 0
    %v3775 = vsel %vm753, %v3741, 0
    %v3778 = vsel %vm753, %v3742, 0
    %3780 = vmatprep.subr.mxu0 %v3723
    %3781 = vmatpush1.msra.mxu0 %v3722
    %3782 = vmatprep.subr.mxu0 %v3727
    %3783 = vmatpush1.msra.mxu0 %v3726
    %3784 = vmatprep.subr.mxu0 %v3731
    %3785 = vmatpush1.msra.mxu0 %v3730
    %3786 = vmatprep.subr.mxu0 %v3735
    %3787 = vmatpush1.msra.mxu0 %v3734
    %3788 = vmatprep.subr.mxu0 0.0
    %3789 = vmatpush1.msra.mxu0 0.0
    %3790 = vmatprep.subr.mxu0 0.0
    %3791 = vmatpush1.msra.mxu0 0.0
    %3792 = vmatprep.subr.mxu0 0.0
    %3793 = vmatpush1.msra.mxu0 0.0
    %3794 = vmatprep.subr.mxu0 0.0
    %3795 = vmatpush1.msra.mxu0 0.0
    %3796 = vmatprep.subr.mxu0 0.0
    %3797 = vmatpush1.msra.mxu0 0.0
    %3798 = vmatprep.subr.mxu0 0.0
    %3799 = vmatpush1.msra.mxu0 0.0
    %3800 = vmatprep.subr.mxu0 0.0
    %3801 = vmatpush1.msra.mxu0 0.0
    %3802 = vmatprep.subr.mxu0 0.0
    %3803 = vmatpush1.msra.mxu0 0.0
    %3804 = vmatprep.subr.mxu0 0.0
    %3805 = vmatpush1.msra.mxu0 0.0
    %3806 = vmatprep.subr.mxu0 0.0
    %3807 = vmatpush1.msra.mxu0 0.0
    %3808 = vmatprep.subr.mxu0 0.0
    %3809 = vmatpush1.msra.mxu0 0.0
    %3810 = vmatprep.subr.mxu0 0.0
    %3811 = vmatpush1.msra.mxu0 0.0
    %3812 = vmatprep.subr.mxu0 0.0
    %3813 = vmatpush1.msra.mxu0 0.0
    %3814 = vmatprep.subr.mxu0 0.0
    %3815 = vmatpush1.msra.mxu0 0.0
    %3816 = vmatprep.subr.mxu0 0.0
    %3817 = vmatpush1.msra.mxu0 0.0
    %3818 = vmatprep.subr.mxu0 0.0
    %3819 = vmatpush1.msra.mxu0 0.0
    %3820 = vmatprep.subr.mxu0 0.0
    %3821 = vmatpush1.msra.mxu0 0.0
    %3822 = vmatprep.subr.mxu0 0.0
    %3823 = vmatpush1.msra.mxu0 0.0
    %3824 = vmatprep.subr.mxu0 0.0
    %3825 = vmatpush1.msra.mxu0 0.0
    %3826 = vmatprep.subr.mxu0 0.0
    %3827 = vmatpush1.msra.mxu0 0.0
    %3828 = vmatprep.subr.mxu0 0.0
    %3829 = vmatpush1.msra.mxu0 0.0
    %3830 = vmatprep.subr.mxu0 0.0
    %3831 = vmatpush1.msra.mxu0 0.0
    %3832 = vmatprep.subr.mxu0 0.0
    %3833 = vmatpush1.msra.mxu0 0.0
    %3834 = vmatprep.subr.mxu0 0.0
    %3835 = vmatpush1.msra.mxu0 0.0
    %3836 = vmatprep.subr.mxu0 0.0
    %3837 = vmatpush1.msra.mxu0 0.0
    %3838 = vmatprep.subr.mxu0 0.0
    %3839 = vmatpush1.msra.mxu0 0.0
    %3840 = vmatprep.subr.mxu0 0.0
    %3841 = vmatpush1.msra.mxu0 0.0
    %3842 = vmatprep.subr.mxu0 0.0
    %3843 = vmatpush1.msra.mxu0 0.0
    %3844 = vmatprep.mubr.f32.mxu0 0.0
    %3845 = vmatmul.mubr.f32.gmra.mrb[0].mxu0 %v3769
    %v3846 = vpop.f32.mrb[0].mxu0
    %v3847 = vadd.f32 %v3751, %v3846
    %v3848 = vpop.f32.mrb[0].mxu0
    %v3849 = vadd.f32 %v3751, %v3848
    %3850 = vmatprep.mubr.f32.mxu0 0.0
    %3851 = vmatmul.mubr.f32.gmra.mrb[0].mxu0 %v3772
    %v3852 = vpop.f32.mrb[0].mxu0
    %v3853 = vadd.f32 %v3756, %v3852
    %v3854 = vpop.f32.mrb[0].mxu0
    %v3855 = vadd.f32 %v3756, %v3854
    %3856 = vmatprep.mubr.f32.mxu0 0.0
    %3857 = vmatmul.mubr.f32.gmra.mrb[0].mxu0 %v3775
    %v3858 = vpop.f32.mrb[0].mxu0
    %v3859 = vadd.f32 %v3761, %v3858
    %v3860 = vpop.f32.mrb[0].mxu0
    %v3861 = vadd.f32 %v3761, %v3860
    %3862 = vmatprep.mubr.f32.mxu0 0.0
    %3863 = vmatmul.mubr.f32.gmra.mrb[0].mxu0 %v3778
    %v3864 = vpop.f32.mrb[0].mxu0
    %v3865 = vadd.f32 %v3766, %v3864
    %v3866 = vpop.f32.mrb[0].mxu0
    %v3867 = vadd.f32 %v3766, %v3866
    %3868 = vdwg.mxu0
    %3869 = vmatprep.subr.mxu0 %v3725
    %3870 = vmatpush1.msra.mxu0 %v3724
    %3871 = vmatprep.subr.mxu0 %v3729
    %3872 = vmatpush1.msra.mxu0 %v3728
    %3873 = vmatprep.subr.mxu0 %v3733
    %3874 = vmatpush1.msra.mxu0 %v3732
    %3875 = vmatprep.subr.mxu0 %v3737
    %3876 = vmatpush1.msra.mxu0 %v3736
    %3877 = vmatprep.subr.mxu0 0.0
    %3878 = vmatpush1.msra.mxu0 0.0
    %3879 = vmatprep.subr.mxu0 0.0
    %3880 = vmatpush1.msra.mxu0 0.0
    %3881 = vmatprep.subr.mxu0 0.0
    %3882 = vmatpush1.msra.mxu0 0.0
    %3883 = vmatprep.subr.mxu0 0.0
    %3884 = vmatpush1.msra.mxu0 0.0
    %3885 = vmatprep.subr.mxu0 0.0
    %3886 = vmatpush1.msra.mxu0 0.0
    %3887 = vmatprep.subr.mxu0 0.0
    %3888 = vmatpush1.msra.mxu0 0.0
    %3889 = vmatprep.subr.mxu0 0.0
    %3890 = vmatpush1.msra.mxu0 0.0
    %3891 = vmatprep.subr.mxu0 0.0
    %3892 = vmatpush1.msra.mxu0 0.0
    %3893 = vmatprep.subr.mxu0 0.0
    %3894 = vmatpush1.msra.mxu0 0.0
    %3895 = vmatprep.subr.mxu0 0.0
    %3896 = vmatpush1.msra.mxu0 0.0
    %3897 = vmatprep.subr.mxu0 0.0
    %3898 = vmatpush1.msra.mxu0 0.0
    %3899 = vmatprep.subr.mxu0 0.0
    %3900 = vmatpush1.msra.mxu0 0.0
    %3901 = vmatprep.subr.mxu0 0.0
    %3902 = vmatpush1.msra.mxu0 0.0
    %3903 = vmatprep.subr.mxu0 0.0
    %3904 = vmatpush1.msra.mxu0 0.0
    %3905 = vmatprep.subr.mxu0 0.0
    %3906 = vmatpush1.msra.mxu0 0.0
    %3907 = vmatprep.subr.mxu0 0.0
    %3908 = vmatpush1.msra.mxu0 0.0
    %3909 = vmatprep.subr.mxu0 0.0
    %3910 = vmatpush1.msra.mxu0 0.0
    %3911 = vmatprep.subr.mxu0 0.0
    %3912 = vmatpush1.msra.mxu0 0.0
    %3913 = vmatprep.subr.mxu0 0.0
    %3914 = vmatpush1.msra.mxu0 0.0
    %3915 = vmatprep.subr.mxu0 0.0
    %3916 = vmatpush1.msra.mxu0 0.0
    %3917 = vmatprep.subr.mxu0 0.0
    %3918 = vmatpush1.msra.mxu0 0.0
    %3919 = vmatprep.subr.mxu0 0.0
    %3920 = vmatpush1.msra.mxu0 0.0
    %3921 = vmatprep.subr.mxu0 0.0
    %3922 = vmatpush1.msra.mxu0 0.0
    %3923 = vmatprep.subr.mxu0 0.0
    %3924 = vmatpush1.msra.mxu0 0.0
    %3925 = vmatprep.subr.mxu0 0.0
    %3926 = vmatpush1.msra.mxu0 0.0
    %3927 = vmatprep.subr.mxu0 0.0
    %3928 = vmatpush1.msra.mxu0 0.0
    %3929 = vmatprep.subr.mxu0 0.0
    %3930 = vmatpush1.msra.mxu0 0.0
    %3931 = vmatprep.subr.mxu0 0.0
    %3932 = vmatpush1.msra.mxu0 0.0
    %3933 = vmatprep.mubr.f32.mxu0 0.0
    %3934 = vmatmul.mubr.f32.gmra.mrb[0].mxu0 %v3769
    %v3935 = vpop.f32.mrb[0].mxu0
    %v3936 = vadd.f32 %v3751, %v3935
    %v3937 = vpop.f32.mrb[0].mxu0
    %v3938 = vadd.f32 %v3751, %v3937
    %3939 = vmatprep.mubr.f32.mxu0 0.0
    %3940 = vmatmul.mubr.f32.gmra.mrb[0].mxu0 %v3772
    %v3941 = vpop.f32.mrb[0].mxu0
    %v3942 = vadd.f32 %v3756, %v3941
    %v3943 = vpop.f32.mrb[0].mxu0
    %v3944 = vadd.f32 %v3756, %v3943
    %3945 = vmatprep.mubr.f32.mxu0 0.0
    %3946 = vmatmul.mubr.f32.gmra.mrb[0].mxu0 %v3775
    %v3947 = vpop.f32.mrb[0].mxu0
    %v3948 = vadd.f32 %v3761, %v3947
    %v3949 = vpop.f32.mrb[0].mxu0
    %v3950 = vadd.f32 %v3761, %v3949
    %3951 = vmatprep.mubr.f32.mxu0 0.0
    %3952 = vmatmul.mubr.f32.gmra.mrb[0].mxu0 %v3778
    %v3953 = vpop.f32.mrb[0].mxu0
    %v3954 = vadd.f32 %v3766, %v3953
    %v3955 = vpop.f32.mrb[0].mxu0
    %v3956 = vadd.f32 %v3766, %v3955
    %3957 = vdwg.mxu0
    %s3958 = scalar_lea.vmem %s7, 32
    %v3959 = vld [vmem:[%s3958] sm:$0xff]
    %v3960 = vld [vmem:[%s3958 + $0x8] sm:$0xff]
    %v3961 = vld [vmem:[%s3958 + $0x10] sm:$0xff]
    %v3962 = vld [vmem:[%s3958 + $0x18] sm:$0xff]
    %3964 = vset.pattern.permute.xlu0 0
    %3965 = vperm.xlu0 %3964, %v3959
    %v3966 = vpop.permute.xlu0 %3965
    %3969 = vset.pattern.permute.xlu0 0
    %3970 = vperm.xlu0 %3969, %v3960
    %v3971 = vpop.permute.xlu0 %3970
    %3974 = vset.pattern.permute.xlu0 0
    %3975 = vperm.xlu0 %3974, %v3961
    %v3976 = vpop.permute.xlu0 %3975
    %3979 = vset.pattern.permute.xlu0 0
    %3980 = vperm.xlu0 %3979, %v3962
    %v3981 = vpop.permute.xlu0 %3980
    %v3983 = vadd.f32 %v3847, %v3966
    %v3984 = vadd.f32 %v3849, %v3966
    %v3985 = vadd.f32 %v3936, %v3966
    %v3986 = vadd.f32 %v3938, %v3966
    %v3987 = vadd.f32 %v3853, %v3971
    %v3988 = vadd.f32 %v3855, %v3971
    %v3989 = vadd.f32 %v3942, %v3971
    %v3990 = vadd.f32 %v3944, %v3971
    %v3991 = vadd.f32 %v3859, %v3976
    %v3992 = vadd.f32 %v3861, %v3976
    %v3993 = vadd.f32 %v3948, %v3976
    %v3994 = vadd.f32 %v3950, %v3976
    %v3995 = vadd.f32 %v3865, %v3981
    %v3996 = vadd.f32 %v3867, %v3981
    %v3997 = vadd.f32 %v3954, %v3981
    %v3998 = vadd.f32 %v3956, %v3981
    %3999 = vrot.lane.b32.xlu0 %v3722, 17
    %v4000 = vpop.permute.xlu0 %3999
    %4001 = vrot.lane.b32.xlu0 %v3726, 17
    %v4002 = vpop.permute.xlu0 %4001
    %4003 = vrot.lane.b32.xlu0 %v3730, 17
    %v4004 = vpop.permute.xlu0 %4003
    %4005 = vrot.lane.b32.xlu0 %v3734, 17
    %v4006 = vpop.permute.xlu0 %4005
    %4007 = vrot.lane.b32.xlu0 %v3723, 17
    %v4008 = vpop.permute.xlu0 %4007
    %4009 = vrot.lane.b32.xlu0 %v3727, 17
    %v4010 = vpop.permute.xlu0 %4009
    %4011 = vrot.lane.b32.xlu0 %v3731, 17
    %v4012 = vpop.permute.xlu0 %4011
    %4013 = vrot.lane.b32.xlu0 %v3735, 17
    %v4014 = vpop.permute.xlu0 %4013
    %4015 = vrot.lane.b32.xlu0 %v3724, 17
    %v4016 = vpop.permute.xlu0 %4015
    %4017 = vrot.lane.b32.xlu0 %v3728, 17
    %v4018 = vpop.permute.xlu0 %4017
    %4019 = vrot.lane.b32.xlu0 %v3732, 17
    %v4020 = vpop.permute.xlu0 %4019
    %4021 = vrot.lane.b32.xlu0 %v3736, 17
    %v4022 = vpop.permute.xlu0 %4021
    %4023 = vrot.lane.b32.xlu0 %v3725, 17
    %v4024 = vpop.permute.xlu0 %4023
    %4025 = vrot.lane.b32.xlu0 %v3729, 17
    %v4026 = vpop.permute.xlu0 %4025
    %4027 = vrot.lane.b32.xlu0 %v3733, 17
    %v4028 = vpop.permute.xlu0 %4027
    %4029 = vrot.lane.b32.xlu0 %v3737, 17
    %v4030 = vpop.permute.xlu0 %4029
    %v4031 = vsel %vm1018, %v4016, %v4024
    %v4032 = vsel %vm1018, %v4018, %v4026
    %v4033 = vsel %vm1018, %v4020, %v4028
    %v4034 = vsel %vm1018, %v4022, %v4030
    %v4035 = vsel %vm1018, %v4008, %v4016
    %v4036 = vsel %vm1018, %v4010, %v4018
    %v4037 = vsel %vm1018, %v4012, %v4020
    %v4038 = vsel %vm1018, %v4014, %v4022
    %v4039 = vsel %vm1018, %v4000, %v4008
    %v4040 = vsel %vm1018, %v4002, %v4010
    %v4041 = vsel %vm1018, %v4004, %v4012
    %v4042 = vsel %vm1018, %v4006, %v4014
    %v4043 = vsel %vm1018, %v4024, %v4000
    %v4044 = vsel %vm1018, %v4026, %v4002
    %v4045 = vsel %vm1018, %v4028, %v4004
    %v4046 = vsel %vm1018, %v4030, %v4006
    %s4047 = scalar_lea.vmem [#allocation2], 288
    %v4048 = vld [vmem:[%s4047] sm:$0xff]
    %v4049 = vld [vmem:[%s4047 + $0x8] sm:$0xff]
    %v4050 = vld [vmem:[%s4047 + $0x10] sm:$0xff]
    %v4051 = vld [vmem:[%s4047 + $0x18] sm:$0xff]
    %v4052 = vmul.f32 %v4043, %v1044
    %v4053 = vmul.f32 %v4039, %v1048
    %v4054 = vmul.f32 %v4035, %v1052
    %v4055 = vmul.f32 %v4031, %v1056
    %v4056 = vmul.f32 %v4044, %v1044
    %v4057 = vmul.f32 %v4040, %v1048
    %v4058 = vmul.f32 %v4036, %v1052
    %v4059 = vmul.f32 %v4032, %v1056
    %v4060 = vmul.f32 %v4045, %v1044
    %v4061 = vmul.f32 %v4041, %v1048
    %v4062 = vmul.f32 %v4037, %v1052
    %v4063 = vmul.f32 %v4033, %v1056
    %v4064 = vmul.f32 %v4046, %v1044
    %v4065 = vmul.f32 %v4042, %v1048
    %v4066 = vmul.f32 %v4038, %v1052
    %v4067 = vmul.f32 %v4034, %v1056
    %v4069 = vsel %vm753, %v4048, 0
    %v4072 = vsel %vm753, %v4049, 0
    %v4075 = vsel %vm753, %v4050, 0
    %v4078 = vsel %vm753, %v4051, 0
    %4080 = vmatprep.subr.mxu0 %v4053
    %4081 = vmatpush1.msra.mxu0 %v4052
    %4082 = vmatprep.subr.mxu0 %v4057
    %4083 = vmatpush1.msra.mxu0 %v4056
    %4084 = vmatprep.subr.mxu0 %v4061
    %4085 = vmatpush1.msra.mxu0 %v4060
    %4086 = vmatprep.subr.mxu0 %v4065
    %4087 = vmatpush1.msra.mxu0 %v4064
    %4088 = vmatprep.subr.mxu0 0.0
    %4089 = vmatpush1.msra.mxu0 0.0
    %4090 = vmatprep.subr.mxu0 0.0
    %4091 = vmatpush1.msra.mxu0 0.0
    %4092 = vmatprep.subr.mxu0 0.0
    %4093 = vmatpush1.msra.mxu0 0.0
    %4094 = vmatprep.subr.mxu0 0.0
    %4095 = vmatpush1.msra.mxu0 0.0
    %4096 = vmatprep.subr.mxu0 0.0
    %4097 = vmatpush1.msra.mxu0 0.0
    %4098 = vmatprep.subr.mxu0 0.0
    %4099 = vmatpush1.msra.mxu0 0.0
    %4100 = vmatprep.subr.mxu0 0.0
    %4101 = vmatpush1.msra.mxu0 0.0
    %4102 = vmatprep.subr.mxu0 0.0
    %4103 = vmatpush1.msra.mxu0 0.0
    %4104 = vmatprep.subr.mxu0 0.0
    %4105 = vmatpush1.msra.mxu0 0.0
    %4106 = vmatprep.subr.mxu0 0.0
    %4107 = vmatpush1.msra.mxu0 0.0
    %4108 = vmatprep.subr.mxu0 0.0
    %4109 = vmatpush1.msra.mxu0 0.0
    %4110 = vmatprep.subr.mxu0 0.0
    %4111 = vmatpush1.msra.mxu0 0.0
    %4112 = vmatprep.subr.mxu0 0.0
    %4113 = vmatpush1.msra.mxu0 0.0
    %4114 = vmatprep.subr.mxu0 0.0
    %4115 = vmatpush1.msra.mxu0 0.0
    %4116 = vmatprep.subr.mxu0 0.0
    %4117 = vmatpush1.msra.mxu0 0.0
    %4118 = vmatprep.subr.mxu0 0.0
    %4119 = vmatpush1.msra.mxu0 0.0
    %4120 = vmatprep.subr.mxu0 0.0
    %4121 = vmatpush1.msra.mxu0 0.0
    %4122 = vmatprep.subr.mxu0 0.0
    %4123 = vmatpush1.msra.mxu0 0.0
    %4124 = vmatprep.subr.mxu0 0.0
    %4125 = vmatpush1.msra.mxu0 0.0
    %4126 = vmatprep.subr.mxu0 0.0
    %4127 = vmatpush1.msra.mxu0 0.0
    %4128 = vmatprep.subr.mxu0 0.0
    %4129 = vmatpush1.msra.mxu0 0.0
    %4130 = vmatprep.subr.mxu0 0.0
    %4131 = vmatpush1.msra.mxu0 0.0
    %4132 = vmatprep.subr.mxu0 0.0
    %4133 = vmatpush1.msra.mxu0 0.0
    %4134 = vmatprep.subr.mxu0 0.0
    %4135 = vmatpush1.msra.mxu0 0.0
    %4136 = vmatprep.subr.mxu0 0.0
    %4137 = vmatpush1.msra.mxu0 0.0
    %4138 = vmatprep.subr.mxu0 0.0
    %4139 = vmatpush1.msra.mxu0 0.0
    %4140 = vmatprep.subr.mxu0 0.0
    %4141 = vmatpush1.msra.mxu0 0.0
    %4142 = vmatprep.subr.mxu0 0.0
    %4143 = vmatpush1.msra.mxu0 0.0
    %4144 = vmatprep.mubr.f32.mxu0 0.0
    %4145 = vmatmul.mubr.f32.gmra.mrb[0].mxu0 %v4069
    %v4146 = vpop.f32.mrb[0].mxu0
    %v4147 = vadd.f32 0.0, %v4146
    %v4148 = vpop.f32.mrb[0].mxu0
    %v4149 = vadd.f32 0.0, %v4148
    %4150 = vmatprep.mubr.f32.mxu0 0.0
    %4151 = vmatmul.mubr.f32.gmra.mrb[0].mxu0 %v4072
    %v4152 = vpop.f32.mrb[0].mxu0
    %v4153 = vadd.f32 0.0, %v4152
    %v4154 = vpop.f32.mrb[0].mxu0
    %v4155 = vadd.f32 0.0, %v4154
    %4156 = vmatprep.mubr.f32.mxu0 0.0
    %4157 = vmatmul.mubr.f32.gmra.mrb[0].mxu0 %v4075
    %v4158 = vpop.f32.mrb[0].mxu0
    %v4159 = vadd.f32 0.0, %v4158
    %v4160 = vpop.f32.mrb[0].mxu0
    %v4161 = vadd.f32 0.0, %v4160
    %4162 = vmatprep.mubr.f32.mxu0 0.0
    %4163 = vmatmul.mubr.f32.gmra.mrb[0].mxu0 %v4078
    %v4164 = vpop.f32.mrb[0].mxu0
    %v4165 = vadd.f32 0.0, %v4164
    %v4166 = vpop.f32.mrb[0].mxu0
    %v4167 = vadd.f32 0.0, %v4166
    %4168 = vdwg.mxu0
    %4169 = vmatprep.subr.mxu0 %v4055
    %4170 = vmatpush1.msra.mxu0 %v4054
    %4171 = vmatprep.subr.mxu0 %v4059
    %4172 = vmatpush1.msra.mxu0 %v4058
    %4173 = vmatprep.subr.mxu0 %v4063
    %4174 = vmatpush1.msra.mxu0 %v4062
    %4175 = vmatprep.subr.mxu0 %v4067
    %4176 = vmatpush1.msra.mxu0 %v4066
    %4177 = vmatprep.subr.mxu0 0.0
    %4178 = vmatpush1.msra.mxu0 0.0
    %4179 = vmatprep.subr.mxu0 0.0
    %4180 = vmatpush1.msra.mxu0 0.0
    %4181 = vmatprep.subr.mxu0 0.0
    %4182 = vmatpush1.msra.mxu0 0.0
    %4183 = vmatprep.subr.mxu0 0.0
    %4184 = vmatpush1.msra.mxu0 0.0
    %4185 = vmatprep.subr.mxu0 0.0
    %4186 = vmatpush1.msra.mxu0 0.0
    %4187 = vmatprep.subr.mxu0 0.0
    %4188 = vmatpush1.msra.mxu0 0.0
    %4189 = vmatprep.subr.mxu0 0.0
    %4190 = vmatpush1.msra.mxu0 0.0
    %4191 = vmatprep.subr.mxu0 0.0
    %4192 = vmatpush1.msra.mxu0 0.0
    %4193 = vmatprep.subr.mxu0 0.0
    %4194 = vmatpush1.msra.mxu0 0.0
    %4195 = vmatprep.subr.mxu0 0.0
    %4196 = vmatpush1.msra.mxu0 0.0
    %4197 = vmatprep.subr.mxu0 0.0
    %4198 = vmatpush1.msra.mxu0 0.0
    %4199 = vmatprep.subr.mxu0 0.0
    %4200 = vmatpush1.msra.mxu0 0.0
    %4201 = vmatprep.subr.mxu0 0.0
    %4202 = vmatpush1.msra.mxu0 0.0
    %4203 = vmatprep.subr.mxu0 0.0
    %4204 = vmatpush1.msra.mxu0 0.0
    %4205 = vmatprep.subr.mxu0 0.0
    %4206 = vmatpush1.msra.mxu0 0.0
    %4207 = vmatprep.subr.mxu0 0.0
    %4208 = vmatpush1.msra.mxu0 0.0
    %4209 = vmatprep.subr.mxu0 0.0
    %4210 = vmatpush1.msra.mxu0 0.0
    %4211 = vmatprep.subr.mxu0 0.0
    %4212 = vmatpush1.msra.mxu0 0.0
    %4213 = vmatprep.subr.mxu0 0.0
    %4214 = vmatpush1.msra.mxu0 0.0
    %4215 = vmatprep.subr.mxu0 0.0
    %4216 = vmatpush1.msra.mxu0 0.0
    %4217 = vmatprep.subr.mxu0 0.0
    %4218 = vmatpush1.msra.mxu0 0.0
    %4219 = vmatprep.subr.mxu0 0.0
    %4220 = vmatpush1.msra.mxu0 0.0
    %4221 = vmatprep.subr.mxu0 0.0
    %4222 = vmatpush1.msra.mxu0 0.0
    %4223 = vmatprep.subr.mxu0 0.0
    %4224 = vmatpush1.msra.mxu0 0.0
    %4225 = vmatprep.subr.mxu0 0.0
    %4226 = vmatpush1.msra.mxu0 0.0
    %4227 = vmatprep.subr.mxu0 0.0
    %4228 = vmatpush1.msra.mxu0 0.0
    %4229 = vmatprep.subr.mxu0 0.0
    %4230 = vmatpush1.msra.mxu0 0.0
    %4231 = vmatprep.subr.mxu0 0.0
    %4232 = vmatpush1.msra.mxu0 0.0
    %4233 = vmatprep.mubr.f32.mxu0 0.0
    %4234 = vmatmul.mubr.f32.gmra.mrb[0].mxu0 %v4069
    %v4235 = vpop.f32.mrb[0].mxu0
    %v4236 = vadd.f32 0.0, %v4235
    %v4237 = vpop.f32.mrb[0].mxu0
    %v4238 = vadd.f32 0.0, %v4237
    %4239 = vmatprep.mubr.f32.mxu0 0.0
    %4240 = vmatmul.mubr.f32.gmra.mrb[0].mxu0 %v4072
    %v4241 = vpop.f32.mrb[0].mxu0
    %v4242 = vadd.f32 0.0, %v4241
    %v4243 = vpop.f32.mrb[0].mxu0
    %v4244 = vadd.f32 0.0, %v4243
    %4245 = vmatprep.mubr.f32.mxu0 0.0
    %4246 = vmatmul.mubr.f32.gmra.mrb[0].mxu0 %v4075
    %v4247 = vpop.f32.mrb[0].mxu0
    %v4248 = vadd.f32 0.0, %v4247
    %v4249 = vpop.f32.mrb[0].mxu0
    %v4250 = vadd.f32 0.0, %v4249
    %4251 = vmatprep.mubr.f32.mxu0 0.0
    %4252 = vmatmul.mubr.f32.gmra.mrb[0].mxu0 %v4078
    %v4253 = vpop.f32.mrb[0].mxu0
    %v4254 = vadd.f32 0.0, %v4253
    %v4255 = vpop.f32.mrb[0].mxu0
    %v4256 = vadd.f32 0.0, %v4255
    %4257 = vdwg.mxu0
    %v4258 = vadd.f32 %v3983, %v4147
    %v4259 = vadd.f32 %v3984, %v4149
    %v4260 = vadd.f32 %v3985, %v4236
    %v4261 = vadd.f32 %v3986, %v4238
    %v4262 = vadd.f32 %v3987, %v4153
    %v4263 = vadd.f32 %v3988, %v4155
    %v4264 = vadd.f32 %v3989, %v4242
    %v4265 = vadd.f32 %v3990, %v4244
    %v4266 = vadd.f32 %v3991, %v4159
    %v4267 = vadd.f32 %v3992, %v4161
    %v4268 = vadd.f32 %v3993, %v4248
    %v4269 = vadd.f32 %v3994, %v4250
    %v4270 = vadd.f32 %v3995, %v4165
    %v4271 = vadd.f32 %v3996, %v4167
    %v4272 = vadd.f32 %v3997, %v4254
    %v4273 = vadd.f32 %v3998, %v4256
    %4274 = vrot.lane.b32.xlu0 %v3722, 16
    %v4275 = vpop.permute.xlu0 %4274
    %4276 = vrot.lane.b32.xlu0 %v3726, 16
    %v4277 = vpop.permute.xlu0 %4276
    %4278 = vrot.lane.b32.xlu0 %v3730, 16
    %v4279 = vpop.permute.xlu0 %4278
    %4280 = vrot.lane.b32.xlu0 %v3734, 16
    %v4281 = vpop.permute.xlu0 %4280
    %4282 = vrot.lane.b32.xlu0 %v3723, 16
    %v4283 = vpop.permute.xlu0 %4282
    %4284 = vrot.lane.b32.xlu0 %v3727, 16
    %v4285 = vpop.permute.xlu0 %4284
    %4286 = vrot.lane.b32.xlu0 %v3731, 16
    %v4287 = vpop.permute.xlu0 %4286
    %4288 = vrot.lane.b32.xlu0 %v3735, 16
    %v4289 = vpop.permute.xlu0 %4288
    %4290 = vrot.lane.b32.xlu0 %v3724, 16
    %v4291 = vpop.permute.xlu0 %4290
    %4292 = vrot.lane.b32.xlu0 %v3728, 16
    %v4293 = vpop.permute.xlu0 %4292
    %4294 = vrot.lane.b32.xlu0 %v3732, 16
    %v4295 = vpop.permute.xlu0 %4294
    %4296 = vrot.lane.b32.xlu0 %v3736, 16
    %v4297 = vpop.permute.xlu0 %4296
    %4298 = vrot.lane.b32.xlu0 %v3725, 16
    %v4299 = vpop.permute.xlu0 %4298
    %4300 = vrot.lane.b32.xlu0 %v3729, 16
    %v4301 = vpop.permute.xlu0 %4300
    %4302 = vrot.lane.b32.xlu0 %v3733, 16
    %v4303 = vpop.permute.xlu0 %4302
    %4304 = vrot.lane.b32.xlu0 %v3737, 16
    %v4305 = vpop.permute.xlu0 %4304
    %v4306 = vsel %vm1315, %v4291, %v4299
    %v4307 = vsel %vm1315, %v4293, %v4301
    %v4308 = vsel %vm1315, %v4295, %v4303
    %v4309 = vsel %vm1315, %v4297, %v4305
    %v4310 = vsel %vm1315, %v4283, %v4291
    %v4311 = vsel %vm1315, %v4285, %v4293
    %v4312 = vsel %vm1315, %v4287, %v4295
    %v4313 = vsel %vm1315, %v4289, %v4297
    %v4314 = vsel %vm1315, %v4275, %v4283
    %v4315 = vsel %vm1315, %v4277, %v4285
    %v4316 = vsel %vm1315, %v4279, %v4287
    %v4317 = vsel %vm1315, %v4281, %v4289
    %v4318 = vsel %vm1315, %v4299, %v4275
    %v4319 = vsel %vm1315, %v4301, %v4277
    %v4320 = vsel %vm1315, %v4303, %v4279
    %v4321 = vsel %vm1315, %v4305, %v4281
    %s4322 = scalar_lea.vmem [#allocation2], 320
    %v4323 = vld [vmem:[%s4322] sm:$0xff]
    %v4324 = vld [vmem:[%s4322 + $0x8] sm:$0xff]
    %v4325 = vld [vmem:[%s4322 + $0x10] sm:$0xff]
    %v4326 = vld [vmem:[%s4322 + $0x18] sm:$0xff]
    %v4327 = vmul.f32 %v4318, %v1343
    %v4328 = vmul.f32 %v4314, %v1347
    %v4329 = vmul.f32 %v4310, %v1351
    %v4330 = vmul.f32 %v4306, %v1355
    %v4331 = vmul.f32 %v4319, %v1343
    %v4332 = vmul.f32 %v4315, %v1347
    %v4333 = vmul.f32 %v4311, %v1351
    %v4334 = vmul.f32 %v4307, %v1355
    %v4335 = vmul.f32 %v4320, %v1343
    %v4336 = vmul.f32 %v4316, %v1347
    %v4337 = vmul.f32 %v4312, %v1351
    %v4338 = vmul.f32 %v4308, %v1355
    %v4339 = vmul.f32 %v4321, %v1343
    %v4340 = vmul.f32 %v4317, %v1347
    %v4341 = vmul.f32 %v4313, %v1351
    %v4342 = vmul.f32 %v4309, %v1355
    %v4344 = vsel %vm753, %v4323, 0
    %v4347 = vsel %vm753, %v4324, 0
    %v4350 = vsel %vm753, %v4325, 0
    %v4353 = vsel %vm753, %v4326, 0
    %4355 = vmatprep.subr.mxu0 %v4328
    %4356 = vmatpush1.msra.mxu0 %v4327
    %4357 = vmatprep.subr.mxu0 %v4332
    %4358 = vmatpush1.msra.mxu0 %v4331
    %4359 = vmatprep.subr.mxu0 %v4336
    %4360 = vmatpush1.msra.mxu0 %v4335
    %4361 = vmatprep.subr.mxu0 %v4340
    %4362 = vmatpush1.msra.mxu0 %v4339
    %4363 = vmatprep.subr.mxu0 0.0
    %4364 = vmatpush1.msra.mxu0 0.0
    %4365 = vmatprep.subr.mxu0 0.0
    %4366 = vmatpush1.msra.mxu0 0.0
    %4367 = vmatprep.subr.mxu0 0.0
    %4368 = vmatpush1.msra.mxu0 0.0
    %4369 = vmatprep.subr.mxu0 0.0
    %4370 = vmatpush1.msra.mxu0 0.0
    %4371 = vmatprep.subr.mxu0 0.0
    %4372 = vmatpush1.msra.mxu0 0.0
    %4373 = vmatprep.subr.mxu0 0.0
    %4374 = vmatpush1.msra.mxu0 0.0
    %4375 = vmatprep.subr.mxu0 0.0
    %4376 = vmatpush1.msra.mxu0 0.0
    %4377 = vmatprep.subr.mxu0 0.0
    %4378 = vmatpush1.msra.mxu0 0.0
    %4379 = vmatprep.subr.mxu0 0.0
    %4380 = vmatpush1.msra.mxu0 0.0
    %4381 = vmatprep.subr.mxu0 0.0
    %4382 = vmatpush1.msra.mxu0 0.0
    %4383 = vmatprep.subr.mxu0 0.0
    %4384 = vmatpush1.msra.mxu0 0.0
    %4385 = vmatprep.subr.mxu0 0.0
    %4386 = vmatpush1.msra.mxu0 0.0
    %4387 = vmatprep.subr.mxu0 0.0
    %4388 = vmatpush1.msra.mxu0 0.0
    %4389 = vmatprep.subr.mxu0 0.0
    %4390 = vmatpush1.msra.mxu0 0.0
    %4391 = vmatprep.subr.mxu0 0.0
    %4392 = vmatpush1.msra.mxu0 0.0
    %4393 = vmatprep.subr.mxu0 0.0
    %4394 = vmatpush1.msra.mxu0 0.0
    %4395 = vmatprep.subr.mxu0 0.0
    %4396 = vmatpush1.msra.mxu0 0.0
    %4397 = vmatprep.subr.mxu0 0.0
    %4398 = vmatpush1.msra.mxu0 0.0
    %4399 = vmatprep.subr.mxu0 0.0
    %4400 = vmatpush1.msra.mxu0 0.0
    %4401 = vmatprep.subr.mxu0 0.0
    %4402 = vmatpush1.msra.mxu0 0.0
    %4403 = vmatprep.subr.mxu0 0.0
    %4404 = vmatpush1.msra.mxu0 0.0
    %4405 = vmatprep.subr.mxu0 0.0
    %4406 = vmatpush1.msra.mxu0 0.0
    %4407 = vmatprep.subr.mxu0 0.0
    %4408 = vmatpush1.msra.mxu0 0.0
    %4409 = vmatprep.subr.mxu0 0.0
    %4410 = vmatpush1.msra.mxu0 0.0
    %4411 = vmatprep.subr.mxu0 0.0
    %4412 = vmatpush1.msra.mxu0 0.0
    %4413 = vmatprep.subr.mxu0 0.0
    %4414 = vmatpush1.msra.mxu0 0.0
    %4415 = vmatprep.subr.mxu0 0.0
    %4416 = vmatpush1.msra.mxu0 0.0
    %4417 = vmatprep.subr.mxu0 0.0
    %4418 = vmatpush1.msra.mxu0 0.0
    %4419 = vmatprep.mubr.f32.mxu0 0.0
    %4420 = vmatmul.mubr.f32.gmra.mrb[0].mxu0 %v4344
    %v4421 = vpop.f32.mrb[0].mxu0
    %v4422 = vadd.f32 0.0, %v4421
    %v4423 = vpop.f32.mrb[0].mxu0
    %v4424 = vadd.f32 0.0, %v4423
    %4425 = vmatprep.mubr.f32.mxu0 0.0
    %4426 = vmatmul.mubr.f32.gmra.mrb[0].mxu0 %v4347
    %v4427 = vpop.f32.mrb[0].mxu0
    %v4428 = vadd.f32 0.0, %v4427
    %v4429 = vpop.f32.mrb[0].mxu0
    %v4430 = vadd.f32 0.0, %v4429
    %4431 = vmatprep.mubr.f32.mxu0 0.0
    %4432 = vmatmul.mubr.f32.gmra.mrb[0].mxu0 %v4350
    %v4433 = vpop.f32.mrb[0].mxu0
    %v4434 = vadd.f32 0.0, %v4433
    %v4435 = vpop.f32.mrb[0].mxu0
    %v4436 = vadd.f32 0.0, %v4435
    %4437 = vmatprep.mubr.f32.mxu0 0.0
    %4438 = vmatmul.mubr.f32.gmra.mrb[0].mxu0 %v4353
    %v4439 = vpop.f32.mrb[0].mxu0
    %v4440 = vadd.f32 0.0, %v4439
    %v4441 = vpop.f32.mrb[0].mxu0
    %v4442 = vadd.f32 0.0, %v4441
    %4443 = vdwg.mxu0
    %4444 = vmatprep.subr.mxu0 %v4330
    %4445 = vmatpush1.msra.mxu0 %v4329
    %4446 = vmatprep.subr.mxu0 %v4334
    %4447 = vmatpush1.msra.mxu0 %v4333
    %4448 = vmatprep.subr.mxu0 %v4338
    %4449 = vmatpush1.msra.mxu0 %v4337
    %4450 = vmatprep.subr.mxu0 %v4342
    %4451 = vmatpush1.msra.mxu0 %v4341
    %4452 = vmatprep.subr.mxu0 0.0
    %4453 = vmatpush1.msra.mxu0 0.0
    %4454 = vmatprep.subr.mxu0 0.0
    %4455 = vmatpush1.msra.mxu0 0.0
    %4456 = vmatprep.subr.mxu0 0.0
    %4457 = vmatpush1.msra.mxu0 0.0
    %4458 = vmatprep.subr.mxu0 0.0
    %4459 = vmatpush1.msra.mxu0 0.0
    %4460 = vmatprep.subr.mxu0 0.0
    %4461 = vmatpush1.msra.mxu0 0.0
    %4462 = vmatprep.subr.mxu0 0.0
    %4463 = vmatpush1.msra.mxu0 0.0
    %4464 = vmatprep.subr.mxu0 0.0
    %4465 = vmatpush1.msra.mxu0 0.0
    %4466 = vmatprep.subr.mxu0 0.0
    %4467 = vmatpush1.msra.mxu0 0.0
    %4468 = vmatprep.subr.mxu0 0.0
    %4469 = vmatpush1.msra.mxu0 0.0
    %4470 = vmatprep.subr.mxu0 0.0
    %4471 = vmatpush1.msra.mxu0 0.0
    %4472 = vmatprep.subr.mxu0 0.0
    %4473 = vmatpush1.msra.mxu0 0.0
    %4474 = vmatprep.subr.mxu0 0.0
    %4475 = vmatpush1.msra.mxu0 0.0
    %4476 = vmatprep.subr.mxu0 0.0
    %4477 = vmatpush1.msra.mxu0 0.0
    %4478 = vmatprep.subr.mxu0 0.0
    %4479 = vmatpush1.msra.mxu0 0.0
    %4480 = vmatprep.subr.mxu0 0.0
    %4481 = vmatpush1.msra.mxu0 0.0
    %4482 = vmatprep.subr.mxu0 0.0
    %4483 = vmatpush1.msra.mxu0 0.0
    %4484 = vmatprep.subr.mxu0 0.0
    %4485 = vmatpush1.msra.mxu0 0.0
    %4486 = vmatprep.subr.mxu0 0.0
    %4487 = vmatpush1.msra.mxu0 0.0
    %4488 = vmatprep.subr.mxu0 0.0
    %4489 = vmatpush1.msra.mxu0 0.0
    %4490 = vmatprep.subr.mxu0 0.0
    %4491 = vmatpush1.msra.mxu0 0.0
    %4492 = vmatprep.subr.mxu0 0.0
    %4493 = vmatpush1.msra.mxu0 0.0
    %4494 = vmatprep.subr.mxu0 0.0
    %4495 = vmatpush1.msra.mxu0 0.0
    %4496 = vmatprep.subr.mxu0 0.0
    %4497 = vmatpush1.msra.mxu0 0.0
    %4498 = vmatprep.subr.mxu0 0.0
    %4499 = vmatpush1.msra.mxu0 0.0
    %4500 = vmatprep.subr.mxu0 0.0
    %4501 = vmatpush1.msra.mxu0 0.0
    %4502 = vmatprep.subr.mxu0 0.0
    %4503 = vmatpush1.msra.mxu0 0.0
    %4504 = vmatprep.subr.mxu0 0.0
    %4505 = vmatpush1.msra.mxu0 0.0
    %4506 = vmatprep.subr.mxu0 0.0
    %4507 = vmatpush1.msra.mxu0 0.0
    %4508 = vmatprep.mubr.f32.mxu0 0.0
    %4509 = vmatmul.mubr.f32.gmra.mrb[0].mxu0 %v4344
    %v4510 = vpop.f32.mrb[0].mxu0
    %v4511 = vadd.f32 0.0, %v4510
    %v4512 = vpop.f32.mrb[0].mxu0
    %v4513 = vadd.f32 0.0, %v4512
    %4514 = vmatprep.mubr.f32.mxu0 0.0
    %4515 = vmatmul.mubr.f32.gmra.mrb[0].mxu0 %v4347
    %v4516 = vpop.f32.mrb[0].mxu0
    %v4517 = vadd.f32 0.0, %v4516
    %v4518 = vpop.f32.mrb[0].mxu0
    %v4519 = vadd.f32 0.0, %v4518
    %4520 = vmatprep.mubr.f32.mxu0 0.0
    %4521 = vmatmul.mubr.f32.gmra.mrb[0].mxu0 %v4350
    %v4522 = vpop.f32.mrb[0].mxu0
    %v4523 = vadd.f32 0.0, %v4522
    %v4524 = vpop.f32.mrb[0].mxu0
    %v4525 = vadd.f32 0.0, %v4524
    %4526 = vmatprep.mubr.f32.mxu0 0.0
    %4527 = vmatmul.mubr.f32.gmra.mrb[0].mxu0 %v4353
    %v4528 = vpop.f32.mrb[0].mxu0
    %v4529 = vadd.f32 0.0, %v4528
    %v4530 = vpop.f32.mrb[0].mxu0
    %v4531 = vadd.f32 0.0, %v4530
    %4532 = vdwg.mxu0
    %v4533 = vadd.f32 %v4258, %v4422
    %v4534 = vadd.f32 %v4259, %v4424
    %v4535 = vadd.f32 %v4260, %v4511
    %v4536 = vadd.f32 %v4261, %v4513
    %v4537 = vadd.f32 %v4262, %v4428
    %v4538 = vadd.f32 %v4263, %v4430
    %v4539 = vadd.f32 %v4264, %v4517
    %v4540 = vadd.f32 %v4265, %v4519
    %v4541 = vadd.f32 %v4266, %v4434
    %v4542 = vadd.f32 %v4267, %v4436
    %v4543 = vadd.f32 %v4268, %v4523
    %v4544 = vadd.f32 %v4269, %v4525
    %v4545 = vadd.f32 %v4270, %v4440
    %v4546 = vadd.f32 %v4271, %v4442
    %v4547 = vadd.f32 %v4272, %v4529
    %v4548 = vadd.f32 %v4273, %v4531
    %4549 = vrot.lane.b32.xlu0 %v3722, 15
    %v4550 = vpop.permute.xlu0 %4549
    %4551 = vrot.lane.b32.xlu0 %v3726, 15
    %v4552 = vpop.permute.xlu0 %4551
    %4553 = vrot.lane.b32.xlu0 %v3730, 15
    %v4554 = vpop.permute.xlu0 %4553
    %4555 = vrot.lane.b32.xlu0 %v3734, 15
    %v4556 = vpop.permute.xlu0 %4555
    %4557 = vrot.lane.b32.xlu0 %v3723, 15
    %v4558 = vpop.permute.xlu0 %4557
    %4559 = vrot.lane.b32.xlu0 %v3727, 15
    %v4560 = vpop.permute.xlu0 %4559
    %4561 = vrot.lane.b32.xlu0 %v3731, 15
    %v4562 = vpop.permute.xlu0 %4561
    %4563 = vrot.lane.b32.xlu0 %v3735, 15
    %v4564 = vpop.permute.xlu0 %4563
    %4565 = vrot.lane.b32.xlu0 %v3724, 15
    %v4566 = vpop.permute.xlu0 %4565
    %4567 = vrot.lane.b32.xlu0 %v3728, 15
    %v4568 = vpop.permute.xlu0 %4567
    %4569 = vrot.lane.b32.xlu0 %v3732, 15
    %v4570 = vpop.permute.xlu0 %4569
    %4571 = vrot.lane.b32.xlu0 %v3736, 15
    %v4572 = vpop.permute.xlu0 %4571
    %4573 = vrot.lane.b32.xlu0 %v3725, 15
    %v4574 = vpop.permute.xlu0 %4573
    %4575 = vrot.lane.b32.xlu0 %v3729, 15
    %v4576 = vpop.permute.xlu0 %4575
    %4577 = vrot.lane.b32.xlu0 %v3733, 15
    %v4578 = vpop.permute.xlu0 %4577
    %4579 = vrot.lane.b32.xlu0 %v3737, 15
    %v4580 = vpop.permute.xlu0 %4579
    %v4581 = vsel %vm1614, %v4566, %v4574
    %v4582 = vsel %vm1614, %v4568, %v4576
    %v4583 = vsel %vm1614, %v4570, %v4578
    %v4584 = vsel %vm1614, %v4572, %v4580
    %v4585 = vsel %vm1614, %v4558, %v4566
    %v4586 = vsel %vm1614, %v4560, %v4568
    %v4587 = vsel %vm1614, %v4562, %v4570
    %v4588 = vsel %vm1614, %v4564, %v4572
    %v4589 = vsel %vm1614, %v4550, %v4558
    %v4590 = vsel %vm1614, %v4552, %v4560
    %v4591 = vsel %vm1614, %v4554, %v4562
    %v4592 = vsel %vm1614, %v4556, %v4564
    %v4593 = vsel %vm1614, %v4574, %v4550
    %v4594 = vsel %vm1614, %v4576, %v4552
    %v4595 = vsel %vm1614, %v4578, %v4554
    %v4596 = vsel %vm1614, %v4580, %v4556
    %s4597 = scalar_lea.vmem [#allocation2], 352
    %v4598 = vld [vmem:[%s4597] sm:$0xff]
    %v4599 = vld [vmem:[%s4597 + $0x8] sm:$0xff]
    %v4600 = vld [vmem:[%s4597 + $0x10] sm:$0xff]
    %v4601 = vld [vmem:[%s4597 + $0x18] sm:$0xff]
    %v4602 = vmul.f32 %v4593, %v1642
    %v4603 = vmul.f32 %v4589, %v1646
    %v4604 = vmul.f32 %v4585, %v1650
    %v4605 = vmul.f32 %v4581, %v1654
    %v4606 = vmul.f32 %v4594, %v1642
    %v4607 = vmul.f32 %v4590, %v1646
    %v4608 = vmul.f32 %v4586, %v1650
    %v4609 = vmul.f32 %v4582, %v1654
    %v4610 = vmul.f32 %v4595, %v1642
    %v4611 = vmul.f32 %v4591, %v1646
    %v4612 = vmul.f32 %v4587, %v1650
    %v4613 = vmul.f32 %v4583, %v1654
    %v4614 = vmul.f32 %v4596, %v1642
    %v4615 = vmul.f32 %v4592, %v1646
    %v4616 = vmul.f32 %v4588, %v1650
    %v4617 = vmul.f32 %v4584, %v1654
    %v4619 = vsel %vm753, %v4598, 0
    %v4622 = vsel %vm753, %v4599, 0
    %v4625 = vsel %vm753, %v4600, 0
    %v4628 = vsel %vm753, %v4601, 0
    %4630 = vmatprep.subr.mxu0 %v4603
    %4631 = vmatpush1.msra.mxu0 %v4602
    %4632 = vmatprep.subr.mxu0 %v4607
    %4633 = vmatpush1.msra.mxu0 %v4606
    %4634 = vmatprep.subr.mxu0 %v4611
    %4635 = vmatpush1.msra.mxu0 %v4610
    %4636 = vmatprep.subr.mxu0 %v4615
    %4637 = vmatpush1.msra.mxu0 %v4614
    %4638 = vmatprep.subr.mxu0 0.0
    %4639 = vmatpush1.msra.mxu0 0.0
    %4640 = vmatprep.subr.mxu0 0.0
    %4641 = vmatpush1.msra.mxu0 0.0
    %4642 = vmatprep.subr.mxu0 0.0
    %4643 = vmatpush1.msra.mxu0 0.0
    %4644 = vmatprep.subr.mxu0 0.0
    %4645 = vmatpush1.msra.mxu0 0.0
    %4646 = vmatprep.subr.mxu0 0.0
    %4647 = vmatpush1.msra.mxu0 0.0
    %4648 = vmatprep.subr.mxu0 0.0
    %4649 = vmatpush1.msra.mxu0 0.0
    %4650 = vmatprep.subr.mxu0 0.0
    %4651 = vmatpush1.msra.mxu0 0.0
    %4652 = vmatprep.subr.mxu0 0.0
    %4653 = vmatpush1.msra.mxu0 0.0
    %4654 = vmatprep.subr.mxu0 0.0
    %4655 = vmatpush1.msra.mxu0 0.0
    %4656 = vmatprep.subr.mxu0 0.0
    %4657 = vmatpush1.msra.mxu0 0.0
    %4658 = vmatprep.subr.mxu0 0.0
    %4659 = vmatpush1.msra.mxu0 0.0
    %4660 = vmatprep.subr.mxu0 0.0
    %4661 = vmatpush1.msra.mxu0 0.0
    %4662 = vmatprep.subr.mxu0 0.0
    %4663 = vmatpush1.msra.mxu0 0.0
    %4664 = vmatprep.subr.mxu0 0.0
    %4665 = vmatpush1.msra.mxu0 0.0
    %4666 = vmatprep.subr.mxu0 0.0
    %4667 = vmatpush1.msra.mxu0 0.0
    %4668 = vmatprep.subr.mxu0 0.0
    %4669 = vmatpush1.msra.mxu0 0.0
    %4670 = vmatprep.subr.mxu0 0.0
    %4671 = vmatpush1.msra.mxu0 0.0
    %4672 = vmatprep.subr.mxu0 0.0
    %4673 = vmatpush1.msra.mxu0 0.0
    %4674 = vmatprep.subr.mxu0 0.0
    %4675 = vmatpush1.msra.mxu0 0.0
    %4676 = vmatprep.subr.mxu0 0.0
    %4677 = vmatpush1.msra.mxu0 0.0
    %4678 = vmatprep.subr.mxu0 0.0
    %4679 = vmatpush1.msra.mxu0 0.0
    %4680 = vmatprep.subr.mxu0 0.0
    %4681 = vmatpush1.msra.mxu0 0.0
    %4682 = vmatprep.subr.mxu0 0.0
    %4683 = vmatpush1.msra.mxu0 0.0
    %4684 = vmatprep.subr.mxu0 0.0
    %4685 = vmatpush1.msra.mxu0 0.0
    %4686 = vmatprep.subr.mxu0 0.0
    %4687 = vmatpush1.msra.mxu0 0.0
    %4688 = vmatprep.subr.mxu0 0.0
    %4689 = vmatpush1.msra.mxu0 0.0
    %4690 = vmatprep.subr.mxu0 0.0
    %4691 = vmatpush1.msra.mxu0 0.0
    %4692 = vmatprep.subr.mxu0 0.0
    %4693 = vmatpush1.msra.mxu0 0.0
    %4694 = vmatprep.mubr.f32.mxu0 0.0
    %4695 = vmatmul.mubr.f32.gmra.mrb[0].mxu0 %v4619
    %v4696 = vpop.f32.mrb[0].mxu0
    %v4697 = vadd.f32 0.0, %v4696
    %v4698 = vpop.f32.mrb[0].mxu0
    %v4699 = vadd.f32 0.0, %v4698
    %4700 = vmatprep.mubr.f32.mxu0 0.0
    %4701 = vmatmul.mubr.f32.gmra.mrb[0].mxu0 %v4622
    %v4702 = vpop.f32.mrb[0].mxu0
    %v4703 = vadd.f32 0.0, %v4702
    %v4704 = vpop.f32.mrb[0].mxu0
    %v4705 = vadd.f32 0.0, %v4704
    %4706 = vmatprep.mubr.f32.mxu0 0.0
    %4707 = vmatmul.mubr.f32.gmra.mrb[0].mxu0 %v4625
    %v4708 = vpop.f32.mrb[0].mxu0
    %v4709 = vadd.f32 0.0, %v4708
    %v4710 = vpop.f32.mrb[0].mxu0
    %v4711 = vadd.f32 0.0, %v4710
    %4712 = vmatprep.mubr.f32.mxu0 0.0
    %4713 = vmatmul.mubr.f32.gmra.mrb[0].mxu0 %v4628
    %v4714 = vpop.f32.mrb[0].mxu0
    %v4715 = vadd.f32 0.0, %v4714
    %v4716 = vpop.f32.mrb[0].mxu0
    %v4717 = vadd.f32 0.0, %v4716
    %4718 = vdwg.mxu0
    %4719 = vmatprep.subr.mxu0 %v4605
    %4720 = vmatpush1.msra.mxu0 %v4604
    %4721 = vmatprep.subr.mxu0 %v4609
    %4722 = vmatpush1.msra.mxu0 %v4608
    %4723 = vmatprep.subr.mxu0 %v4613
    %4724 = vmatpush1.msra.mxu0 %v4612
    %4725 = vmatprep.subr.mxu0 %v4617
    %4726 = vmatpush1.msra.mxu0 %v4616
    %4727 = vmatprep.subr.mxu0 0.0
    %4728 = vmatpush1.msra.mxu0 0.0
    %4729 = vmatprep.subr.mxu0 0.0
    %4730 = vmatpush1.msra.mxu0 0.0
    %4731 = vmatprep.subr.mxu0 0.0
    %4732 = vmatpush1.msra.mxu0 0.0
    %4733 = vmatprep.subr.mxu0 0.0
    %4734 = vmatpush1.msra.mxu0 0.0
    %4735 = vmatprep.subr.mxu0 0.0
    %4736 = vmatpush1.msra.mxu0 0.0
    %4737 = vmatprep.subr.mxu0 0.0
    %4738 = vmatpush1.msra.mxu0 0.0
    %4739 = vmatprep.subr.mxu0 0.0
    %4740 = vmatpush1.msra.mxu0 0.0
    %4741 = vmatprep.subr.mxu0 0.0
    %4742 = vmatpush1.msra.mxu0 0.0
    %4743 = vmatprep.subr.mxu0 0.0
    %4744 = vmatpush1.msra.mxu0 0.0
    %4745 = vmatprep.subr.mxu0 0.0
    %4746 = vmatpush1.msra.mxu0 0.0
    %4747 = vmatprep.subr.mxu0 0.0
    %4748 = vmatpush1.msra.mxu0 0.0
    %4749 = vmatprep.subr.mxu0 0.0
    %4750 = vmatpush1.msra.mxu0 0.0
    %4751 = vmatprep.subr.mxu0 0.0
    %4752 = vmatpush1.msra.mxu0 0.0
    %4753 = vmatprep.subr.mxu0 0.0
    %4754 = vmatpush1.msra.mxu0 0.0
    %4755 = vmatprep.subr.mxu0 0.0
    %4756 = vmatpush1.msra.mxu0 0.0
    %4757 = vmatprep.subr.mxu0 0.0
    %4758 = vmatpush1.msra.mxu0 0.0
    %4759 = vmatprep.subr.mxu0 0.0
    %4760 = vmatpush1.msra.mxu0 0.0
    %4761 = vmatprep.subr.mxu0 0.0
    %4762 = vmatpush1.msra.mxu0 0.0
    %4763 = vmatprep.subr.mxu0 0.0
    %4764 = vmatpush1.msra.mxu0 0.0
    %4765 = vmatprep.subr.mxu0 0.0
    %4766 = vmatpush1.msra.mxu0 0.0
    %4767 = vmatprep.subr.mxu0 0.0
    %4768 = vmatpush1.msra.mxu0 0.0
    %4769 = vmatprep.subr.mxu0 0.0
    %4770 = vmatpush1.msra.mxu0 0.0
    %4771 = vmatprep.subr.mxu0 0.0
    %4772 = vmatpush1.msra.mxu0 0.0
    %4773 = vmatprep.subr.mxu0 0.0
    %4774 = vmatpush1.msra.mxu0 0.0
    %4775 = vmatprep.subr.mxu0 0.0
    %4776 = vmatpush1.msra.mxu0 0.0
    %4777 = vmatprep.subr.mxu0 0.0
    %4778 = vmatpush1.msra.mxu0 0.0
    %4779 = vmatprep.subr.mxu0 0.0
    %4780 = vmatpush1.msra.mxu0 0.0
    %4781 = vmatprep.subr.mxu0 0.0
    %4782 = vmatpush1.msra.mxu0 0.0
    %4783 = vmatprep.mubr.f32.mxu0 0.0
    %4784 = vmatmul.mubr.f32.gmra.mrb[0].mxu0 %v4619
    %v4785 = vpop.f32.mrb[0].mxu0
    %v4786 = vadd.f32 0.0, %v4785
    %v4787 = vpop.f32.mrb[0].mxu0
    %v4788 = vadd.f32 0.0, %v4787
    %4789 = vmatprep.mubr.f32.mxu0 0.0
    %4790 = vmatmul.mubr.f32.gmra.mrb[0].mxu0 %v4622
    %v4791 = vpop.f32.mrb[0].mxu0
    %v4792 = vadd.f32 0.0, %v4791
    %v4793 = vpop.f32.mrb[0].mxu0
    %v4794 = vadd.f32 0.0, %v4793
    %4795 = vmatprep.mubr.f32.mxu0 0.0
    %4796 = vmatmul.mubr.f32.gmra.mrb[0].mxu0 %v4625
    %v4797 = vpop.f32.mrb[0].mxu0
    %v4798 = vadd.f32 0.0, %v4797
    %v4799 = vpop.f32.mrb[0].mxu0
    %v4800 = vadd.f32 0.0, %v4799
    %4801 = vmatprep.mubr.f32.mxu0 0.0
    %4802 = vmatmul.mubr.f32.gmra.mrb[0].mxu0 %v4628
    %v4803 = vpop.f32.mrb[0].mxu0
    %v4804 = vadd.f32 0.0, %v4803
    %v4805 = vpop.f32.mrb[0].mxu0
    %v4806 = vadd.f32 0.0, %v4805
    %4807 = vdwg.mxu0
    %v4808 = vadd.f32 %v4533, %v4697
    %v4809 = vadd.f32 %v4534, %v4699
    %v4810 = vadd.f32 %v4535, %v4786
    %v4811 = vadd.f32 %v4536, %v4788
    %v4812 = vadd.f32 %v4537, %v4703
    %v4813 = vadd.f32 %v4538, %v4705
    %v4814 = vadd.f32 %v4539, %v4792
    %v4815 = vadd.f32 %v4540, %v4794
    %v4816 = vadd.f32 %v4541, %v4709
    %v4817 = vadd.f32 %v4542, %v4711
    %v4818 = vadd.f32 %v4543, %v4798
    %v4819 = vadd.f32 %v4544, %v4800
    %v4820 = vadd.f32 %v4545, %v4715
    %v4821 = vadd.f32 %v4546, %v4717
    %v4822 = vadd.f32 %v4547, %v4804
    %v4823 = vadd.f32 %v4548, %v4806
    %4824 = vrot.lane.b32.xlu0 %v3722, 1
    %v4825 = vpop.permute.xlu0 %4824
    %4826 = vrot.lane.b32.xlu0 %v3726, 1
    %v4827 = vpop.permute.xlu0 %4826
    %4828 = vrot.lane.b32.xlu0 %v3730, 1
    %v4829 = vpop.permute.xlu0 %4828
    %4830 = vrot.lane.b32.xlu0 %v3734, 1
    %v4831 = vpop.permute.xlu0 %4830
    %4832 = vrot.lane.b32.xlu0 %v3723, 1
    %v4833 = vpop.permute.xlu0 %4832
    %4834 = vrot.lane.b32.xlu0 %v3727, 1
    %v4835 = vpop.permute.xlu0 %4834
    %4836 = vrot.lane.b32.xlu0 %v3731, 1
    %v4837 = vpop.permute.xlu0 %4836
    %4838 = vrot.lane.b32.xlu0 %v3735, 1
    %v4839 = vpop.permute.xlu0 %4838
    %4840 = vrot.lane.b32.xlu0 %v3724, 1
    %v4841 = vpop.permute.xlu0 %4840
    %4842 = vrot.lane.b32.xlu0 %v3728, 1
    %v4843 = vpop.permute.xlu0 %4842
    %4844 = vrot.lane.b32.xlu0 %v3732, 1
    %v4845 = vpop.permute.xlu0 %4844
    %4846 = vrot.lane.b32.xlu0 %v3736, 1
    %v4847 = vpop.permute.xlu0 %4846
    %4848 = vrot.lane.b32.xlu0 %v3725, 1
    %v4849 = vpop.permute.xlu0 %4848
    %4850 = vrot.lane.b32.xlu0 %v3729, 1
    %v4851 = vpop.permute.xlu0 %4850
    %4852 = vrot.lane.b32.xlu0 %v3733, 1
    %v4853 = vpop.permute.xlu0 %4852
    %4854 = vrot.lane.b32.xlu0 %v3737, 1
    %v4855 = vpop.permute.xlu0 %4854
    %v4856 = vsel %vm1913, %v4841, %v4849
    %v4857 = vsel %vm1913, %v4843, %v4851
    %v4858 = vsel %vm1913, %v4845, %v4853
    %v4859 = vsel %vm1913, %v4847, %v4855
    %v4860 = vsel %vm1913, %v4833, %v4841
    %v4861 = vsel %vm1913, %v4835, %v4843
    %v4862 = vsel %vm1913, %v4837, %v4845
    %v4863 = vsel %vm1913, %v4839, %v4847
    %v4864 = vsel %vm1913, %v4825, %v4833
    %v4865 = vsel %vm1913, %v4827, %v4835
    %v4866 = vsel %vm1913, %v4829, %v4837
    %v4867 = vsel %vm1913, %v4831, %v4839
    %v4868 = vsel %vm1913, %v4849, %v4825
    %v4869 = vsel %vm1913, %v4851, %v4827
    %v4870 = vsel %vm1913, %v4853, %v4829
    %v4871 = vsel %vm1913, %v4855, %v4831
    %s4872 = scalar_lea.vmem [#allocation2], 384
    %v4873 = vld [vmem:[%s4872] sm:$0xff]
    %v4874 = vld [vmem:[%s4872 + $0x8] sm:$0xff]
    %v4875 = vld [vmem:[%s4872 + $0x10] sm:$0xff]
    %v4876 = vld [vmem:[%s4872 + $0x18] sm:$0xff]
    %v4877 = vmul.f32 %v4868, %v1941
    %v4878 = vmul.f32 %v4864, %v1945
    %v4879 = vmul.f32 %v4860, %v1949
    %v4880 = vmul.f32 %v4856, %v1953
    %v4881 = vmul.f32 %v4869, %v1941
    %v4882 = vmul.f32 %v4865, %v1945
    %v4883 = vmul.f32 %v4861, %v1949
    %v4884 = vmul.f32 %v4857, %v1953
    %v4885 = vmul.f32 %v4870, %v1941
    %v4886 = vmul.f32 %v4866, %v1945
    %v4887 = vmul.f32 %v4862, %v1949
    %v4888 = vmul.f32 %v4858, %v1953
    %v4889 = vmul.f32 %v4871, %v1941
    %v4890 = vmul.f32 %v4867, %v1945
    %v4891 = vmul.f32 %v4863, %v1949
    %v4892 = vmul.f32 %v4859, %v1953
    %v4894 = vsel %vm753, %v4873, 0
    %v4897 = vsel %vm753, %v4874, 0
    %v4900 = vsel %vm753, %v4875, 0
    %v4903 = vsel %vm753, %v4876, 0
    %4905 = vmatprep.subr.mxu0 %v4878
    %4906 = vmatpush1.msra.mxu0 %v4877
    %4907 = vmatprep.subr.mxu0 %v4882
    %4908 = vmatpush1.msra.mxu0 %v4881
    %4909 = vmatprep.subr.mxu0 %v4886
    %4910 = vmatpush1.msra.mxu0 %v4885
    %4911 = vmatprep.subr.mxu0 %v4890
    %4912 = vmatpush1.msra.mxu0 %v4889
    %4913 = vmatprep.subr.mxu0 0.0
    %4914 = vmatpush1.msra.mxu0 0.0
    %4915 = vmatprep.subr.mxu0 0.0
    %4916 = vmatpush1.msra.mxu0 0.0
    %4917 = vmatprep.subr.mxu0 0.0
    %4918 = vmatpush1.msra.mxu0 0.0
    %4919 = vmatprep.subr.mxu0 0.0
    %4920 = vmatpush1.msra.mxu0 0.0
    %4921 = vmatprep.subr.mxu0 0.0
    %4922 = vmatpush1.msra.mxu0 0.0
    %4923 = vmatprep.subr.mxu0 0.0
    %4924 = vmatpush1.msra.mxu0 0.0
    %4925 = vmatprep.subr.mxu0 0.0
    %4926 = vmatpush1.msra.mxu0 0.0
    %4927 = vmatprep.subr.mxu0 0.0
    %4928 = vmatpush1.msra.mxu0 0.0
    %4929 = vmatprep.subr.mxu0 0.0
    %4930 = vmatpush1.msra.mxu0 0.0
    %4931 = vmatprep.subr.mxu0 0.0
    %4932 = vmatpush1.msra.mxu0 0.0
    %4933 = vmatprep.subr.mxu0 0.0
    %4934 = vmatpush1.msra.mxu0 0.0
    %4935 = vmatprep.subr.mxu0 0.0
    %4936 = vmatpush1.msra.mxu0 0.0
    %4937 = vmatprep.subr.mxu0 0.0
    %4938 = vmatpush1.msra.mxu0 0.0
    %4939 = vmatprep.subr.mxu0 0.0
    %4940 = vmatpush1.msra.mxu0 0.0
    %4941 = vmatprep.subr.mxu0 0.0
    %4942 = vmatpush1.msra.mxu0 0.0
    %4943 = vmatprep.subr.mxu0 0.0
    %4944 = vmatpush1.msra.mxu0 0.0
    %4945 = vmatprep.subr.mxu0 0.0
    %4946 = vmatpush1.msra.mxu0 0.0
    %4947 = vmatprep.subr.mxu0 0.0
    %4948 = vmatpush1.msra.mxu0 0.0
    %4949 = vmatprep.subr.mxu0 0.0
    %4950 = vmatpush1.msra.mxu0 0.0
    %4951 = vmatprep.subr.mxu0 0.0
    %4952 = vmatpush1.msra.mxu0 0.0
    %4953 = vmatprep.subr.mxu0 0.0
    %4954 = vmatpush1.msra.mxu0 0.0
    %4955 = vmatprep.subr.mxu0 0.0
    %4956 = vmatpush1.msra.mxu0 0.0
    %4957 = vmatprep.subr.mxu0 0.0
    %4958 = vmatpush1.msra.mxu0 0.0
    %4959 = vmatprep.subr.mxu0 0.0
    %4960 = vmatpush1.msra.mxu0 0.0
    %4961 = vmatprep.subr.mxu0 0.0
    %4962 = vmatpush1.msra.mxu0 0.0
    %4963 = vmatprep.subr.mxu0 0.0
    %4964 = vmatpush1.msra.mxu0 0.0
    %4965 = vmatprep.subr.mxu0 0.0
    %4966 = vmatpush1.msra.mxu0 0.0
    %4967 = vmatprep.subr.mxu0 0.0
    %4968 = vmatpush1.msra.mxu0 0.0
    %4969 = vmatprep.mubr.f32.mxu0 0.0
    %4970 = vmatmul.mubr.f32.gmra.mrb[0].mxu0 %v4894
    %v4971 = vpop.f32.mrb[0].mxu0
    %v4972 = vadd.f32 0.0, %v4971
    %v4973 = vpop.f32.mrb[0].mxu0
    %v4974 = vadd.f32 0.0, %v4973
    %4975 = vmatprep.mubr.f32.mxu0 0.0
    %4976 = vmatmul.mubr.f32.gmra.mrb[0].mxu0 %v4897
    %v4977 = vpop.f32.mrb[0].mxu0
    %v4978 = vadd.f32 0.0, %v4977
    %v4979 = vpop.f32.mrb[0].mxu0
    %v4980 = vadd.f32 0.0, %v4979
    %4981 = vmatprep.mubr.f32.mxu0 0.0
    %4982 = vmatmul.mubr.f32.gmra.mrb[0].mxu0 %v4900
    %v4983 = vpop.f32.mrb[0].mxu0
    %v4984 = vadd.f32 0.0, %v4983
    %v4985 = vpop.f32.mrb[0].mxu0
    %v4986 = vadd.f32 0.0, %v4985
    %4987 = vmatprep.mubr.f32.mxu0 0.0
    %4988 = vmatmul.mubr.f32.gmra.mrb[0].mxu0 %v4903
    %v4989 = vpop.f32.mrb[0].mxu0
    %v4990 = vadd.f32 0.0, %v4989
    %v4991 = vpop.f32.mrb[0].mxu0
    %v4992 = vadd.f32 0.0, %v4991
    %4993 = vdwg.mxu0
    %4994 = vmatprep.subr.mxu0 %v4880
    %4995 = vmatpush1.msra.mxu0 %v4879
    %4996 = vmatprep.subr.mxu0 %v4884
    %4997 = vmatpush1.msra.mxu0 %v4883
    %4998 = vmatprep.subr.mxu0 %v4888
    %4999 = vmatpush1.msra.mxu0 %v4887
    %5000 = vmatprep.subr.mxu0 %v4892
    %5001 = vmatpush1.msra.mxu0 %v4891
    %5002 = vmatprep.subr.mxu0 0.0
    %5003 = vmatpush1.msra.mxu0 0.0
    %5004 = vmatprep.subr.mxu0 0.0
    %5005 = vmatpush1.msra.mxu0 0.0
    %5006 = vmatprep.subr.mxu0 0.0
    %5007 = vmatpush1.msra.mxu0 0.0
    %5008 = vmatprep.subr.mxu0 0.0
    %5009 = vmatpush1.msra.mxu0 0.0
    %5010 = vmatprep.subr.mxu0 0.0
    %5011 = vmatpush1.msra.mxu0 0.0
    %5012 = vmatprep.subr.mxu0 0.0
    %5013 = vmatpush1.msra.mxu0 0.0
    %5014 = vmatprep.subr.mxu0 0.0
    %5015 = vmatpush1.msra.mxu0 0.0
    %5016 = vmatprep.subr.mxu0 0.0
    %5017 = vmatpush1.msra.mxu0 0.0
    %5018 = vmatprep.subr.mxu0 0.0
    %5019 = vmatpush1.msra.mxu0 0.0
    %5020 = vmatprep.subr.mxu0 0.0
    %5021 = vmatpush1.msra.mxu0 0.0
    %5022 = vmatprep.subr.mxu0 0.0
    %5023 = vmatpush1.msra.mxu0 0.0
    %5024 = vmatprep.subr.mxu0 0.0
    %5025 = vmatpush1.msra.mxu0 0.0
    %5026 = vmatprep.subr.mxu0 0.0
    %5027 = vmatpush1.msra.mxu0 0.0
    %5028 = vmatprep.subr.mxu0 0.0
    %5029 = vmatpush1.msra.mxu0 0.0
    %5030 = vmatprep.subr.mxu0 0.0
    %5031 = vmatpush1.msra.mxu0 0.0
    %5032 = vmatprep.subr.mxu0 0.0
    %5033 = vmatpush1.msra.mxu0 0.0
    %5034 = vmatprep.subr.mxu0 0.0
    %5035 = vmatpush1.msra.mxu0 0.0
    %5036 = vmatprep.subr.mxu0 0.0
    %5037 = vmatpush1.msra.mxu0 0.0
    %5038 = vmatprep.subr.mxu0 0.0
    %5039 = vmatpush1.msra.mxu0 0.0
    %5040 = vmatprep.subr.mxu0 0.0
    %5041 = vmatpush1.msra.mxu0 0.0
    %5042 = vmatprep.subr.mxu0 0.0
    %5043 = vmatpush1.msra.mxu0 0.0
    %5044 = vmatprep.subr.mxu0 0.0
    %5045 = vmatpush1.msra.mxu0 0.0
    %5046 = vmatprep.subr.mxu0 0.0
    %5047 = vmatpush1.msra.mxu0 0.0
    %5048 = vmatprep.subr.mxu0 0.0
    %5049 = vmatpush1.msra.mxu0 0.0
    %5050 = vmatprep.subr.mxu0 0.0
    %5051 = vmatpush1.msra.mxu0 0.0
    %5052 = vmatprep.subr.mxu0 0.0
    %5053 = vmatpush1.msra.mxu0 0.0
    %5054 = vmatprep.subr.mxu0 0.0
    %5055 = vmatpush1.msra.mxu0 0.0
    %5056 = vmatprep.subr.mxu0 0.0
    %5057 = vmatpush1.msra.mxu0 0.0
    %5058 = vmatprep.mubr.f32.mxu0 0.0
    %5059 = vmatmul.mubr.f32.gmra.mrb[0].mxu0 %v4894
    %v5060 = vpop.f32.mrb[0].mxu0
    %v5061 = vadd.f32 0.0, %v5060
    %v5062 = vpop.f32.mrb[0].mxu0
    %v5063 = vadd.f32 0.0, %v5062
    %5064 = vmatprep.mubr.f32.mxu0 0.0
    %5065 = vmatmul.mubr.f32.gmra.mrb[0].mxu0 %v4897
    %v5066 = vpop.f32.mrb[0].mxu0
    %v5067 = vadd.f32 0.0, %v5066
    %v5068 = vpop.f32.mrb[0].mxu0
    %v5069 = vadd.f32 0.0, %v5068
    %5070 = vmatprep.mubr.f32.mxu0 0.0
    %5071 = vmatmul.mubr.f32.gmra.mrb[0].mxu0 %v4900
    %v5072 = vpop.f32.mrb[0].mxu0
    %v5073 = vadd.f32 0.0, %v5072
    %v5074 = vpop.f32.mrb[0].mxu0
    %v5075 = vadd.f32 0.0, %v5074
    %5076 = vmatprep.mubr.f32.mxu0 0.0
    %5077 = vmatmul.mubr.f32.gmra.mrb[0].mxu0 %v4903
    %v5078 = vpop.f32.mrb[0].mxu0
    %v5079 = vadd.f32 0.0, %v5078
    %v5080 = vpop.f32.mrb[0].mxu0
    %v5081 = vadd.f32 0.0, %v5080
    %5082 = vdwg.mxu0
    %v5083 = vadd.f32 %v4808, %v4972
    %v5084 = vadd.f32 %v4809, %v4974
    %v5085 = vadd.f32 %v4810, %v5061
    %v5086 = vadd.f32 %v4811, %v5063
    %v5087 = vadd.f32 %v4812, %v4978
    %v5088 = vadd.f32 %v4813, %v4980
    %v5089 = vadd.f32 %v4814, %v5067
    %v5090 = vadd.f32 %v4815, %v5069
    %v5091 = vadd.f32 %v4816, %v4984
    %v5092 = vadd.f32 %v4817, %v4986
    %v5093 = vadd.f32 %v4818, %v5073
    %v5094 = vadd.f32 %v4819, %v5075
    %v5095 = vadd.f32 %v4820, %v4990
    %v5096 = vadd.f32 %v4821, %v4992
    %v5097 = vadd.f32 %v4822, %v5079
    %v5098 = vadd.f32 %v4823, %v5081
    %s5099 = scalar_lea.vmem [#allocation2], 416
    %v5100 = vld [vmem:[%s5099] sm:$0xff]
    %v5101 = vld [vmem:[%s5099 + $0x8] sm:$0xff]
    %v5102 = vld [vmem:[%s5099 + $0x10] sm:$0xff]
    %v5103 = vld [vmem:[%s5099 + $0x18] sm:$0xff]
    %v5104 = vmul.f32 %v3722, %v2191
    %v5105 = vmul.f32 %v3723, %v2195
    %v5106 = vmul.f32 %v3724, %v2199
    %v5107 = vmul.f32 %v3725, %v2203
    %v5108 = vmul.f32 %v3726, %v2191
    %v5109 = vmul.f32 %v3727, %v2195
    %v5110 = vmul.f32 %v3728, %v2199
    %v5111 = vmul.f32 %v3729, %v2203
    %v5112 = vmul.f32 %v3730, %v2191
    %v5113 = vmul.f32 %v3731, %v2195
    %v5114 = vmul.f32 %v3732, %v2199
    %v5115 = vmul.f32 %v3733, %v2203
    %v5116 = vmul.f32 %v3734, %v2191
    %v5117 = vmul.f32 %v3735, %v2195
    %v5118 = vmul.f32 %v3736, %v2199
    %v5119 = vmul.f32 %v3737, %v2203
    %v5121 = vsel %vm753, %v5100, 0
    %v5124 = vsel %vm753, %v5101, 0
    %v5127 = vsel %vm753, %v5102, 0
    %v5130 = vsel %vm753, %v5103, 0
    %5132 = vmatprep.subr.mxu0 %v5105
    %5133 = vmatpush1.msra.mxu0 %v5104
    %5134 = vmatprep.subr.mxu0 %v5109
    %5135 = vmatpush1.msra.mxu0 %v5108
    %5136 = vmatprep.subr.mxu0 %v5113
    %5137 = vmatpush1.msra.mxu0 %v5112
    %5138 = vmatprep.subr.mxu0 %v5117
    %5139 = vmatpush1.msra.mxu0 %v5116
    %5140 = vmatprep.subr.mxu0 0.0
    %5141 = vmatpush1.msra.mxu0 0.0
    %5142 = vmatprep.subr.mxu0 0.0
    %5143 = vmatpush1.msra.mxu0 0.0
    %5144 = vmatprep.subr.mxu0 0.0
    %5145 = vmatpush1.msra.mxu0 0.0
    %5146 = vmatprep.subr.mxu0 0.0
    %5147 = vmatpush1.msra.mxu0 0.0
    %5148 = vmatprep.subr.mxu0 0.0
    %5149 = vmatpush1.msra.mxu0 0.0
    %5150 = vmatprep.subr.mxu0 0.0
    %5151 = vmatpush1.msra.mxu0 0.0
    %5152 = vmatprep.subr.mxu0 0.0
    %5153 = vmatpush1.msra.mxu0 0.0
    %5154 = vmatprep.subr.mxu0 0.0
    %5155 = vmatpush1.msra.mxu0 0.0
    %5156 = vmatprep.subr.mxu0 0.0
    %5157 = vmatpush1.msra.mxu0 0.0
    %5158 = vmatprep.subr.mxu0 0.0
    %5159 = vmatpush1.msra.mxu0 0.0
    %5160 = vmatprep.subr.mxu0 0.0
    %5161 = vmatpush1.msra.mxu0 0.0
    %5162 = vmatprep.subr.mxu0 0.0
    %5163 = vmatpush1.msra.mxu0 0.0
    %5164 = vmatprep.subr.mxu0 0.0
    %5165 = vmatpush1.msra.mxu0 0.0
    %5166 = vmatprep.subr.mxu0 0.0
    %5167 = vmatpush1.msra.mxu0 0.0
    %5168 = vmatprep.subr.mxu0 0.0
    %5169 = vmatpush1.msra.mxu0 0.0
    %5170 = vmatprep.subr.mxu0 0.0
    %5171 = vmatpush1.msra.mxu0 0.0
    %5172 = vmatprep.subr.mxu0 0.0
    %5173 = vmatpush1.msra.mxu0 0.0
    %5174 = vmatprep.subr.mxu0 0.0
    %5175 = vmatpush1.msra.mxu0 0.0
    %5176 = vmatprep.subr.mxu0 0.0
    %5177 = vmatpush1.msra.mxu0 0.0
    %5178 = vmatprep.subr.mxu0 0.0
    %5179 = vmatpush1.msra.mxu0 0.0
    %5180 = vmatprep.subr.mxu0 0.0
    %5181 = vmatpush1.msra.mxu0 0.0
    %5182 = vmatprep.subr.mxu0 0.0
    %5183 = vmatpush1.msra.mxu0 0.0
    %5184 = vmatprep.subr.mxu0 0.0
    %5185 = vmatpush1.msra.mxu0 0.0
    %5186 = vmatprep.subr.mxu0 0.0
    %5187 = vmatpush1.msra.mxu0 0.0
    %5188 = vmatprep.subr.mxu0 0.0
    %5189 = vmatpush1.msra.mxu0 0.0
    %5190 = vmatprep.subr.mxu0 0.0
    %5191 = vmatpush1.msra.mxu0 0.0
    %5192 = vmatprep.subr.mxu0 0.0
    %5193 = vmatpush1.msra.mxu0 0.0
    %5194 = vmatprep.subr.mxu0 0.0
    %5195 = vmatpush1.msra.mxu0 0.0
    %5196 = vmatprep.mubr.f32.mxu0 0.0
    %5197 = vmatmul.mubr.f32.gmra.mrb[0].mxu0 %v5121
    %v5198 = vpop.f32.mrb[0].mxu0
    %v5199 = vadd.f32 0.0, %v5198
    %v5200 = vpop.f32.mrb[0].mxu0
    %v5201 = vadd.f32 0.0, %v5200
    %5202 = vmatprep.mubr.f32.mxu0 0.0
    %5203 = vmatmul.mubr.f32.gmra.mrb[0].mxu0 %v5124
    %v5204 = vpop.f32.mrb[0].mxu0
    %v5205 = vadd.f32 0.0, %v5204
    %v5206 = vpop.f32.mrb[0].mxu0
    %v5207 = vadd.f32 0.0, %v5206
    %5208 = vmatprep.mubr.f32.mxu0 0.0
    %5209 = vmatmul.mubr.f32.gmra.mrb[0].mxu0 %v5127
    %v5210 = vpop.f32.mrb[0].mxu0
    %v5211 = vadd.f32 0.0, %v5210
    %v5212 = vpop.f32.mrb[0].mxu0
    %v5213 = vadd.f32 0.0, %v5212
    %5214 = vmatprep.mubr.f32.mxu0 0.0
    %5215 = vmatmul.mubr.f32.gmra.mrb[0].mxu0 %v5130
    %v5216 = vpop.f32.mrb[0].mxu0
    %v5217 = vadd.f32 0.0, %v5216
    %v5218 = vpop.f32.mrb[0].mxu0
    %v5219 = vadd.f32 0.0, %v5218
    %5220 = vdwg.mxu0
    %5221 = vmatprep.subr.mxu0 %v5107
    %5222 = vmatpush1.msra.mxu0 %v5106
    %5223 = vmatprep.subr.mxu0 %v5111
    %5224 = vmatpush1.msra.mxu0 %v5110
    %5225 = vmatprep.subr.mxu0 %v5115
    %5226 = vmatpush1.msra.mxu0 %v5114
    %5227 = vmatprep.subr.mxu0 %v5119
    %5228 = vmatpush1.msra.mxu0 %v5118
    %5229 = vmatprep.subr.mxu0 0.0
    %5230 = vmatpush1.msra.mxu0 0.0
    %5231 = vmatprep.subr.mxu0 0.0
    %5232 = vmatpush1.msra.mxu0 0.0
    %5233 = vmatprep.subr.mxu0 0.0
    %5234 = vmatpush1.msra.mxu0 0.0
    %5235 = vmatprep.subr.mxu0 0.0
    %5236 = vmatpush1.msra.mxu0 0.0
    %5237 = vmatprep.subr.mxu0 0.0
    %5238 = vmatpush1.msra.mxu0 0.0
    %5239 = vmatprep.subr.mxu0 0.0
    %5240 = vmatpush1.msra.mxu0 0.0
    %5241 = vmatprep.subr.mxu0 0.0
    %5242 = vmatpush1.msra.mxu0 0.0
    %5243 = vmatprep.subr.mxu0 0.0
    %5244 = vmatpush1.msra.mxu0 0.0
    %5245 = vmatprep.subr.mxu0 0.0
    %5246 = vmatpush1.msra.mxu0 0.0
    %5247 = vmatprep.subr.mxu0 0.0
    %5248 = vmatpush1.msra.mxu0 0.0
    %5249 = vmatprep.subr.mxu0 0.0
    %5250 = vmatpush1.msra.mxu0 0.0
    %5251 = vmatprep.subr.mxu0 0.0
    %5252 = vmatpush1.msra.mxu0 0.0
    %5253 = vmatprep.subr.mxu0 0.0
    %5254 = vmatpush1.msra.mxu0 0.0
    %5255 = vmatprep.subr.mxu0 0.0
    %5256 = vmatpush1.msra.mxu0 0.0
    %5257 = vmatprep.subr.mxu0 0.0
    %5258 = vmatpush1.msra.mxu0 0.0
    %5259 = vmatprep.subr.mxu0 0.0
    %5260 = vmatpush1.msra.mxu0 0.0
    %5261 = vmatprep.subr.mxu0 0.0
    %5262 = vmatpush1.msra.mxu0 0.0
    %5263 = vmatprep.subr.mxu0 0.0
    %5264 = vmatpush1.msra.mxu0 0.0
    %5265 = vmatprep.subr.mxu0 0.0
    %5266 = vmatpush1.msra.mxu0 0.0
    %5267 = vmatprep.subr.mxu0 0.0
    %5268 = vmatpush1.msra.mxu0 0.0
    %5269 = vmatprep.subr.mxu0 0.0
    %5270 = vmatpush1.msra.mxu0 0.0
    %5271 = vmatprep.subr.mxu0 0.0
    %5272 = vmatpush1.msra.mxu0 0.0
    %5273 = vmatprep.subr.mxu0 0.0
    %5274 = vmatpush1.msra.mxu0 0.0
    %5275 = vmatprep.subr.mxu0 0.0
    %5276 = vmatpush1.msra.mxu0 0.0
    %5277 = vmatprep.subr.mxu0 0.0
    %5278 = vmatpush1.msra.mxu0 0.0
    %5279 = vmatprep.subr.mxu0 0.0
    %5280 = vmatpush1.msra.mxu0 0.0
    %5281 = vmatprep.subr.mxu0 0.0
    %5282 = vmatpush1.msra.mxu0 0.0
    %5283 = vmatprep.subr.mxu0 0.0
    %5284 = vmatpush1.msra.mxu0 0.0
    %5285 = vmatprep.mubr.f32.mxu0 0.0
    %5286 = vmatmul.mubr.f32.gmra.mrb[0].mxu0 %v5121
    %v5287 = vpop.f32.mrb[0].mxu0
    %v5288 = vadd.f32 0.0, %v5287
    %v5289 = vpop.f32.mrb[0].mxu0
    %v5290 = vadd.f32 0.0, %v5289
    %5291 = vmatprep.mubr.f32.mxu0 0.0
    %5292 = vmatmul.mubr.f32.gmra.mrb[0].mxu0 %v5124
    %v5293 = vpop.f32.mrb[0].mxu0
    %v5294 = vadd.f32 0.0, %v5293
    %v5295 = vpop.f32.mrb[0].mxu0
    %v5296 = vadd.f32 0.0, %v5295
    %5297 = vmatprep.mubr.f32.mxu0 0.0
    %5298 = vmatmul.mubr.f32.gmra.mrb[0].mxu0 %v5127
    %v5299 = vpop.f32.mrb[0].mxu0
    %v5300 = vadd.f32 0.0, %v5299
    %v5301 = vpop.f32.mrb[0].mxu0
    %v5302 = vadd.f32 0.0, %v5301
    %5303 = vmatprep.mubr.f32.mxu0 0.0
    %5304 = vmatmul.mubr.f32.gmra.mrb[0].mxu0 %v5130
    %v5305 = vpop.f32.mrb[0].mxu0
    %v5306 = vadd.f32 0.0, %v5305
    %v5307 = vpop.f32.mrb[0].mxu0
    %v5308 = vadd.f32 0.0, %v5307
    %5309 = vdwg.mxu0
    %v5310 = vadd.f32 %v5083, %v5199
    %v5311 = vadd.f32 %v5084, %v5201
    %v5312 = vadd.f32 %v5085, %v5288
    %v5313 = vadd.f32 %v5086, %v5290
    %v5314 = vadd.f32 %v5087, %v5205
    %v5315 = vadd.f32 %v5088, %v5207
    %v5316 = vadd.f32 %v5089, %v5294
    %v5317 = vadd.f32 %v5090, %v5296
    %v5318 = vadd.f32 %v5091, %v5211
    %v5319 = vadd.f32 %v5092, %v5213
    %v5320 = vadd.f32 %v5093, %v5300
    %v5321 = vadd.f32 %v5094, %v5302
    %v5322 = vadd.f32 %v5095, %v5217
    %v5323 = vadd.f32 %v5096, %v5219
    %v5324 = vadd.f32 %v5097, %v5306
    %v5325 = vadd.f32 %v5098, %v5308
    %5326 = vrot.lane.b32.xlu0 %v3722, 127
    %v5327 = vpop.permute.xlu0 %5326
    %5328 = vrot.lane.b32.xlu0 %v3726, 127
    %v5329 = vpop.permute.xlu0 %5328
    %5330 = vrot.lane.b32.xlu0 %v3730, 127
    %v5331 = vpop.permute.xlu0 %5330
    %5332 = vrot.lane.b32.xlu0 %v3734, 127
    %v5333 = vpop.permute.xlu0 %5332
    %5334 = vrot.lane.b32.xlu0 %v3723, 127
    %v5335 = vpop.permute.xlu0 %5334
    %5336 = vrot.lane.b32.xlu0 %v3727, 127
    %v5337 = vpop.permute.xlu0 %5336
    %5338 = vrot.lane.b32.xlu0 %v3731, 127
    %v5339 = vpop.permute.xlu0 %5338
    %5340 = vrot.lane.b32.xlu0 %v3735, 127
    %v5341 = vpop.permute.xlu0 %5340
    %5342 = vrot.lane.b32.xlu0 %v3724, 127
    %v5343 = vpop.permute.xlu0 %5342
    %5344 = vrot.lane.b32.xlu0 %v3728, 127
    %v5345 = vpop.permute.xlu0 %5344
    %5346 = vrot.lane.b32.xlu0 %v3732, 127
    %v5347 = vpop.permute.xlu0 %5346
    %5348 = vrot.lane.b32.xlu0 %v3736, 127
    %v5349 = vpop.permute.xlu0 %5348
    %5350 = vrot.lane.b32.xlu0 %v3725, 127
    %v5351 = vpop.permute.xlu0 %5350
    %5352 = vrot.lane.b32.xlu0 %v3729, 127
    %v5353 = vpop.permute.xlu0 %5352
    %5354 = vrot.lane.b32.xlu0 %v3733, 127
    %v5355 = vpop.permute.xlu0 %5354
    %5356 = vrot.lane.b32.xlu0 %v3737, 127
    %v5357 = vpop.permute.xlu0 %5356
    %v5358 = vsel %vm2462, %v5343, %v5351
    %v5359 = vsel %vm2462, %v5345, %v5353
    %v5360 = vsel %vm2462, %v5347, %v5355
    %v5361 = vsel %vm2462, %v5349, %v5357
    %v5362 = vsel %vm2462, %v5335, %v5343
    %v5363 = vsel %vm2462, %v5337, %v5345
    %v5364 = vsel %vm2462, %v5339, %v5347
    %v5365 = vsel %vm2462, %v5341, %v5349
    %v5366 = vsel %vm2462, %v5327, %v5335
    %v5367 = vsel %vm2462, %v5329, %v5337
    %v5368 = vsel %vm2462, %v5331, %v5339
    %v5369 = vsel %vm2462, %v5333, %v5341
    %v5370 = vsel %vm2462, %v5351, %v5327
    %v5371 = vsel %vm2462, %v5353, %v5329
    %v5372 = vsel %vm2462, %v5355, %v5331
    %v5373 = vsel %vm2462, %v5357, %v5333
    %s5374 = scalar_lea.vmem [#allocation2], 448
    %v5375 = vld [vmem:[%s5374] sm:$0xff]
    %v5376 = vld [vmem:[%s5374 + $0x8] sm:$0xff]
    %v5377 = vld [vmem:[%s5374 + $0x10] sm:$0xff]
    %v5378 = vld [vmem:[%s5374 + $0x18] sm:$0xff]
    %v5379 = vmul.f32 %v5366, %v2490
    %v5380 = vmul.f32 %v5362, %v2494
    %v5381 = vmul.f32 %v5358, %v2498
    %v5382 = vmul.f32 %v5370, %v2502
    %v5383 = vmul.f32 %v5367, %v2490
    %v5384 = vmul.f32 %v5363, %v2494
    %v5385 = vmul.f32 %v5359, %v2498
    %v5386 = vmul.f32 %v5371, %v2502
    %v5387 = vmul.f32 %v5368, %v2490
    %v5388 = vmul.f32 %v5364, %v2494
    %v5389 = vmul.f32 %v5360, %v2498
    %v5390 = vmul.f32 %v5372, %v2502
    %v5391 = vmul.f32 %v5369, %v2490
    %v5392 = vmul.f32 %v5365, %v2494
    %v5393 = vmul.f32 %v5361, %v2498
    %v5394 = vmul.f32 %v5373, %v2502
    %v5396 = vsel %vm753, %v5375, 0
    %v5399 = vsel %vm753, %v5376, 0
    %v5402 = vsel %vm753, %v5377, 0
    %v5405 = vsel %vm753, %v5378, 0
    %5407 = vmatprep.subr.mxu0 %v5380
    %5408 = vmatpush1.msra.mxu0 %v5379
    %5409 = vmatprep.subr.mxu0 %v5384
    %5410 = vmatpush1.msra.mxu0 %v5383
    %5411 = vmatprep.subr.mxu0 %v5388
    %5412 = vmatpush1.msra.mxu0 %v5387
    %5413 = vmatprep.subr.mxu0 %v5392
    %5414 = vmatpush1.msra.mxu0 %v5391
    %5415 = vmatprep.subr.mxu0 0.0
    %5416 = vmatpush1.msra.mxu0 0.0
    %5417 = vmatprep.subr.mxu0 0.0
    %5418 = vmatpush1.msra.mxu0 0.0
    %5419 = vmatprep.subr.mxu0 0.0
    %5420 = vmatpush1.msra.mxu0 0.0
    %5421 = vmatprep.subr.mxu0 0.0
    %5422 = vmatpush1.msra.mxu0 0.0
    %5423 = vmatprep.subr.mxu0 0.0
    %5424 = vmatpush1.msra.mxu0 0.0
    %5425 = vmatprep.subr.mxu0 0.0
    %5426 = vmatpush1.msra.mxu0 0.0
    %5427 = vmatprep.subr.mxu0 0.0
    %5428 = vmatpush1.msra.mxu0 0.0
    %5429 = vmatprep.subr.mxu0 0.0
    %5430 = vmatpush1.msra.mxu0 0.0
    %5431 = vmatprep.subr.mxu0 0.0
    %5432 = vmatpush1.msra.mxu0 0.0
    %5433 = vmatprep.subr.mxu0 0.0
    %5434 = vmatpush1.msra.mxu0 0.0
    %5435 = vmatprep.subr.mxu0 0.0
    %5436 = vmatpush1.msra.mxu0 0.0
    %5437 = vmatprep.subr.mxu0 0.0
    %5438 = vmatpush1.msra.mxu0 0.0
    %5439 = vmatprep.subr.mxu0 0.0
    %5440 = vmatpush1.msra.mxu0 0.0
    %5441 = vmatprep.subr.mxu0 0.0
    %5442 = vmatpush1.msra.mxu0 0.0
    %5443 = vmatprep.subr.mxu0 0.0
    %5444 = vmatpush1.msra.mxu0 0.0
    %5445 = vmatprep.subr.mxu0 0.0
    %5446 = vmatpush1.msra.mxu0 0.0
    %5447 = vmatprep.subr.mxu0 0.0
    %5448 = vmatpush1.msra.mxu0 0.0
    %5449 = vmatprep.subr.mxu0 0.0
    %5450 = vmatpush1.msra.mxu0 0.0
    %5451 = vmatprep.subr.mxu0 0.0
    %5452 = vmatpush1.msra.mxu0 0.0
    %5453 = vmatprep.subr.mxu0 0.0
    %5454 = vmatpush1.msra.mxu0 0.0
    %5455 = vmatprep.subr.mxu0 0.0
    %5456 = vmatpush1.msra.mxu0 0.0
    %5457 = vmatprep.subr.mxu0 0.0
    %5458 = vmatpush1.msra.mxu0 0.0
    %5459 = vmatprep.subr.mxu0 0.0
    %5460 = vmatpush1.msra.mxu0 0.0
    %5461 = vmatprep.subr.mxu0 0.0
    %5462 = vmatpush1.msra.mxu0 0.0
    %5463 = vmatprep.subr.mxu0 0.0
    %5464 = vmatpush1.msra.mxu0 0.0
    %5465 = vmatprep.subr.mxu0 0.0
    %5466 = vmatpush1.msra.mxu0 0.0
    %5467 = vmatprep.subr.mxu0 0.0
    %5468 = vmatpush1.msra.mxu0 0.0
    %5469 = vmatprep.subr.mxu0 0.0
    %5470 = vmatpush1.msra.mxu0 0.0
    %5471 = vmatprep.mubr.f32.mxu0 0.0
    %5472 = vmatmul.mubr.f32.gmra.mrb[0].mxu0 %v5396
    %v5473 = vpop.f32.mrb[0].mxu0
    %v5474 = vadd.f32 0.0, %v5473
    %v5475 = vpop.f32.mrb[0].mxu0
    %v5476 = vadd.f32 0.0, %v5475
    %5477 = vmatprep.mubr.f32.mxu0 0.0
    %5478 = vmatmul.mubr.f32.gmra.mrb[0].mxu0 %v5399
    %v5479 = vpop.f32.mrb[0].mxu0
    %v5480 = vadd.f32 0.0, %v5479
    %v5481 = vpop.f32.mrb[0].mxu0
    %v5482 = vadd.f32 0.0, %v5481
    %5483 = vmatprep.mubr.f32.mxu0 0.0
    %5484 = vmatmul.mubr.f32.gmra.mrb[0].mxu0 %v5402
    %v5485 = vpop.f32.mrb[0].mxu0
    %v5486 = vadd.f32 0.0, %v5485
    %v5487 = vpop.f32.mrb[0].mxu0
    %v5488 = vadd.f32 0.0, %v5487
    %5489 = vmatprep.mubr.f32.mxu0 0.0
    %5490 = vmatmul.mubr.f32.gmra.mrb[0].mxu0 %v5405
    %v5491 = vpop.f32.mrb[0].mxu0
    %v5492 = vadd.f32 0.0, %v5491
    %v5493 = vpop.f32.mrb[0].mxu0
    %v5494 = vadd.f32 0.0, %v5493
    %5495 = vdwg.mxu0
    %5496 = vmatprep.subr.mxu0 %v5382
    %5497 = vmatpush1.msra.mxu0 %v5381
    %5498 = vmatprep.subr.mxu0 %v5386
    %5499 = vmatpush1.msra.mxu0 %v5385
    %5500 = vmatprep.subr.mxu0 %v5390
    %5501 = vmatpush1.msra.mxu0 %v5389
    %5502 = vmatprep.subr.mxu0 %v5394
    %5503 = vmatpush1.msra.mxu0 %v5393
    %5504 = vmatprep.subr.mxu0 0.0
    %5505 = vmatpush1.msra.mxu0 0.0
    %5506 = vmatprep.subr.mxu0 0.0
    %5507 = vmatpush1.msra.mxu0 0.0
    %5508 = vmatprep.subr.mxu0 0.0
    %5509 = vmatpush1.msra.mxu0 0.0
    %5510 = vmatprep.subr.mxu0 0.0
    %5511 = vmatpush1.msra.mxu0 0.0
    %5512 = vmatprep.subr.mxu0 0.0
    %5513 = vmatpush1.msra.mxu0 0.0
    %5514 = vmatprep.subr.mxu0 0.0
    %5515 = vmatpush1.msra.mxu0 0.0
    %5516 = vmatprep.subr.mxu0 0.0
    %5517 = vmatpush1.msra.mxu0 0.0
    %5518 = vmatprep.subr.mxu0 0.0
    %5519 = vmatpush1.msra.mxu0 0.0
    %5520 = vmatprep.subr.mxu0 0.0
    %5521 = vmatpush1.msra.mxu0 0.0
    %5522 = vmatprep.subr.mxu0 0.0
    %5523 = vmatpush1.msra.mxu0 0.0
    %5524 = vmatprep.subr.mxu0 0.0
    %5525 = vmatpush1.msra.mxu0 0.0
    %5526 = vmatprep.subr.mxu0 0.0
    %5527 = vmatpush1.msra.mxu0 0.0
    %5528 = vmatprep.subr.mxu0 0.0
    %5529 = vmatpush1.msra.mxu0 0.0
    %5530 = vmatprep.subr.mxu0 0.0
    %5531 = vmatpush1.msra.mxu0 0.0
    %5532 = vmatprep.subr.mxu0 0.0
    %5533 = vmatpush1.msra.mxu0 0.0
    %5534 = vmatprep.subr.mxu0 0.0
    %5535 = vmatpush1.msra.mxu0 0.0
    %5536 = vmatprep.subr.mxu0 0.0
    %5537 = vmatpush1.msra.mxu0 0.0
    %5538 = vmatprep.subr.mxu0 0.0
    %5539 = vmatpush1.msra.mxu0 0.0
    %5540 = vmatprep.subr.mxu0 0.0
    %5541 = vmatpush1.msra.mxu0 0.0
    %5542 = vmatprep.subr.mxu0 0.0
    %5543 = vmatpush1.msra.mxu0 0.0
    %5544 = vmatprep.subr.mxu0 0.0
    %5545 = vmatpush1.msra.mxu0 0.0
    %5546 = vmatprep.subr.mxu0 0.0
    %5547 = vmatpush1.msra.mxu0 0.0
    %5548 = vmatprep.subr.mxu0 0.0
    %5549 = vmatpush1.msra.mxu0 0.0
    %5550 = vmatprep.subr.mxu0 0.0
    %5551 = vmatpush1.msra.mxu0 0.0
    %5552 = vmatprep.subr.mxu0 0.0
    %5553 = vmatpush1.msra.mxu0 0.0
    %5554 = vmatprep.subr.mxu0 0.0
    %5555 = vmatpush1.msra.mxu0 0.0
    %5556 = vmatprep.subr.mxu0 0.0
    %5557 = vmatpush1.msra.mxu0 0.0
    %5558 = vmatprep.subr.mxu0 0.0
    %5559 = vmatpush1.msra.mxu0 0.0
    %5560 = vmatprep.mubr.f32.mxu0 0.0
    %5561 = vmatmul.mubr.f32.gmra.mrb[0].mxu0 %v5396
    %v5562 = vpop.f32.mrb[0].mxu0
    %v5563 = vadd.f32 0.0, %v5562
    %v5564 = vpop.f32.mrb[0].mxu0
    %v5565 = vadd.f32 0.0, %v5564
    %5566 = vmatprep.mubr.f32.mxu0 0.0
    %5567 = vmatmul.mubr.f32.gmra.mrb[0].mxu0 %v5399
    %v5568 = vpop.f32.mrb[0].mxu0
    %v5569 = vadd.f32 0.0, %v5568
    %v5570 = vpop.f32.mrb[0].mxu0
    %v5571 = vadd.f32 0.0, %v5570
    %5572 = vmatprep.mubr.f32.mxu0 0.0
    %5573 = vmatmul.mubr.f32.gmra.mrb[0].mxu0 %v5402
    %v5574 = vpop.f32.mrb[0].mxu0
    %v5575 = vadd.f32 0.0, %v5574
    %v5576 = vpop.f32.mrb[0].mxu0
    %v5577 = vadd.f32 0.0, %v5576
    %5578 = vmatprep.mubr.f32.mxu0 0.0
    %5579 = vmatmul.mubr.f32.gmra.mrb[0].mxu0 %v5405
    %v5580 = vpop.f32.mrb[0].mxu0
    %v5581 = vadd.f32 0.0, %v5580
    %v5582 = vpop.f32.mrb[0].mxu0
    %v5583 = vadd.f32 0.0, %v5582
    %5584 = vdwg.mxu0
    %v5585 = vadd.f32 %v5310, %v5474
    %v5586 = vadd.f32 %v5311, %v5476
    %v5587 = vadd.f32 %v5312, %v5563
    %v5588 = vadd.f32 %v5313, %v5565
    %v5589 = vadd.f32 %v5314, %v5480
    %v5590 = vadd.f32 %v5315, %v5482
    %v5591 = vadd.f32 %v5316, %v5569
    %v5592 = vadd.f32 %v5317, %v5571
    %v5593 = vadd.f32 %v5318, %v5486
    %v5594 = vadd.f32 %v5319, %v5488
    %v5595 = vadd.f32 %v5320, %v5575
    %v5596 = vadd.f32 %v5321, %v5577
    %v5597 = vadd.f32 %v5322, %v5492
    %v5598 = vadd.f32 %v5323, %v5494
    %v5599 = vadd.f32 %v5324, %v5581
    %v5600 = vadd.f32 %v5325, %v5583
    %5601 = vrot.lane.b32.xlu0 %v3722, 113
    %v5602 = vpop.permute.xlu0 %5601
    %5603 = vrot.lane.b32.xlu0 %v3726, 113
    %v5604 = vpop.permute.xlu0 %5603
    %5605 = vrot.lane.b32.xlu0 %v3730, 113
    %v5606 = vpop.permute.xlu0 %5605
    %5607 = vrot.lane.b32.xlu0 %v3734, 113
    %v5608 = vpop.permute.xlu0 %5607
    %5609 = vrot.lane.b32.xlu0 %v3723, 113
    %v5610 = vpop.permute.xlu0 %5609
    %5611 = vrot.lane.b32.xlu0 %v3727, 113
    %v5612 = vpop.permute.xlu0 %5611
    %5613 = vrot.lane.b32.xlu0 %v3731, 113
    %v5614 = vpop.permute.xlu0 %5613
    %5615 = vrot.lane.b32.xlu0 %v3735, 113
    %v5616 = vpop.permute.xlu0 %5615
    %5617 = vrot.lane.b32.xlu0 %v3724, 113
    %v5618 = vpop.permute.xlu0 %5617
    %5619 = vrot.lane.b32.xlu0 %v3728, 113
    %v5620 = vpop.permute.xlu0 %5619
    %5621 = vrot.lane.b32.xlu0 %v3732, 113
    %v5622 = vpop.permute.xlu0 %5621
    %5623 = vrot.lane.b32.xlu0 %v3736, 113
    %v5624 = vpop.permute.xlu0 %5623
    %5625 = vrot.lane.b32.xlu0 %v3725, 113
    %v5626 = vpop.permute.xlu0 %5625
    %5627 = vrot.lane.b32.xlu0 %v3729, 113
    %v5628 = vpop.permute.xlu0 %5627
    %5629 = vrot.lane.b32.xlu0 %v3733, 113
    %v5630 = vpop.permute.xlu0 %5629
    %5631 = vrot.lane.b32.xlu0 %v3737, 113
    %v5632 = vpop.permute.xlu0 %5631
    %v5633 = vsel %vm2761, %v5618, %v5626
    %v5634 = vsel %vm2761, %v5620, %v5628
    %v5635 = vsel %vm2761, %v5622, %v5630
    %v5636 = vsel %vm2761, %v5624, %v5632
    %v5637 = vsel %vm2761, %v5610, %v5618
    %v5638 = vsel %vm2761, %v5612, %v5620
    %v5639 = vsel %vm2761, %v5614, %v5622
    %v5640 = vsel %vm2761, %v5616, %v5624
    %v5641 = vsel %vm2761, %v5602, %v5610
    %v5642 = vsel %vm2761, %v5604, %v5612
    %v5643 = vsel %vm2761, %v5606, %v5614
    %v5644 = vsel %vm2761, %v5608, %v5616
    %v5645 = vsel %vm2761, %v5626, %v5602
    %v5646 = vsel %vm2761, %v5628, %v5604
    %v5647 = vsel %vm2761, %v5630, %v5606
    %v5648 = vsel %vm2761, %v5632, %v5608
    %s5649 = scalar_lea.vmem [#allocation2], 480
    %v5650 = vld [vmem:[%s5649] sm:$0xff]
    %v5651 = vld [vmem:[%s5649 + $0x8] sm:$0xff]
    %v5652 = vld [vmem:[%s5649 + $0x10] sm:$0xff]
    %v5653 = vld [vmem:[%s5649 + $0x18] sm:$0xff]
    %v5654 = vmul.f32 %v5641, %v2789
    %v5655 = vmul.f32 %v5637, %v2793
    %v5656 = vmul.f32 %v5633, %v2797
    %v5657 = vmul.f32 %v5645, %v2801
    %v5658 = vmul.f32 %v5642, %v2789
    %v5659 = vmul.f32 %v5638, %v2793
    %v5660 = vmul.f32 %v5634, %v2797
    %v5661 = vmul.f32 %v5646, %v2801
    %v5662 = vmul.f32 %v5643, %v2789
    %v5663 = vmul.f32 %v5639, %v2793
    %v5664 = vmul.f32 %v5635, %v2797
    %v5665 = vmul.f32 %v5647, %v2801
    %v5666 = vmul.f32 %v5644, %v2789
    %v5667 = vmul.f32 %v5640, %v2793
    %v5668 = vmul.f32 %v5636, %v2797
    %v5669 = vmul.f32 %v5648, %v2801
    %v5671 = vsel %vm753, %v5650, 0
    %v5674 = vsel %vm753, %v5651, 0
    %v5677 = vsel %vm753, %v5652, 0
    %v5680 = vsel %vm753, %v5653, 0
    %5682 = vmatprep.subr.mxu0 %v5655
    %5683 = vmatpush1.msra.mxu0 %v5654
    %5684 = vmatprep.subr.mxu0 %v5659
    %5685 = vmatpush1.msra.mxu0 %v5658
    %5686 = vmatprep.subr.mxu0 %v5663
    %5687 = vmatpush1.msra.mxu0 %v5662
    %5688 = vmatprep.subr.mxu0 %v5667
    %5689 = vmatpush1.msra.mxu0 %v5666
    %5690 = vmatprep.subr.mxu0 0.0
    %5691 = vmatpush1.msra.mxu0 0.0
    %5692 = vmatprep.subr.mxu0 0.0
    %5693 = vmatpush1.msra.mxu0 0.0
    %5694 = vmatprep.subr.mxu0 0.0
    %5695 = vmatpush1.msra.mxu0 0.0
    %5696 = vmatprep.subr.mxu0 0.0
    %5697 = vmatpush1.msra.mxu0 0.0
    %5698 = vmatprep.subr.mxu0 0.0
    %5699 = vmatpush1.msra.mxu0 0.0
    %5700 = vmatprep.subr.mxu0 0.0
    %5701 = vmatpush1.msra.mxu0 0.0
    %5702 = vmatprep.subr.mxu0 0.0
    %5703 = vmatpush1.msra.mxu0 0.0
    %5704 = vmatprep.subr.mxu0 0.0
    %5705 = vmatpush1.msra.mxu0 0.0
    %5706 = vmatprep.subr.mxu0 0.0
    %5707 = vmatpush1.msra.mxu0 0.0
    %5708 = vmatprep.subr.mxu0 0.0
    %5709 = vmatpush1.msra.mxu0 0.0
    %5710 = vmatprep.subr.mxu0 0.0
    %5711 = vmatpush1.msra.mxu0 0.0
    %5712 = vmatprep.subr.mxu0 0.0
    %5713 = vmatpush1.msra.mxu0 0.0
    %5714 = vmatprep.subr.mxu0 0.0
    %5715 = vmatpush1.msra.mxu0 0.0
    %5716 = vmatprep.subr.mxu0 0.0
    %5717 = vmatpush1.msra.mxu0 0.0
    %5718 = vmatprep.subr.mxu0 0.0
    %5719 = vmatpush1.msra.mxu0 0.0
    %5720 = vmatprep.subr.mxu0 0.0
    %5721 = vmatpush1.msra.mxu0 0.0
    %5722 = vmatprep.subr.mxu0 0.0
    %5723 = vmatpush1.msra.mxu0 0.0
    %5724 = vmatprep.subr.mxu0 0.0
    %5725 = vmatpush1.msra.mxu0 0.0
    %5726 = vmatprep.subr.mxu0 0.0
    %5727 = vmatpush1.msra.mxu0 0.0
    %5728 = vmatprep.subr.mxu0 0.0
    %5729 = vmatpush1.msra.mxu0 0.0
    %5730 = vmatprep.subr.mxu0 0.0
    %5731 = vmatpush1.msra.mxu0 0.0
    %5732 = vmatprep.subr.mxu0 0.0
    %5733 = vmatpush1.msra.mxu0 0.0
    %5734 = vmatprep.subr.mxu0 0.0
    %5735 = vmatpush1.msra.mxu0 0.0
    %5736 = vmatprep.subr.mxu0 0.0
    %5737 = vmatpush1.msra.mxu0 0.0
    %5738 = vmatprep.subr.mxu0 0.0
    %5739 = vmatpush1.msra.mxu0 0.0
    %5740 = vmatprep.subr.mxu0 0.0
    %5741 = vmatpush1.msra.mxu0 0.0
    %5742 = vmatprep.subr.mxu0 0.0
    %5743 = vmatpush1.msra.mxu0 0.0
    %5744 = vmatprep.subr.mxu0 0.0
    %5745 = vmatpush1.msra.mxu0 0.0
    %5746 = vmatprep.mubr.f32.mxu0 0.0
    %5747 = vmatmul.mubr.f32.gmra.mrb[0].mxu0 %v5671
    %v5748 = vpop.f32.mrb[0].mxu0
    %v5749 = vadd.f32 0.0, %v5748
    %v5750 = vpop.f32.mrb[0].mxu0
    %v5751 = vadd.f32 0.0, %v5750
    %5752 = vmatprep.mubr.f32.mxu0 0.0
    %5753 = vmatmul.mubr.f32.gmra.mrb[0].mxu0 %v5674
    %v5754 = vpop.f32.mrb[0].mxu0
    %v5755 = vadd.f32 0.0, %v5754
    %v5756 = vpop.f32.mrb[0].mxu0
    %v5757 = vadd.f32 0.0, %v5756
    %5758 = vmatprep.mubr.f32.mxu0 0.0
    %5759 = vmatmul.mubr.f32.gmra.mrb[0].mxu0 %v5677
    %v5760 = vpop.f32.mrb[0].mxu0
    %v5761 = vadd.f32 0.0, %v5760
    %v5762 = vpop.f32.mrb[0].mxu0
    %v5763 = vadd.f32 0.0, %v5762
    %5764 = vmatprep.mubr.f32.mxu0 0.0
    %5765 = vmatmul.mubr.f32.gmra.mrb[0].mxu0 %v5680
    %v5766 = vpop.f32.mrb[0].mxu0
    %v5767 = vadd.f32 0.0, %v5766
    %v5768 = vpop.f32.mrb[0].mxu0
    %v5769 = vadd.f32 0.0, %v5768
    %5770 = vdwg.mxu0
    %5771 = vmatprep.subr.mxu0 %v5657
    %5772 = vmatpush1.msra.mxu0 %v5656
    %5773 = vmatprep.subr.mxu0 %v5661
    %5774 = vmatpush1.msra.mxu0 %v5660
    %5775 = vmatprep.subr.mxu0 %v5665
    %5776 = vmatpush1.msra.mxu0 %v5664
    %5777 = vmatprep.subr.mxu0 %v5669
    %5778 = vmatpush1.msra.mxu0 %v5668
    %5779 = vmatprep.subr.mxu0 0.0
    %5780 = vmatpush1.msra.mxu0 0.0
    %5781 = vmatprep.subr.mxu0 0.0
    %5782 = vmatpush1.msra.mxu0 0.0
    %5783 = vmatprep.subr.mxu0 0.0
    %5784 = vmatpush1.msra.mxu0 0.0
    %5785 = vmatprep.subr.mxu0 0.0
    %5786 = vmatpush1.msra.mxu0 0.0
    %5787 = vmatprep.subr.mxu0 0.0
    %5788 = vmatpush1.msra.mxu0 0.0
    %5789 = vmatprep.subr.mxu0 0.0
    %5790 = vmatpush1.msra.mxu0 0.0
    %5791 = vmatprep.subr.mxu0 0.0
    %5792 = vmatpush1.msra.mxu0 0.0
    %5793 = vmatprep.subr.mxu0 0.0
    %5794 = vmatpush1.msra.mxu0 0.0
    %5795 = vmatprep.subr.mxu0 0.0
    %5796 = vmatpush1.msra.mxu0 0.0
    %5797 = vmatprep.subr.mxu0 0.0
    %5798 = vmatpush1.msra.mxu0 0.0
    %5799 = vmatprep.subr.mxu0 0.0
    %5800 = vmatpush1.msra.mxu0 0.0
    %5801 = vmatprep.subr.mxu0 0.0
    %5802 = vmatpush1.msra.mxu0 0.0
    %5803 = vmatprep.subr.mxu0 0.0
    %5804 = vmatpush1.msra.mxu0 0.0
    %5805 = vmatprep.subr.mxu0 0.0
    %5806 = vmatpush1.msra.mxu0 0.0
    %5807 = vmatprep.subr.mxu0 0.0
    %5808 = vmatpush1.msra.mxu0 0.0
    %5809 = vmatprep.subr.mxu0 0.0
    %5810 = vmatpush1.msra.mxu0 0.0
    %5811 = vmatprep.subr.mxu0 0.0
    %5812 = vmatpush1.msra.mxu0 0.0
    %5813 = vmatprep.subr.mxu0 0.0
    %5814 = vmatpush1.msra.mxu0 0.0
    %5815 = vmatprep.subr.mxu0 0.0
    %5816 = vmatpush1.msra.mxu0 0.0
    %5817 = vmatprep.subr.mxu0 0.0
    %5818 = vmatpush1.msra.mxu0 0.0
    %5819 = vmatprep.subr.mxu0 0.0
    %5820 = vmatpush1.msra.mxu0 0.0
    %5821 = vmatprep.subr.mxu0 0.0
    %5822 = vmatpush1.msra.mxu0 0.0
    %5823 = vmatprep.subr.mxu0 0.0
    %5824 = vmatpush1.msra.mxu0 0.0
    %5825 = vmatprep.subr.mxu0 0.0
    %5826 = vmatpush1.msra.mxu0 0.0
    %5827 = vmatprep.subr.mxu0 0.0
    %5828 = vmatpush1.msra.mxu0 0.0
    %5829 = vmatprep.subr.mxu0 0.0
    %5830 = vmatpush1.msra.mxu0 0.0
    %5831 = vmatprep.subr.mxu0 0.0
    %5832 = vmatpush1.msra.mxu0 0.0
    %5833 = vmatprep.subr.mxu0 0.0
    %5834 = vmatpush1.msra.mxu0 0.0
    %5835 = vmatprep.mubr.f32.mxu0 0.0
    %5836 = vmatmul.mubr.f32.gmra.mrb[0].mxu0 %v5671
    %v5837 = vpop.f32.mrb[0].mxu0
    %v5838 = vadd.f32 0.0, %v5837
    %v5839 = vpop.f32.mrb[0].mxu0
    %v5840 = vadd.f32 0.0, %v5839
    %5841 = vmatprep.mubr.f32.mxu0 0.0
    %5842 = vmatmul.mubr.f32.gmra.mrb[0].mxu0 %v5674
    %v5843 = vpop.f32.mrb[0].mxu0
    %v5844 = vadd.f32 0.0, %v5843
    %v5845 = vpop.f32.mrb[0].mxu0
    %v5846 = vadd.f32 0.0, %v5845
    %5847 = vmatprep.mubr.f32.mxu0 0.0
    %5848 = vmatmul.mubr.f32.gmra.mrb[0].mxu0 %v5677
    %v5849 = vpop.f32.mrb[0].mxu0
    %v5850 = vadd.f32 0.0, %v5849
    %v5851 = vpop.f32.mrb[0].mxu0
    %v5852 = vadd.f32 0.0, %v5851
    %5853 = vmatprep.mubr.f32.mxu0 0.0
    %5854 = vmatmul.mubr.f32.gmra.mrb[0].mxu0 %v5680
    %v5855 = vpop.f32.mrb[0].mxu0
    %v5856 = vadd.f32 0.0, %v5855
    %v5857 = vpop.f32.mrb[0].mxu0
    %v5858 = vadd.f32 0.0, %v5857
    %5859 = vdwg.mxu0
    %v5860 = vadd.f32 %v5585, %v5749
    %v5861 = vadd.f32 %v5586, %v5751
    %v5862 = vadd.f32 %v5587, %v5838
    %v5863 = vadd.f32 %v5588, %v5840
    %v5864 = vadd.f32 %v5589, %v5755
    %v5865 = vadd.f32 %v5590, %v5757
    %v5866 = vadd.f32 %v5591, %v5844
    %v5867 = vadd.f32 %v5592, %v5846
    %v5868 = vadd.f32 %v5593, %v5761
    %v5869 = vadd.f32 %v5594, %v5763
    %v5870 = vadd.f32 %v5595, %v5850
    %v5871 = vadd.f32 %v5596, %v5852
    %v5872 = vadd.f32 %v5597, %v5767
    %v5873 = vadd.f32 %v5598, %v5769
    %v5874 = vadd.f32 %v5599, %v5856
    %v5875 = vadd.f32 %v5600, %v5858
    %5876 = vrot.lane.b32.xlu0 %v3722, 112
    %v5877 = vpop.permute.xlu0 %5876
    %5878 = vrot.lane.b32.xlu0 %v3726, 112
    %v5879 = vpop.permute.xlu0 %5878
    %5880 = vrot.lane.b32.xlu0 %v3730, 112
    %v5881 = vpop.permute.xlu0 %5880
    %5882 = vrot.lane.b32.xlu0 %v3734, 112
    %v5883 = vpop.permute.xlu0 %5882
    %5884 = vrot.lane.b32.xlu0 %v3723, 112
    %v5885 = vpop.permute.xlu0 %5884
    %5886 = vrot.lane.b32.xlu0 %v3727, 112
    %v5887 = vpop.permute.xlu0 %5886
    %5888 = vrot.lane.b32.xlu0 %v3731, 112
    %v5889 = vpop.permute.xlu0 %5888
    %5890 = vrot.lane.b32.xlu0 %v3735, 112
    %v5891 = vpop.permute.xlu0 %5890
    %5892 = vrot.lane.b32.xlu0 %v3724, 112
    %v5893 = vpop.permute.xlu0 %5892
    %5894 = vrot.lane.b32.xlu0 %v3728, 112
    %v5895 = vpop.permute.xlu0 %5894
    %5896 = vrot.lane.b32.xlu0 %v3732, 112
    %v5897 = vpop.permute.xlu0 %5896
    %5898 = vrot.lane.b32.xlu0 %v3736, 112
    %v5899 = vpop.permute.xlu0 %5898
    %5900 = vrot.lane.b32.xlu0 %v3725, 112
    %v5901 = vpop.permute.xlu0 %5900
    %5902 = vrot.lane.b32.xlu0 %v3729, 112
    %v5903 = vpop.permute.xlu0 %5902
    %5904 = vrot.lane.b32.xlu0 %v3733, 112
    %v5905 = vpop.permute.xlu0 %5904
    %5906 = vrot.lane.b32.xlu0 %v3737, 112
    %v5907 = vpop.permute.xlu0 %5906
    %v5908 = vsel %vm3060, %v5893, %v5901
    %v5909 = vsel %vm3060, %v5895, %v5903
    %v5910 = vsel %vm3060, %v5897, %v5905
    %v5911 = vsel %vm3060, %v5899, %v5907
    %v5912 = vsel %vm3060, %v5885, %v5893
    %v5913 = vsel %vm3060, %v5887, %v5895
    %v5914 = vsel %vm3060, %v5889, %v5897
    %v5915 = vsel %vm3060, %v5891, %v5899
    %v5916 = vsel %vm3060, %v5877, %v5885
    %v5917 = vsel %vm3060, %v5879, %v5887
    %v5918 = vsel %vm3060, %v5881, %v5889
    %v5919 = vsel %vm3060, %v5883, %v5891
    %v5920 = vsel %vm3060, %v5901, %v5877
    %v5921 = vsel %vm3060, %v5903, %v5879
    %v5922 = vsel %vm3060, %v5905, %v5881
    %v5923 = vsel %vm3060, %v5907, %v5883
    %s5924 = scalar_lea.vmem [#allocation2], 512
    %v5925 = vld [vmem:[%s5924] sm:$0xff]
    %v5926 = vld [vmem:[%s5924 + $0x8] sm:$0xff]
    %v5927 = vld [vmem:[%s5924 + $0x10] sm:$0xff]
    %v5928 = vld [vmem:[%s5924 + $0x18] sm:$0xff]
    %v5929 = vmul.f32 %v5916, %v3088
    %v5930 = vmul.f32 %v5912, %v3092
    %v5931 = vmul.f32 %v5908, %v3096
    %v5932 = vmul.f32 %v5920, %v3100
    %v5933 = vmul.f32 %v5917, %v3088
    %v5934 = vmul.f32 %v5913, %v3092
    %v5935 = vmul.f32 %v5909, %v3096
    %v5936 = vmul.f32 %v5921, %v3100
    %v5937 = vmul.f32 %v5918, %v3088
    %v5938 = vmul.f32 %v5914, %v3092
    %v5939 = vmul.f32 %v5910, %v3096
    %v5940 = vmul.f32 %v5922, %v3100
    %v5941 = vmul.f32 %v5919, %v3088
    %v5942 = vmul.f32 %v5915, %v3092
    %v5943 = vmul.f32 %v5911, %v3096
    %v5944 = vmul.f32 %v5923, %v3100
    %v5946 = vsel %vm753, %v5925, 0
    %v5949 = vsel %vm753, %v5926, 0
    %v5952 = vsel %vm753, %v5927, 0
    %v5955 = vsel %vm753, %v5928, 0
    %5957 = vmatprep.subr.mxu0 %v5930
    %5958 = vmatpush1.msra.mxu0 %v5929
    %5959 = vmatprep.subr.mxu0 %v5934
    %5960 = vmatpush1.msra.mxu0 %v5933
    %5961 = vmatprep.subr.mxu0 %v5938
    %5962 = vmatpush1.msra.mxu0 %v5937
    %5963 = vmatprep.subr.mxu0 %v5942
    %5964 = vmatpush1.msra.mxu0 %v5941
    %5965 = vmatprep.subr.mxu0 0.0
    %5966 = vmatpush1.msra.mxu0 0.0
    %5967 = vmatprep.subr.mxu0 0.0
    %5968 = vmatpush1.msra.mxu0 0.0
    %5969 = vmatprep.subr.mxu0 0.0
    %5970 = vmatpush1.msra.mxu0 0.0
    %5971 = vmatprep.subr.mxu0 0.0
    %5972 = vmatpush1.msra.mxu0 0.0
    %5973 = vmatprep.subr.mxu0 0.0
    %5974 = vmatpush1.msra.mxu0 0.0
    %5975 = vmatprep.subr.mxu0 0.0
    %5976 = vmatpush1.msra.mxu0 0.0
    %5977 = vmatprep.subr.mxu0 0.0
    %5978 = vmatpush1.msra.mxu0 0.0
    %5979 = vmatprep.subr.mxu0 0.0
    %5980 = vmatpush1.msra.mxu0 0.0
    %5981 = vmatprep.subr.mxu0 0.0
    %5982 = vmatpush1.msra.mxu0 0.0
    %5983 = vmatprep.subr.mxu0 0.0
    %5984 = vmatpush1.msra.mxu0 0.0
    %5985 = vmatprep.subr.mxu0 0.0
    %5986 = vmatpush1.msra.mxu0 0.0
    %5987 = vmatprep.subr.mxu0 0.0
    %5988 = vmatpush1.msra.mxu0 0.0
    %5989 = vmatprep.subr.mxu0 0.0
    %5990 = vmatpush1.msra.mxu0 0.0
    %5991 = vmatprep.subr.mxu0 0.0
    %5992 = vmatpush1.msra.mxu0 0.0
    %5993 = vmatprep.subr.mxu0 0.0
    %5994 = vmatpush1.msra.mxu0 0.0
    %5995 = vmatprep.subr.mxu0 0.0
    %5996 = vmatpush1.msra.mxu0 0.0
    %5997 = vmatprep.subr.mxu0 0.0
    %5998 = vmatpush1.msra.mxu0 0.0
    %5999 = vmatprep.subr.mxu0 0.0
    %6000 = vmatpush1.msra.mxu0 0.0
    %6001 = vmatprep.subr.mxu0 0.0
    %6002 = vmatpush1.msra.mxu0 0.0
    %6003 = vmatprep.subr.mxu0 0.0
    %6004 = vmatpush1.msra.mxu0 0.0
    %6005 = vmatprep.subr.mxu0 0.0
    %6006 = vmatpush1.msra.mxu0 0.0
    %6007 = vmatprep.subr.mxu0 0.0
    %6008 = vmatpush1.msra.mxu0 0.0
    %6009 = vmatprep.subr.mxu0 0.0
    %6010 = vmatpush1.msra.mxu0 0.0
    %6011 = vmatprep.subr.mxu0 0.0
    %6012 = vmatpush1.msra.mxu0 0.0
    %6013 = vmatprep.subr.mxu0 0.0
    %6014 = vmatpush1.msra.mxu0 0.0
    %6015 = vmatprep.subr.mxu0 0.0
    %6016 = vmatpush1.msra.mxu0 0.0
    %6017 = vmatprep.subr.mxu0 0.0
    %6018 = vmatpush1.msra.mxu0 0.0
    %6019 = vmatprep.subr.mxu0 0.0
    %6020 = vmatpush1.msra.mxu0 0.0
    %6021 = vmatprep.mubr.f32.mxu0 0.0
    %6022 = vmatmul.mubr.f32.gmra.mrb[0].mxu0 %v5946
    %v6023 = vpop.f32.mrb[0].mxu0
    %v6024 = vadd.f32 0.0, %v6023
    %v6025 = vpop.f32.mrb[0].mxu0
    %v6026 = vadd.f32 0.0, %v6025
    %6027 = vmatprep.mubr.f32.mxu0 0.0
    %6028 = vmatmul.mubr.f32.gmra.mrb[0].mxu0 %v5949
    %v6029 = vpop.f32.mrb[0].mxu0
    %v6030 = vadd.f32 0.0, %v6029
    %v6031 = vpop.f32.mrb[0].mxu0
    %v6032 = vadd.f32 0.0, %v6031
    %6033 = vmatprep.mubr.f32.mxu0 0.0
    %6034 = vmatmul.mubr.f32.gmra.mrb[0].mxu0 %v5952
    %v6035 = vpop.f32.mrb[0].mxu0
    %v6036 = vadd.f32 0.0, %v6035
    %v6037 = vpop.f32.mrb[0].mxu0
    %v6038 = vadd.f32 0.0, %v6037
    %6039 = vmatprep.mubr.f32.mxu0 0.0
    %6040 = vmatmul.mubr.f32.gmra.mrb[0].mxu0 %v5955
    %v6041 = vpop.f32.mrb[0].mxu0
    %v6042 = vadd.f32 0.0, %v6041
    %v6043 = vpop.f32.mrb[0].mxu0
    %v6044 = vadd.f32 0.0, %v6043
    %6045 = vdwg.mxu0
    %6046 = vmatprep.subr.mxu0 %v5932
    %6047 = vmatpush1.msra.mxu0 %v5931
    %6048 = vmatprep.subr.mxu0 %v5936
    %6049 = vmatpush1.msra.mxu0 %v5935
    %6050 = vmatprep.subr.mxu0 %v5940
    %6051 = vmatpush1.msra.mxu0 %v5939
    %6052 = vmatprep.subr.mxu0 %v5944
    %6053 = vmatpush1.msra.mxu0 %v5943
    %6054 = vmatprep.subr.mxu0 0.0
    %6055 = vmatpush1.msra.mxu0 0.0
    %6056 = vmatprep.subr.mxu0 0.0
    %6057 = vmatpush1.msra.mxu0 0.0
    %6058 = vmatprep.subr.mxu0 0.0
    %6059 = vmatpush1.msra.mxu0 0.0
    %6060 = vmatprep.subr.mxu0 0.0
    %6061 = vmatpush1.msra.mxu0 0.0
    %6062 = vmatprep.subr.mxu0 0.0
    %6063 = vmatpush1.msra.mxu0 0.0
    %6064 = vmatprep.subr.mxu0 0.0
    %6065 = vmatpush1.msra.mxu0 0.0
    %6066 = vmatprep.subr.mxu0 0.0
    %6067 = vmatpush1.msra.mxu0 0.0
    %6068 = vmatprep.subr.mxu0 0.0
    %6069 = vmatpush1.msra.mxu0 0.0
    %6070 = vmatprep.subr.mxu0 0.0
    %6071 = vmatpush1.msra.mxu0 0.0
    %6072 = vmatprep.subr.mxu0 0.0
    %6073 = vmatpush1.msra.mxu0 0.0
    %6074 = vmatprep.subr.mxu0 0.0
    %6075 = vmatpush1.msra.mxu0 0.0
    %6076 = vmatprep.subr.mxu0 0.0
    %6077 = vmatpush1.msra.mxu0 0.0
    %6078 = vmatprep.subr.mxu0 0.0
    %6079 = vmatpush1.msra.mxu0 0.0
    %6080 = vmatprep.subr.mxu0 0.0
    %6081 = vmatpush1.msra.mxu0 0.0
    %6082 = vmatprep.subr.mxu0 0.0
    %6083 = vmatpush1.msra.mxu0 0.0
    %6084 = vmatprep.subr.mxu0 0.0
    %6085 = vmatpush1.msra.mxu0 0.0
    %6086 = vmatprep.subr.mxu0 0.0
    %6087 = vmatpush1.msra.mxu0 0.0
    %6088 = vmatprep.subr.mxu0 0.0
    %6089 = vmatpush1.msra.mxu0 0.0
    %6090 = vmatprep.subr.mxu0 0.0
    %6091 = vmatpush1.msra.mxu0 0.0
    %6092 = vmatprep.subr.mxu0 0.0
    %6093 = vmatpush1.msra.mxu0 0.0
    %6094 = vmatprep.subr.mxu0 0.0
    %6095 = vmatpush1.msra.mxu0 0.0
    %6096 = vmatprep.subr.mxu0 0.0
    %6097 = vmatpush1.msra.mxu0 0.0
    %6098 = vmatprep.subr.mxu0 0.0
    %6099 = vmatpush1.msra.mxu0 0.0
    %6100 = vmatprep.subr.mxu0 0.0
    %6101 = vmatpush1.msra.mxu0 0.0
    %6102 = vmatprep.subr.mxu0 0.0
    %6103 = vmatpush1.msra.mxu0 0.0
    %6104 = vmatprep.subr.mxu0 0.0
    %6105 = vmatpush1.msra.mxu0 0.0
    %6106 = vmatprep.subr.mxu0 0.0
    %6107 = vmatpush1.msra.mxu0 0.0
    %6108 = vmatprep.subr.mxu0 0.0
    %6109 = vmatpush1.msra.mxu0 0.0
    %6110 = vmatprep.mubr.f32.mxu0 0.0
    %6111 = vmatmul.mubr.f32.gmra.mrb[0].mxu0 %v5946
    %v6112 = vpop.f32.mrb[0].mxu0
    %v6113 = vadd.f32 0.0, %v6112
    %v6114 = vpop.f32.mrb[0].mxu0
    %v6115 = vadd.f32 0.0, %v6114
    %6116 = vmatprep.mubr.f32.mxu0 0.0
    %6117 = vmatmul.mubr.f32.gmra.mrb[0].mxu0 %v5949
    %v6118 = vpop.f32.mrb[0].mxu0
    %v6119 = vadd.f32 0.0, %v6118
    %v6120 = vpop.f32.mrb[0].mxu0
    %v6121 = vadd.f32 0.0, %v6120
    %6122 = vmatprep.mubr.f32.mxu0 0.0
    %6123 = vmatmul.mubr.f32.gmra.mrb[0].mxu0 %v5952
    %v6124 = vpop.f32.mrb[0].mxu0
    %v6125 = vadd.f32 0.0, %v6124
    %v6126 = vpop.f32.mrb[0].mxu0
    %v6127 = vadd.f32 0.0, %v6126
    %6128 = vmatprep.mubr.f32.mxu0 0.0
    %6129 = vmatmul.mubr.f32.gmra.mrb[0].mxu0 %v5955
    %v6130 = vpop.f32.mrb[0].mxu0
    %v6131 = vadd.f32 0.0, %v6130
    %v6132 = vpop.f32.mrb[0].mxu0
    %v6133 = vadd.f32 0.0, %v6132
    %6134 = vdwg.mxu0
    %v6135 = vadd.f32 %v5860, %v6024
    %v6136 = vadd.f32 %v5861, %v6026
    %v6137 = vadd.f32 %v5862, %v6113
    %v6138 = vadd.f32 %v5863, %v6115
    %v6139 = vadd.f32 %v5864, %v6030
    %v6140 = vadd.f32 %v5865, %v6032
    %v6141 = vadd.f32 %v5866, %v6119
    %v6142 = vadd.f32 %v5867, %v6121
    %v6143 = vadd.f32 %v5868, %v6036
    %v6144 = vadd.f32 %v5869, %v6038
    %v6145 = vadd.f32 %v5870, %v6125
    %v6146 = vadd.f32 %v5871, %v6127
    %v6147 = vadd.f32 %v5872, %v6042
    %v6148 = vadd.f32 %v5873, %v6044
    %v6149 = vadd.f32 %v5874, %v6131
    %v6150 = vadd.f32 %v5875, %v6133
    %6151 = vrot.lane.b32.xlu0 %v3722, 111
    %v6152 = vpop.permute.xlu0 %6151
    %6153 = vrot.lane.b32.xlu0 %v3726, 111
    %v6154 = vpop.permute.xlu0 %6153
    %6155 = vrot.lane.b32.xlu0 %v3730, 111
    %v6156 = vpop.permute.xlu0 %6155
    %6157 = vrot.lane.b32.xlu0 %v3734, 111
    %v6158 = vpop.permute.xlu0 %6157
    %6159 = vrot.lane.b32.xlu0 %v3723, 111
    %v6160 = vpop.permute.xlu0 %6159
    %6161 = vrot.lane.b32.xlu0 %v3727, 111
    %v6162 = vpop.permute.xlu0 %6161
    %6163 = vrot.lane.b32.xlu0 %v3731, 111
    %v6164 = vpop.permute.xlu0 %6163
    %6165 = vrot.lane.b32.xlu0 %v3735, 111
    %v6166 = vpop.permute.xlu0 %6165
    %6167 = vrot.lane.b32.xlu0 %v3724, 111
    %v6168 = vpop.permute.xlu0 %6167
    %6169 = vrot.lane.b32.xlu0 %v3728, 111
    %v6170 = vpop.permute.xlu0 %6169
    %6171 = vrot.lane.b32.xlu0 %v3732, 111
    %v6172 = vpop.permute.xlu0 %6171
    %6173 = vrot.lane.b32.xlu0 %v3736, 111
    %v6174 = vpop.permute.xlu0 %6173
    %6175 = vrot.lane.b32.xlu0 %v3725, 111
    %v6176 = vpop.permute.xlu0 %6175
    %6177 = vrot.lane.b32.xlu0 %v3729, 111
    %v6178 = vpop.permute.xlu0 %6177
    %6179 = vrot.lane.b32.xlu0 %v3733, 111
    %v6180 = vpop.permute.xlu0 %6179
    %6181 = vrot.lane.b32.xlu0 %v3737, 111
    %v6182 = vpop.permute.xlu0 %6181
    %v6183 = vsel %vm3359, %v6168, %v6176
    %v6184 = vsel %vm3359, %v6170, %v6178
    %v6185 = vsel %vm3359, %v6172, %v6180
    %v6186 = vsel %vm3359, %v6174, %v6182
    %v6187 = vsel %vm3359, %v6160, %v6168
    %v6188 = vsel %vm3359, %v6162, %v6170
    %v6189 = vsel %vm3359, %v6164, %v6172
    %v6190 = vsel %vm3359, %v6166, %v6174
    %v6191 = vsel %vm3359, %v6152, %v6160
    %v6192 = vsel %vm3359, %v6154, %v6162
    %v6193 = vsel %vm3359, %v6156, %v6164
    %v6194 = vsel %vm3359, %v6158, %v6166
    %v6195 = vsel %vm3359, %v6176, %v6152
    %v6196 = vsel %vm3359, %v6178, %v6154
    %v6197 = vsel %vm3359, %v6180, %v6156
    %v6198 = vsel %vm3359, %v6182, %v6158
    %s6199 = scalar_lea.vmem [#allocation2], 544
    %v6200 = vld [vmem:[%s6199] sm:$0xff]
    %v6201 = vld [vmem:[%s6199 + $0x8] sm:$0xff]
    %v6202 = vld [vmem:[%s6199 + $0x10] sm:$0xff]
    %v6203 = vld [vmem:[%s6199 + $0x18] sm:$0xff]
    %v6204 = vmul.f32 %v6191, %v3387
    %v6205 = vmul.f32 %v6187, %v3391
    %v6206 = vmul.f32 %v6183, %v3395
    %v6207 = vmul.f32 %v6195, %v3399
    %v6208 = vmul.f32 %v6192, %v3387
    %v6209 = vmul.f32 %v6188, %v3391
    %v6210 = vmul.f32 %v6184, %v3395
    %v6211 = vmul.f32 %v6196, %v3399
    %v6212 = vmul.f32 %v6193, %v3387
    %v6213 = vmul.f32 %v6189, %v3391
    %v6214 = vmul.f32 %v6185, %v3395
    %v6215 = vmul.f32 %v6197, %v3399
    %v6216 = vmul.f32 %v6194, %v3387
    %v6217 = vmul.f32 %v6190, %v3391
    %v6218 = vmul.f32 %v6186, %v3395
    %v6219 = vmul.f32 %v6198, %v3399
    %v6221 = vsel %vm753, %v6200, 0
    %v6224 = vsel %vm753, %v6201, 0
    %v6227 = vsel %vm753, %v6202, 0
    %v6230 = vsel %vm753, %v6203, 0
    %6232 = vmatprep.subr.mxu0 %v6205
    %6233 = vmatpush1.msra.mxu0 %v6204
    %6234 = vmatprep.subr.mxu0 %v6209
    %6235 = vmatpush1.msra.mxu0 %v6208
    %6236 = vmatprep.subr.mxu0 %v6213
    %6237 = vmatpush1.msra.mxu0 %v6212
    %6238 = vmatprep.subr.mxu0 %v6217
    %6239 = vmatpush1.msra.mxu0 %v6216
    %6240 = vmatprep.subr.mxu0 0.0
    %6241 = vmatpush1.msra.mxu0 0.0
    %6242 = vmatprep.subr.mxu0 0.0
    %6243 = vmatpush1.msra.mxu0 0.0
    %6244 = vmatprep.subr.mxu0 0.0
    %6245 = vmatpush1.msra.mxu0 0.0
    %6246 = vmatprep.subr.mxu0 0.0
    %6247 = vmatpush1.msra.mxu0 0.0
    %6248 = vmatprep.subr.mxu0 0.0
    %6249 = vmatpush1.msra.mxu0 0.0
    %6250 = vmatprep.subr.mxu0 0.0
    %6251 = vmatpush1.msra.mxu0 0.0
    %6252 = vmatprep.subr.mxu0 0.0
    %6253 = vmatpush1.msra.mxu0 0.0
    %6254 = vmatprep.subr.mxu0 0.0
    %6255 = vmatpush1.msra.mxu0 0.0
    %6256 = vmatprep.subr.mxu0 0.0
    %6257 = vmatpush1.msra.mxu0 0.0
    %6258 = vmatprep.subr.mxu0 0.0
    %6259 = vmatpush1.msra.mxu0 0.0
    %6260 = vmatprep.subr.mxu0 0.0
    %6261 = vmatpush1.msra.mxu0 0.0
    %6262 = vmatprep.subr.mxu0 0.0
    %6263 = vmatpush1.msra.mxu0 0.0
    %6264 = vmatprep.subr.mxu0 0.0
    %6265 = vmatpush1.msra.mxu0 0.0
    %6266 = vmatprep.subr.mxu0 0.0
    %6267 = vmatpush1.msra.mxu0 0.0
    %6268 = vmatprep.subr.mxu0 0.0
    %6269 = vmatpush1.msra.mxu0 0.0
    %6270 = vmatprep.subr.mxu0 0.0
    %6271 = vmatpush1.msra.mxu0 0.0
    %6272 = vmatprep.subr.mxu0 0.0
    %6273 = vmatpush1.msra.mxu0 0.0
    %6274 = vmatprep.subr.mxu0 0.0
    %6275 = vmatpush1.msra.mxu0 0.0
    %6276 = vmatprep.subr.mxu0 0.0
    %6277 = vmatpush1.msra.mxu0 0.0
    %6278 = vmatprep.subr.mxu0 0.0
    %6279 = vmatpush1.msra.mxu0 0.0
    %6280 = vmatprep.subr.mxu0 0.0
    %6281 = vmatpush1.msra.mxu0 0.0
    %6282 = vmatprep.subr.mxu0 0.0
    %6283 = vmatpush1.msra.mxu0 0.0
    %6284 = vmatprep.subr.mxu0 0.0
    %6285 = vmatpush1.msra.mxu0 0.0
    %6286 = vmatprep.subr.mxu0 0.0
    %6287 = vmatpush1.msra.mxu0 0.0
    %6288 = vmatprep.subr.mxu0 0.0
    %6289 = vmatpush1.msra.mxu0 0.0
    %6290 = vmatprep.subr.mxu0 0.0
    %6291 = vmatpush1.msra.mxu0 0.0
    %6292 = vmatprep.subr.mxu0 0.0
    %6293 = vmatpush1.msra.mxu0 0.0
    %6294 = vmatprep.subr.mxu0 0.0
    %6295 = vmatpush1.msra.mxu0 0.0
    %6296 = vmatprep.mubr.f32.mxu0 0.0
    %6297 = vmatmul.mubr.f32.gmra.mrb[0].mxu0 %v6221
    %v6298 = vpop.f32.mrb[0].mxu0
    %v6299 = vadd.f32 0.0, %v6298
    %v6300 = vpop.f32.mrb[0].mxu0
    %v6301 = vadd.f32 0.0, %v6300
    %6302 = vmatprep.mubr.f32.mxu0 0.0
    %6303 = vmatmul.mubr.f32.gmra.mrb[0].mxu0 %v6224
    %v6304 = vpop.f32.mrb[0].mxu0
    %v6305 = vadd.f32 0.0, %v6304
    %v6306 = vpop.f32.mrb[0].mxu0
    %v6307 = vadd.f32 0.0, %v6306
    %6308 = vmatprep.mubr.f32.mxu0 0.0
    %6309 = vmatmul.mubr.f32.gmra.mrb[0].mxu0 %v6227
    %v6310 = vpop.f32.mrb[0].mxu0
    %v6311 = vadd.f32 0.0, %v6310
    %v6312 = vpop.f32.mrb[0].mxu0
    %v6313 = vadd.f32 0.0, %v6312
    %6314 = vmatprep.mubr.f32.mxu0 0.0
    %6315 = vmatmul.mubr.f32.gmra.mrb[0].mxu0 %v6230
    %v6316 = vpop.f32.mrb[0].mxu0
    %v6317 = vadd.f32 0.0, %v6316
    %v6318 = vpop.f32.mrb[0].mxu0
    %v6319 = vadd.f32 0.0, %v6318
    %6320 = vdwg.mxu0
    %6321 = vmatprep.subr.mxu0 %v6207
    %6322 = vmatpush1.msra.mxu0 %v6206
    %6323 = vmatprep.subr.mxu0 %v6211
    %6324 = vmatpush1.msra.mxu0 %v6210
    %6325 = vmatprep.subr.mxu0 %v6215
    %6326 = vmatpush1.msra.mxu0 %v6214
    %6327 = vmatprep.subr.mxu0 %v6219
    %6328 = vmatpush1.msra.mxu0 %v6218
    %6329 = vmatprep.subr.mxu0 0.0
    %6330 = vmatpush1.msra.mxu0 0.0
    %6331 = vmatprep.subr.mxu0 0.0
    %6332 = vmatpush1.msra.mxu0 0.0
    %6333 = vmatprep.subr.mxu0 0.0
    %6334 = vmatpush1.msra.mxu0 0.0
    %6335 = vmatprep.subr.mxu0 0.0
    %6336 = vmatpush1.msra.mxu0 0.0
    %6337 = vmatprep.subr.mxu0 0.0
    %6338 = vmatpush1.msra.mxu0 0.0
    %6339 = vmatprep.subr.mxu0 0.0
    %6340 = vmatpush1.msra.mxu0 0.0
    %6341 = vmatprep.subr.mxu0 0.0
    %6342 = vmatpush1.msra.mxu0 0.0
    %6343 = vmatprep.subr.mxu0 0.0
    %6344 = vmatpush1.msra.mxu0 0.0
    %6345 = vmatprep.subr.mxu0 0.0
    %6346 = vmatpush1.msra.mxu0 0.0
    %6347 = vmatprep.subr.mxu0 0.0
    %6348 = vmatpush1.msra.mxu0 0.0
    %6349 = vmatprep.subr.mxu0 0.0
    %6350 = vmatpush1.msra.mxu0 0.0
    %6351 = vmatprep.subr.mxu0 0.0
    %6352 = vmatpush1.msra.mxu0 0.0
    %6353 = vmatprep.subr.mxu0 0.0
    %6354 = vmatpush1.msra.mxu0 0.0
    %6355 = vmatprep.subr.mxu0 0.0
    %6356 = vmatpush1.msra.mxu0 0.0
    %6357 = vmatprep.subr.mxu0 0.0
    %6358 = vmatpush1.msra.mxu0 0.0
    %6359 = vmatprep.subr.mxu0 0.0
    %6360 = vmatpush1.msra.mxu0 0.0
    %6361 = vmatprep.subr.mxu0 0.0
    %6362 = vmatpush1.msra.mxu0 0.0
    %6363 = vmatprep.subr.mxu0 0.0
    %6364 = vmatpush1.msra.mxu0 0.0
    %6365 = vmatprep.subr.mxu0 0.0
    %6366 = vmatpush1.msra.mxu0 0.0
    %6367 = vmatprep.subr.mxu0 0.0
    %6368 = vmatpush1.msra.mxu0 0.0
    %6369 = vmatprep.subr.mxu0 0.0
    %6370 = vmatpush1.msra.mxu0 0.0
    %6371 = vmatprep.subr.mxu0 0.0
    %6372 = vmatpush1.msra.mxu0 0.0
    %6373 = vmatprep.subr.mxu0 0.0
    %6374 = vmatpush1.msra.mxu0 0.0
    %6375 = vmatprep.subr.mxu0 0.0
    %6376 = vmatpush1.msra.mxu0 0.0
    %6377 = vmatprep.subr.mxu0 0.0
    %6378 = vmatpush1.msra.mxu0 0.0
    %6379 = vmatprep.subr.mxu0 0.0
    %6380 = vmatpush1.msra.mxu0 0.0
    %6381 = vmatprep.subr.mxu0 0.0
    %6382 = vmatpush1.msra.mxu0 0.0
    %6383 = vmatprep.subr.mxu0 0.0
    %6384 = vmatpush1.msra.mxu0 0.0
    %6385 = vmatprep.mubr.f32.mxu0 0.0
    %6386 = vmatmul.mubr.f32.gmra.mrb[0].mxu0 %v6221
    %v6387 = vpop.f32.mrb[0].mxu0
    %v6388 = vadd.f32 0.0, %v6387
    %v6389 = vpop.f32.mrb[0].mxu0
    %v6390 = vadd.f32 0.0, %v6389
    %6391 = vmatprep.mubr.f32.mxu0 0.0
    %6392 = vmatmul.mubr.f32.gmra.mrb[0].mxu0 %v6224
    %v6393 = vpop.f32.mrb[0].mxu0
    %v6394 = vadd.f32 0.0, %v6393
    %v6395 = vpop.f32.mrb[0].mxu0
    %v6396 = vadd.f32 0.0, %v6395
    %6397 = vmatprep.mubr.f32.mxu0 0.0
    %6398 = vmatmul.mubr.f32.gmra.mrb[0].mxu0 %v6227
    %v6399 = vpop.f32.mrb[0].mxu0
    %v6400 = vadd.f32 0.0, %v6399
    %v6401 = vpop.f32.mrb[0].mxu0
    %v6402 = vadd.f32 0.0, %v6401
    %6403 = vmatprep.mubr.f32.mxu0 0.0
    %6404 = vmatmul.mubr.f32.gmra.mrb[0].mxu0 %v6230
    %v6405 = vpop.f32.mrb[0].mxu0
    %v6406 = vadd.f32 0.0, %v6405
    %v6407 = vpop.f32.mrb[0].mxu0
    %v6408 = vadd.f32 0.0, %v6407
    %6409 = vdwg.mxu0
    %v6410 = vadd.f32 %v6135, %v6299
    %v6411 = vadd.f32 %v6136, %v6301
    %v6412 = vadd.f32 %v6137, %v6388
    %v6413 = vadd.f32 %v6138, %v6390
    %v6414 = vadd.f32 %v6139, %v6305
    %v6415 = vadd.f32 %v6140, %v6307
    %v6416 = vadd.f32 %v6141, %v6394
    %v6417 = vadd.f32 %v6142, %v6396
    %v6418 = vadd.f32 %v6143, %v6311
    %v6419 = vadd.f32 %v6144, %v6313
    %v6420 = vadd.f32 %v6145, %v6400
    %v6421 = vadd.f32 %v6146, %v6402
    %v6422 = vadd.f32 %v6147, %v6317
    %v6423 = vadd.f32 %v6148, %v6319
    %v6424 = vadd.f32 %v6149, %v6406
    %v6425 = vadd.f32 %v6150, %v6408
    %v6426 = vxor.u32 %v6410, 2147483648
    %v6427 = vxor.u32 %v6411, 2147483648
    %v6428 = vxor.u32 %v6412, 2147483648
    %v6429 = vxor.u32 %v6413, 2147483648
    %v6430 = vxor.u32 %v6414, 2147483648
    %v6431 = vxor.u32 %v6415, 2147483648
    %v6432 = vxor.u32 %v6416, 2147483648
    %v6433 = vxor.u32 %v6417, 2147483648
    %v6434 = vxor.u32 %v6418, 2147483648
    %v6435 = vxor.u32 %v6419, 2147483648
    %v6436 = vxor.u32 %v6420, 2147483648
    %v6437 = vxor.u32 %v6421, 2147483648
    %v6438 = vxor.u32 %v6422, 2147483648
    %v6439 = vxor.u32 %v6423, 2147483648
    %v6440 = vxor.u32 %v6424, 2147483648
    %v6441 = vxor.u32 %v6425, 2147483648
    %v6442 = vmul.f32 %v6426, 1.442695
    %v6443 = vpow.pop %v6442
    %v6444 = vmul.f32 %v6427, 1.442695
    %v6445 = vpow.pop %v6444
    %v6446 = vmul.f32 %v6428, 1.442695
    %v6447 = vpow.pop %v6446
    %v6448 = vmul.f32 %v6429, 1.442695
    %v6449 = vpow.pop %v6448
    %v6450 = vmul.f32 %v6430, 1.442695
    %v6451 = vpow.pop %v6450
    %v6452 = vmul.f32 %v6431, 1.442695
    %v6453 = vpow.pop %v6452
    %v6454 = vmul.f32 %v6432, 1.442695
    %v6455 = vpow.pop %v6454
    %v6456 = vmul.f32 %v6433, 1.442695
    %v6457 = vpow.pop %v6456
    %v6458 = vmul.f32 %v6434, 1.442695
    %v6459 = vpow.pop %v6458
    %v6460 = vmul.f32 %v6435, 1.442695
    %v6461 = vpow.pop %v6460
    %v6462 = vmul.f32 %v6436, 1.442695
    %v6463 = vpow.pop %v6462
    %v6464 = vmul.f32 %v6437, 1.442695
    %v6465 = vpow.pop %v6464
    %v6466 = vmul.f32 %v6438, 1.442695
    %v6467 = vpow.pop %v6466
    %v6468 = vmul.f32 %v6439, 1.442695
    %v6469 = vpow.pop %v6468
    %v6470 = vmul.f32 %v6440, 1.442695
    %v6471 = vpow.pop %v6470
    %v6472 = vmul.f32 %v6441, 1.442695
    %v6473 = vpow.pop %v6472
    %v6474 = vadd.f32 %v6443, 1.0
    %v6475 = vadd.f32 %v6445, 1.0
    %v6476 = vadd.f32 %v6447, 1.0
    %v6477 = vadd.f32 %v6449, 1.0
    %v6478 = vadd.f32 %v6451, 1.0
    %v6479 = vadd.f32 %v6453, 1.0
    %v6480 = vadd.f32 %v6455, 1.0
    %v6481 = vadd.f32 %v6457, 1.0
    %v6482 = vadd.f32 %v6459, 1.0
    %v6483 = vadd.f32 %v6461, 1.0
    %v6484 = vadd.f32 %v6463, 1.0
    %v6485 = vadd.f32 %v6465, 1.0
    %v6486 = vadd.f32 %v6467, 1.0
    %v6487 = vadd.f32 %v6469, 1.0
    %v6488 = vadd.f32 %v6471, 1.0
    %v6489 = vadd.f32 %v6473, 1.0
    %v6490 = vrcp.pop %v6474
    %v6491 = vmul.f32 1.0, %v6490
    %v6492 = vrcp.pop %v6475
    %v6493 = vmul.f32 1.0, %v6492
    %v6494 = vrcp.pop %v6476
    %v6495 = vmul.f32 1.0, %v6494
    %v6496 = vrcp.pop %v6477
    %v6497 = vmul.f32 1.0, %v6496
    %v6498 = vrcp.pop %v6478
    %v6499 = vmul.f32 1.0, %v6498
    %v6500 = vrcp.pop %v6479
    %v6501 = vmul.f32 1.0, %v6500
    %v6502 = vrcp.pop %v6480
    %v6503 = vmul.f32 1.0, %v6502
    %v6504 = vrcp.pop %v6481
    %v6505 = vmul.f32 1.0, %v6504
    %v6506 = vrcp.pop %v6482
    %v6507 = vmul.f32 1.0, %v6506
    %v6508 = vrcp.pop %v6483
    %v6509 = vmul.f32 1.0, %v6508
    %v6510 = vrcp.pop %v6484
    %v6511 = vmul.f32 1.0, %v6510
    %v6512 = vrcp.pop %v6485
    %v6513 = vmul.f32 1.0, %v6512
    %v6514 = vrcp.pop %v6486
    %v6515 = vmul.f32 1.0, %v6514
    %v6516 = vrcp.pop %v6487
    %v6517 = vmul.f32 1.0, %v6516
    %v6518 = vrcp.pop %v6488
    %v6519 = vmul.f32 1.0, %v6518
    %v6520 = vrcp.pop %v6489
    %v6521 = vmul.f32 1.0, %v6520
    %v6522 = vmul.f32 %v6410, %v6491
    %v6523 = vmul.f32 %v6411, %v6493
    %v6524 = vmul.f32 %v6412, %v6495
    %v6525 = vmul.f32 %v6413, %v6497
    %v6526 = vmul.f32 %v6414, %v6499
    %v6527 = vmul.f32 %v6415, %v6501
    %v6528 = vmul.f32 %v6416, %v6503
    %v6529 = vmul.f32 %v6417, %v6505
    %v6530 = vmul.f32 %v6418, %v6507
    %v6531 = vmul.f32 %v6419, %v6509
    %v6532 = vmul.f32 %v6420, %v6511
    %v6533 = vmul.f32 %v6421, %v6513
    %v6534 = vmul.f32 %v6422, %v6515
    %v6535 = vmul.f32 %v6423, %v6517
    %v6536 = vmul.f32 %v6424, %v6519
    %v6537 = vmul.f32 %v6425, %v6521
    %s6538 = scalar_lea.vmem %s8, 64
    %v6539 = vld [vmem:[%s6538] sm:$0xff]
    %v6540 = vld [vmem:[%s6538 + $0x8] sm:$0xff]
    %v6541 = vld [vmem:[%s6538 + $0x10] sm:$0xff]
    %v6542 = vld [vmem:[%s6538 + $0x18] sm:$0xff]
    %s6543 = scalar_lea.vmem %s9, 64
    %v6544 = vld [vmem:[%s6543] sm:$0xff]
    %v6545 = vld [vmem:[%s6543 + $0x8] sm:$0xff]
    %v6546 = vld [vmem:[%s6543 + $0x10] sm:$0xff]
    %v6547 = vld [vmem:[%s6543 + $0x18] sm:$0xff]
    %6549 = vset.pattern.permute.xlu0 0
    %6550 = vperm.xlu0 %6549, %v6544
    %v6551 = vpop.permute.xlu0 %6550
    %6554 = vset.pattern.permute.xlu0 0
    %6555 = vperm.xlu0 %6554, %v6545
    %v6556 = vpop.permute.xlu0 %6555
    %6559 = vset.pattern.permute.xlu0 0
    %6560 = vperm.xlu0 %6559, %v6546
    %v6561 = vpop.permute.xlu0 %6560
    %6564 = vset.pattern.permute.xlu0 0
    %6565 = vperm.xlu0 %6564, %v6547
    %v6566 = vpop.permute.xlu0 %6565
    %v6569 = vsel %vm753, %v6539, 0
    %v6572 = vsel %vm753, %v6540, 0
    %v6575 = vsel %vm753, %v6541, 0
    %v6578 = vsel %vm753, %v6542, 0
    %6580 = vmatprep.subr.mxu0 %v6523
    %6581 = vmatpush1.msra.mxu0 %v6522
    %6582 = vmatprep.subr.mxu0 %v6527
    %6583 = vmatpush1.msra.mxu0 %v6526
    %6584 = vmatprep.subr.mxu0 %v6531
    %6585 = vmatpush1.msra.mxu0 %v6530
    %6586 = vmatprep.subr.mxu0 %v6535
    %6587 = vmatpush1.msra.mxu0 %v6534
    %6588 = vmatprep.subr.mxu0 0.0
    %6589 = vmatpush1.msra.mxu0 0.0
    %6590 = vmatprep.subr.mxu0 0.0
    %6591 = vmatpush1.msra.mxu0 0.0
    %6592 = vmatprep.subr.mxu0 0.0
    %6593 = vmatpush1.msra.mxu0 0.0
    %6594 = vmatprep.subr.mxu0 0.0
    %6595 = vmatpush1.msra.mxu0 0.0
    %6596 = vmatprep.subr.mxu0 0.0
    %6597 = vmatpush1.msra.mxu0 0.0
    %6598 = vmatprep.subr.mxu0 0.0
    %6599 = vmatpush1.msra.mxu0 0.0
    %6600 = vmatprep.subr.mxu0 0.0
    %6601 = vmatpush1.msra.mxu0 0.0
    %6602 = vmatprep.subr.mxu0 0.0
    %6603 = vmatpush1.msra.mxu0 0.0
    %6604 = vmatprep.subr.mxu0 0.0
    %6605 = vmatpush1.msra.mxu0 0.0
    %6606 = vmatprep.subr.mxu0 0.0
    %6607 = vmatpush1.msra.mxu0 0.0
    %6608 = vmatprep.subr.mxu0 0.0
    %6609 = vmatpush1.msra.mxu0 0.0
    %6610 = vmatprep.subr.mxu0 0.0
    %6611 = vmatpush1.msra.mxu0 0.0
    %6612 = vmatprep.subr.mxu0 0.0
    %6613 = vmatpush1.msra.mxu0 0.0
    %6614 = vmatprep.subr.mxu0 0.0
    %6615 = vmatpush1.msra.mxu0 0.0
    %6616 = vmatprep.subr.mxu0 0.0
    %6617 = vmatpush1.msra.mxu0 0.0
    %6618 = vmatprep.subr.mxu0 0.0
    %6619 = vmatpush1.msra.mxu0 0.0
    %6620 = vmatprep.subr.mxu0 0.0
    %6621 = vmatpush1.msra.mxu0 0.0
    %6622 = vmatprep.subr.mxu0 0.0
    %6623 = vmatpush1.msra.mxu0 0.0
    %6624 = vmatprep.subr.mxu0 0.0
    %6625 = vmatpush1.msra.mxu0 0.0
    %6626 = vmatprep.subr.mxu0 0.0
    %6627 = vmatpush1.msra.mxu0 0.0
    %6628 = vmatprep.subr.mxu0 0.0
    %6629 = vmatpush1.msra.mxu0 0.0
    %6630 = vmatprep.subr.mxu0 0.0
    %6631 = vmatpush1.msra.mxu0 0.0
    %6632 = vmatprep.subr.mxu0 0.0
    %6633 = vmatpush1.msra.mxu0 0.0
    %6634 = vmatprep.subr.mxu0 0.0
    %6635 = vmatpush1.msra.mxu0 0.0
    %6636 = vmatprep.subr.mxu0 0.0
    %6637 = vmatpush1.msra.mxu0 0.0
    %6638 = vmatprep.subr.mxu0 0.0
    %6639 = vmatpush1.msra.mxu0 0.0
    %6640 = vmatprep.subr.mxu0 0.0
    %6641 = vmatpush1.msra.mxu0 0.0
    %6642 = vmatprep.subr.mxu0 0.0
    %6643 = vmatpush1.msra.mxu0 0.0
    %6644 = vmatprep.mubr.f32.mxu0 0.0
    %6645 = vmatmul.mubr.f32.gmra.mrb[0].mxu0 %v6569
    %v6646 = vpop.f32.mrb[0].mxu0
    %v6647 = vadd.f32 %v6551, %v6646
    %v6648 = vpop.f32.mrb[0].mxu0
    %v6649 = vadd.f32 %v6551, %v6648
    %6650 = vmatprep.mubr.f32.mxu0 0.0
    %6651 = vmatmul.mubr.f32.gmra.mrb[0].mxu0 %v6572
    %v6652 = vpop.f32.mrb[0].mxu0
    %v6653 = vadd.f32 %v6556, %v6652
    %v6654 = vpop.f32.mrb[0].mxu0
    %v6655 = vadd.f32 %v6556, %v6654
    %6656 = vmatprep.mubr.f32.mxu0 0.0
    %6657 = vmatmul.mubr.f32.gmra.mrb[0].mxu0 %v6575
    %v6658 = vpop.f32.mrb[0].mxu0
    %v6659 = vadd.f32 %v6561, %v6658
    %v6660 = vpop.f32.mrb[0].mxu0
    %v6661 = vadd.f32 %v6561, %v6660
    %6662 = vmatprep.mubr.f32.mxu0 0.0
    %6663 = vmatmul.mubr.f32.gmra.mrb[0].mxu0 %v6578
    %v6664 = vpop.f32.mrb[0].mxu0
    %v6665 = vadd.f32 %v6566, %v6664
    %v6666 = vpop.f32.mrb[0].mxu0
    %v6667 = vadd.f32 %v6566, %v6666
    %6668 = vdwg.mxu0
    %6669 = vmatprep.subr.mxu0 %v6525
    %6670 = vmatpush1.msra.mxu0 %v6524
    %6671 = vmatprep.subr.mxu0 %v6529
    %6672 = vmatpush1.msra.mxu0 %v6528
    %6673 = vmatprep.subr.mxu0 %v6533
    %6674 = vmatpush1.msra.mxu0 %v6532
    %6675 = vmatprep.subr.mxu0 %v6537
    %6676 = vmatpush1.msra.mxu0 %v6536
    %6677 = vmatprep.subr.mxu0 0.0
    %6678 = vmatpush1.msra.mxu0 0.0
    %6679 = vmatprep.subr.mxu0 0.0
    %6680 = vmatpush1.msra.mxu0 0.0
    %6681 = vmatprep.subr.mxu0 0.0
    %6682 = vmatpush1.msra.mxu0 0.0
    %6683 = vmatprep.subr.mxu0 0.0
    %6684 = vmatpush1.msra.mxu0 0.0
    %6685 = vmatprep.subr.mxu0 0.0
    %6686 = vmatpush1.msra.mxu0 0.0
    %6687 = vmatprep.subr.mxu0 0.0
    %6688 = vmatpush1.msra.mxu0 0.0
    %6689 = vmatprep.subr.mxu0 0.0
    %6690 = vmatpush1.msra.mxu0 0.0
    %6691 = vmatprep.subr.mxu0 0.0
    %6692 = vmatpush1.msra.mxu0 0.0
    %6693 = vmatprep.subr.mxu0 0.0
    %6694 = vmatpush1.msra.mxu0 0.0
    %6695 = vmatprep.subr.mxu0 0.0
    %6696 = vmatpush1.msra.mxu0 0.0
    %6697 = vmatprep.subr.mxu0 0.0
    %6698 = vmatpush1.msra.mxu0 0.0
    %6699 = vmatprep.subr.mxu0 0.0
    %6700 = vmatpush1.msra.mxu0 0.0
    %6701 = vmatprep.subr.mxu0 0.0
    %6702 = vmatpush1.msra.mxu0 0.0
    %6703 = vmatprep.subr.mxu0 0.0
    %6704 = vmatpush1.msra.mxu0 0.0
    %6705 = vmatprep.subr.mxu0 0.0
    %6706 = vmatpush1.msra.mxu0 0.0
    %6707 = vmatprep.subr.mxu0 0.0
    %6708 = vmatpush1.msra.mxu0 0.0
    %6709 = vmatprep.subr.mxu0 0.0
    %6710 = vmatpush1.msra.mxu0 0.0
    %6711 = vmatprep.subr.mxu0 0.0
    %6712 = vmatpush1.msra.mxu0 0.0
    %6713 = vmatprep.subr.mxu0 0.0
    %6714 = vmatpush1.msra.mxu0 0.0
    %6715 = vmatprep.subr.mxu0 0.0
    %6716 = vmatpush1.msra.mxu0 0.0
    %6717 = vmatprep.subr.mxu0 0.0
    %6718 = vmatpush1.msra.mxu0 0.0
    %6719 = vmatprep.subr.mxu0 0.0
    %6720 = vmatpush1.msra.mxu0 0.0
    %6721 = vmatprep.subr.mxu0 0.0
    %6722 = vmatpush1.msra.mxu0 0.0
    %6723 = vmatprep.subr.mxu0 0.0
    %6724 = vmatpush1.msra.mxu0 0.0
    %6725 = vmatprep.subr.mxu0 0.0
    %6726 = vmatpush1.msra.mxu0 0.0
    %6727 = vmatprep.subr.mxu0 0.0
    %6728 = vmatpush1.msra.mxu0 0.0
    %6729 = vmatprep.subr.mxu0 0.0
    %6730 = vmatpush1.msra.mxu0 0.0
    %6731 = vmatprep.subr.mxu0 0.0
    %6732 = vmatpush1.msra.mxu0 0.0
    %6733 = vmatprep.mubr.f32.mxu0 0.0
    %6734 = vmatmul.mubr.f32.gmra.mrb[0].mxu0 %v6569
    %v6735 = vpop.f32.mrb[0].mxu0
    %v6736 = vadd.f32 %v6551, %v6735
    %v6737 = vpop.f32.mrb[0].mxu0
    %v6738 = vadd.f32 %v6551, %v6737
    %6739 = vmatprep.mubr.f32.mxu0 0.0
    %6740 = vmatmul.mubr.f32.gmra.mrb[0].mxu0 %v6572
    %v6741 = vpop.f32.mrb[0].mxu0
    %v6742 = vadd.f32 %v6556, %v6741
    %v6743 = vpop.f32.mrb[0].mxu0
    %v6744 = vadd.f32 %v6556, %v6743
    %6745 = vmatprep.mubr.f32.mxu0 0.0
    %6746 = vmatmul.mubr.f32.gmra.mrb[0].mxu0 %v6575
    %v6747 = vpop.f32.mrb[0].mxu0
    %v6748 = vadd.f32 %v6561, %v6747
    %v6749 = vpop.f32.mrb[0].mxu0
    %v6750 = vadd.f32 %v6561, %v6749
    %6751 = vmatprep.mubr.f32.mxu0 0.0
    %6752 = vmatmul.mubr.f32.gmra.mrb[0].mxu0 %v6578
    %v6753 = vpop.f32.mrb[0].mxu0
    %v6754 = vadd.f32 %v6566, %v6753
    %v6755 = vpop.f32.mrb[0].mxu0
    %v6756 = vadd.f32 %v6566, %v6755
    %6757 = vdwg.mxu0
    %s6758 = scalar_lea.vmem %s7, 64
    %v6759 = vld [vmem:[%s6758] sm:$0xff]
    %v6760 = vld [vmem:[%s6758 + $0x8] sm:$0xff]
    %v6761 = vld [vmem:[%s6758 + $0x10] sm:$0xff]
    %v6762 = vld [vmem:[%s6758 + $0x18] sm:$0xff]
    %6764 = vset.pattern.permute.xlu0 0
    %6765 = vperm.xlu0 %6764, %v6759
    %v6766 = vpop.permute.xlu0 %6765
    %6769 = vset.pattern.permute.xlu0 0
    %6770 = vperm.xlu0 %6769, %v6760
    %v6771 = vpop.permute.xlu0 %6770
    %6774 = vset.pattern.permute.xlu0 0
    %6775 = vperm.xlu0 %6774, %v6761
    %v6776 = vpop.permute.xlu0 %6775
    %6779 = vset.pattern.permute.xlu0 0
    %6780 = vperm.xlu0 %6779, %v6762
    %v6781 = vpop.permute.xlu0 %6780
    %v6783 = vadd.f32 %v6647, %v6766
    %v6784 = vadd.f32 %v6649, %v6766
    %v6785 = vadd.f32 %v6736, %v6766
    %v6786 = vadd.f32 %v6738, %v6766
    %v6787 = vadd.f32 %v6653, %v6771
    %v6788 = vadd.f32 %v6655, %v6771
    %v6789 = vadd.f32 %v6742, %v6771
    %v6790 = vadd.f32 %v6744, %v6771
    %v6791 = vadd.f32 %v6659, %v6776
    %v6792 = vadd.f32 %v6661, %v6776
    %v6793 = vadd.f32 %v6748, %v6776
    %v6794 = vadd.f32 %v6750, %v6776
    %v6795 = vadd.f32 %v6665, %v6781
    %v6796 = vadd.f32 %v6667, %v6781
    %v6797 = vadd.f32 %v6754, %v6781
    %v6798 = vadd.f32 %v6756, %v6781
    %6799 = vrot.lane.b32.xlu0 %v6522, 17
    %v6800 = vpop.permute.xlu0 %6799
    %6801 = vrot.lane.b32.xlu0 %v6526, 17
    %v6802 = vpop.permute.xlu0 %6801
    %6803 = vrot.lane.b32.xlu0 %v6530, 17
    %v6804 = vpop.permute.xlu0 %6803
    %6805 = vrot.lane.b32.xlu0 %v6534, 17
    %v6806 = vpop.permute.xlu0 %6805
    %6807 = vrot.lane.b32.xlu0 %v6523, 17
    %v6808 = vpop.permute.xlu0 %6807
    %6809 = vrot.lane.b32.xlu0 %v6527, 17
    %v6810 = vpop.permute.xlu0 %6809
    %6811 = vrot.lane.b32.xlu0 %v6531, 17
    %v6812 = vpop.permute.xlu0 %6811
    %6813 = vrot.lane.b32.xlu0 %v6535, 17
    %v6814 = vpop.permute.xlu0 %6813
    %6815 = vrot.lane.b32.xlu0 %v6524, 17
    %v6816 = vpop.permute.xlu0 %6815
    %6817 = vrot.lane.b32.xlu0 %v6528, 17
    %v6818 = vpop.permute.xlu0 %6817
    %6819 = vrot.lane.b32.xlu0 %v6532, 17
    %v6820 = vpop.permute.xlu0 %6819
    %6821 = vrot.lane.b32.xlu0 %v6536, 17
    %v6822 = vpop.permute.xlu0 %6821
    %6823 = vrot.lane.b32.xlu0 %v6525, 17
    %v6824 = vpop.permute.xlu0 %6823
    %6825 = vrot.lane.b32.xlu0 %v6529, 17
    %v6826 = vpop.permute.xlu0 %6825
    %6827 = vrot.lane.b32.xlu0 %v6533, 17
    %v6828 = vpop.permute.xlu0 %6827
    %6829 = vrot.lane.b32.xlu0 %v6537, 17
    %v6830 = vpop.permute.xlu0 %6829
    %v6831 = vsel %vm1018, %v6816, %v6824
    %v6832 = vsel %vm1018, %v6818, %v6826
    %v6833 = vsel %vm1018, %v6820, %v6828
    %v6834 = vsel %vm1018, %v6822, %v6830
    %v6835 = vsel %vm1018, %v6808, %v6816
    %v6836 = vsel %vm1018, %v6810, %v6818
    %v6837 = vsel %vm1018, %v6812, %v6820
    %v6838 = vsel %vm1018, %v6814, %v6822
    %v6839 = vsel %vm1018, %v6800, %v6808
    %v6840 = vsel %vm1018, %v6802, %v6810
    %v6841 = vsel %vm1018, %v6804, %v6812
    %v6842 = vsel %vm1018, %v6806, %v6814
    %v6843 = vsel %vm1018, %v6824, %v6800
    %v6844 = vsel %vm1018, %v6826, %v6802
    %v6845 = vsel %vm1018, %v6828, %v6804
    %v6846 = vsel %vm1018, %v6830, %v6806
    %s6847 = scalar_lea.vmem [#allocation2], 576
    %v6848 = vld [vmem:[%s6847] sm:$0xff]
    %v6849 = vld [vmem:[%s6847 + $0x8] sm:$0xff]
    %v6850 = vld [vmem:[%s6847 + $0x10] sm:$0xff]
    %v6851 = vld [vmem:[%s6847 + $0x18] sm:$0xff]
    %v6852 = vmul.f32 %v6843, %v1044
    %v6853 = vmul.f32 %v6839, %v1048
    %v6854 = vmul.f32 %v6835, %v1052
    %v6855 = vmul.f32 %v6831, %v1056
    %v6856 = vmul.f32 %v6844, %v1044
    %v6857 = vmul.f32 %v6840, %v1048
    %v6858 = vmul.f32 %v6836, %v1052
    %v6859 = vmul.f32 %v6832, %v1056
    %v6860 = vmul.f32 %v6845, %v1044
    %v6861 = vmul.f32 %v6841, %v1048
    %v6862 = vmul.f32 %v6837, %v1052
    %v6863 = vmul.f32 %v6833, %v1056
    %v6864 = vmul.f32 %v6846, %v1044
    %v6865 = vmul.f32 %v6842, %v1048
    %v6866 = vmul.f32 %v6838, %v1052
    %v6867 = vmul.f32 %v6834, %v1056
    %v6869 = vsel %vm753, %v6848, 0
    %v6872 = vsel %vm753, %v6849, 0
    %v6875 = vsel %vm753, %v6850, 0
    %v6878 = vsel %vm753, %v6851, 0
    %6880 = vmatprep.subr.mxu0 %v6853
    %6881 = vmatpush1.msra.mxu0 %v6852
    %6882 = vmatprep.subr.mxu0 %v6857
    %6883 = vmatpush1.msra.mxu0 %v6856
    %6884 = vmatprep.subr.mxu0 %v6861
    %6885 = vmatpush1.msra.mxu0 %v6860
    %6886 = vmatprep.subr.mxu0 %v6865
    %6887 = vmatpush1.msra.mxu0 %v6864
    %6888 = vmatprep.subr.mxu0 0.0
    %6889 = vmatpush1.msra.mxu0 0.0
    %6890 = vmatprep.subr.mxu0 0.0
    %6891 = vmatpush1.msra.mxu0 0.0
    %6892 = vmatprep.subr.mxu0 0.0
    %6893 = vmatpush1.msra.mxu0 0.0
    %6894 = vmatprep.subr.mxu0 0.0
    %6895 = vmatpush1.msra.mxu0 0.0
    %6896 = vmatprep.subr.mxu0 0.0
    %6897 = vmatpush1.msra.mxu0 0.0
    %6898 = vmatprep.subr.mxu0 0.0
    %6899 = vmatpush1.msra.mxu0 0.0
    %6900 = vmatprep.subr.mxu0 0.0
    %6901 = vmatpush1.msra.mxu0 0.0
    %6902 = vmatprep.subr.mxu0 0.0
    %6903 = vmatpush1.msra.mxu0 0.0
    %6904 = vmatprep.subr.mxu0 0.0
    %6905 = vmatpush1.msra.mxu0 0.0
    %6906 = vmatprep.subr.mxu0 0.0
    %6907 = vmatpush1.msra.mxu0 0.0
    %6908 = vmatprep.subr.mxu0 0.0
    %6909 = vmatpush1.msra.mxu0 0.0
    %6910 = vmatprep.subr.mxu0 0.0
    %6911 = vmatpush1.msra.mxu0 0.0
    %6912 = vmatprep.subr.mxu0 0.0
    %6913 = vmatpush1.msra.mxu0 0.0
    %6914 = vmatprep.subr.mxu0 0.0
    %6915 = vmatpush1.msra.mxu0 0.0
    %6916 = vmatprep.subr.mxu0 0.0
    %6917 = vmatpush1.msra.mxu0 0.0
    %6918 = vmatprep.subr.mxu0 0.0
    %6919 = vmatpush1.msra.mxu0 0.0
    %6920 = vmatprep.subr.mxu0 0.0
    %6921 = vmatpush1.msra.mxu0 0.0
    %6922 = vmatprep.subr.mxu0 0.0
    %6923 = vmatpush1.msra.mxu0 0.0
    %6924 = vmatprep.subr.mxu0 0.0
    %6925 = vmatpush1.msra.mxu0 0.0
    %6926 = vmatprep.subr.mxu0 0.0
    %6927 = vmatpush1.msra.mxu0 0.0
    %6928 = vmatprep.subr.mxu0 0.0
    %6929 = vmatpush1.msra.mxu0 0.0
    %6930 = vmatprep.subr.mxu0 0.0
    %6931 = vmatpush1.msra.mxu0 0.0
    %6932 = vmatprep.subr.mxu0 0.0
    %6933 = vmatpush1.msra.mxu0 0.0
    %6934 = vmatprep.subr.mxu0 0.0
    %6935 = vmatpush1.msra.mxu0 0.0
    %6936 = vmatprep.subr.mxu0 0.0
    %6937 = vmatpush1.msra.mxu0 0.0
    %6938 = vmatprep.subr.mxu0 0.0
    %6939 = vmatpush1.msra.mxu0 0.0
    %6940 = vmatprep.subr.mxu0 0.0
    %6941 = vmatpush1.msra.mxu0 0.0
    %6942 = vmatprep.subr.mxu0 0.0
    %6943 = vmatpush1.msra.mxu0 0.0
    %6944 = vmatprep.mubr.f32.mxu0 0.0
    %6945 = vmatmul.mubr.f32.gmra.mrb[0].mxu0 %v6869
    %v6946 = vpop.f32.mrb[0].mxu0
    %v6947 = vadd.f32 0.0, %v6946
    %v6948 = vpop.f32.mrb[0].mxu0
    %v6949 = vadd.f32 0.0, %v6948
    %6950 = vmatprep.mubr.f32.mxu0 0.0
    %6951 = vmatmul.mubr.f32.gmra.mrb[0].mxu0 %v6872
    %v6952 = vpop.f32.mrb[0].mxu0
    %v6953 = vadd.f32 0.0, %v6952
    %v6954 = vpop.f32.mrb[0].mxu0
    %v6955 = vadd.f32 0.0, %v6954
    %6956 = vmatprep.mubr.f32.mxu0 0.0
    %6957 = vmatmul.mubr.f32.gmra.mrb[0].mxu0 %v6875
    %v6958 = vpop.f32.mrb[0].mxu0
    %v6959 = vadd.f32 0.0, %v6958
    %v6960 = vpop.f32.mrb[0].mxu0
    %v6961 = vadd.f32 0.0, %v6960
    %6962 = vmatprep.mubr.f32.mxu0 0.0
    %6963 = vmatmul.mubr.f32.gmra.mrb[0].mxu0 %v6878
    %v6964 = vpop.f32.mrb[0].mxu0
    %v6965 = vadd.f32 0.0, %v6964
    %v6966 = vpop.f32.mrb[0].mxu0
    %v6967 = vadd.f32 0.0, %v6966
    %6968 = vdwg.mxu0
    %6969 = vmatprep.subr.mxu0 %v6855
    %6970 = vmatpush1.msra.mxu0 %v6854
    %6971 = vmatprep.subr.mxu0 %v6859
    %6972 = vmatpush1.msra.mxu0 %v6858
    %6973 = vmatprep.subr.mxu0 %v6863
    %6974 = vmatpush1.msra.mxu0 %v6862
    %6975 = vmatprep.subr.mxu0 %v6867
    %6976 = vmatpush1.msra.mxu0 %v6866
    %6977 = vmatprep.subr.mxu0 0.0
    %6978 = vmatpush1.msra.mxu0 0.0
    %6979 = vmatprep.subr.mxu0 0.0
    %6980 = vmatpush1.msra.mxu0 0.0
    %6981 = vmatprep.subr.mxu0 0.0
    %6982 = vmatpush1.msra.mxu0 0.0
    %6983 = vmatprep.subr.mxu0 0.0
    %6984 = vmatpush1.msra.mxu0 0.0
    %6985 = vmatprep.subr.mxu0 0.0
    %6986 = vmatpush1.msra.mxu0 0.0
    %6987 = vmatprep.subr.mxu0 0.0
    %6988 = vmatpush1.msra.mxu0 0.0
    %6989 = vmatprep.subr.mxu0 0.0
    %6990 = vmatpush1.msra.mxu0 0.0
    %6991 = vmatprep.subr.mxu0 0.0
    %6992 = vmatpush1.msra.mxu0 0.0
    %6993 = vmatprep.subr.mxu0 0.0
    %6994 = vmatpush1.msra.mxu0 0.0
    %6995 = vmatprep.subr.mxu0 0.0
    %6996 = vmatpush1.msra.mxu0 0.0
    %6997 = vmatprep.subr.mxu0 0.0
    %6998 = vmatpush1.msra.mxu0 0.0
    %6999 = vmatprep.subr.mxu0 0.0
    %7000 = vmatpush1.msra.mxu0 0.0
    %7001 = vmatprep.subr.mxu0 0.0
    %7002 = vmatpush1.msra.mxu0 0.0
    %7003 = vmatprep.subr.mxu0 0.0
    %7004 = vmatpush1.msra.mxu0 0.0
    %7005 = vmatprep.subr.mxu0 0.0
    %7006 = vmatpush1.msra.mxu0 0.0
    %7007 = vmatprep.subr.mxu0 0.0
    %7008 = vmatpush1.msra.mxu0 0.0
    %7009 = vmatprep.subr.mxu0 0.0
    %7010 = vmatpush1.msra.mxu0 0.0
    %7011 = vmatprep.subr.mxu0 0.0
    %7012 = vmatpush1.msra.mxu0 0.0
    %7013 = vmatprep.subr.mxu0 0.0
    %7014 = vmatpush1.msra.mxu0 0.0
    %7015 = vmatprep.subr.mxu0 0.0
    %7016 = vmatpush1.msra.mxu0 0.0
    %7017 = vmatprep.subr.mxu0 0.0
    %7018 = vmatpush1.msra.mxu0 0.0
    %7019 = vmatprep.subr.mxu0 0.0
    %7020 = vmatpush1.msra.mxu0 0.0
    %7021 = vmatprep.subr.mxu0 0.0
    %7022 = vmatpush1.msra.mxu0 0.0
    %7023 = vmatprep.subr.mxu0 0.0
    %7024 = vmatpush1.msra.mxu0 0.0
    %7025 = vmatprep.subr.mxu0 0.0
    %7026 = vmatpush1.msra.mxu0 0.0
    %7027 = vmatprep.subr.mxu0 0.0
    %7028 = vmatpush1.msra.mxu0 0.0
    %7029 = vmatprep.subr.mxu0 0.0
    %7030 = vmatpush1.msra.mxu0 0.0
    %7031 = vmatprep.subr.mxu0 0.0
    %7032 = vmatpush1.msra.mxu0 0.0
    %7033 = vmatprep.mubr.f32.mxu0 0.0
    %7034 = vmatmul.mubr.f32.gmra.mrb[0].mxu0 %v6869
    %v7035 = vpop.f32.mrb[0].mxu0
    %v7036 = vadd.f32 0.0, %v7035
    %v7037 = vpop.f32.mrb[0].mxu0
    %v7038 = vadd.f32 0.0, %v7037
    %7039 = vmatprep.mubr.f32.mxu0 0.0
    %7040 = vmatmul.mubr.f32.gmra.mrb[0].mxu0 %v6872
    %v7041 = vpop.f32.mrb[0].mxu0
    %v7042 = vadd.f32 0.0, %v7041
    %v7043 = vpop.f32.mrb[0].mxu0
    %v7044 = vadd.f32 0.0, %v7043
    %7045 = vmatprep.mubr.f32.mxu0 0.0
    %7046 = vmatmul.mubr.f32.gmra.mrb[0].mxu0 %v6875
    %v7047 = vpop.f32.mrb[0].mxu0
    %v7048 = vadd.f32 0.0, %v7047
    %v7049 = vpop.f32.mrb[0].mxu0
    %v7050 = vadd.f32 0.0, %v7049
    %7051 = vmatprep.mubr.f32.mxu0 0.0
    %7052 = vmatmul.mubr.f32.gmra.mrb[0].mxu0 %v6878
    %v7053 = vpop.f32.mrb[0].mxu0
    %v7054 = vadd.f32 0.0, %v7053
    %v7055 = vpop.f32.mrb[0].mxu0
    %v7056 = vadd.f32 0.0, %v7055
    %7057 = vdwg.mxu0
    %v7058 = vadd.f32 %v6783, %v6947
    %v7059 = vadd.f32 %v6784, %v6949
    %v7060 = vadd.f32 %v6785, %v7036
    %v7061 = vadd.f32 %v6786, %v7038
    %v7062 = vadd.f32 %v6787, %v6953
    %v7063 = vadd.f32 %v6788, %v6955
    %v7064 = vadd.f32 %v6789, %v7042
    %v7065 = vadd.f32 %v6790, %v7044
    %v7066 = vadd.f32 %v6791, %v6959
    %v7067 = vadd.f32 %v6792, %v6961
    %v7068 = vadd.f32 %v6793, %v7048
    %v7069 = vadd.f32 %v6794, %v7050
    %v7070 = vadd.f32 %v6795, %v6965
    %v7071 = vadd.f32 %v6796, %v6967
    %v7072 = vadd.f32 %v6797, %v7054
    %v7073 = vadd.f32 %v6798, %v7056
    %7074 = vrot.lane.b32.xlu0 %v6522, 16
    %v7075 = vpop.permute.xlu0 %7074
    %7076 = vrot.lane.b32.xlu0 %v6526, 16
    %v7077 = vpop.permute.xlu0 %7076
    %7078 = vrot.lane.b32.xlu0 %v6530, 16
    %v7079 = vpop.permute.xlu0 %7078
    %7080 = vrot.lane.b32.xlu0 %v6534, 16
    %v7081 = vpop.permute.xlu0 %7080
    %7082 = vrot.lane.b32.xlu0 %v6523, 16
    %v7083 = vpop.permute.xlu0 %7082
    %7084 = vrot.lane.b32.xlu0 %v6527, 16
    %v7085 = vpop.permute.xlu0 %7084
    %7086 = vrot.lane.b32.xlu0 %v6531, 16
    %v7087 = vpop.permute.xlu0 %7086
    %7088 = vrot.lane.b32.xlu0 %v6535, 16
    %v7089 = vpop.permute.xlu0 %7088
    %7090 = vrot.lane.b32.xlu0 %v6524, 16
    %v7091 = vpop.permute.xlu0 %7090
    %7092 = vrot.lane.b32.xlu0 %v6528, 16
    %v7093 = vpop.permute.xlu0 %7092
    %7094 = vrot.lane.b32.xlu0 %v6532, 16
    %v7095 = vpop.permute.xlu0 %7094
    %7096 = vrot.lane.b32.xlu0 %v6536, 16
    %v7097 = vpop.permute.xlu0 %7096
    %7098 = vrot.lane.b32.xlu0 %v6525, 16
    %v7099 = vpop.permute.xlu0 %7098
    %7100 = vrot.lane.b32.xlu0 %v6529, 16
    %v7101 = vpop.permute.xlu0 %7100
    %7102 = vrot.lane.b32.xlu0 %v6533, 16
    %v7103 = vpop.permute.xlu0 %7102
    %7104 = vrot.lane.b32.xlu0 %v6537, 16
    %v7105 = vpop.permute.xlu0 %7104
    %v7106 = vsel %vm1315, %v7091, %v7099
    %v7107 = vsel %vm1315, %v7093, %v7101
    %v7108 = vsel %vm1315, %v7095, %v7103
    %v7109 = vsel %vm1315, %v7097, %v7105
    %v7110 = vsel %vm1315, %v7083, %v7091
    %v7111 = vsel %vm1315, %v7085, %v7093
    %v7112 = vsel %vm1315, %v7087, %v7095
    %v7113 = vsel %vm1315, %v7089, %v7097
    %v7114 = vsel %vm1315, %v7075, %v7083
    %v7115 = vsel %vm1315, %v7077, %v7085
    %v7116 = vsel %vm1315, %v7079, %v7087
    %v7117 = vsel %vm1315, %v7081, %v7089
    %v7118 = vsel %vm1315, %v7099, %v7075
    %v7119 = vsel %vm1315, %v7101, %v7077
    %v7120 = vsel %vm1315, %v7103, %v7079
    %v7121 = vsel %vm1315, %v7105, %v7081
    %s7122 = scalar_lea.vmem [#allocation2], 608
    %v7123 = vld [vmem:[%s7122] sm:$0xff]
    %v7124 = vld [vmem:[%s7122 + $0x8] sm:$0xff]
    %v7125 = vld [vmem:[%s7122 + $0x10] sm:$0xff]
    %v7126 = vld [vmem:[%s7122 + $0x18] sm:$0xff]
    %v7127 = vmul.f32 %v7118, %v1343
    %v7128 = vmul.f32 %v7114, %v1347
    %v7129 = vmul.f32 %v7110, %v1351
    %v7130 = vmul.f32 %v7106, %v1355
    %v7131 = vmul.f32 %v7119, %v1343
    %v7132 = vmul.f32 %v7115, %v1347
    %v7133 = vmul.f32 %v7111, %v1351
    %v7134 = vmul.f32 %v7107, %v1355
    %v7135 = vmul.f32 %v7120, %v1343
    %v7136 = vmul.f32 %v7116, %v1347
    %v7137 = vmul.f32 %v7112, %v1351
    %v7138 = vmul.f32 %v7108, %v1355
    %v7139 = vmul.f32 %v7121, %v1343
    %v7140 = vmul.f32 %v7117, %v1347
    %v7141 = vmul.f32 %v7113, %v1351
    %v7142 = vmul.f32 %v7109, %v1355
    %v7144 = vsel %vm753, %v7123, 0
    %v7147 = vsel %vm753, %v7124, 0
    %v7150 = vsel %vm753, %v7125, 0
    %v7153 = vsel %vm753, %v7126, 0
    %7155 = vmatprep.subr.mxu0 %v7128
    %7156 = vmatpush1.msra.mxu0 %v7127
    %7157 = vmatprep.subr.mxu0 %v7132
    %7158 = vmatpush1.msra.mxu0 %v7131
    %7159 = vmatprep.subr.mxu0 %v7136
    %7160 = vmatpush1.msra.mxu0 %v7135
    %7161 = vmatprep.subr.mxu0 %v7140
    %7162 = vmatpush1.msra.mxu0 %v7139
    %7163 = vmatprep.subr.mxu0 0.0
    %7164 = vmatpush1.msra.mxu0 0.0
    %7165 = vmatprep.subr.mxu0 0.0
    %7166 = vmatpush1.msra.mxu0 0.0
    %7167 = vmatprep.subr.mxu0 0.0
    %7168 = vmatpush1.msra.mxu0 0.0
    %7169 = vmatprep.subr.mxu0 0.0
    %7170 = vmatpush1.msra.mxu0 0.0
    %7171 = vmatprep.subr.mxu0 0.0
    %7172 = vmatpush1.msra.mxu0 0.0
    %7173 = vmatprep.subr.mxu0 0.0
    %7174 = vmatpush1.msra.mxu0 0.0
    %7175 = vmatprep.subr.mxu0 0.0
    %7176 = vmatpush1.msra.mxu0 0.0
    %7177 = vmatprep.subr.mxu0 0.0
    %7178 = vmatpush1.msra.mxu0 0.0
    %7179 = vmatprep.subr.mxu0 0.0
    %7180 = vmatpush1.msra.mxu0 0.0
    %7181 = vmatprep.subr.mxu0 0.0
    %7182 = vmatpush1.msra.mxu0 0.0
    %7183 = vmatprep.subr.mxu0 0.0
    %7184 = vmatpush1.msra.mxu0 0.0
    %7185 = vmatprep.subr.mxu0 0.0
    %7186 = vmatpush1.msra.mxu0 0.0
    %7187 = vmatprep.subr.mxu0 0.0
    %7188 = vmatpush1.msra.mxu0 0.0
    %7189 = vmatprep.subr.mxu0 0.0
    %7190 = vmatpush1.msra.mxu0 0.0
    %7191 = vmatprep.subr.mxu0 0.0
    %7192 = vmatpush1.msra.mxu0 0.0
    %7193 = vmatprep.subr.mxu0 0.0
    %7194 = vmatpush1.msra.mxu0 0.0
    %7195 = vmatprep.subr.mxu0 0.0
    %7196 = vmatpush1.msra.mxu0 0.0
    %7197 = vmatprep.subr.mxu0 0.0
    %7198 = vmatpush1.msra.mxu0 0.0
    %7199 = vmatprep.subr.mxu0 0.0
    %7200 = vmatpush1.msra.mxu0 0.0
    %7201 = vmatprep.subr.mxu0 0.0
    %7202 = vmatpush1.msra.mxu0 0.0
    %7203 = vmatprep.subr.mxu0 0.0
    %7204 = vmatpush1.msra.mxu0 0.0
    %7205 = vmatprep.subr.mxu0 0.0
    %7206 = vmatpush1.msra.mxu0 0.0
    %7207 = vmatprep.subr.mxu0 0.0
    %7208 = vmatpush1.msra.mxu0 0.0
    %7209 = vmatprep.subr.mxu0 0.0
    %7210 = vmatpush1.msra.mxu0 0.0
    %7211 = vmatprep.subr.mxu0 0.0
    %7212 = vmatpush1.msra.mxu0 0.0
    %7213 = vmatprep.subr.mxu0 0.0
    %7214 = vmatpush1.msra.mxu0 0.0
    %7215 = vmatprep.subr.mxu0 0.0
    %7216 = vmatpush1.msra.mxu0 0.0
    %7217 = vmatprep.subr.mxu0 0.0
    %7218 = vmatpush1.msra.mxu0 0.0
    %7219 = vmatprep.mubr.f32.mxu0 0.0
    %7220 = vmatmul.mubr.f32.gmra.mrb[0].mxu0 %v7144
    %v7221 = vpop.f32.mrb[0].mxu0
    %v7222 = vadd.f32 0.0, %v7221
    %v7223 = vpop.f32.mrb[0].mxu0
    %v7224 = vadd.f32 0.0, %v7223
    %7225 = vmatprep.mubr.f32.mxu0 0.0
    %7226 = vmatmul.mubr.f32.gmra.mrb[0].mxu0 %v7147
    %v7227 = vpop.f32.mrb[0].mxu0
    %v7228 = vadd.f32 0.0, %v7227
    %v7229 = vpop.f32.mrb[0].mxu0
    %v7230 = vadd.f32 0.0, %v7229
    %7231 = vmatprep.mubr.f32.mxu0 0.0
    %7232 = vmatmul.mubr.f32.gmra.mrb[0].mxu0 %v7150
    %v7233 = vpop.f32.mrb[0].mxu0
    %v7234 = vadd.f32 0.0, %v7233
    %v7235 = vpop.f32.mrb[0].mxu0
    %v7236 = vadd.f32 0.0, %v7235
    %7237 = vmatprep.mubr.f32.mxu0 0.0
    %7238 = vmatmul.mubr.f32.gmra.mrb[0].mxu0 %v7153
    %v7239 = vpop.f32.mrb[0].mxu0
    %v7240 = vadd.f32 0.0, %v7239
    %v7241 = vpop.f32.mrb[0].mxu0
    %v7242 = vadd.f32 0.0, %v7241
    %7243 = vdwg.mxu0
    %7244 = vmatprep.subr.mxu0 %v7130
    %7245 = vmatpush1.msra.mxu0 %v7129
    %7246 = vmatprep.subr.mxu0 %v7134
    %7247 = vmatpush1.msra.mxu0 %v7133
    %7248 = vmatprep.subr.mxu0 %v7138
    %7249 = vmatpush1.msra.mxu0 %v7137
    %7250 = vmatprep.subr.mxu0 %v7142
    %7251 = vmatpush1.msra.mxu0 %v7141
    %7252 = vmatprep.subr.mxu0 0.0
    %7253 = vmatpush1.msra.mxu0 0.0
    %7254 = vmatprep.subr.mxu0 0.0
    %7255 = vmatpush1.msra.mxu0 0.0
    %7256 = vmatprep.subr.mxu0 0.0
    %7257 = vmatpush1.msra.mxu0 0.0
    %7258 = vmatprep.subr.mxu0 0.0
    %7259 = vmatpush1.msra.mxu0 0.0
    %7260 = vmatprep.subr.mxu0 0.0
    %7261 = vmatpush1.msra.mxu0 0.0
    %7262 = vmatprep.subr.mxu0 0.0
    %7263 = vmatpush1.msra.mxu0 0.0
    %7264 = vmatprep.subr.mxu0 0.0
    %7265 = vmatpush1.msra.mxu0 0.0
    %7266 = vmatprep.subr.mxu0 0.0
    %7267 = vmatpush1.msra.mxu0 0.0
    %7268 = vmatprep.subr.mxu0 0.0
    %7269 = vmatpush1.msra.mxu0 0.0
    %7270 = vmatprep.subr.mxu0 0.0
    %7271 = vmatpush1.msra.mxu0 0.0
    %7272 = vmatprep.subr.mxu0 0.0
    %7273 = vmatpush1.msra.mxu0 0.0
    %7274 = vmatprep.subr.mxu0 0.0
    %7275 = vmatpush1.msra.mxu0 0.0
    %7276 = vmatprep.subr.mxu0 0.0
    %7277 = vmatpush1.msra.mxu0 0.0
    %7278 = vmatprep.subr.mxu0 0.0
    %7279 = vmatpush1.msra.mxu0 0.0
    %7280 = vmatprep.subr.mxu0 0.0
    %7281 = vmatpush1.msra.mxu0 0.0
    %7282 = vmatprep.subr.mxu0 0.0
    %7283 = vmatpush1.msra.mxu0 0.0
    %7284 = vmatprep.subr.mxu0 0.0
    %7285 = vmatpush1.msra.mxu0 0.0
    %7286 = vmatprep.subr.mxu0 0.0
    %7287 = vmatpush1.msra.mxu0 0.0
    %7288 = vmatprep.subr.mxu0 0.0
    %7289 = vmatpush1.msra.mxu0 0.0
    %7290 = vmatprep.subr.mxu0 0.0
    %7291 = vmatpush1.msra.mxu0 0.0
    %7292 = vmatprep.subr.mxu0 0.0
    %7293 = vmatpush1.msra.mxu0 0.0
    %7294 = vmatprep.subr.mxu0 0.0
    %7295 = vmatpush1.msra.mxu0 0.0
    %7296 = vmatprep.subr.mxu0 0.0
    %7297 = vmatpush1.msra.mxu0 0.0
    %7298 = vmatprep.subr.mxu0 0.0
    %7299 = vmatpush1.msra.mxu0 0.0
    %7300 = vmatprep.subr.mxu0 0.0
    %7301 = vmatpush1.msra.mxu0 0.0
    %7302 = vmatprep.subr.mxu0 0.0
    %7303 = vmatpush1.msra.mxu0 0.0
    %7304 = vmatprep.subr.mxu0 0.0
    %7305 = vmatpush1.msra.mxu0 0.0
    %7306 = vmatprep.subr.mxu0 0.0
    %7307 = vmatpush1.msra.mxu0 0.0
    %7308 = vmatprep.mubr.f32.mxu0 0.0
    %7309 = vmatmul.mubr.f32.gmra.mrb[0].mxu0 %v7144
    %v7310 = vpop.f32.mrb[0].mxu0
    %v7311 = vadd.f32 0.0, %v7310
    %v7312 = vpop.f32.mrb[0].mxu0
    %v7313 = vadd.f32 0.0, %v7312
    %7314 = vmatprep.mubr.f32.mxu0 0.0
    %7315 = vmatmul.mubr.f32.gmra.mrb[0].mxu0 %v7147
    %v7316 = vpop.f32.mrb[0].mxu0
    %v7317 = vadd.f32 0.0, %v7316
    %v7318 = vpop.f32.mrb[0].mxu0
    %v7319 = vadd.f32 0.0, %v7318
    %7320 = vmatprep.mubr.f32.mxu0 0.0
    %7321 = vmatmul.mubr.f32.gmra.mrb[0].mxu0 %v7150
    %v7322 = vpop.f32.mrb[0].mxu0
    %v7323 = vadd.f32 0.0, %v7322
    %v7324 = vpop.f32.mrb[0].mxu0
    %v7325 = vadd.f32 0.0, %v7324
    %7326 = vmatprep.mubr.f32.mxu0 0.0
    %7327 = vmatmul.mubr.f32.gmra.mrb[0].mxu0 %v7153
    %v7328 = vpop.f32.mrb[0].mxu0
    %v7329 = vadd.f32 0.0, %v7328
    %v7330 = vpop.f32.mrb[0].mxu0
    %v7331 = vadd.f32 0.0, %v7330
    %7332 = vdwg.mxu0
    %v7333 = vadd.f32 %v7058, %v7222
    %v7334 = vadd.f32 %v7059, %v7224
    %v7335 = vadd.f32 %v7060, %v7311
    %v7336 = vadd.f32 %v7061, %v7313
    %v7337 = vadd.f32 %v7062, %v7228
    %v7338 = vadd.f32 %v7063, %v7230
    %v7339 = vadd.f32 %v7064, %v7317
    %v7340 = vadd.f32 %v7065, %v7319
    %v7341 = vadd.f32 %v7066, %v7234
    %v7342 = vadd.f32 %v7067, %v7236
    %v7343 = vadd.f32 %v7068, %v7323
    %v7344 = vadd.f32 %v7069, %v7325
    %v7345 = vadd.f32 %v7070, %v7240
    %v7346 = vadd.f32 %v7071, %v7242
    %v7347 = vadd.f32 %v7072, %v7329
    %v7348 = vadd.f32 %v7073, %v7331
    %7349 = vrot.lane.b32.xlu0 %v6522, 15
    %v7350 = vpop.permute.xlu0 %7349
    %7351 = vrot.lane.b32.xlu0 %v6526, 15
    %v7352 = vpop.permute.xlu0 %7351
    %7353 = vrot.lane.b32.xlu0 %v6530, 15
    %v7354 = vpop.permute.xlu0 %7353
    %7355 = vrot.lane.b32.xlu0 %v6534, 15
    %v7356 = vpop.permute.xlu0 %7355
    %7357 = vrot.lane.b32.xlu0 %v6523, 15
    %v7358 = vpop.permute.xlu0 %7357
    %7359 = vrot.lane.b32.xlu0 %v6527, 15
    %v7360 = vpop.permute.xlu0 %7359
    %7361 = vrot.lane.b32.xlu0 %v6531, 15
    %v7362 = vpop.permute.xlu0 %7361
    %7363 = vrot.lane.b32.xlu0 %v6535, 15
    %v7364 = vpop.permute.xlu0 %7363
    %7365 = vrot.lane.b32.xlu0 %v6524, 15
    %v7366 = vpop.permute.xlu0 %7365
    %7367 = vrot.lane.b32.xlu0 %v6528, 15
    %v7368 = vpop.permute.xlu0 %7367
    %7369 = vrot.lane.b32.xlu0 %v6532, 15
    %v7370 = vpop.permute.xlu0 %7369
    %7371 = vrot.lane.b32.xlu0 %v6536, 15
    %v7372 = vpop.permute.xlu0 %7371
    %7373 = vrot.lane.b32.xlu0 %v6525, 15
    %v7374 = vpop.permute.xlu0 %7373
    %7375 = vrot.lane.b32.xlu0 %v6529, 15
    %v7376 = vpop.permute.xlu0 %7375
    %7377 = vrot.lane.b32.xlu0 %v6533, 15
    %v7378 = vpop.permute.xlu0 %7377
    %7379 = vrot.lane.b32.xlu0 %v6537, 15
    %v7380 = vpop.permute.xlu0 %7379
    %v7381 = vsel %vm1614, %v7366, %v7374
    %v7382 = vsel %vm1614, %v7368, %v7376
    %v7383 = vsel %vm1614, %v7370, %v7378
    %v7384 = vsel %vm1614, %v7372, %v7380
    %v7385 = vsel %vm1614, %v7358, %v7366
    %v7386 = vsel %vm1614, %v7360, %v7368
    %v7387 = vsel %vm1614, %v7362, %v7370
    %v7388 = vsel %vm1614, %v7364, %v7372
    %v7389 = vsel %vm1614, %v7350, %v7358
    %v7390 = vsel %vm1614, %v7352, %v7360
    %v7391 = vsel %vm1614, %v7354, %v7362
    %v7392 = vsel %vm1614, %v7356, %v7364
    %v7393 = vsel %vm1614, %v7374, %v7350
    %v7394 = vsel %vm1614, %v7376, %v7352
    %v7395 = vsel %vm1614, %v7378, %v7354
    %v7396 = vsel %vm1614, %v7380, %v7356
    %s7397 = scalar_lea.vmem [#allocation2], 640
    %v7398 = vld [vmem:[%s7397] sm:$0xff]
    %v7399 = vld [vmem:[%s7397 + $0x8] sm:$0xff]
    %v7400 = vld [vmem:[%s7397 + $0x10] sm:$0xff]
    %v7401 = vld [vmem:[%s7397 + $0x18] sm:$0xff]
    %v7402 = vmul.f32 %v7393, %v1642
    %v7403 = vmul.f32 %v7389, %v1646
    %v7404 = vmul.f32 %v7385, %v1650
    %v7405 = vmul.f32 %v7381, %v1654
    %v7406 = vmul.f32 %v7394, %v1642
    %v7407 = vmul.f32 %v7390, %v1646
    %v7408 = vmul.f32 %v7386, %v1650
    %v7409 = vmul.f32 %v7382, %v1654
    %v7410 = vmul.f32 %v7395, %v1642
    %v7411 = vmul.f32 %v7391, %v1646
    %v7412 = vmul.f32 %v7387, %v1650
    %v7413 = vmul.f32 %v7383, %v1654
    %v7414 = vmul.f32 %v7396, %v1642
    %v7415 = vmul.f32 %v7392, %v1646
    %v7416 = vmul.f32 %v7388, %v1650
    %v7417 = vmul.f32 %v7384, %v1654
    %v7419 = vsel %vm753, %v7398, 0
    %v7422 = vsel %vm753, %v7399, 0
    %v7425 = vsel %vm753, %v7400, 0
    %v7428 = vsel %vm753, %v7401, 0
    %7430 = vmatprep.subr.mxu0 %v7403
    %7431 = vmatpush1.msra.mxu0 %v7402
    %7432 = vmatprep.subr.mxu0 %v7407
    %7433 = vmatpush1.msra.mxu0 %v7406
    %7434 = vmatprep.subr.mxu0 %v7411
    %7435 = vmatpush1.msra.mxu0 %v7410
    %7436 = vmatprep.subr.mxu0 %v7415
    %7437 = vmatpush1.msra.mxu0 %v7414
    %7438 = vmatprep.subr.mxu0 0.0
    %7439 = vmatpush1.msra.mxu0 0.0
    %7440 = vmatprep.subr.mxu0 0.0
    %7441 = vmatpush1.msra.mxu0 0.0
    %7442 = vmatprep.subr.mxu0 0.0
    %7443 = vmatpush1.msra.mxu0 0.0
    %7444 = vmatprep.subr.mxu0 0.0
    %7445 = vmatpush1.msra.mxu0 0.0
    %7446 = vmatprep.subr.mxu0 0.0
    %7447 = vmatpush1.msra.mxu0 0.0
    %7448 = vmatprep.subr.mxu0 0.0
    %7449 = vmatpush1.msra.mxu0 0.0
    %7450 = vmatprep.subr.mxu0 0.0
    %7451 = vmatpush1.msra.mxu0 0.0
    %7452 = vmatprep.subr.mxu0 0.0
    %7453 = vmatpush1.msra.mxu0 0.0
    %7454 = vmatprep.subr.mxu0 0.0
    %7455 = vmatpush1.msra.mxu0 0.0
    %7456 = vmatprep.subr.mxu0 0.0
    %7457 = vmatpush1.msra.mxu0 0.0
    %7458 = vmatprep.subr.mxu0 0.0
    %7459 = vmatpush1.msra.mxu0 0.0
    %7460 = vmatprep.subr.mxu0 0.0
    %7461 = vmatpush1.msra.mxu0 0.0
    %7462 = vmatprep.subr.mxu0 0.0
    %7463 = vmatpush1.msra.mxu0 0.0
    %7464 = vmatprep.subr.mxu0 0.0
    %7465 = vmatpush1.msra.mxu0 0.0
    %7466 = vmatprep.subr.mxu0 0.0
    %7467 = vmatpush1.msra.mxu0 0.0
    %7468 = vmatprep.subr.mxu0 0.0
    %7469 = vmatpush1.msra.mxu0 0.0
    %7470 = vmatprep.subr.mxu0 0.0
    %7471 = vmatpush1.msra.mxu0 0.0
    %7472 = vmatprep.subr.mxu0 0.0
    %7473 = vmatpush1.msra.mxu0 0.0
    %7474 = vmatprep.subr.mxu0 0.0
    %7475 = vmatpush1.msra.mxu0 0.0
    %7476 = vmatprep.subr.mxu0 0.0
    %7477 = vmatpush1.msra.mxu0 0.0
    %7478 = vmatprep.subr.mxu0 0.0
    %7479 = vmatpush1.msra.mxu0 0.0
    %7480 = vmatprep.subr.mxu0 0.0
    %7481 = vmatpush1.msra.mxu0 0.0
    %7482 = vmatprep.subr.mxu0 0.0
    %7483 = vmatpush1.msra.mxu0 0.0
    %7484 = vmatprep.subr.mxu0 0.0
    %7485 = vmatpush1.msra.mxu0 0.0
    %7486 = vmatprep.subr.mxu0 0.0
    %7487 = vmatpush1.msra.mxu0 0.0
    %7488 = vmatprep.subr.mxu0 0.0
    %7489 = vmatpush1.msra.mxu0 0.0
    %7490 = vmatprep.subr.mxu0 0.0
    %7491 = vmatpush1.msra.mxu0 0.0
    %7492 = vmatprep.subr.mxu0 0.0
    %7493 = vmatpush1.msra.mxu0 0.0
    %7494 = vmatprep.mubr.f32.mxu0 0.0
    %7495 = vmatmul.mubr.f32.gmra.mrb[0].mxu0 %v7419
    %v7496 = vpop.f32.mrb[0].mxu0
    %v7497 = vadd.f32 0.0, %v7496
    %v7498 = vpop.f32.mrb[0].mxu0
    %v7499 = vadd.f32 0.0, %v7498
    %7500 = vmatprep.mubr.f32.mxu0 0.0
    %7501 = vmatmul.mubr.f32.gmra.mrb[0].mxu0 %v7422
    %v7502 = vpop.f32.mrb[0].mxu0
    %v7503 = vadd.f32 0.0, %v7502
    %v7504 = vpop.f32.mrb[0].mxu0
    %v7505 = vadd.f32 0.0, %v7504
    %7506 = vmatprep.mubr.f32.mxu0 0.0
    %7507 = vmatmul.mubr.f32.gmra.mrb[0].mxu0 %v7425
    %v7508 = vpop.f32.mrb[0].mxu0
    %v7509 = vadd.f32 0.0, %v7508
    %v7510 = vpop.f32.mrb[0].mxu0
    %v7511 = vadd.f32 0.0, %v7510
    %7512 = vmatprep.mubr.f32.mxu0 0.0
    %7513 = vmatmul.mubr.f32.gmra.mrb[0].mxu0 %v7428
    %v7514 = vpop.f32.mrb[0].mxu0
    %v7515 = vadd.f32 0.0, %v7514
    %v7516 = vpop.f32.mrb[0].mxu0
    %v7517 = vadd.f32 0.0, %v7516
    %7518 = vdwg.mxu0
    %7519 = vmatprep.subr.mxu0 %v7405
    %7520 = vmatpush1.msra.mxu0 %v7404
    %7521 = vmatprep.subr.mxu0 %v7409
    %7522 = vmatpush1.msra.mxu0 %v7408
    %7523 = vmatprep.subr.mxu0 %v7413
    %7524 = vmatpush1.msra.mxu0 %v7412
    %7525 = vmatprep.subr.mxu0 %v7417
    %7526 = vmatpush1.msra.mxu0 %v7416
    %7527 = vmatprep.subr.mxu0 0.0
    %7528 = vmatpush1.msra.mxu0 0.0
    %7529 = vmatprep.subr.mxu0 0.0
    %7530 = vmatpush1.msra.mxu0 0.0
    %7531 = vmatprep.subr.mxu0 0.0
    %7532 = vmatpush1.msra.mxu0 0.0
    %7533 = vmatprep.subr.mxu0 0.0
    %7534 = vmatpush1.msra.mxu0 0.0
    %7535 = vmatprep.subr.mxu0 0.0
    %7536 = vmatpush1.msra.mxu0 0.0
    %7537 = vmatprep.subr.mxu0 0.0
    %7538 = vmatpush1.msra.mxu0 0.0
    %7539 = vmatprep.subr.mxu0 0.0
    %7540 = vmatpush1.msra.mxu0 0.0
    %7541 = vmatprep.subr.mxu0 0.0
    %7542 = vmatpush1.msra.mxu0 0.0
    %7543 = vmatprep.subr.mxu0 0.0
    %7544 = vmatpush1.msra.mxu0 0.0
    %7545 = vmatprep.subr.mxu0 0.0
    %7546 = vmatpush1.msra.mxu0 0.0
    %7547 = vmatprep.subr.mxu0 0.0
    %7548 = vmatpush1.msra.mxu0 0.0
    %7549 = vmatprep.subr.mxu0 0.0
    %7550 = vmatpush1.msra.mxu0 0.0
    %7551 = vmatprep.subr.mxu0 0.0
    %7552 = vmatpush1.msra.mxu0 0.0
    %7553 = vmatprep.subr.mxu0 0.0
    %7554 = vmatpush1.msra.mxu0 0.0
    %7555 = vmatprep.subr.mxu0 0.0
    %7556 = vmatpush1.msra.mxu0 0.0
    %7557 = vmatprep.subr.mxu0 0.0
    %7558 = vmatpush1.msra.mxu0 0.0
    %7559 = vmatprep.subr.mxu0 0.0
    %7560 = vmatpush1.msra.mxu0 0.0
    %7561 = vmatprep.subr.mxu0 0.0
    %7562 = vmatpush1.msra.mxu0 0.0
    %7563 = vmatprep.subr.mxu0 0.0
    %7564 = vmatpush1.msra.mxu0 0.0
    %7565 = vmatprep.subr.mxu0 0.0
    %7566 = vmatpush1.msra.mxu0 0.0
    %7567 = vmatprep.subr.mxu0 0.0
    %7568 = vmatpush1.msra.mxu0 0.0
    %7569 = vmatprep.subr.mxu0 0.0
    %7570 = vmatpush1.msra.mxu0 0.0
    %7571 = vmatprep.subr.mxu0 0.0
    %7572 = vmatpush1.msra.mxu0 0.0
    %7573 = vmatprep.subr.mxu0 0.0
    %7574 = vmatpush1.msra.mxu0 0.0
    %7575 = vmatprep.subr.mxu0 0.0
    %7576 = vmatpush1.msra.mxu0 0.0
    %7577 = vmatprep.subr.mxu0 0.0
    %7578 = vmatpush1.msra.mxu0 0.0
    %7579 = vmatprep.subr.mxu0 0.0
    %7580 = vmatpush1.msra.mxu0 0.0
    %7581 = vmatprep.subr.mxu0 0.0
    %7582 = vmatpush1.msra.mxu0 0.0
    %7583 = vmatprep.mubr.f32.mxu0 0.0
    %7584 = vmatmul.mubr.f32.gmra.mrb[0].mxu0 %v7419
    %v7585 = vpop.f32.mrb[0].mxu0
    %v7586 = vadd.f32 0.0, %v7585
    %v7587 = vpop.f32.mrb[0].mxu0
    %v7588 = vadd.f32 0.0, %v7587
    %7589 = vmatprep.mubr.f32.mxu0 0.0
    %7590 = vmatmul.mubr.f32.gmra.mrb[0].mxu0 %v7422
    %v7591 = vpop.f32.mrb[0].mxu0
    %v7592 = vadd.f32 0.0, %v7591
    %v7593 = vpop.f32.mrb[0].mxu0
    %v7594 = vadd.f32 0.0, %v7593
    %7595 = vmatprep.mubr.f32.mxu0 0.0
    %7596 = vmatmul.mubr.f32.gmra.mrb[0].mxu0 %v7425
    %v7597 = vpop.f32.mrb[0].mxu0
    %v7598 = vadd.f32 0.0, %v7597
    %v7599 = vpop.f32.mrb[0].mxu0
    %v7600 = vadd.f32 0.0, %v7599
    %7601 = vmatprep.mubr.f32.mxu0 0.0
    %7602 = vmatmul.mubr.f32.gmra.mrb[0].mxu0 %v7428
    %v7603 = vpop.f32.mrb[0].mxu0
    %v7604 = vadd.f32 0.0, %v7603
    %v7605 = vpop.f32.mrb[0].mxu0
    %v7606 = vadd.f32 0.0, %v7605
    %7607 = vdwg.mxu0
    %v7608 = vadd.f32 %v7333, %v7497
    %v7609 = vadd.f32 %v7334, %v7499
    %v7610 = vadd.f32 %v7335, %v7586
    %v7611 = vadd.f32 %v7336, %v7588
    %v7612 = vadd.f32 %v7337, %v7503
    %v7613 = vadd.f32 %v7338, %v7505
    %v7614 = vadd.f32 %v7339, %v7592
    %v7615 = vadd.f32 %v7340, %v7594
    %v7616 = vadd.f32 %v7341, %v7509
    %v7617 = vadd.f32 %v7342, %v7511
    %v7618 = vadd.f32 %v7343, %v7598
    %v7619 = vadd.f32 %v7344, %v7600
    %v7620 = vadd.f32 %v7345, %v7515
    %v7621 = vadd.f32 %v7346, %v7517
    %v7622 = vadd.f32 %v7347, %v7604
    %v7623 = vadd.f32 %v7348, %v7606
    %7624 = vrot.lane.b32.xlu0 %v6522, 1
    %v7625 = vpop.permute.xlu0 %7624
    %7626 = vrot.lane.b32.xlu0 %v6526, 1
    %v7627 = vpop.permute.xlu0 %7626
    %7628 = vrot.lane.b32.xlu0 %v6530, 1
    %v7629 = vpop.permute.xlu0 %7628
    %7630 = vrot.lane.b32.xlu0 %v6534, 1
    %v7631 = vpop.permute.xlu0 %7630
    %7632 = vrot.lane.b32.xlu0 %v6523, 1
    %v7633 = vpop.permute.xlu0 %7632
    %7634 = vrot.lane.b32.xlu0 %v6527, 1
    %v7635 = vpop.permute.xlu0 %7634
    %7636 = vrot.lane.b32.xlu0 %v6531, 1
    %v7637 = vpop.permute.xlu0 %7636
    %7638 = vrot.lane.b32.xlu0 %v6535, 1
    %v7639 = vpop.permute.xlu0 %7638
    %7640 = vrot.lane.b32.xlu0 %v6524, 1
    %v7641 = vpop.permute.xlu0 %7640
    %7642 = vrot.lane.b32.xlu0 %v6528, 1
    %v7643 = vpop.permute.xlu0 %7642
    %7644 = vrot.lane.b32.xlu0 %v6532, 1
    %v7645 = vpop.permute.xlu0 %7644
    %7646 = vrot.lane.b32.xlu0 %v6536, 1
    %v7647 = vpop.permute.xlu0 %7646
    %7648 = vrot.lane.b32.xlu0 %v6525, 1
    %v7649 = vpop.permute.xlu0 %7648
    %7650 = vrot.lane.b32.xlu0 %v6529, 1
    %v7651 = vpop.permute.xlu0 %7650
    %7652 = vrot.lane.b32.xlu0 %v6533, 1
    %v7653 = vpop.permute.xlu0 %7652
    %7654 = vrot.lane.b32.xlu0 %v6537, 1
    %v7655 = vpop.permute.xlu0 %7654
    %v7656 = vsel %vm1913, %v7641, %v7649
    %v7657 = vsel %vm1913, %v7643, %v7651
    %v7658 = vsel %vm1913, %v7645, %v7653
    %v7659 = vsel %vm1913, %v7647, %v7655
    %v7660 = vsel %vm1913, %v7633, %v7641
    %v7661 = vsel %vm1913, %v7635, %v7643
    %v7662 = vsel %vm1913, %v7637, %v7645
    %v7663 = vsel %vm1913, %v7639, %v7647
    %v7664 = vsel %vm1913, %v7625, %v7633
    %v7665 = vsel %vm1913, %v7627, %v7635
    %v7666 = vsel %vm1913, %v7629, %v7637
    %v7667 = vsel %vm1913, %v7631, %v7639
    %v7668 = vsel %vm1913, %v7649, %v7625
    %v7669 = vsel %vm1913, %v7651, %v7627
    %v7670 = vsel %vm1913, %v7653, %v7629
    %v7671 = vsel %vm1913, %v7655, %v7631
    %s7672 = scalar_lea.vmem [#allocation2], 672
    %v7673 = vld [vmem:[%s7672] sm:$0xff]
    %v7674 = vld [vmem:[%s7672 + $0x8] sm:$0xff]
    %v7675 = vld [vmem:[%s7672 + $0x10] sm:$0xff]
    %v7676 = vld [vmem:[%s7672 + $0x18] sm:$0xff]
    %v7677 = vmul.f32 %v7668, %v1941
    %v7678 = vmul.f32 %v7664, %v1945
    %v7679 = vmul.f32 %v7660, %v1949
    %v7680 = vmul.f32 %v7656, %v1953
    %v7681 = vmul.f32 %v7669, %v1941
    %v7682 = vmul.f32 %v7665, %v1945
    %v7683 = vmul.f32 %v7661, %v1949
    %v7684 = vmul.f32 %v7657, %v1953
    %v7685 = vmul.f32 %v7670, %v1941
    %v7686 = vmul.f32 %v7666, %v1945
    %v7687 = vmul.f32 %v7662, %v1949
    %v7688 = vmul.f32 %v7658, %v1953
    %v7689 = vmul.f32 %v7671, %v1941
    %v7690 = vmul.f32 %v7667, %v1945
    %v7691 = vmul.f32 %v7663, %v1949
    %v7692 = vmul.f32 %v7659, %v1953
    %v7694 = vsel %vm753, %v7673, 0
    %v7697 = vsel %vm753, %v7674, 0
    %v7700 = vsel %vm753, %v7675, 0
    %v7703 = vsel %vm753, %v7676, 0
    %7705 = vmatprep.subr.mxu0 %v7678
    %7706 = vmatpush1.msra.mxu0 %v7677
    %7707 = vmatprep.subr.mxu0 %v7682
    %7708 = vmatpush1.msra.mxu0 %v7681
    %7709 = vmatprep.subr.mxu0 %v7686
    %7710 = vmatpush1.msra.mxu0 %v7685
    %7711 = vmatprep.subr.mxu0 %v7690
    %7712 = vmatpush1.msra.mxu0 %v7689
    %7713 = vmatprep.subr.mxu0 0.0
    %7714 = vmatpush1.msra.mxu0 0.0
    %7715 = vmatprep.subr.mxu0 0.0
    %7716 = vmatpush1.msra.mxu0 0.0
    %7717 = vmatprep.subr.mxu0 0.0
    %7718 = vmatpush1.msra.mxu0 0.0
    %7719 = vmatprep.subr.mxu0 0.0
    %7720 = vmatpush1.msra.mxu0 0.0
    %7721 = vmatprep.subr.mxu0 0.0
    %7722 = vmatpush1.msra.mxu0 0.0
    %7723 = vmatprep.subr.mxu0 0.0
    %7724 = vmatpush1.msra.mxu0 0.0
    %7725 = vmatprep.subr.mxu0 0.0
    %7726 = vmatpush1.msra.mxu0 0.0
    %7727 = vmatprep.subr.mxu0 0.0
    %7728 = vmatpush1.msra.mxu0 0.0
    %7729 = vmatprep.subr.mxu0 0.0
    %7730 = vmatpush1.msra.mxu0 0.0
    %7731 = vmatprep.subr.mxu0 0.0
    %7732 = vmatpush1.msra.mxu0 0.0
    %7733 = vmatprep.subr.mxu0 0.0
    %7734 = vmatpush1.msra.mxu0 0.0
    %7735 = vmatprep.subr.mxu0 0.0
    %7736 = vmatpush1.msra.mxu0 0.0
    %7737 = vmatprep.subr.mxu0 0.0
    %7738 = vmatpush1.msra.mxu0 0.0
    %7739 = vmatprep.subr.mxu0 0.0
    %7740 = vmatpush1.msra.mxu0 0.0
    %7741 = vmatprep.subr.mxu0 0.0
    %7742 = vmatpush1.msra.mxu0 0.0
    %7743 = vmatprep.subr.mxu0 0.0
    %7744 = vmatpush1.msra.mxu0 0.0
    %7745 = vmatprep.subr.mxu0 0.0
    %7746 = vmatpush1.msra.mxu0 0.0
    %7747 = vmatprep.subr.mxu0 0.0
    %7748 = vmatpush1.msra.mxu0 0.0
    %7749 = vmatprep.subr.mxu0 0.0
    %7750 = vmatpush1.msra.mxu0 0.0
    %7751 = vmatprep.subr.mxu0 0.0
    %7752 = vmatpush1.msra.mxu0 0.0
    %7753 = vmatprep.subr.mxu0 0.0
    %7754 = vmatpush1.msra.mxu0 0.0
    %7755 = vmatprep.subr.mxu0 0.0
    %7756 = vmatpush1.msra.mxu0 0.0
    %7757 = vmatprep.subr.mxu0 0.0
    %7758 = vmatpush1.msra.mxu0 0.0
    %7759 = vmatprep.subr.mxu0 0.0
    %7760 = vmatpush1.msra.mxu0 0.0
    %7761 = vmatprep.subr.mxu0 0.0
    %7762 = vmatpush1.msra.mxu0 0.0
    %7763 = vmatprep.subr.mxu0 0.0
    %7764 = vmatpush1.msra.mxu0 0.0
    %7765 = vmatprep.subr.mxu0 0.0
    %7766 = vmatpush1.msra.mxu0 0.0
    %7767 = vmatprep.subr.mxu0 0.0
    %7768 = vmatpush1.msra.mxu0 0.0
    %7769 = vmatprep.mubr.f32.mxu0 0.0
    %7770 = vmatmul.mubr.f32.gmra.mrb[0].mxu0 %v7694
    %v7771 = vpop.f32.mrb[0].mxu0
    %v7772 = vadd.f32 0.0, %v7771
    %v7773 = vpop.f32.mrb[0].mxu0
    %v7774 = vadd.f32 0.0, %v7773
    %7775 = vmatprep.mubr.f32.mxu0 0.0
    %7776 = vmatmul.mubr.f32.gmra.mrb[0].mxu0 %v7697
    %v7777 = vpop.f32.mrb[0].mxu0
    %v7778 = vadd.f32 0.0, %v7777
    %v7779 = vpop.f32.mrb[0].mxu0
    %v7780 = vadd.f32 0.0, %v7779
    %7781 = vmatprep.mubr.f32.mxu0 0.0
    %7782 = vmatmul.mubr.f32.gmra.mrb[0].mxu0 %v7700
    %v7783 = vpop.f32.mrb[0].mxu0
    %v7784 = vadd.f32 0.0, %v7783
    %v7785 = vpop.f32.mrb[0].mxu0
    %v7786 = vadd.f32 0.0, %v7785
    %7787 = vmatprep.mubr.f32.mxu0 0.0
    %7788 = vmatmul.mubr.f32.gmra.mrb[0].mxu0 %v7703
    %v7789 = vpop.f32.mrb[0].mxu0
    %v7790 = vadd.f32 0.0, %v7789
    %v7791 = vpop.f32.mrb[0].mxu0
    %v7792 = vadd.f32 0.0, %v7791
    %7793 = vdwg.mxu0
    %7794 = vmatprep.subr.mxu0 %v7680
    %7795 = vmatpush1.msra.mxu0 %v7679
    %7796 = vmatprep.subr.mxu0 %v7684
    %7797 = vmatpush1.msra.mxu0 %v7683
    %7798 = vmatprep.subr.mxu0 %v7688
    %7799 = vmatpush1.msra.mxu0 %v7687
    %7800 = vmatprep.subr.mxu0 %v7692
    %7801 = vmatpush1.msra.mxu0 %v7691
    %7802 = vmatprep.subr.mxu0 0.0
    %7803 = vmatpush1.msra.mxu0 0.0
    %7804 = vmatprep.subr.mxu0 0.0
    %7805 = vmatpush1.msra.mxu0 0.0
    %7806 = vmatprep.subr.mxu0 0.0
    %7807 = vmatpush1.msra.mxu0 0.0
    %7808 = vmatprep.subr.mxu0 0.0
    %7809 = vmatpush1.msra.mxu0 0.0
    %7810 = vmatprep.subr.mxu0 0.0
    %7811 = vmatpush1.msra.mxu0 0.0
    %7812 = vmatprep.subr.mxu0 0.0
    %7813 = vmatpush1.msra.mxu0 0.0
    %7814 = vmatprep.subr.mxu0 0.0
    %7815 = vmatpush1.msra.mxu0 0.0
    %7816 = vmatprep.subr.mxu0 0.0
    %7817 = vmatpush1.msra.mxu0 0.0
    %7818 = vmatprep.subr.mxu0 0.0
    %7819 = vmatpush1.msra.mxu0 0.0
    %7820 = vmatprep.subr.mxu0 0.0
    %7821 = vmatpush1.msra.mxu0 0.0
    %7822 = vmatprep.subr.mxu0 0.0
    %7823 = vmatpush1.msra.mxu0 0.0
    %7824 = vmatprep.subr.mxu0 0.0
    %7825 = vmatpush1.msra.mxu0 0.0
    %7826 = vmatprep.subr.mxu0 0.0
    %7827 = vmatpush1.msra.mxu0 0.0
    %7828 = vmatprep.subr.mxu0 0.0
    %7829 = vmatpush1.msra.mxu0 0.0
    %7830 = vmatprep.subr.mxu0 0.0
    %7831 = vmatpush1.msra.mxu0 0.0
    %7832 = vmatprep.subr.mxu0 0.0
    %7833 = vmatpush1.msra.mxu0 0.0
    %7834 = vmatprep.subr.mxu0 0.0
    %7835 = vmatpush1.msra.mxu0 0.0
    %7836 = vmatprep.subr.mxu0 0.0
    %7837 = vmatpush1.msra.mxu0 0.0
    %7838 = vmatprep.subr.mxu0 0.0
    %7839 = vmatpush1.msra.mxu0 0.0
    %7840 = vmatprep.subr.mxu0 0.0
    %7841 = vmatpush1.msra.mxu0 0.0
    %7842 = vmatprep.subr.mxu0 0.0
    %7843 = vmatpush1.msra.mxu0 0.0
    %7844 = vmatprep.subr.mxu0 0.0
    %7845 = vmatpush1.msra.mxu0 0.0
    %7846 = vmatprep.subr.mxu0 0.0
    %7847 = vmatpush1.msra.mxu0 0.0
    %7848 = vmatprep.subr.mxu0 0.0
    %7849 = vmatpush1.msra.mxu0 0.0
    %7850 = vmatprep.subr.mxu0 0.0
    %7851 = vmatpush1.msra.mxu0 0.0
    %7852 = vmatprep.subr.mxu0 0.0
    %7853 = vmatpush1.msra.mxu0 0.0
    %7854 = vmatprep.subr.mxu0 0.0
    %7855 = vmatpush1.msra.mxu0 0.0
    %7856 = vmatprep.subr.mxu0 0.0
    %7857 = vmatpush1.msra.mxu0 0.0
    %7858 = vmatprep.mubr.f32.mxu0 0.0
    %7859 = vmatmul.mubr.f32.gmra.mrb[0].mxu0 %v7694
    %v7860 = vpop.f32.mrb[0].mxu0
    %v7861 = vadd.f32 0.0, %v7860
    %v7862 = vpop.f32.mrb[0].mxu0
    %v7863 = vadd.f32 0.0, %v7862
    %7864 = vmatprep.mubr.f32.mxu0 0.0
    %7865 = vmatmul.mubr.f32.gmra.mrb[0].mxu0 %v7697
    %v7866 = vpop.f32.mrb[0].mxu0
    %v7867 = vadd.f32 0.0, %v7866
    %v7868 = vpop.f32.mrb[0].mxu0
    %v7869 = vadd.f32 0.0, %v7868
    %7870 = vmatprep.mubr.f32.mxu0 0.0
    %7871 = vmatmul.mubr.f32.gmra.mrb[0].mxu0 %v7700
    %v7872 = vpop.f32.mrb[0].mxu0
    %v7873 = vadd.f32 0.0, %v7872
    %v7874 = vpop.f32.mrb[0].mxu0
    %v7875 = vadd.f32 0.0, %v7874
    %7876 = vmatprep.mubr.f32.mxu0 0.0
    %7877 = vmatmul.mubr.f32.gmra.mrb[0].mxu0 %v7703
    %v7878 = vpop.f32.mrb[0].mxu0
    %v7879 = vadd.f32 0.0, %v7878
    %v7880 = vpop.f32.mrb[0].mxu0
    %v7881 = vadd.f32 0.0, %v7880
    %7882 = vdwg.mxu0
    %v7883 = vadd.f32 %v7608, %v7772
    %v7884 = vadd.f32 %v7609, %v7774
    %v7885 = vadd.f32 %v7610, %v7861
    %v7886 = vadd.f32 %v7611, %v7863
    %v7887 = vadd.f32 %v7612, %v7778
    %v7888 = vadd.f32 %v7613, %v7780
    %v7889 = vadd.f32 %v7614, %v7867
    %v7890 = vadd.f32 %v7615, %v7869
    %v7891 = vadd.f32 %v7616, %v7784
    %v7892 = vadd.f32 %v7617, %v7786
    %v7893 = vadd.f32 %v7618, %v7873
    %v7894 = vadd.f32 %v7619, %v7875
    %v7895 = vadd.f32 %v7620, %v7790
    %v7896 = vadd.f32 %v7621, %v7792
    %v7897 = vadd.f32 %v7622, %v7879
    %v7898 = vadd.f32 %v7623, %v7881
    %s7899 = scalar_lea.vmem [#allocation2], 704
    %v7900 = vld [vmem:[%s7899] sm:$0xff]
    %v7901 = vld [vmem:[%s7899 + $0x8] sm:$0xff]
    %v7902 = vld [vmem:[%s7899 + $0x10] sm:$0xff]
    %v7903 = vld [vmem:[%s7899 + $0x18] sm:$0xff]
    %v7904 = vmul.f32 %v6522, %v2191
    %v7905 = vmul.f32 %v6523, %v2195
    %v7906 = vmul.f32 %v6524, %v2199
    %v7907 = vmul.f32 %v6525, %v2203
    %v7908 = vmul.f32 %v6526, %v2191
    %v7909 = vmul.f32 %v6527, %v2195
    %v7910 = vmul.f32 %v6528, %v2199
    %v7911 = vmul.f32 %v6529, %v2203
    %v7912 = vmul.f32 %v6530, %v2191
    %v7913 = vmul.f32 %v6531, %v2195
    %v7914 = vmul.f32 %v6532, %v2199
    %v7915 = vmul.f32 %v6533, %v2203
    %v7916 = vmul.f32 %v6534, %v2191
    %v7917 = vmul.f32 %v6535, %v2195
    %v7918 = vmul.f32 %v6536, %v2199
    %v7919 = vmul.f32 %v6537, %v2203
    %v7921 = vsel %vm753, %v7900, 0
    %v7924 = vsel %vm753, %v7901, 0
    %v7927 = vsel %vm753, %v7902, 0
    %v7930 = vsel %vm753, %v7903, 0
    %7932 = vmatprep.subr.mxu0 %v7905
    %7933 = vmatpush1.msra.mxu0 %v7904
    %7934 = vmatprep.subr.mxu0 %v7909
    %7935 = vmatpush1.msra.mxu0 %v7908
    %7936 = vmatprep.subr.mxu0 %v7913
    %7937 = vmatpush1.msra.mxu0 %v7912
    %7938 = vmatprep.subr.mxu0 %v7917
    %7939 = vmatpush1.msra.mxu0 %v7916
    %7940 = vmatprep.subr.mxu0 0.0
    %7941 = vmatpush1.msra.mxu0 0.0
    %7942 = vmatprep.subr.mxu0 0.0
    %7943 = vmatpush1.msra.mxu0 0.0
    %7944 = vmatprep.subr.mxu0 0.0
    %7945 = vmatpush1.msra.mxu0 0.0
    %7946 = vmatprep.subr.mxu0 0.0
    %7947 = vmatpush1.msra.mxu0 0.0
    %7948 = vmatprep.subr.mxu0 0.0
    %7949 = vmatpush1.msra.mxu0 0.0
    %7950 = vmatprep.subr.mxu0 0.0
    %7951 = vmatpush1.msra.mxu0 0.0
    %7952 = vmatprep.subr.mxu0 0.0
    %7953 = vmatpush1.msra.mxu0 0.0
    %7954 = vmatprep.subr.mxu0 0.0
    %7955 = vmatpush1.msra.mxu0 0.0
    %7956 = vmatprep.subr.mxu0 0.0
    %7957 = vmatpush1.msra.mxu0 0.0
    %7958 = vmatprep.subr.mxu0 0.0
    %7959 = vmatpush1.msra.mxu0 0.0
    %7960 = vmatprep.subr.mxu0 0.0
    %7961 = vmatpush1.msra.mxu0 0.0
    %7962 = vmatprep.subr.mxu0 0.0
    %7963 = vmatpush1.msra.mxu0 0.0
    %7964 = vmatprep.subr.mxu0 0.0
    %7965 = vmatpush1.msra.mxu0 0.0
    %7966 = vmatprep.subr.mxu0 0.0
    %7967 = vmatpush1.msra.mxu0 0.0
    %7968 = vmatprep.subr.mxu0 0.0
    %7969 = vmatpush1.msra.mxu0 0.0
    %7970 = vmatprep.subr.mxu0 0.0
    %7971 = vmatpush1.msra.mxu0 0.0
    %7972 = vmatprep.subr.mxu0 0.0
    %7973 = vmatpush1.msra.mxu0 0.0
    %7974 = vmatprep.subr.mxu0 0.0
    %7975 = vmatpush1.msra.mxu0 0.0
    %7976 = vmatprep.subr.mxu0 0.0
    %7977 = vmatpush1.msra.mxu0 0.0
    %7978 = vmatprep.subr.mxu0 0.0
    %7979 = vmatpush1.msra.mxu0 0.0
    %7980 = vmatprep.subr.mxu0 0.0
    %7981 = vmatpush1.msra.mxu0 0.0
    %7982 = vmatprep.subr.mxu0 0.0
    %7983 = vmatpush1.msra.mxu0 0.0
    %7984 = vmatprep.subr.mxu0 0.0
    %7985 = vmatpush1.msra.mxu0 0.0
    %7986 = vmatprep.subr.mxu0 0.0
    %7987 = vmatpush1.msra.mxu0 0.0
    %7988 = vmatprep.subr.mxu0 0.0
    %7989 = vmatpush1.msra.mxu0 0.0
    %7990 = vmatprep.subr.mxu0 0.0
    %7991 = vmatpush1.msra.mxu0 0.0
    %7992 = vmatprep.subr.mxu0 0.0
    %7993 = vmatpush1.msra.mxu0 0.0
    %7994 = vmatprep.subr.mxu0 0.0
    %7995 = vmatpush1.msra.mxu0 0.0
    %7996 = vmatprep.mubr.f32.mxu0 0.0
    %7997 = vmatmul.mubr.f32.gmra.mrb[0].mxu0 %v7921
    %v7998 = vpop.f32.mrb[0].mxu0
    %v7999 = vadd.f32 0.0, %v7998
    %v8000 = vpop.f32.mrb[0].mxu0
    %v8001 = vadd.f32 0.0, %v8000
    %8002 = vmatprep.mubr.f32.mxu0 0.0
    %8003 = vmatmul.mubr.f32.gmra.mrb[0].mxu0 %v7924
    %v8004 = vpop.f32.mrb[0].mxu0
    %v8005 = vadd.f32 0.0, %v8004
    %v8006 = vpop.f32.mrb[0].mxu0
    %v8007 = vadd.f32 0.0, %v8006
    %8008 = vmatprep.mubr.f32.mxu0 0.0
    %8009 = vmatmul.mubr.f32.gmra.mrb[0].mxu0 %v7927
    %v8010 = vpop.f32.mrb[0].mxu0
    %v8011 = vadd.f32 0.0, %v8010
    %v8012 = vpop.f32.mrb[0].mxu0
    %v8013 = vadd.f32 0.0, %v8012
    %8014 = vmatprep.mubr.f32.mxu0 0.0
    %8015 = vmatmul.mubr.f32.gmra.mrb[0].mxu0 %v7930
    %v8016 = vpop.f32.mrb[0].mxu0
    %v8017 = vadd.f32 0.0, %v8016
    %v8018 = vpop.f32.mrb[0].mxu0
    %v8019 = vadd.f32 0.0, %v8018
    %8020 = vdwg.mxu0
    %8021 = vmatprep.subr.mxu0 %v7907
    %8022 = vmatpush1.msra.mxu0 %v7906
    %8023 = vmatprep.subr.mxu0 %v7911
    %8024 = vmatpush1.msra.mxu0 %v7910
    %8025 = vmatprep.subr.mxu0 %v7915
    %8026 = vmatpush1.msra.mxu0 %v7914
    %8027 = vmatprep.subr.mxu0 %v7919
    %8028 = vmatpush1.msra.mxu0 %v7918
    %8029 = vmatprep.subr.mxu0 0.0
    %8030 = vmatpush1.msra.mxu0 0.0
    %8031 = vmatprep.subr.mxu0 0.0
    %8032 = vmatpush1.msra.mxu0 0.0
    %8033 = vmatprep.subr.mxu0 0.0
    %8034 = vmatpush1.msra.mxu0 0.0
    %8035 = vmatprep.subr.mxu0 0.0
    %8036 = vmatpush1.msra.mxu0 0.0
    %8037 = vmatprep.subr.mxu0 0.0
    %8038 = vmatpush1.msra.mxu0 0.0
    %8039 = vmatprep.subr.mxu0 0.0
    %8040 = vmatpush1.msra.mxu0 0.0
    %8041 = vmatprep.subr.mxu0 0.0
    %8042 = vmatpush1.msra.mxu0 0.0
    %8043 = vmatprep.subr.mxu0 0.0
    %8044 = vmatpush1.msra.mxu0 0.0
    %8045 = vmatprep.subr.mxu0 0.0
    %8046 = vmatpush1.msra.mxu0 0.0
    %8047 = vmatprep.subr.mxu0 0.0
    %8048 = vmatpush1.msra.mxu0 0.0
    %8049 = vmatprep.subr.mxu0 0.0
    %8050 = vmatpush1.msra.mxu0 0.0
    %8051 = vmatprep.subr.mxu0 0.0
    %8052 = vmatpush1.msra.mxu0 0.0
    %8053 = vmatprep.subr.mxu0 0.0
    %8054 = vmatpush1.msra.mxu0 0.0
    %8055 = vmatprep.subr.mxu0 0.0
    %8056 = vmatpush1.msra.mxu0 0.0
    %8057 = vmatprep.subr.mxu0 0.0
    %8058 = vmatpush1.msra.mxu0 0.0
    %8059 = vmatprep.subr.mxu0 0.0
    %8060 = vmatpush1.msra.mxu0 0.0
    %8061 = vmatprep.subr.mxu0 0.0
    %8062 = vmatpush1.msra.mxu0 0.0
    %8063 = vmatprep.subr.mxu0 0.0
    %8064 = vmatpush1.msra.mxu0 0.0
    %8065 = vmatprep.subr.mxu0 0.0
    %8066 = vmatpush1.msra.mxu0 0.0
    %8067 = vmatprep.subr.mxu0 0.0
    %8068 = vmatpush1.msra.mxu0 0.0
    %8069 = vmatprep.subr.mxu0 0.0
    %8070 = vmatpush1.msra.mxu0 0.0
    %8071 = vmatprep.subr.mxu0 0.0
    %8072 = vmatpush1.msra.mxu0 0.0
    %8073 = vmatprep.subr.mxu0 0.0
    %8074 = vmatpush1.msra.mxu0 0.0
    %8075 = vmatprep.subr.mxu0 0.0
    %8076 = vmatpush1.msra.mxu0 0.0
    %8077 = vmatprep.subr.mxu0 0.0
    %8078 = vmatpush1.msra.mxu0 0.0
    %8079 = vmatprep.subr.mxu0 0.0
    %8080 = vmatpush1.msra.mxu0 0.0
    %8081 = vmatprep.subr.mxu0 0.0
    %8082 = vmatpush1.msra.mxu0 0.0
    %8083 = vmatprep.subr.mxu0 0.0
    %8084 = vmatpush1.msra.mxu0 0.0
    %8085 = vmatprep.mubr.f32.mxu0 0.0
    %8086 = vmatmul.mubr.f32.gmra.mrb[0].mxu0 %v7921
    %v8087 = vpop.f32.mrb[0].mxu0
    %v8088 = vadd.f32 0.0, %v8087
    %v8089 = vpop.f32.mrb[0].mxu0
    %v8090 = vadd.f32 0.0, %v8089
    %8091 = vmatprep.mubr.f32.mxu0 0.0
    %8092 = vmatmul.mubr.f32.gmra.mrb[0].mxu0 %v7924
    %v8093 = vpop.f32.mrb[0].mxu0
    %v8094 = vadd.f32 0.0, %v8093
    %v8095 = vpop.f32.mrb[0].mxu0
    %v8096 = vadd.f32 0.0, %v8095
    %8097 = vmatprep.mubr.f32.mxu0 0.0
    %8098 = vmatmul.mubr.f32.gmra.mrb[0].mxu0 %v7927
    %v8099 = vpop.f32.mrb[0].mxu0
    %v8100 = vadd.f32 0.0, %v8099
    %v8101 = vpop.f32.mrb[0].mxu0
    %v8102 = vadd.f32 0.0, %v8101
    %8103 = vmatprep.mubr.f32.mxu0 0.0
    %8104 = vmatmul.mubr.f32.gmra.mrb[0].mxu0 %v7930
    %v8105 = vpop.f32.mrb[0].mxu0
    %v8106 = vadd.f32 0.0, %v8105
    %v8107 = vpop.f32.mrb[0].mxu0
    %v8108 = vadd.f32 0.0, %v8107
    %8109 = vdwg.mxu0
    %v8110 = vadd.f32 %v7883, %v7999
    %v8111 = vadd.f32 %v7884, %v8001
    %v8112 = vadd.f32 %v7885, %v8088
    %v8113 = vadd.f32 %v7886, %v8090
    %v8114 = vadd.f32 %v7887, %v8005
    %v8115 = vadd.f32 %v7888, %v8007
    %v8116 = vadd.f32 %v7889, %v8094
    %v8117 = vadd.f32 %v7890, %v8096
    %v8118 = vadd.f32 %v7891, %v8011
    %v8119 = vadd.f32 %v7892, %v8013
    %v8120 = vadd.f32 %v7893, %v8100
    %v8121 = vadd.f32 %v7894, %v8102
    %v8122 = vadd.f32 %v7895, %v8017
    %v8123 = vadd.f32 %v7896, %v8019
    %v8124 = vadd.f32 %v7897, %v8106
    %v8125 = vadd.f32 %v7898, %v8108
    %8126 = vrot.lane.b32.xlu0 %v6522, 127
    %v8127 = vpop.permute.xlu0 %8126
    %8128 = vrot.lane.b32.xlu0 %v6526, 127
    %v8129 = vpop.permute.xlu0 %8128
    %8130 = vrot.lane.b32.xlu0 %v6530, 127
    %v8131 = vpop.permute.xlu0 %8130
    %8132 = vrot.lane.b32.xlu0 %v6534, 127
    %v8133 = vpop.permute.xlu0 %8132
    %8134 = vrot.lane.b32.xlu0 %v6523, 127
    %v8135 = vpop.permute.xlu0 %8134
    %8136 = vrot.lane.b32.xlu0 %v6527, 127
    %v8137 = vpop.permute.xlu0 %8136
    %8138 = vrot.lane.b32.xlu0 %v6531, 127
    %v8139 = vpop.permute.xlu0 %8138
    %8140 = vrot.lane.b32.xlu0 %v6535, 127
    %v8141 = vpop.permute.xlu0 %8140
    %8142 = vrot.lane.b32.xlu0 %v6524, 127
    %v8143 = vpop.permute.xlu0 %8142
    %8144 = vrot.lane.b32.xlu0 %v6528, 127
    %v8145 = vpop.permute.xlu0 %8144
    %8146 = vrot.lane.b32.xlu0 %v6532, 127
    %v8147 = vpop.permute.xlu0 %8146
    %8148 = vrot.lane.b32.xlu0 %v6536, 127
    %v8149 = vpop.permute.xlu0 %8148
    %8150 = vrot.lane.b32.xlu0 %v6525, 127
    %v8151 = vpop.permute.xlu0 %8150
    %8152 = vrot.lane.b32.xlu0 %v6529, 127
    %v8153 = vpop.permute.xlu0 %8152
    %8154 = vrot.lane.b32.xlu0 %v6533, 127
    %v8155 = vpop.permute.xlu0 %8154
    %8156 = vrot.lane.b32.xlu0 %v6537, 127
    %v8157 = vpop.permute.xlu0 %8156
    %v8158 = vsel %vm2462, %v8143, %v8151
    %v8159 = vsel %vm2462, %v8145, %v8153
    %v8160 = vsel %vm2462, %v8147, %v8155
    %v8161 = vsel %vm2462, %v8149, %v8157
    %v8162 = vsel %vm2462, %v8135, %v8143
    %v8163 = vsel %vm2462, %v8137, %v8145
    %v8164 = vsel %vm2462, %v8139, %v8147
    %v8165 = vsel %vm2462, %v8141, %v8149
    %v8166 = vsel %vm2462, %v8127, %v8135
    %v8167 = vsel %vm2462, %v8129, %v8137
    %v8168 = vsel %vm2462, %v8131, %v8139
    %v8169 = vsel %vm2462, %v8133, %v8141
    %v8170 = vsel %vm2462, %v8151, %v8127
    %v8171 = vsel %vm2462, %v8153, %v8129
    %v8172 = vsel %vm2462, %v8155, %v8131
    %v8173 = vsel %vm2462, %v8157, %v8133
    %s8174 = scalar_lea.vmem [#allocation2], 736
    %v8175 = vld [vmem:[%s8174] sm:$0xff]
    %v8176 = vld [vmem:[%s8174 + $0x8] sm:$0xff]
    %v8177 = vld [vmem:[%s8174 + $0x10] sm:$0xff]
    %v8178 = vld [vmem:[%s8174 + $0x18] sm:$0xff]
    %v8179 = vmul.f32 %v8166, %v2490
    %v8180 = vmul.f32 %v8162, %v2494
    %v8181 = vmul.f32 %v8158, %v2498
    %v8182 = vmul.f32 %v8170, %v2502
    %v8183 = vmul.f32 %v8167, %v2490
    %v8184 = vmul.f32 %v8163, %v2494
    %v8185 = vmul.f32 %v8159, %v2498
    %v8186 = vmul.f32 %v8171, %v2502
    %v8187 = vmul.f32 %v8168, %v2490
    %v8188 = vmul.f32 %v8164, %v2494
    %v8189 = vmul.f32 %v8160, %v2498
    %v8190 = vmul.f32 %v8172, %v2502
    %v8191 = vmul.f32 %v8169, %v2490
    %v8192 = vmul.f32 %v8165, %v2494
    %v8193 = vmul.f32 %v8161, %v2498
    %v8194 = vmul.f32 %v8173, %v2502
    %v8196 = vsel %vm753, %v8175, 0
    %v8199 = vsel %vm753, %v8176, 0
    %v8202 = vsel %vm753, %v8177, 0
    %v8205 = vsel %vm753, %v8178, 0
    %8207 = vmatprep.subr.mxu0 %v8180
    %8208 = vmatpush1.msra.mxu0 %v8179
    %8209 = vmatprep.subr.mxu0 %v8184
    %8210 = vmatpush1.msra.mxu0 %v8183
    %8211 = vmatprep.subr.mxu0 %v8188
    %8212 = vmatpush1.msra.mxu0 %v8187
    %8213 = vmatprep.subr.mxu0 %v8192
    %8214 = vmatpush1.msra.mxu0 %v8191
    %8215 = vmatprep.subr.mxu0 0.0
    %8216 = vmatpush1.msra.mxu0 0.0
    %8217 = vmatprep.subr.mxu0 0.0
    %8218 = vmatpush1.msra.mxu0 0.0
    %8219 = vmatprep.subr.mxu0 0.0
    %8220 = vmatpush1.msra.mxu0 0.0
    %8221 = vmatprep.subr.mxu0 0.0
    %8222 = vmatpush1.msra.mxu0 0.0
    %8223 = vmatprep.subr.mxu0 0.0
    %8224 = vmatpush1.msra.mxu0 0.0
    %8225 = vmatprep.subr.mxu0 0.0
    %8226 = vmatpush1.msra.mxu0 0.0
    %8227 = vmatprep.subr.mxu0 0.0
    %8228 = vmatpush1.msra.mxu0 0.0
    %8229 = vmatprep.subr.mxu0 0.0
    %8230 = vmatpush1.msra.mxu0 0.0
    %8231 = vmatprep.subr.mxu0 0.0
    %8232 = vmatpush1.msra.mxu0 0.0
    %8233 = vmatprep.subr.mxu0 0.0
    %8234 = vmatpush1.msra.mxu0 0.0
    %8235 = vmatprep.subr.mxu0 0.0
    %8236 = vmatpush1.msra.mxu0 0.0
    %8237 = vmatprep.subr.mxu0 0.0
    %8238 = vmatpush1.msra.mxu0 0.0
    %8239 = vmatprep.subr.mxu0 0.0
    %8240 = vmatpush1.msra.mxu0 0.0
    %8241 = vmatprep.subr.mxu0 0.0
    %8242 = vmatpush1.msra.mxu0 0.0
    %8243 = vmatprep.subr.mxu0 0.0
    %8244 = vmatpush1.msra.mxu0 0.0
    %8245 = vmatprep.subr.mxu0 0.0
    %8246 = vmatpush1.msra.mxu0 0.0
    %8247 = vmatprep.subr.mxu0 0.0
    %8248 = vmatpush1.msra.mxu0 0.0
    %8249 = vmatprep.subr.mxu0 0.0
    %8250 = vmatpush1.msra.mxu0 0.0
    %8251 = vmatprep.subr.mxu0 0.0
    %8252 = vmatpush1.msra.mxu0 0.0
    %8253 = vmatprep.subr.mxu0 0.0
    %8254 = vmatpush1.msra.mxu0 0.0
    %8255 = vmatprep.subr.mxu0 0.0
    %8256 = vmatpush1.msra.mxu0 0.0
    %8257 = vmatprep.subr.mxu0 0.0
    %8258 = vmatpush1.msra.mxu0 0.0
    %8259 = vmatprep.subr.mxu0 0.0
    %8260 = vmatpush1.msra.mxu0 0.0
    %8261 = vmatprep.subr.mxu0 0.0
    %8262 = vmatpush1.msra.mxu0 0.0
    %8263 = vmatprep.subr.mxu0 0.0
    %8264 = vmatpush1.msra.mxu0 0.0
    %8265 = vmatprep.subr.mxu0 0.0
    %8266 = vmatpush1.msra.mxu0 0.0
    %8267 = vmatprep.subr.mxu0 0.0
    %8268 = vmatpush1.msra.mxu0 0.0
    %8269 = vmatprep.subr.mxu0 0.0
    %8270 = vmatpush1.msra.mxu0 0.0
    %8271 = vmatprep.mubr.f32.mxu0 0.0
    %8272 = vmatmul.mubr.f32.gmra.mrb[0].mxu0 %v8196
    %v8273 = vpop.f32.mrb[0].mxu0
    %v8274 = vadd.f32 0.0, %v8273
    %v8275 = vpop.f32.mrb[0].mxu0
    %v8276 = vadd.f32 0.0, %v8275
    %8277 = vmatprep.mubr.f32.mxu0 0.0
    %8278 = vmatmul.mubr.f32.gmra.mrb[0].mxu0 %v8199
    %v8279 = vpop.f32.mrb[0].mxu0
    %v8280 = vadd.f32 0.0, %v8279
    %v8281 = vpop.f32.mrb[0].mxu0
    %v8282 = vadd.f32 0.0, %v8281
    %8283 = vmatprep.mubr.f32.mxu0 0.0
    %8284 = vmatmul.mubr.f32.gmra.mrb[0].mxu0 %v8202
    %v8285 = vpop.f32.mrb[0].mxu0
    %v8286 = vadd.f32 0.0, %v8285
    %v8287 = vpop.f32.mrb[0].mxu0
    %v8288 = vadd.f32 0.0, %v8287
    %8289 = vmatprep.mubr.f32.mxu0 0.0
    %8290 = vmatmul.mubr.f32.gmra.mrb[0].mxu0 %v8205
    %v8291 = vpop.f32.mrb[0].mxu0
    %v8292 = vadd.f32 0.0, %v8291
    %v8293 = vpop.f32.mrb[0].mxu0
    %v8294 = vadd.f32 0.0, %v8293
    %8295 = vdwg.mxu0
    %8296 = vmatprep.subr.mxu0 %v8182
    %8297 = vmatpush1.msra.mxu0 %v8181
    %8298 = vmatprep.subr.mxu0 %v8186
    %8299 = vmatpush1.msra.mxu0 %v8185
    %8300 = vmatprep.subr.mxu0 %v8190
    %8301 = vmatpush1.msra.mxu0 %v8189
    %8302 = vmatprep.subr.mxu0 %v8194
    %8303 = vmatpush1.msra.mxu0 %v8193
    %8304 = vmatprep.subr.mxu0 0.0
    %8305 = vmatpush1.msra.mxu0 0.0
    %8306 = vmatprep.subr.mxu0 0.0
    %8307 = vmatpush1.msra.mxu0 0.0
    %8308 = vmatprep.subr.mxu0 0.0
    %8309 = vmatpush1.msra.mxu0 0.0
    %8310 = vmatprep.subr.mxu0 0.0
    %8311 = vmatpush1.msra.mxu0 0.0
    %8312 = vmatprep.subr.mxu0 0.0
    %8313 = vmatpush1.msra.mxu0 0.0
    %8314 = vmatprep.subr.mxu0 0.0
    %8315 = vmatpush1.msra.mxu0 0.0
    %8316 = vmatprep.subr.mxu0 0.0
    %8317 = vmatpush1.msra.mxu0 0.0
    %8318 = vmatprep.subr.mxu0 0.0
    %8319 = vmatpush1.msra.mxu0 0.0
    %8320 = vmatprep.subr.mxu0 0.0
    %8321 = vmatpush1.msra.mxu0 0.0
    %8322 = vmatprep.subr.mxu0 0.0
    %8323 = vmatpush1.msra.mxu0 0.0
    %8324 = vmatprep.subr.mxu0 0.0
    %8325 = vmatpush1.msra.mxu0 0.0
    %8326 = vmatprep.subr.mxu0 0.0
    %8327 = vmatpush1.msra.mxu0 0.0
    %8328 = vmatprep.subr.mxu0 0.0
    %8329 = vmatpush1.msra.mxu0 0.0
    %8330 = vmatprep.subr.mxu0 0.0
    %8331 = vmatpush1.msra.mxu0 0.0
    %8332 = vmatprep.subr.mxu0 0.0
    %8333 = vmatpush1.msra.mxu0 0.0
    %8334 = vmatprep.subr.mxu0 0.0
    %8335 = vmatpush1.msra.mxu0 0.0
    %8336 = vmatprep.subr.mxu0 0.0
    %8337 = vmatpush1.msra.mxu0 0.0
    %8338 = vmatprep.subr.mxu0 0.0
    %8339 = vmatpush1.msra.mxu0 0.0
    %8340 = vmatprep.subr.mxu0 0.0
    %8341 = vmatpush1.msra.mxu0 0.0
    %8342 = vmatprep.subr.mxu0 0.0
    %8343 = vmatpush1.msra.mxu0 0.0
    %8344 = vmatprep.subr.mxu0 0.0
    %8345 = vmatpush1.msra.mxu0 0.0
    %8346 = vmatprep.subr.mxu0 0.0
    %8347 = vmatpush1.msra.mxu0 0.0
    %8348 = vmatprep.subr.mxu0 0.0
    %8349 = vmatpush1.msra.mxu0 0.0
    %8350 = vmatprep.subr.mxu0 0.0
    %8351 = vmatpush1.msra.mxu0 0.0
    %8352 = vmatprep.subr.mxu0 0.0
    %8353 = vmatpush1.msra.mxu0 0.0
    %8354 = vmatprep.subr.mxu0 0.0
    %8355 = vmatpush1.msra.mxu0 0.0
    %8356 = vmatprep.subr.mxu0 0.0
    %8357 = vmatpush1.msra.mxu0 0.0
    %8358 = vmatprep.subr.mxu0 0.0
    %8359 = vmatpush1.msra.mxu0 0.0
    %8360 = vmatprep.mubr.f32.mxu0 0.0
    %8361 = vmatmul.mubr.f32.gmra.mrb[0].mxu0 %v8196
    %v8362 = vpop.f32.mrb[0].mxu0
    %v8363 = vadd.f32 0.0, %v8362
    %v8364 = vpop.f32.mrb[0].mxu0
    %v8365 = vadd.f32 0.0, %v8364
    %8366 = vmatprep.mubr.f32.mxu0 0.0
    %8367 = vmatmul.mubr.f32.gmra.mrb[0].mxu0 %v8199
    %v8368 = vpop.f32.mrb[0].mxu0
    %v8369 = vadd.f32 0.0, %v8368
    %v8370 = vpop.f32.mrb[0].mxu0
    %v8371 = vadd.f32 0.0, %v8370
    %8372 = vmatprep.mubr.f32.mxu0 0.0
    %8373 = vmatmul.mubr.f32.gmra.mrb[0].mxu0 %v8202
    %v8374 = vpop.f32.mrb[0].mxu0
    %v8375 = vadd.f32 0.0, %v8374
    %v8376 = vpop.f32.mrb[0].mxu0
    %v8377 = vadd.f32 0.0, %v8376
    %8378 = vmatprep.mubr.f32.mxu0 0.0
    %8379 = vmatmul.mubr.f32.gmra.mrb[0].mxu0 %v8205
    %v8380 = vpop.f32.mrb[0].mxu0
    %v8381 = vadd.f32 0.0, %v8380
    %v8382 = vpop.f32.mrb[0].mxu0
    %v8383 = vadd.f32 0.0, %v8382
    %8384 = vdwg.mxu0
    %v8385 = vadd.f32 %v8110, %v8274
    %v8386 = vadd.f32 %v8111, %v8276
    %v8387 = vadd.f32 %v8112, %v8363
    %v8388 = vadd.f32 %v8113, %v8365
    %v8389 = vadd.f32 %v8114, %v8280
    %v8390 = vadd.f32 %v8115, %v8282
    %v8391 = vadd.f32 %v8116, %v8369
    %v8392 = vadd.f32 %v8117, %v8371
    %v8393 = vadd.f32 %v8118, %v8286
    %v8394 = vadd.f32 %v8119, %v8288
    %v8395 = vadd.f32 %v8120, %v8375
    %v8396 = vadd.f32 %v8121, %v8377
    %v8397 = vadd.f32 %v8122, %v8292
    %v8398 = vadd.f32 %v8123, %v8294
    %v8399 = vadd.f32 %v8124, %v8381
    %v8400 = vadd.f32 %v8125, %v8383
    %8401 = vrot.lane.b32.xlu0 %v6522, 113
    %v8402 = vpop.permute.xlu0 %8401
    %8403 = vrot.lane.b32.xlu0 %v6526, 113
    %v8404 = vpop.permute.xlu0 %8403
    %8405 = vrot.lane.b32.xlu0 %v6530, 113
    %v8406 = vpop.permute.xlu0 %8405
    %8407 = vrot.lane.b32.xlu0 %v6534, 113
    %v8408 = vpop.permute.xlu0 %8407
    %8409 = vrot.lane.b32.xlu0 %v6523, 113
    %v8410 = vpop.permute.xlu0 %8409
    %8411 = vrot.lane.b32.xlu0 %v6527, 113
    %v8412 = vpop.permute.xlu0 %8411
    %8413 = vrot.lane.b32.xlu0 %v6531, 113
    %v8414 = vpop.permute.xlu0 %8413
    %8415 = vrot.lane.b32.xlu0 %v6535, 113
    %v8416 = vpop.permute.xlu0 %8415
    %8417 = vrot.lane.b32.xlu0 %v6524, 113
    %v8418 = vpop.permute.xlu0 %8417
    %8419 = vrot.lane.b32.xlu0 %v6528, 113
    %v8420 = vpop.permute.xlu0 %8419
    %8421 = vrot.lane.b32.xlu0 %v6532, 113
    %v8422 = vpop.permute.xlu0 %8421
    %8423 = vrot.lane.b32.xlu0 %v6536, 113
    %v8424 = vpop.permute.xlu0 %8423
    %8425 = vrot.lane.b32.xlu0 %v6525, 113
    %v8426 = vpop.permute.xlu0 %8425
    %8427 = vrot.lane.b32.xlu0 %v6529, 113
    %v8428 = vpop.permute.xlu0 %8427
    %8429 = vrot.lane.b32.xlu0 %v6533, 113
    %v8430 = vpop.permute.xlu0 %8429
    %8431 = vrot.lane.b32.xlu0 %v6537, 113
    %v8432 = vpop.permute.xlu0 %8431
    %v8433 = vsel %vm2761, %v8418, %v8426
    %v8434 = vsel %vm2761, %v8420, %v8428
    %v8435 = vsel %vm2761, %v8422, %v8430
    %v8436 = vsel %vm2761, %v8424, %v8432
    %v8437 = vsel %vm2761, %v8410, %v8418
    %v8438 = vsel %vm2761, %v8412, %v8420
    %v8439 = vsel %vm2761, %v8414, %v8422
    %v8440 = vsel %vm2761, %v8416, %v8424
    %v8441 = vsel %vm2761, %v8402, %v8410
    %v8442 = vsel %vm2761, %v8404, %v8412
    %v8443 = vsel %vm2761, %v8406, %v8414
    %v8444 = vsel %vm2761, %v8408, %v8416
    %v8445 = vsel %vm2761, %v8426, %v8402
    %v8446 = vsel %vm2761, %v8428, %v8404
    %v8447 = vsel %vm2761, %v8430, %v8406
    %v8448 = vsel %vm2761, %v8432, %v8408
    %s8449 = scalar_lea.vmem [#allocation2], 768
    %v8450 = vld [vmem:[%s8449] sm:$0xff]
    %v8451 = vld [vmem:[%s8449 + $0x8] sm:$0xff]
    %v8452 = vld [vmem:[%s8449 + $0x10] sm:$0xff]
    %v8453 = vld [vmem:[%s8449 + $0x18] sm:$0xff]
    %v8454 = vmul.f32 %v8441, %v2789
    %v8455 = vmul.f32 %v8437, %v2793
    %v8456 = vmul.f32 %v8433, %v2797
    %v8457 = vmul.f32 %v8445, %v2801
    %v8458 = vmul.f32 %v8442, %v2789
    %v8459 = vmul.f32 %v8438, %v2793
    %v8460 = vmul.f32 %v8434, %v2797
    %v8461 = vmul.f32 %v8446, %v2801
    %v8462 = vmul.f32 %v8443, %v2789
    %v8463 = vmul.f32 %v8439, %v2793
    %v8464 = vmul.f32 %v8435, %v2797
    %v8465 = vmul.f32 %v8447, %v2801
    %v8466 = vmul.f32 %v8444, %v2789
    %v8467 = vmul.f32 %v8440, %v2793
    %v8468 = vmul.f32 %v8436, %v2797
    %v8469 = vmul.f32 %v8448, %v2801
    %v8471 = vsel %vm753, %v8450, 0
    %v8474 = vsel %vm753, %v8451, 0
    %v8477 = vsel %vm753, %v8452, 0
    %v8480 = vsel %vm753, %v8453, 0
    %8482 = vmatprep.subr.mxu0 %v8455
    %8483 = vmatpush1.msra.mxu0 %v8454
    %8484 = vmatprep.subr.mxu0 %v8459
    %8485 = vmatpush1.msra.mxu0 %v8458
    %8486 = vmatprep.subr.mxu0 %v8463
    %8487 = vmatpush1.msra.mxu0 %v8462
    %8488 = vmatprep.subr.mxu0 %v8467
    %8489 = vmatpush1.msra.mxu0 %v8466
    %8490 = vmatprep.subr.mxu0 0.0
    %8491 = vmatpush1.msra.mxu0 0.0
    %8492 = vmatprep.subr.mxu0 0.0
    %8493 = vmatpush1.msra.mxu0 0.0
    %8494 = vmatprep.subr.mxu0 0.0
    %8495 = vmatpush1.msra.mxu0 0.0
    %8496 = vmatprep.subr.mxu0 0.0
    %8497 = vmatpush1.msra.mxu0 0.0
    %8498 = vmatprep.subr.mxu0 0.0
    %8499 = vmatpush1.msra.mxu0 0.0
    %8500 = vmatprep.subr.mxu0 0.0
    %8501 = vmatpush1.msra.mxu0 0.0
    %8502 = vmatprep.subr.mxu0 0.0
    %8503 = vmatpush1.msra.mxu0 0.0
    %8504 = vmatprep.subr.mxu0 0.0
    %8505 = vmatpush1.msra.mxu0 0.0
    %8506 = vmatprep.subr.mxu0 0.0
    %8507 = vmatpush1.msra.mxu0 0.0
    %8508 = vmatprep.subr.mxu0 0.0
    %8509 = vmatpush1.msra.mxu0 0.0
    %8510 = vmatprep.subr.mxu0 0.0
    %8511 = vmatpush1.msra.mxu0 0.0
    %8512 = vmatprep.subr.mxu0 0.0
    %8513 = vmatpush1.msra.mxu0 0.0
    %8514 = vmatprep.subr.mxu0 0.0
    %8515 = vmatpush1.msra.mxu0 0.0
    %8516 = vmatprep.subr.mxu0 0.0
    %8517 = vmatpush1.msra.mxu0 0.0
    %8518 = vmatprep.subr.mxu0 0.0
    %8519 = vmatpush1.msra.mxu0 0.0
    %8520 = vmatprep.subr.mxu0 0.0
    %8521 = vmatpush1.msra.mxu0 0.0
    %8522 = vmatprep.subr.mxu0 0.0
    %8523 = vmatpush1.msra.mxu0 0.0
    %8524 = vmatprep.subr.mxu0 0.0
    %8525 = vmatpush1.msra.mxu0 0.0
    %8526 = vmatprep.subr.mxu0 0.0
    %8527 = vmatpush1.msra.mxu0 0.0
    %8528 = vmatprep.subr.mxu0 0.0
    %8529 = vmatpush1.msra.mxu0 0.0
    %8530 = vmatprep.subr.mxu0 0.0
    %8531 = vmatpush1.msra.mxu0 0.0
    %8532 = vmatprep.subr.mxu0 0.0
    %8533 = vmatpush1.msra.mxu0 0.0
    %8534 = vmatprep.subr.mxu0 0.0
    %8535 = vmatpush1.msra.mxu0 0.0
    %8536 = vmatprep.subr.mxu0 0.0
    %8537 = vmatpush1.msra.mxu0 0.0
    %8538 = vmatprep.subr.mxu0 0.0
    %8539 = vmatpush1.msra.mxu0 0.0
    %8540 = vmatprep.subr.mxu0 0.0
    %8541 = vmatpush1.msra.mxu0 0.0
    %8542 = vmatprep.subr.mxu0 0.0
    %8543 = vmatpush1.msra.mxu0 0.0
    %8544 = vmatprep.subr.mxu0 0.0
    %8545 = vmatpush1.msra.mxu0 0.0
    %8546 = vmatprep.mubr.f32.mxu0 0.0
    %8547 = vmatmul.mubr.f32.gmra.mrb[0].mxu0 %v8471
    %v8548 = vpop.f32.mrb[0].mxu0
    %v8549 = vadd.f32 0.0, %v8548
    %v8550 = vpop.f32.mrb[0].mxu0
    %v8551 = vadd.f32 0.0, %v8550
    %8552 = vmatprep.mubr.f32.mxu0 0.0
    %8553 = vmatmul.mubr.f32.gmra.mrb[0].mxu0 %v8474
    %v8554 = vpop.f32.mrb[0].mxu0
    %v8555 = vadd.f32 0.0, %v8554
    %v8556 = vpop.f32.mrb[0].mxu0
    %v8557 = vadd.f32 0.0, %v8556
    %8558 = vmatprep.mubr.f32.mxu0 0.0
    %8559 = vmatmul.mubr.f32.gmra.mrb[0].mxu0 %v8477
    %v8560 = vpop.f32.mrb[0].mxu0
    %v8561 = vadd.f32 0.0, %v8560
    %v8562 = vpop.f32.mrb[0].mxu0
    %v8563 = vadd.f32 0.0, %v8562
    %8564 = vmatprep.mubr.f32.mxu0 0.0
    %8565 = vmatmul.mubr.f32.gmra.mrb[0].mxu0 %v8480
    %v8566 = vpop.f32.mrb[0].mxu0
    %v8567 = vadd.f32 0.0, %v8566
    %v8568 = vpop.f32.mrb[0].mxu0
    %v8569 = vadd.f32 0.0, %v8568
    %8570 = vdwg.mxu0
    %8571 = vmatprep.subr.mxu0 %v8457
    %8572 = vmatpush1.msra.mxu0 %v8456
    %8573 = vmatprep.subr.mxu0 %v8461
    %8574 = vmatpush1.msra.mxu0 %v8460
    %8575 = vmatprep.subr.mxu0 %v8465
    %8576 = vmatpush1.msra.mxu0 %v8464
    %8577 = vmatprep.subr.mxu0 %v8469
    %8578 = vmatpush1.msra.mxu0 %v8468
    %8579 = vmatprep.subr.mxu0 0.0
    %8580 = vmatpush1.msra.mxu0 0.0
    %8581 = vmatprep.subr.mxu0 0.0
    %8582 = vmatpush1.msra.mxu0 0.0
    %8583 = vmatprep.subr.mxu0 0.0
    %8584 = vmatpush1.msra.mxu0 0.0
    %8585 = vmatprep.subr.mxu0 0.0
    %8586 = vmatpush1.msra.mxu0 0.0
    %8587 = vmatprep.subr.mxu0 0.0
    %8588 = vmatpush1.msra.mxu0 0.0
    %8589 = vmatprep.subr.mxu0 0.0
    %8590 = vmatpush1.msra.mxu0 0.0
    %8591 = vmatprep.subr.mxu0 0.0
    %8592 = vmatpush1.msra.mxu0 0.0
    %8593 = vmatprep.subr.mxu0 0.0
    %8594 = vmatpush1.msra.mxu0 0.0
    %8595 = vmatprep.subr.mxu0 0.0
    %8596 = vmatpush1.msra.mxu0 0.0
    %8597 = vmatprep.subr.mxu0 0.0
    %8598 = vmatpush1.msra.mxu0 0.0
    %8599 = vmatprep.subr.mxu0 0.0
    %8600 = vmatpush1.msra.mxu0 0.0
    %8601 = vmatprep.subr.mxu0 0.0
    %8602 = vmatpush1.msra.mxu0 0.0
    %8603 = vmatprep.subr.mxu0 0.0
    %8604 = vmatpush1.msra.mxu0 0.0
    %8605 = vmatprep.subr.mxu0 0.0
    %8606 = vmatpush1.msra.mxu0 0.0
    %8607 = vmatprep.subr.mxu0 0.0
    %8608 = vmatpush1.msra.mxu0 0.0
    %8609 = vmatprep.subr.mxu0 0.0
    %8610 = vmatpush1.msra.mxu0 0.0
    %8611 = vmatprep.subr.mxu0 0.0
    %8612 = vmatpush1.msra.mxu0 0.0
    %8613 = vmatprep.subr.mxu0 0.0
    %8614 = vmatpush1.msra.mxu0 0.0
    %8615 = vmatprep.subr.mxu0 0.0
    %8616 = vmatpush1.msra.mxu0 0.0
    %8617 = vmatprep.subr.mxu0 0.0
    %8618 = vmatpush1.msra.mxu0 0.0
    %8619 = vmatprep.subr.mxu0 0.0
    %8620 = vmatpush1.msra.mxu0 0.0
    %8621 = vmatprep.subr.mxu0 0.0
    %8622 = vmatpush1.msra.mxu0 0.0
    %8623 = vmatprep.subr.mxu0 0.0
    %8624 = vmatpush1.msra.mxu0 0.0
    %8625 = vmatprep.subr.mxu0 0.0
    %8626 = vmatpush1.msra.mxu0 0.0
    %8627 = vmatprep.subr.mxu0 0.0
    %8628 = vmatpush1.msra.mxu0 0.0
    %8629 = vmatprep.subr.mxu0 0.0
    %8630 = vmatpush1.msra.mxu0 0.0
    %8631 = vmatprep.subr.mxu0 0.0
    %8632 = vmatpush1.msra.mxu0 0.0
    %8633 = vmatprep.subr.mxu0 0.0
    %8634 = vmatpush1.msra.mxu0 0.0
    %8635 = vmatprep.mubr.f32.mxu0 0.0
    %8636 = vmatmul.mubr.f32.gmra.mrb[0].mxu0 %v8471
    %v8637 = vpop.f32.mrb[0].mxu0
    %v8638 = vadd.f32 0.0, %v8637
    %v8639 = vpop.f32.mrb[0].mxu0
    %v8640 = vadd.f32 0.0, %v8639
    %8641 = vmatprep.mubr.f32.mxu0 0.0
    %8642 = vmatmul.mubr.f32.gmra.mrb[0].mxu0 %v8474
    %v8643 = vpop.f32.mrb[0].mxu0
    %v8644 = vadd.f32 0.0, %v8643
    %v8645 = vpop.f32.mrb[0].mxu0
    %v8646 = vadd.f32 0.0, %v8645
    %8647 = vmatprep.mubr.f32.mxu0 0.0
    %8648 = vmatmul.mubr.f32.gmra.mrb[0].mxu0 %v8477
    %v8649 = vpop.f32.mrb[0].mxu0
    %v8650 = vadd.f32 0.0, %v8649
    %v8651 = vpop.f32.mrb[0].mxu0
    %v8652 = vadd.f32 0.0, %v8651
    %8653 = vmatprep.mubr.f32.mxu0 0.0
    %8654 = vmatmul.mubr.f32.gmra.mrb[0].mxu0 %v8480
    %v8655 = vpop.f32.mrb[0].mxu0
    %v8656 = vadd.f32 0.0, %v8655
    %v8657 = vpop.f32.mrb[0].mxu0
    %v8658 = vadd.f32 0.0, %v8657
    %8659 = vdwg.mxu0
    %v8660 = vadd.f32 %v8385, %v8549
    %v8661 = vadd.f32 %v8386, %v8551
    %v8662 = vadd.f32 %v8387, %v8638
    %v8663 = vadd.f32 %v8388, %v8640
    %v8664 = vadd.f32 %v8389, %v8555
    %v8665 = vadd.f32 %v8390, %v8557
    %v8666 = vadd.f32 %v8391, %v8644
    %v8667 = vadd.f32 %v8392, %v8646
    %v8668 = vadd.f32 %v8393, %v8561
    %v8669 = vadd.f32 %v8394, %v8563
    %v8670 = vadd.f32 %v8395, %v8650
    %v8671 = vadd.f32 %v8396, %v8652
    %v8672 = vadd.f32 %v8397, %v8567
    %v8673 = vadd.f32 %v8398, %v8569
    %v8674 = vadd.f32 %v8399, %v8656
    %v8675 = vadd.f32 %v8400, %v8658
    %8676 = vrot.lane.b32.xlu0 %v6522, 112
    %v8677 = vpop.permute.xlu0 %8676
    %8678 = vrot.lane.b32.xlu0 %v6526, 112
    %v8679 = vpop.permute.xlu0 %8678
    %8680 = vrot.lane.b32.xlu0 %v6530, 112
    %v8681 = vpop.permute.xlu0 %8680
    %8682 = vrot.lane.b32.xlu0 %v6534, 112
    %v8683 = vpop.permute.xlu0 %8682
    %8684 = vrot.lane.b32.xlu0 %v6523, 112
    %v8685 = vpop.permute.xlu0 %8684
    %8686 = vrot.lane.b32.xlu0 %v6527, 112
    %v8687 = vpop.permute.xlu0 %8686
    %8688 = vrot.lane.b32.xlu0 %v6531, 112
    %v8689 = vpop.permute.xlu0 %8688
    %8690 = vrot.lane.b32.xlu0 %v6535, 112
    %v8691 = vpop.permute.xlu0 %8690
    %8692 = vrot.lane.b32.xlu0 %v6524, 112
    %v8693 = vpop.permute.xlu0 %8692
    %8694 = vrot.lane.b32.xlu0 %v6528, 112
    %v8695 = vpop.permute.xlu0 %8694
    %8696 = vrot.lane.b32.xlu0 %v6532, 112
    %v8697 = vpop.permute.xlu0 %8696
    %8698 = vrot.lane.b32.xlu0 %v6536, 112
    %v8699 = vpop.permute.xlu0 %8698
    %8700 = vrot.lane.b32.xlu0 %v6525, 112
    %v8701 = vpop.permute.xlu0 %8700
    %8702 = vrot.lane.b32.xlu0 %v6529, 112
    %v8703 = vpop.permute.xlu0 %8702
    %8704 = vrot.lane.b32.xlu0 %v6533, 112
    %v8705 = vpop.permute.xlu0 %8704
    %8706 = vrot.lane.b32.xlu0 %v6537, 112
    %v8707 = vpop.permute.xlu0 %8706
    %v8708 = vsel %vm3060, %v8693, %v8701
    %v8709 = vsel %vm3060, %v8695, %v8703
    %v8710 = vsel %vm3060, %v8697, %v8705
    %v8711 = vsel %vm3060, %v8699, %v8707
    %v8712 = vsel %vm3060, %v8685, %v8693
    %v8713 = vsel %vm3060, %v8687, %v8695
    %v8714 = vsel %vm3060, %v8689, %v8697
    %v8715 = vsel %vm3060, %v8691, %v8699
    %v8716 = vsel %vm3060, %v8677, %v8685
    %v8717 = vsel %vm3060, %v8679, %v8687
    %v8718 = vsel %vm3060, %v8681, %v8689
    %v8719 = vsel %vm3060, %v8683, %v8691
    %v8720 = vsel %vm3060, %v8701, %v8677
    %v8721 = vsel %vm3060, %v8703, %v8679
    %v8722 = vsel %vm3060, %v8705, %v8681
    %v8723 = vsel %vm3060, %v8707, %v8683
    %s8724 = scalar_lea.vmem [#allocation2], 800
    %v8725 = vld [vmem:[%s8724] sm:$0xff]
    %v8726 = vld [vmem:[%s8724 + $0x8] sm:$0xff]
    %v8727 = vld [vmem:[%s8724 + $0x10] sm:$0xff]
    %v8728 = vld [vmem:[%s8724 + $0x18] sm:$0xff]
    %v8729 = vmul.f32 %v8716, %v3088
    %v8730 = vmul.f32 %v8712, %v3092
    %v8731 = vmul.f32 %v8708, %v3096
    %v8732 = vmul.f32 %v8720, %v3100
    %v8733 = vmul.f32 %v8717, %v3088
    %v8734 = vmul.f32 %v8713, %v3092
    %v8735 = vmul.f32 %v8709, %v3096
    %v8736 = vmul.f32 %v8721, %v3100
    %v8737 = vmul.f32 %v8718, %v3088
    %v8738 = vmul.f32 %v8714, %v3092
    %v8739 = vmul.f32 %v8710, %v3096
    %v8740 = vmul.f32 %v8722, %v3100
    %v8741 = vmul.f32 %v8719, %v3088
    %v8742 = vmul.f32 %v8715, %v3092
    %v8743 = vmul.f32 %v8711, %v3096
    %v8744 = vmul.f32 %v8723, %v3100
    %v8746 = vsel %vm753, %v8725, 0
    %v8749 = vsel %vm753, %v8726, 0
    %v8752 = vsel %vm753, %v8727, 0
    %v8755 = vsel %vm753, %v8728, 0
    %8757 = vmatprep.subr.mxu0 %v8730
    %8758 = vmatpush1.msra.mxu0 %v8729
    %8759 = vmatprep.subr.mxu0 %v8734
    %8760 = vmatpush1.msra.mxu0 %v8733
    %8761 = vmatprep.subr.mxu0 %v8738
    %8762 = vmatpush1.msra.mxu0 %v8737
    %8763 = vmatprep.subr.mxu0 %v8742
    %8764 = vmatpush1.msra.mxu0 %v8741
    %8765 = vmatprep.subr.mxu0 0.0
    %8766 = vmatpush1.msra.mxu0 0.0
    %8767 = vmatprep.subr.mxu0 0.0
    %8768 = vmatpush1.msra.mxu0 0.0
    %8769 = vmatprep.subr.mxu0 0.0
    %8770 = vmatpush1.msra.mxu0 0.0
    %8771 = vmatprep.subr.mxu0 0.0
    %8772 = vmatpush1.msra.mxu0 0.0
    %8773 = vmatprep.subr.mxu0 0.0
    %8774 = vmatpush1.msra.mxu0 0.0
    %8775 = vmatprep.subr.mxu0 0.0
    %8776 = vmatpush1.msra.mxu0 0.0
    %8777 = vmatprep.subr.mxu0 0.0
    %8778 = vmatpush1.msra.mxu0 0.0
    %8779 = vmatprep.subr.mxu0 0.0
    %8780 = vmatpush1.msra.mxu0 0.0
    %8781 = vmatprep.subr.mxu0 0.0
    %8782 = vmatpush1.msra.mxu0 0.0
    %8783 = vmatprep.subr.mxu0 0.0
    %8784 = vmatpush1.msra.mxu0 0.0
    %8785 = vmatprep.subr.mxu0 0.0
    %8786 = vmatpush1.msra.mxu0 0.0
    %8787 = vmatprep.subr.mxu0 0.0
    %8788 = vmatpush1.msra.mxu0 0.0
    %8789 = vmatprep.subr.mxu0 0.0
    %8790 = vmatpush1.msra.mxu0 0.0
    %8791 = vmatprep.subr.mxu0 0.0
    %8792 = vmatpush1.msra.mxu0 0.0
    %8793 = vmatprep.subr.mxu0 0.0
    %8794 = vmatpush1.msra.mxu0 0.0
    %8795 = vmatprep.subr.mxu0 0.0
    %8796 = vmatpush1.msra.mxu0 0.0
    %8797 = vmatprep.subr.mxu0 0.0
    %8798 = vmatpush1.msra.mxu0 0.0
    %8799 = vmatprep.subr.mxu0 0.0
    %8800 = vmatpush1.msra.mxu0 0.0
    %8801 = vmatprep.subr.mxu0 0.0
    %8802 = vmatpush1.msra.mxu0 0.0
    %8803 = vmatprep.subr.mxu0 0.0
    %8804 = vmatpush1.msra.mxu0 0.0
    %8805 = vmatprep.subr.mxu0 0.0
    %8806 = vmatpush1.msra.mxu0 0.0
    %8807 = vmatprep.subr.mxu0 0.0
    %8808 = vmatpush1.msra.mxu0 0.0
    %8809 = vmatprep.subr.mxu0 0.0
    %8810 = vmatpush1.msra.mxu0 0.0
    %8811 = vmatprep.subr.mxu0 0.0
    %8812 = vmatpush1.msra.mxu0 0.0
    %8813 = vmatprep.subr.mxu0 0.0
    %8814 = vmatpush1.msra.mxu0 0.0
    %8815 = vmatprep.subr.mxu0 0.0
    %8816 = vmatpush1.msra.mxu0 0.0
    %8817 = vmatprep.subr.mxu0 0.0
    %8818 = vmatpush1.msra.mxu0 0.0
    %8819 = vmatprep.subr.mxu0 0.0
    %8820 = vmatpush1.msra.mxu0 0.0
    %8821 = vmatprep.mubr.f32.mxu0 0.0
    %8822 = vmatmul.mubr.f32.gmra.mrb[0].mxu0 %v8746
    %v8823 = vpop.f32.mrb[0].mxu0
    %v8824 = vadd.f32 0.0, %v8823
    %v8825 = vpop.f32.mrb[0].mxu0
    %v8826 = vadd.f32 0.0, %v8825
    %8827 = vmatprep.mubr.f32.mxu0 0.0
    %8828 = vmatmul.mubr.f32.gmra.mrb[0].mxu0 %v8749
    %v8829 = vpop.f32.mrb[0].mxu0
    %v8830 = vadd.f32 0.0, %v8829
    %v8831 = vpop.f32.mrb[0].mxu0
    %v8832 = vadd.f32 0.0, %v8831
    %8833 = vmatprep.mubr.f32.mxu0 0.0
    %8834 = vmatmul.mubr.f32.gmra.mrb[0].mxu0 %v8752
    %v8835 = vpop.f32.mrb[0].mxu0
    %v8836 = vadd.f32 0.0, %v8835
    %v8837 = vpop.f32.mrb[0].mxu0
    %v8838 = vadd.f32 0.0, %v8837
    %8839 = vmatprep.mubr.f32.mxu0 0.0
    %8840 = vmatmul.mubr.f32.gmra.mrb[0].mxu0 %v8755
    %v8841 = vpop.f32.mrb[0].mxu0
    %v8842 = vadd.f32 0.0, %v8841
    %v8843 = vpop.f32.mrb[0].mxu0
    %v8844 = vadd.f32 0.0, %v8843
    %8845 = vdwg.mxu0
    %8846 = vmatprep.subr.mxu0 %v8732
    %8847 = vmatpush1.msra.mxu0 %v8731
    %8848 = vmatprep.subr.mxu0 %v8736
    %8849 = vmatpush1.msra.mxu0 %v8735
    %8850 = vmatprep.subr.mxu0 %v8740
    %8851 = vmatpush1.msra.mxu0 %v8739
    %8852 = vmatprep.subr.mxu0 %v8744
    %8853 = vmatpush1.msra.mxu0 %v8743
    %8854 = vmatprep.subr.mxu0 0.0
    %8855 = vmatpush1.msra.mxu0 0.0
    %8856 = vmatprep.subr.mxu0 0.0
    %8857 = vmatpush1.msra.mxu0 0.0
    %8858 = vmatprep.subr.mxu0 0.0
    %8859 = vmatpush1.msra.mxu0 0.0
    %8860 = vmatprep.subr.mxu0 0.0
    %8861 = vmatpush1.msra.mxu0 0.0
    %8862 = vmatprep.subr.mxu0 0.0
    %8863 = vmatpush1.msra.mxu0 0.0
    %8864 = vmatprep.subr.mxu0 0.0
    %8865 = vmatpush1.msra.mxu0 0.0
    %8866 = vmatprep.subr.mxu0 0.0
    %8867 = vmatpush1.msra.mxu0 0.0
    %8868 = vmatprep.subr.mxu0 0.0
    %8869 = vmatpush1.msra.mxu0 0.0
    %8870 = vmatprep.subr.mxu0 0.0
    %8871 = vmatpush1.msra.mxu0 0.0
    %8872 = vmatprep.subr.mxu0 0.0
    %8873 = vmatpush1.msra.mxu0 0.0
    %8874 = vmatprep.subr.mxu0 0.0
    %8875 = vmatpush1.msra.mxu0 0.0
    %8876 = vmatprep.subr.mxu0 0.0
    %8877 = vmatpush1.msra.mxu0 0.0
    %8878 = vmatprep.subr.mxu0 0.0
    %8879 = vmatpush1.msra.mxu0 0.0
    %8880 = vmatprep.subr.mxu0 0.0
    %8881 = vmatpush1.msra.mxu0 0.0
    %8882 = vmatprep.subr.mxu0 0.0
    %8883 = vmatpush1.msra.mxu0 0.0
    %8884 = vmatprep.subr.mxu0 0.0
    %8885 = vmatpush1.msra.mxu0 0.0
    %8886 = vmatprep.subr.mxu0 0.0
    %8887 = vmatpush1.msra.mxu0 0.0
    %8888 = vmatprep.subr.mxu0 0.0
    %8889 = vmatpush1.msra.mxu0 0.0
    %8890 = vmatprep.subr.mxu0 0.0
    %8891 = vmatpush1.msra.mxu0 0.0
    %8892 = vmatprep.subr.mxu0 0.0
    %8893 = vmatpush1.msra.mxu0 0.0
    %8894 = vmatprep.subr.mxu0 0.0
    %8895 = vmatpush1.msra.mxu0 0.0
    %8896 = vmatprep.subr.mxu0 0.0
    %8897 = vmatpush1.msra.mxu0 0.0
    %8898 = vmatprep.subr.mxu0 0.0
    %8899 = vmatpush1.msra.mxu0 0.0
    %8900 = vmatprep.subr.mxu0 0.0
    %8901 = vmatpush1.msra.mxu0 0.0
    %8902 = vmatprep.subr.mxu0 0.0
    %8903 = vmatpush1.msra.mxu0 0.0
    %8904 = vmatprep.subr.mxu0 0.0
    %8905 = vmatpush1.msra.mxu0 0.0
    %8906 = vmatprep.subr.mxu0 0.0
    %8907 = vmatpush1.msra.mxu0 0.0
    %8908 = vmatprep.subr.mxu0 0.0
    %8909 = vmatpush1.msra.mxu0 0.0
    %8910 = vmatprep.mubr.f32.mxu0 0.0
    %8911 = vmatmul.mubr.f32.gmra.mrb[0].mxu0 %v8746
    %v8912 = vpop.f32.mrb[0].mxu0
    %v8913 = vadd.f32 0.0, %v8912
    %v8914 = vpop.f32.mrb[0].mxu0
    %v8915 = vadd.f32 0.0, %v8914
    %8916 = vmatprep.mubr.f32.mxu0 0.0
    %8917 = vmatmul.mubr.f32.gmra.mrb[0].mxu0 %v8749
    %v8918 = vpop.f32.mrb[0].mxu0
    %v8919 = vadd.f32 0.0, %v8918
    %v8920 = vpop.f32.mrb[0].mxu0
    %v8921 = vadd.f32 0.0, %v8920
    %8922 = vmatprep.mubr.f32.mxu0 0.0
    %8923 = vmatmul.mubr.f32.gmra.mrb[0].mxu0 %v8752
    %v8924 = vpop.f32.mrb[0].mxu0
    %v8925 = vadd.f32 0.0, %v8924
    %v8926 = vpop.f32.mrb[0].mxu0
    %v8927 = vadd.f32 0.0, %v8926
    %8928 = vmatprep.mubr.f32.mxu0 0.0
    %8929 = vmatmul.mubr.f32.gmra.mrb[0].mxu0 %v8755
    %v8930 = vpop.f32.mrb[0].mxu0
    %v8931 = vadd.f32 0.0, %v8930
    %v8932 = vpop.f32.mrb[0].mxu0
    %v8933 = vadd.f32 0.0, %v8932
    %8934 = vdwg.mxu0
    %v8935 = vadd.f32 %v8660, %v8824
    %v8936 = vadd.f32 %v8661, %v8826
    %v8937 = vadd.f32 %v8662, %v8913
    %v8938 = vadd.f32 %v8663, %v8915
    %v8939 = vadd.f32 %v8664, %v8830
    %v8940 = vadd.f32 %v8665, %v8832
    %v8941 = vadd.f32 %v8666, %v8919
    %v8942 = vadd.f32 %v8667, %v8921
    %v8943 = vadd.f32 %v8668, %v8836
    %v8944 = vadd.f32 %v8669, %v8838
    %v8945 = vadd.f32 %v8670, %v8925
    %v8946 = vadd.f32 %v8671, %v8927
    %v8947 = vadd.f32 %v8672, %v8842
    %v8948 = vadd.f32 %v8673, %v8844
    %v8949 = vadd.f32 %v8674, %v8931
    %v8950 = vadd.f32 %v8675, %v8933
    %8951 = vrot.lane.b32.xlu0 %v6522, 111
    %v8952 = vpop.permute.xlu0 %8951
    %8953 = vrot.lane.b32.xlu0 %v6526, 111
    %v8954 = vpop.permute.xlu0 %8953
    %8955 = vrot.lane.b32.xlu0 %v6530, 111
    %v8956 = vpop.permute.xlu0 %8955
    %8957 = vrot.lane.b32.xlu0 %v6534, 111
    %v8958 = vpop.permute.xlu0 %8957
    %8959 = vrot.lane.b32.xlu0 %v6523, 111
    %v8960 = vpop.permute.xlu0 %8959
    %8961 = vrot.lane.b32.xlu0 %v6527, 111
    %v8962 = vpop.permute.xlu0 %8961
    %8963 = vrot.lane.b32.xlu0 %v6531, 111
    %v8964 = vpop.permute.xlu0 %8963
    %8965 = vrot.lane.b32.xlu0 %v6535, 111
    %v8966 = vpop.permute.xlu0 %8965
    %8967 = vrot.lane.b32.xlu0 %v6524, 111
    %v8968 = vpop.permute.xlu0 %8967
    %8969 = vrot.lane.b32.xlu0 %v6528, 111
    %v8970 = vpop.permute.xlu0 %8969
    %8971 = vrot.lane.b32.xlu0 %v6532, 111
    %v8972 = vpop.permute.xlu0 %8971
    %8973 = vrot.lane.b32.xlu0 %v6536, 111
    %v8974 = vpop.permute.xlu0 %8973
    %8975 = vrot.lane.b32.xlu0 %v6525, 111
    %v8976 = vpop.permute.xlu0 %8975
    %8977 = vrot.lane.b32.xlu0 %v6529, 111
    %v8978 = vpop.permute.xlu0 %8977
    %8979 = vrot.lane.b32.xlu0 %v6533, 111
    %v8980 = vpop.permute.xlu0 %8979
    %8981 = vrot.lane.b32.xlu0 %v6537, 111
    %v8982 = vpop.permute.xlu0 %8981
    %v8983 = vsel %vm3359, %v8968, %v8976
    %v8984 = vsel %vm3359, %v8970, %v8978
    %v8985 = vsel %vm3359, %v8972, %v8980
    %v8986 = vsel %vm3359, %v8974, %v8982
    %v8987 = vsel %vm3359, %v8960, %v8968
    %v8988 = vsel %vm3359, %v8962, %v8970
    %v8989 = vsel %vm3359, %v8964, %v8972
    %v8990 = vsel %vm3359, %v8966, %v8974
    %v8991 = vsel %vm3359, %v8952, %v8960
    %v8992 = vsel %vm3359, %v8954, %v8962
    %v8993 = vsel %vm3359, %v8956, %v8964
    %v8994 = vsel %vm3359, %v8958, %v8966
    %v8995 = vsel %vm3359, %v8976, %v8952
    %v8996 = vsel %vm3359, %v8978, %v8954
    %v8997 = vsel %vm3359, %v8980, %v8956
    %v8998 = vsel %vm3359, %v8982, %v8958
    %s8999 = scalar_lea.vmem [#allocation2], 832
    %v9000 = vld [vmem:[%s8999] sm:$0xff]
    %v9001 = vld [vmem:[%s8999 + $0x8] sm:$0xff]
    %v9002 = vld [vmem:[%s8999 + $0x10] sm:$0xff]
    %v9003 = vld [vmem:[%s8999 + $0x18] sm:$0xff]
    %v9004 = vmul.f32 %v8991, %v3387
    %v9005 = vmul.f32 %v8987, %v3391
    %v9006 = vmul.f32 %v8983, %v3395
    %v9007 = vmul.f32 %v8995, %v3399
    %v9008 = vmul.f32 %v8992, %v3387
    %v9009 = vmul.f32 %v8988, %v3391
    %v9010 = vmul.f32 %v8984, %v3395
    %v9011 = vmul.f32 %v8996, %v3399
    %v9012 = vmul.f32 %v8993, %v3387
    %v9013 = vmul.f32 %v8989, %v3391
    %v9014 = vmul.f32 %v8985, %v3395
    %v9015 = vmul.f32 %v8997, %v3399
    %v9016 = vmul.f32 %v8994, %v3387
    %v9017 = vmul.f32 %v8990, %v3391
    %v9018 = vmul.f32 %v8986, %v3395
    %v9019 = vmul.f32 %v8998, %v3399
    %v9021 = vsel %vm753, %v9000, 0
    %v9024 = vsel %vm753, %v9001, 0
    %v9027 = vsel %vm753, %v9002, 0
    %v9030 = vsel %vm753, %v9003, 0
    %9032 = vmatprep.subr.mxu0 %v9005
    %9033 = vmatpush1.msra.mxu0 %v9004
    %9034 = vmatprep.subr.mxu0 %v9009
    %9035 = vmatpush1.msra.mxu0 %v9008
    %9036 = vmatprep.subr.mxu0 %v9013
    %9037 = vmatpush1.msra.mxu0 %v9012
    %9038 = vmatprep.subr.mxu0 %v9017
    %9039 = vmatpush1.msra.mxu0 %v9016
    %9040 = vmatprep.subr.mxu0 0.0
    %9041 = vmatpush1.msra.mxu0 0.0
    %9042 = vmatprep.subr.mxu0 0.0
    %9043 = vmatpush1.msra.mxu0 0.0
    %9044 = vmatprep.subr.mxu0 0.0
    %9045 = vmatpush1.msra.mxu0 0.0
    %9046 = vmatprep.subr.mxu0 0.0
    %9047 = vmatpush1.msra.mxu0 0.0
    %9048 = vmatprep.subr.mxu0 0.0
    %9049 = vmatpush1.msra.mxu0 0.0
    %9050 = vmatprep.subr.mxu0 0.0
    %9051 = vmatpush1.msra.mxu0 0.0
    %9052 = vmatprep.subr.mxu0 0.0
    %9053 = vmatpush1.msra.mxu0 0.0
    %9054 = vmatprep.subr.mxu0 0.0
    %9055 = vmatpush1.msra.mxu0 0.0
    %9056 = vmatprep.subr.mxu0 0.0
    %9057 = vmatpush1.msra.mxu0 0.0
    %9058 = vmatprep.subr.mxu0 0.0
    %9059 = vmatpush1.msra.mxu0 0.0
    %9060 = vmatprep.subr.mxu0 0.0
    %9061 = vmatpush1.msra.mxu0 0.0
    %9062 = vmatprep.subr.mxu0 0.0
    %9063 = vmatpush1.msra.mxu0 0.0
    %9064 = vmatprep.subr.mxu0 0.0
    %9065 = vmatpush1.msra.mxu0 0.0
    %9066 = vmatprep.subr.mxu0 0.0
    %9067 = vmatpush1.msra.mxu0 0.0
    %9068 = vmatprep.subr.mxu0 0.0
    %9069 = vmatpush1.msra.mxu0 0.0
    %9070 = vmatprep.subr.mxu0 0.0
    %9071 = vmatpush1.msra.mxu0 0.0
    %9072 = vmatprep.subr.mxu0 0.0
    %9073 = vmatpush1.msra.mxu0 0.0
    %9074 = vmatprep.subr.mxu0 0.0
    %9075 = vmatpush1.msra.mxu0 0.0
    %9076 = vmatprep.subr.mxu0 0.0
    %9077 = vmatpush1.msra.mxu0 0.0
    %9078 = vmatprep.subr.mxu0 0.0
    %9079 = vmatpush1.msra.mxu0 0.0
    %9080 = vmatprep.subr.mxu0 0.0
    %9081 = vmatpush1.msra.mxu0 0.0
    %9082 = vmatprep.subr.mxu0 0.0
    %9083 = vmatpush1.msra.mxu0 0.0
    %9084 = vmatprep.subr.mxu0 0.0
    %9085 = vmatpush1.msra.mxu0 0.0
    %9086 = vmatprep.subr.mxu0 0.0
    %9087 = vmatpush1.msra.mxu0 0.0
    %9088 = vmatprep.subr.mxu0 0.0
    %9089 = vmatpush1.msra.mxu0 0.0
    %9090 = vmatprep.subr.mxu0 0.0
    %9091 = vmatpush1.msra.mxu0 0.0
    %9092 = vmatprep.subr.mxu0 0.0
    %9093 = vmatpush1.msra.mxu0 0.0
    %9094 = vmatprep.subr.mxu0 0.0
    %9095 = vmatpush1.msra.mxu0 0.0
    %9096 = vmatprep.mubr.f32.mxu0 0.0
    %9097 = vmatmul.mubr.f32.gmra.mrb[0].mxu0 %v9021
    %v9098 = vpop.f32.mrb[0].mxu0
    %v9099 = vadd.f32 0.0, %v9098
    %v9100 = vpop.f32.mrb[0].mxu0
    %v9101 = vadd.f32 0.0, %v9100
    %9102 = vmatprep.mubr.f32.mxu0 0.0
    %9103 = vmatmul.mubr.f32.gmra.mrb[0].mxu0 %v9024
    %v9104 = vpop.f32.mrb[0].mxu0
    %v9105 = vadd.f32 0.0, %v9104
    %v9106 = vpop.f32.mrb[0].mxu0
    %v9107 = vadd.f32 0.0, %v9106
    %9108 = vmatprep.mubr.f32.mxu0 0.0
    %9109 = vmatmul.mubr.f32.gmra.mrb[0].mxu0 %v9027
    %v9110 = vpop.f32.mrb[0].mxu0
    %v9111 = vadd.f32 0.0, %v9110
    %v9112 = vpop.f32.mrb[0].mxu0
    %v9113 = vadd.f32 0.0, %v9112
    %9114 = vmatprep.mubr.f32.mxu0 0.0
    %9115 = vmatmul.mubr.f32.gmra.mrb[0].mxu0 %v9030
    %v9116 = vpop.f32.mrb[0].mxu0
    %v9117 = vadd.f32 0.0, %v9116
    %v9118 = vpop.f32.mrb[0].mxu0
    %v9119 = vadd.f32 0.0, %v9118
    %9120 = vdwg.mxu0
    %9121 = vmatprep.subr.mxu0 %v9007
    %9122 = vmatpush1.msra.mxu0 %v9006
    %9123 = vmatprep.subr.mxu0 %v9011
    %9124 = vmatpush1.msra.mxu0 %v9010
    %9125 = vmatprep.subr.mxu0 %v9015
    %9126 = vmatpush1.msra.mxu0 %v9014
    %9127 = vmatprep.subr.mxu0 %v9019
    %9128 = vmatpush1.msra.mxu0 %v9018
    %9129 = vmatprep.subr.mxu0 0.0
    %9130 = vmatpush1.msra.mxu0 0.0
    %9131 = vmatprep.subr.mxu0 0.0
    %9132 = vmatpush1.msra.mxu0 0.0
    %9133 = vmatprep.subr.mxu0 0.0
    %9134 = vmatpush1.msra.mxu0 0.0
    %9135 = vmatprep.subr.mxu0 0.0
    %9136 = vmatpush1.msra.mxu0 0.0
    %9137 = vmatprep.subr.mxu0 0.0
    %9138 = vmatpush1.msra.mxu0 0.0
    %9139 = vmatprep.subr.mxu0 0.0
    %9140 = vmatpush1.msra.mxu0 0.0
    %9141 = vmatprep.subr.mxu0 0.0
    %9142 = vmatpush1.msra.mxu0 0.0
    %9143 = vmatprep.subr.mxu0 0.0
    %9144 = vmatpush1.msra.mxu0 0.0
    %9145 = vmatprep.subr.mxu0 0.0
    %9146 = vmatpush1.msra.mxu0 0.0
    %9147 = vmatprep.subr.mxu0 0.0
    %9148 = vmatpush1.msra.mxu0 0.0
    %9149 = vmatprep.subr.mxu0 0.0
    %9150 = vmatpush1.msra.mxu0 0.0
    %9151 = vmatprep.subr.mxu0 0.0
    %9152 = vmatpush1.msra.mxu0 0.0
    %9153 = vmatprep.subr.mxu0 0.0
    %9154 = vmatpush1.msra.mxu0 0.0
    %9155 = vmatprep.subr.mxu0 0.0
    %9156 = vmatpush1.msra.mxu0 0.0
    %9157 = vmatprep.subr.mxu0 0.0
    %9158 = vmatpush1.msra.mxu0 0.0
    %9159 = vmatprep.subr.mxu0 0.0
    %9160 = vmatpush1.msra.mxu0 0.0
    %9161 = vmatprep.subr.mxu0 0.0
    %9162 = vmatpush1.msra.mxu0 0.0
    %9163 = vmatprep.subr.mxu0 0.0
    %9164 = vmatpush1.msra.mxu0 0.0
    %9165 = vmatprep.subr.mxu0 0.0
    %9166 = vmatpush1.msra.mxu0 0.0
    %9167 = vmatprep.subr.mxu0 0.0
    %9168 = vmatpush1.msra.mxu0 0.0
    %9169 = vmatprep.subr.mxu0 0.0
    %9170 = vmatpush1.msra.mxu0 0.0
    %9171 = vmatprep.subr.mxu0 0.0
    %9172 = vmatpush1.msra.mxu0 0.0
    %9173 = vmatprep.subr.mxu0 0.0
    %9174 = vmatpush1.msra.mxu0 0.0
    %9175 = vmatprep.subr.mxu0 0.0
    %9176 = vmatpush1.msra.mxu0 0.0
    %9177 = vmatprep.subr.mxu0 0.0
    %9178 = vmatpush1.msra.mxu0 0.0
    %9179 = vmatprep.subr.mxu0 0.0
    %9180 = vmatpush1.msra.mxu0 0.0
    %9181 = vmatprep.subr.mxu0 0.0
    %9182 = vmatpush1.msra.mxu0 0.0
    %9183 = vmatprep.subr.mxu0 0.0
    %9184 = vmatpush1.msra.mxu0 0.0
    %9185 = vmatprep.mubr.f32.mxu0 0.0
    %9186 = vmatmul.mubr.f32.gmra.mrb[0].mxu0 %v9021
    %v9187 = vpop.f32.mrb[0].mxu0
    %v9188 = vadd.f32 0.0, %v9187
    %v9189 = vpop.f32.mrb[0].mxu0
    %v9190 = vadd.f32 0.0, %v9189
    %9191 = vmatprep.mubr.f32.mxu0 0.0
    %9192 = vmatmul.mubr.f32.gmra.mrb[0].mxu0 %v9024
    %v9193 = vpop.f32.mrb[0].mxu0
    %v9194 = vadd.f32 0.0, %v9193
    %v9195 = vpop.f32.mrb[0].mxu0
    %v9196 = vadd.f32 0.0, %v9195
    %9197 = vmatprep.mubr.f32.mxu0 0.0
    %9198 = vmatmul.mubr.f32.gmra.mrb[0].mxu0 %v9027
    %v9199 = vpop.f32.mrb[0].mxu0
    %v9200 = vadd.f32 0.0, %v9199
    %v9201 = vpop.f32.mrb[0].mxu0
    %v9202 = vadd.f32 0.0, %v9201
    %9203 = vmatprep.mubr.f32.mxu0 0.0
    %9204 = vmatmul.mubr.f32.gmra.mrb[0].mxu0 %v9030
    %v9205 = vpop.f32.mrb[0].mxu0
    %v9206 = vadd.f32 0.0, %v9205
    %v9207 = vpop.f32.mrb[0].mxu0
    %v9208 = vadd.f32 0.0, %v9207
    %9209 = vdwg.mxu0
    %v9210 = vadd.f32 %v8935, %v9099
    %v9211 = vadd.f32 %v8936, %v9101
    %v9212 = vadd.f32 %v8937, %v9188
    %v9213 = vadd.f32 %v8938, %v9190
    %v9214 = vadd.f32 %v8939, %v9105
    %v9215 = vadd.f32 %v8940, %v9107
    %v9216 = vadd.f32 %v8941, %v9194
    %v9217 = vadd.f32 %v8942, %v9196
    %v9218 = vadd.f32 %v8943, %v9111
    %v9219 = vadd.f32 %v8944, %v9113
    %v9220 = vadd.f32 %v8945, %v9200
    %v9221 = vadd.f32 %v8946, %v9202
    %v9222 = vadd.f32 %v8947, %v9117
    %v9223 = vadd.f32 %v8948, %v9119
    %v9224 = vadd.f32 %v8949, %v9206
    %v9225 = vadd.f32 %v8950, %v9208
    %v9226 = vxor.u32 %v9210, 2147483648
    %v9227 = vxor.u32 %v9211, 2147483648
    %v9228 = vxor.u32 %v9212, 2147483648
    %v9229 = vxor.u32 %v9213, 2147483648
    %v9230 = vxor.u32 %v9214, 2147483648
    %v9231 = vxor.u32 %v9215, 2147483648
    %v9232 = vxor.u32 %v9216, 2147483648
    %v9233 = vxor.u32 %v9217, 2147483648
    %v9234 = vxor.u32 %v9218, 2147483648
    %v9235 = vxor.u32 %v9219, 2147483648
    %v9236 = vxor.u32 %v9220, 2147483648
    %v9237 = vxor.u32 %v9221, 2147483648
    %v9238 = vxor.u32 %v9222, 2147483648
    %v9239 = vxor.u32 %v9223, 2147483648
    %v9240 = vxor.u32 %v9224, 2147483648
    %v9241 = vxor.u32 %v9225, 2147483648
    %v9242 = vmul.f32 %v9226, 1.442695
    %v9243 = vpow.pop %v9242
    %v9244 = vmul.f32 %v9227, 1.442695
    %v9245 = vpow.pop %v9244
    %v9246 = vmul.f32 %v9228, 1.442695
    %v9247 = vpow.pop %v9246
    %v9248 = vmul.f32 %v9229, 1.442695
    %v9249 = vpow.pop %v9248
    %v9250 = vmul.f32 %v9230, 1.442695
    %v9251 = vpow.pop %v9250
    %v9252 = vmul.f32 %v9231, 1.442695
    %v9253 = vpow.pop %v9252
    %v9254 = vmul.f32 %v9232, 1.442695
    %v9255 = vpow.pop %v9254
    %v9256 = vmul.f32 %v9233, 1.442695
    %v9257 = vpow.pop %v9256
    %v9258 = vmul.f32 %v9234, 1.442695
    %v9259 = vpow.pop %v9258
    %v9260 = vmul.f32 %v9235, 1.442695
    %v9261 = vpow.pop %v9260
    %v9262 = vmul.f32 %v9236, 1.442695
    %v9263 = vpow.pop %v9262
    %v9264 = vmul.f32 %v9237, 1.442695
    %v9265 = vpow.pop %v9264
    %v9266 = vmul.f32 %v9238, 1.442695
    %v9267 = vpow.pop %v9266
    %v9268 = vmul.f32 %v9239, 1.442695
    %v9269 = vpow.pop %v9268
    %v9270 = vmul.f32 %v9240, 1.442695
    %v9271 = vpow.pop %v9270
    %v9272 = vmul.f32 %v9241, 1.442695
    %v9273 = vpow.pop %v9272
    %v9274 = vadd.f32 %v9243, 1.0
    %v9275 = vadd.f32 %v9245, 1.0
    %v9276 = vadd.f32 %v9247, 1.0
    %v9277 = vadd.f32 %v9249, 1.0
    %v9278 = vadd.f32 %v9251, 1.0
    %v9279 = vadd.f32 %v9253, 1.0
    %v9280 = vadd.f32 %v9255, 1.0
    %v9281 = vadd.f32 %v9257, 1.0
    %v9282 = vadd.f32 %v9259, 1.0
    %v9283 = vadd.f32 %v9261, 1.0
    %v9284 = vadd.f32 %v9263, 1.0
    %v9285 = vadd.f32 %v9265, 1.0
    %v9286 = vadd.f32 %v9267, 1.0
    %v9287 = vadd.f32 %v9269, 1.0
    %v9288 = vadd.f32 %v9271, 1.0
    %v9289 = vadd.f32 %v9273, 1.0
    %v9290 = vrcp.pop %v9274
    %v9291 = vmul.f32 1.0, %v9290
    %v9292 = vrcp.pop %v9275
    %v9293 = vmul.f32 1.0, %v9292
    %v9294 = vrcp.pop %v9276
    %v9295 = vmul.f32 1.0, %v9294
    %v9296 = vrcp.pop %v9277
    %v9297 = vmul.f32 1.0, %v9296
    %v9298 = vrcp.pop %v9278
    %v9299 = vmul.f32 1.0, %v9298
    %v9300 = vrcp.pop %v9279
    %v9301 = vmul.f32 1.0, %v9300
    %v9302 = vrcp.pop %v9280
    %v9303 = vmul.f32 1.0, %v9302
    %v9304 = vrcp.pop %v9281
    %v9305 = vmul.f32 1.0, %v9304
    %v9306 = vrcp.pop %v9282
    %v9307 = vmul.f32 1.0, %v9306
    %v9308 = vrcp.pop %v9283
    %v9309 = vmul.f32 1.0, %v9308
    %v9310 = vrcp.pop %v9284
    %v9311 = vmul.f32 1.0, %v9310
    %v9312 = vrcp.pop %v9285
    %v9313 = vmul.f32 1.0, %v9312
    %v9314 = vrcp.pop %v9286
    %v9315 = vmul.f32 1.0, %v9314
    %v9316 = vrcp.pop %v9287
    %v9317 = vmul.f32 1.0, %v9316
    %v9318 = vrcp.pop %v9288
    %v9319 = vmul.f32 1.0, %v9318
    %v9320 = vrcp.pop %v9289
    %v9321 = vmul.f32 1.0, %v9320
    %v9322 = vmul.f32 %v9210, %v9291
    %v9323 = vmul.f32 %v9211, %v9293
    %v9324 = vmul.f32 %v9212, %v9295
    %v9325 = vmul.f32 %v9213, %v9297
    %v9326 = vmul.f32 %v9214, %v9299
    %v9327 = vmul.f32 %v9215, %v9301
    %v9328 = vmul.f32 %v9216, %v9303
    %v9329 = vmul.f32 %v9217, %v9305
    %v9330 = vmul.f32 %v9218, %v9307
    %v9331 = vmul.f32 %v9219, %v9309
    %v9332 = vmul.f32 %v9220, %v9311
    %v9333 = vmul.f32 %v9221, %v9313
    %v9334 = vmul.f32 %v9222, %v9315
    %v9335 = vmul.f32 %v9223, %v9317
    %v9336 = vmul.f32 %v9224, %v9319
    %v9337 = vmul.f32 %v9225, %v9321
    %v9338 = vadd.f32 %v9322, %v709
    %v9339 = vadd.f32 %v9323, %v710
    %v9340 = vadd.f32 %v9324, %v711
    %v9341 = vadd.f32 %v9325, %v712
    %v9342 = vadd.f32 %v9326, %v713
    %v9343 = vadd.f32 %v9327, %v714
    %v9344 = vadd.f32 %v9328, %v715
    %v9345 = vadd.f32 %v9329, %v716
    %v9346 = vadd.f32 %v9330, %v717
    %v9347 = vadd.f32 %v9331, %v718
    %v9348 = vadd.f32 %v9332, %v719
    %v9349 = vadd.f32 %v9333, %v720
    %v9350 = vadd.f32 %v9334, %v721
    %v9351 = vadd.f32 %v9335, %v722
    %v9352 = vadd.f32 %v9336, %v723
    %v9353 = vadd.f32 %v9337, %v724
    %v9354 = vld [vmem:[%s10] sm:$0xff]
    %v9355 = vld [vmem:[%s10 + $0x8] sm:$0xff]
    %v9356 = vld [vmem:[%s11] sm:$0xff]
    %v9357 = vld [vmem:[%s11 + $0x8] sm:$0xff]
    %9359 = vset.pattern.permute.xlu0 0
    %9360 = vperm.xlu0 %9359, %v9356
    %v9361 = vpop.permute.xlu0 %9360
    %9364 = vset.pattern.permute.xlu0 0
    %9365 = vperm.xlu0 %9364, %v9357
    %v9366 = vpop.permute.xlu0 %9365
    %v9369 = vsel %vm753, %v9354, 0
    %v9372 = vsel %vm753, %v9355, 0
    %9374 = vmatprep.subr.mxu0 %v9339
    %9375 = vmatpush1.msra.mxu0 %v9338
    %9376 = vmatprep.subr.mxu0 %v9343
    %9377 = vmatpush1.msra.mxu0 %v9342
    %9378 = vmatprep.subr.mxu0 %v9347
    %9379 = vmatpush1.msra.mxu0 %v9346
    %9380 = vmatprep.subr.mxu0 %v9351
    %9381 = vmatpush1.msra.mxu0 %v9350
    %9382 = vmatprep.subr.mxu0 0.0
    %9383 = vmatpush1.msra.mxu0 0.0
    %9384 = vmatprep.subr.mxu0 0.0
    %9385 = vmatpush1.msra.mxu0 0.0
    %9386 = vmatprep.subr.mxu0 0.0
    %9387 = vmatpush1.msra.mxu0 0.0
    %9388 = vmatprep.subr.mxu0 0.0
    %9389 = vmatpush1.msra.mxu0 0.0
    %9390 = vmatprep.subr.mxu0 0.0
    %9391 = vmatpush1.msra.mxu0 0.0
    %9392 = vmatprep.subr.mxu0 0.0
    %9393 = vmatpush1.msra.mxu0 0.0
    %9394 = vmatprep.subr.mxu0 0.0
    %9395 = vmatpush1.msra.mxu0 0.0
    %9396 = vmatprep.subr.mxu0 0.0
    %9397 = vmatpush1.msra.mxu0 0.0
    %9398 = vmatprep.subr.mxu0 0.0
    %9399 = vmatpush1.msra.mxu0 0.0
    %9400 = vmatprep.subr.mxu0 0.0
    %9401 = vmatpush1.msra.mxu0 0.0
    %9402 = vmatprep.subr.mxu0 0.0
    %9403 = vmatpush1.msra.mxu0 0.0
    %9404 = vmatprep.subr.mxu0 0.0
    %9405 = vmatpush1.msra.mxu0 0.0
    %9406 = vmatprep.subr.mxu0 0.0
    %9407 = vmatpush1.msra.mxu0 0.0
    %9408 = vmatprep.subr.mxu0 0.0
    %9409 = vmatpush1.msra.mxu0 0.0
    %9410 = vmatprep.subr.mxu0 0.0
    %9411 = vmatpush1.msra.mxu0 0.0
    %9412 = vmatprep.subr.mxu0 0.0
    %9413 = vmatpush1.msra.mxu0 0.0
    %9414 = vmatprep.subr.mxu0 0.0
    %9415 = vmatpush1.msra.mxu0 0.0
    %9416 = vmatprep.subr.mxu0 0.0
    %9417 = vmatpush1.msra.mxu0 0.0
    %9418 = vmatprep.subr.mxu0 0.0
    %9419 = vmatpush1.msra.mxu0 0.0
    %9420 = vmatprep.subr.mxu0 0.0
    %9421 = vmatpush1.msra.mxu0 0.0
    %9422 = vmatprep.subr.mxu0 0.0
    %9423 = vmatpush1.msra.mxu0 0.0
    %9424 = vmatprep.subr.mxu0 0.0
    %9425 = vmatpush1.msra.mxu0 0.0
    %9426 = vmatprep.subr.mxu0 0.0
    %9427 = vmatpush1.msra.mxu0 0.0
    %9428 = vmatprep.subr.mxu0 0.0
    %9429 = vmatpush1.msra.mxu0 0.0
    %9430 = vmatprep.subr.mxu0 0.0
    %9431 = vmatpush1.msra.mxu0 0.0
    %9432 = vmatprep.subr.mxu0 0.0
    %9433 = vmatpush1.msra.mxu0 0.0
    %9434 = vmatprep.subr.mxu0 0.0
    %9435 = vmatpush1.msra.mxu0 0.0
    %9436 = vmatprep.subr.mxu0 0.0
    %9437 = vmatpush1.msra.mxu0 0.0
    %9438 = vmatprep.mubr.f32.mxu0 0.0
    %9439 = vmatmul.mubr.f32.gmra.mrb[0].mxu0 %v9369
    %v9440 = vpop.f32.mrb[0].mxu0
    %v9441 = vadd.f32 %v9361, %v9440
    %v9442 = vpop.f32.mrb[0].mxu0
    %v9443 = vadd.f32 %v9361, %v9442
    %9444 = vmatprep.mubr.f32.mxu0 0.0
    %9445 = vmatmul.mubr.f32.gmra.mrb[0].mxu0 %v9372
    %v9446 = vpop.f32.mrb[0].mxu0
    %v9447 = vadd.f32 %v9366, %v9446
    %v9448 = vpop.f32.mrb[0].mxu0
    %v9449 = vadd.f32 %v9366, %v9448
    %9450 = vdwg.mxu0
    %9451 = vmatprep.subr.mxu0 %v9341
    %9452 = vmatpush1.msra.mxu0 %v9340
    %9453 = vmatprep.subr.mxu0 %v9345
    %9454 = vmatpush1.msra.mxu0 %v9344
    %9455 = vmatprep.subr.mxu0 %v9349
    %9456 = vmatpush1.msra.mxu0 %v9348
    %9457 = vmatprep.subr.mxu0 %v9353
    %9458 = vmatpush1.msra.mxu0 %v9352
    %9459 = vmatprep.subr.mxu0 0.0
    %9460 = vmatpush1.msra.mxu0 0.0
    %9461 = vmatprep.subr.mxu0 0.0
    %9462 = vmatpush1.msra.mxu0 0.0
    %9463 = vmatprep.subr.mxu0 0.0
    %9464 = vmatpush1.msra.mxu0 0.0
    %9465 = vmatprep.subr.mxu0 0.0
    %9466 = vmatpush1.msra.mxu0 0.0
    %9467 = vmatprep.subr.mxu0 0.0
    %9468 = vmatpush1.msra.mxu0 0.0
    %9469 = vmatprep.subr.mxu0 0.0
    %9470 = vmatpush1.msra.mxu0 0.0
    %9471 = vmatprep.subr.mxu0 0.0
    %9472 = vmatpush1.msra.mxu0 0.0
    %9473 = vmatprep.subr.mxu0 0.0
    %9474 = vmatpush1.msra.mxu0 0.0
    %9475 = vmatprep.subr.mxu0 0.0
    %9476 = vmatpush1.msra.mxu0 0.0
    %9477 = vmatprep.subr.mxu0 0.0
    %9478 = vmatpush1.msra.mxu0 0.0
    %9479 = vmatprep.subr.mxu0 0.0
    %9480 = vmatpush1.msra.mxu0 0.0
    %9481 = vmatprep.subr.mxu0 0.0
    %9482 = vmatpush1.msra.mxu0 0.0
    %9483 = vmatprep.subr.mxu0 0.0
    %9484 = vmatpush1.msra.mxu0 0.0
    %9485 = vmatprep.subr.mxu0 0.0
    %9486 = vmatpush1.msra.mxu0 0.0
    %9487 = vmatprep.subr.mxu0 0.0
    %9488 = vmatpush1.msra.mxu0 0.0
    %9489 = vmatprep.subr.mxu0 0.0
    %9490 = vmatpush1.msra.mxu0 0.0
    %9491 = vmatprep.subr.mxu0 0.0
    %9492 = vmatpush1.msra.mxu0 0.0
    %9493 = vmatprep.subr.mxu0 0.0
    %9494 = vmatpush1.msra.mxu0 0.0
    %9495 = vmatprep.subr.mxu0 0.0
    %9496 = vmatpush1.msra.mxu0 0.0
    %9497 = vmatprep.subr.mxu0 0.0
    %9498 = vmatpush1.msra.mxu0 0.0
    %9499 = vmatprep.subr.mxu0 0.0
    %9500 = vmatpush1.msra.mxu0 0.0
    %9501 = vmatprep.subr.mxu0 0.0
    %9502 = vmatpush1.msra.mxu0 0.0
    %9503 = vmatprep.subr.mxu0 0.0
    %9504 = vmatpush1.msra.mxu0 0.0
    %9505 = vmatprep.subr.mxu0 0.0
    %9506 = vmatpush1.msra.mxu0 0.0
    %9507 = vmatprep.subr.mxu0 0.0
    %9508 = vmatpush1.msra.mxu0 0.0
    %9509 = vmatprep.subr.mxu0 0.0
    %9510 = vmatpush1.msra.mxu0 0.0
    %9511 = vmatprep.subr.mxu0 0.0
    %9512 = vmatpush1.msra.mxu0 0.0
    %9513 = vmatprep.subr.mxu0 0.0
    %9514 = vmatpush1.msra.mxu0 0.0
    %9515 = vmatprep.mubr.f32.mxu0 0.0
    %9516 = vmatmul.mubr.f32.gmra.mrb[0].mxu0 %v9369
    %v9517 = vpop.f32.mrb[0].mxu0
    %v9518 = vadd.f32 %v9361, %v9517
    %v9519 = vpop.f32.mrb[0].mxu0
    %v9520 = vadd.f32 %v9361, %v9519
    %9521 = vmatprep.mubr.f32.mxu0 0.0
    %9522 = vmatmul.mubr.f32.gmra.mrb[0].mxu0 %v9372
    %v9523 = vpop.f32.mrb[0].mxu0
    %v9524 = vadd.f32 %v9366, %v9523
    %v9525 = vpop.f32.mrb[0].mxu0
    %v9526 = vadd.f32 %v9366, %v9525
    %9527 = vdwg.mxu0
    %v9528 = vxor.u32 %v9441, 2147483648
    %v9529 = vxor.u32 %v9443, 2147483648
    %v9530 = vxor.u32 %v9518, 2147483648
    %v9531 = vxor.u32 %v9520, 2147483648
    %v9532 = vxor.u32 %v9447, 2147483648
    %v9533 = vxor.u32 %v9449, 2147483648
    %v9534 = vxor.u32 %v9524, 2147483648
    %v9535 = vxor.u32 %v9526, 2147483648
    %v9536 = vmul.f32 %v9528, 1.442695
    %v9537 = vpow.pop %v9536
    %v9538 = vmul.f32 %v9529, 1.442695
    %v9539 = vpow.pop %v9538
    %v9540 = vmul.f32 %v9530, 1.442695
    %v9541 = vpow.pop %v9540
    %v9542 = vmul.f32 %v9531, 1.442695
    %v9543 = vpow.pop %v9542
    %v9544 = vmul.f32 %v9532, 1.442695
    %v9545 = vpow.pop %v9544
    %v9546 = vmul.f32 %v9533, 1.442695
    %v9547 = vpow.pop %v9546
    %v9548 = vmul.f32 %v9534, 1.442695
    %v9549 = vpow.pop %v9548
    %v9550 = vmul.f32 %v9535, 1.442695
    %v9551 = vpow.pop %v9550
    %v9552 = vadd.f32 %v9537, 1.0
    %v9553 = vadd.f32 %v9539, 1.0
    %v9554 = vadd.f32 %v9541, 1.0
    %v9555 = vadd.f32 %v9543, 1.0
    %v9556 = vadd.f32 %v9545, 1.0
    %v9557 = vadd.f32 %v9547, 1.0
    %v9558 = vadd.f32 %v9549, 1.0
    %v9559 = vadd.f32 %v9551, 1.0
    %v9560 = vrcp.pop %v9552
    %v9561 = vmul.f32 1.0, %v9560
    %v9562 = vrcp.pop %v9553
    %v9563 = vmul.f32 1.0, %v9562
    %v9564 = vrcp.pop %v9554
    %v9565 = vmul.f32 1.0, %v9564
    %v9566 = vrcp.pop %v9555
    %v9567 = vmul.f32 1.0, %v9566
    %v9568 = vrcp.pop %v9556
    %v9569 = vmul.f32 1.0, %v9568
    %v9570 = vrcp.pop %v9557
    %v9571 = vmul.f32 1.0, %v9570
    %v9572 = vrcp.pop %v9558
    %v9573 = vmul.f32 1.0, %v9572
    %v9574 = vrcp.pop %v9559
    %v9575 = vmul.f32 1.0, %v9574
    %v9576 = vmul.f32 %v9441, %v9561
    %v9577 = vmul.f32 %v9443, %v9563
    %v9578 = vmul.f32 %v9518, %v9565
    %v9579 = vmul.f32 %v9520, %v9567
    %v9580 = vmul.f32 %v9447, %v9569
    %v9581 = vmul.f32 %v9449, %v9571
    %v9582 = vmul.f32 %v9524, %v9573
    %v9583 = vmul.f32 %v9526, %v9575
    %9584 = vst [vmem:[#allocation5] sm:$0xff] %v9576
    %9585 = vst [vmem:[#allocation5 + $0x8] sm:$0xff] %v9577
    %9586 = vst [vmem:[#allocation5 + $0x10] sm:$0xff] %v9578
    %9587 = vst [vmem:[#allocation5 + $0x18] sm:$0xff] %v9579
    %9588 = vst [vmem:[#allocation5 + $0x20] sm:$0xff] %v9580
    %9589 = vst [vmem:[#allocation5 + $0x28] sm:$0xff] %v9581
    %9590 = vst [vmem:[#allocation5 + $0x30] sm:$0xff] %v9582
    %9591 = vst [vmem:[#allocation5 + $0x38] sm:$0xff] %v9583
    // Predicated region
    $region54: #{tpu_custom_call.1} parent=1 // pred_check
      _
    $region55: #{tpu_custom_call.1} parent=1 // pred_check_branch
      %9593 = sbr.rel (0) target = $region57
    $region56: #{tpu_custom_call.1} parent=1 // pred_region
      %s9595 = ssub.s32 1024, 1024
      %9596 = vsyncadd [#allocation4], %s9595
      %s9597 = sshll.u32 [#allocation5], 4
      %s9598 = int_to_ptr.vmem [resolvable:$true] %s9597
      %9603 = dma.vmem_to_hbm [thread:$0]  %s9598, 1024, %s12, [#allocation4], 512, 512, 32
    $region57: #{tpu_custom_call.1} parent=1 // pred_fallthru
      _
    // Predicated region
    $region58: #{tpu_custom_call.1} parent=1 // pred_check
      _
    $region59: #{tpu_custom_call.1} parent=1 // pred_check_branch
      %9605 = sbr.rel (0) target = $region61
    $region60: #{tpu_custom_call.1} parent=1 // pred_region
      %9606 = dma.done [#allocation4], 1024
    $region61: #{tpu_custom_call.1} parent=1 // pred_fallthru
      _
    %9607 = vsyncpa [#allocation3], 1
    %9608 = vsyncpa [#allocation4], 1

</llo_original>
